<compile_context>
chip_gen: v6e
topology: v6e:2x2x1
jax: 0.10.0
libtpu: 0.0.40
codegen_flags: <defaults>
</compile_context>

<pallas_src>
import jax
import jax.numpy as jnp
from jax.experimental import pallas as pl
from jax.experimental.pallas import tpu as pltpu


# ----------------------------- Pallas kernels -------------------------------

def upsample_kernel(x_ref, w_ref, b_ref, o_ref):
    # ConvTranspose2d(k=2, s=2) as one matmul per image.
    # x_ref: (1, H, W, Cin); w_ref: (Cin, 4*Cu) columns ordered (di, dj, cu); b_ref: (1, 4*Cu)
    # o_ref: (1, H, 2, W, 2*Cu).  Element (0, i, di, j, dj*Cu + c) == u[2i+di, 2j+dj, c],
    # so the wrapper reshape to (N, H2, W2, Cu) is a free row-major reshape (no transpose).
    H, W, Cin = x_ref.shape[1], x_ref.shape[2], x_ref.shape[3]
    two_cu = o_ref.shape[4]
    x2 = x_ref[0].reshape(H * W, Cin)
    y = jnp.dot(x2, w_ref[...], preferred_element_type=jnp.float32) + b_ref[0][None, :]
    for di in range(2):
        o_ref[0, :, di, :, :] = (
            y[:, di * two_cu:(di + 1) * two_cu].reshape(H, W, two_cu).astype(o_ref.dtype))


def _zero_halo(xp_ref):
    # Only the 1-pixel border needs zeros; the interior is fully overwritten every grid step.
    Hp, Wp, C = xp_ref.shape
    xp_ref[0:1, :, :] = jnp.zeros((1, Wp, C), jnp.float32)
    xp_ref[Hp - 1:Hp, :, :] = jnp.zeros((1, Wp, C), jnp.float32)
    xp_ref[:, 0:1, :] = jnp.zeros((Hp, 1, C), jnp.float32)
    xp_ref[:, Wp - 1:Wp, :] = jnp.zeros((Hp, 1, C), jnp.float32)


def _im2col_conv(xp_ref, patch_ref, w_ref):
    # Build the (H*W, 9*C) patch matrix once (per-tap ref slices, stored contiguously),
    # then do a single K=9*C MXU dot instead of 9 K=C dots.
    Hp, Wp, C = xp_ref.shape
    H, W = Hp - 2, Wp - 2
    for k in range(9):
        ky, kx = k // 3, k % 3
        patch_ref[:, k * C:(k + 1) * C] = (
            xp_ref[ky:ky + H, kx:kx + W, :].reshape(H * W, C))
    return jnp.dot(patch_ref[...], w_ref[...], preferred_element_type=jnp.float32)


def concat_conv1_kernel(u_ref, r_ref, w_ref, o_ref, sum_ref, ssq_ref, xp_ref, patch_ref):
    # Fused: channel concat (in VMEM) + halo pad + 3x3 conv (bias=False, one im2col dot)
    # + BN1 per-image sum / sum-of-squares partials from the in-VMEM accumulator.
    H2, W2, Cu = u_ref.shape[1], u_ref.shape[2], u_ref.shape[3]
    C2 = xp_ref.shape[2]
    OC = o_ref.shape[3]

    _zero_halo(xp_ref)
    xp_ref[1:H2 + 1, 1:W2 + 1, 0:Cu] = u_ref[0].astype(jnp.float32)   # "concat" in VMEM
    xp_ref[1:H2 + 1, 1:W2 + 1, Cu:C2] = r_ref[0].astype(jnp.float32)

    acc = _im2col_conv(xp_ref, patch_ref, w_ref)                      # (H2*W2, OC) f32
    o_ref[0] = acc.reshape(H2, W2, OC).astype(o_ref.dtype)
    sum_ref[0] = jnp.sum(acc, axis=0, keepdims=True)
    ssq_ref[0] = jnp.sum(acc * acc, axis=0, keepdims=True)


def bn_relu_conv2_kernel(h_ref, scale_ref, bias_ref, w_ref, o_ref, sum_ref, ssq_ref,
                         xp_ref, patch_ref):
    # Fused: BN1 affine + ReLU prologue + halo pad + 3x3 conv (one im2col dot)
    # + BN2 per-image sum / sum-of-squares partials.
    H2, W2, C = h_ref.shape[1], h_ref.shape[2], h_ref.shape[3]
    OC = o_ref.shape[3]

    _zero_halo(xp_ref)
    h = h_ref[0].astype(jnp.float32)
    xp_ref[1:H2 + 1, 1:W2 + 1, :] = jnp.maximum(h * scale_ref[0] + bias_ref[0], 0.0)

    acc = _im2col_conv(xp_ref, patch_ref, w_ref)
    o_ref[0] = acc.reshape(H2, W2, OC).astype(o_ref.dtype)
    sum_ref[0] = jnp.sum(acc, axis=0, keepdims=True)
    ssq_ref[0] = jnp.sum(acc * acc, axis=0, keepdims=True)


def bn_relu_kernel(x_ref, scale_ref, bias_ref, o_ref):
    # Final BN2 affine + ReLU (needs full-batch stats, hence a separate small pass).
    x = x_ref[...].astype(jnp.float32)
    o_ref[...] = jnp.maximum(x * scale_ref[0] + bias_ref[0], 0.0)


# ----------------------------- wrappers --------------------------------------

def prepare_params(p):
    """Hoist all weight relayouts out of the per-call path (done once)."""
    Cin, Cu = p["up_w"].shape[0], p["up_w"].shape[1]
    OC = p["conv1_w"].shape[0]
    return {
        # (Cin, Cu, di, dj) -> (Cin, di, dj, Cu) -> (Cin, 4*Cu); columns ordered (di, dj, cu)
        "up_w_mat": jnp.transpose(p["up_w"], (0, 2, 3, 1)).reshape(Cin, 4 * Cu),
        "up_b4":    jnp.tile(p["up_b"], (4,)).reshape(1, 4 * Cu),
        # (OC, C, 3, 3) -> (ky, kx, C, OC) -> (9*C, OC)  [matches im2col patch column order]
        "conv1_w9": jnp.transpose(p["conv1_w"], (2, 3, 1, 0)).reshape(9 * Cin, OC),
        "conv2_w9": jnp.transpose(p["conv2_w"], (2, 3, 1, 0)).reshape(9 * OC, OC),
        "bn1_gamma": p["bn1_gamma"], "bn1_beta": p["bn1_beta"],
        "bn2_gamma": p["bn2_gamma"], "bn2_beta": p["bn2_beta"],
    }


def _bn_affine(s1, s2, gamma, beta, count, eps=1e-5):
    """Fold train-mode BatchNorm (biased batch var) into per-channel scale/bias."""
    mean = jnp.sum(s1, axis=(0, 1)) / count
    ex2 = jnp.sum(s2, axis=(0, 1)) / count
    var = jnp.maximum(ex2 - mean * mean, 0.0)
    scale = gamma * jax.lax.rsqrt(var + eps)
    bias = beta - mean * scale
    C = gamma.shape[0]
    return scale.reshape(1, C), bias.reshape(1, C)


_CONV_PARAMS = pltpu.CompilerParams(dimension_semantics=("parallel",),
                                    vmem_limit_bytes=48 * 1024 * 1024)


def _conv1_call(u, r, w9, out_dtype):
    N, H2, W2, Cu = u.shape
    C2, OC = 2 * Cu, w9.shape[1]
    return pl.pallas_call(
        concat_conv1_kernel,
        out_shape=(jax.ShapeDtypeStruct((N, H2, W2, OC), out_dtype),
                   jax.ShapeDtypeStruct((N, 1, OC), jnp.float32),
                   jax.ShapeDtypeStruct((N, 1, OC), jnp.float32)),
        grid=(N,),
        in_specs=[pl.BlockSpec((1, H2, W2, Cu), lambda n: (n, 0, 0, 0)),
                  pl.BlockSpec((1, H2, W2, Cu), lambda n: (n, 0, 0, 0)),
                  pl.BlockSpec((9 * C2, OC), lambda n: (0, 0))],
        out_specs=(pl.BlockSpec((1, H2, W2, OC), lambda n: (n, 0, 0, 0)),
                   pl.BlockSpec((1, 1, OC), lambda n: (n, 0, 0)),
                   pl.BlockSpec((1, 1, OC), lambda n: (n, 0, 0))),
        scratch_shapes=[pltpu.VMEM((H2 + 2, W2 + 2, C2), jnp.float32),
                        pltpu.VMEM((H2 * W2, 9 * C2), jnp.float32)],
        compiler_params=_CONV_PARAMS,
    )(u, r, w9)


def _conv2_call(h, scale, bias, w9, out_dtype):
    N, H2, W2, C = h.shape
    OC = w9.shape[1]
    return pl.pallas_call(
        bn_relu_conv2_kernel,
        out_shape=(jax.ShapeDtypeStruct((N, H2, W2, OC), out_dtype),
                   jax.ShapeDtypeStruct((N, 1, OC), jnp.float32),
                   jax.ShapeDtypeStruct((N, 1, OC), jnp.float32)),
        grid=(N,),
        in_specs=[pl.BlockSpec((1, H2, W2, C), lambda n: (n, 0, 0, 0)),
                  pl.BlockSpec((1, C), lambda n: (0, 0)),
                  pl.BlockSpec((1, C), lambda n: (0, 0)),
                  pl.BlockSpec((9 * C, OC), lambda n: (0, 0))],
        out_specs=(pl.BlockSpec((1, H2, W2, OC), lambda n: (n, 0, 0, 0)),
                   pl.BlockSpec((1, 1, OC), lambda n: (n, 0, 0)),
                   pl.BlockSpec((1, 1, OC), lambda n: (n, 0, 0))),
        scratch_shapes=[pltpu.VMEM((H2 + 2, W2 + 2, C), jnp.float32),
                        pltpu.VMEM((H2 * W2, 9 * C), jnp.float32)],
        compiler_params=_CONV_PARAMS,
    )(h, scale, bias, w9)


def up_forward(image_nchw, residual_nchw, p, storage_dtype=jnp.float32):
    """Up.forward: upsample(image) -> concat(residual) -> [conv3x3 -> BN -> ReLU] x 2."""
    x = jnp.transpose(image_nchw, (0, 2, 3, 1))          # NCHW -> NHWC
    r = jnp.transpose(residual_nchw, (0, 2, 3, 1))
    N, H, W, Cin = x.shape
    Cu = r.shape[3]
    H2, W2 = 2 * H, 2 * W
    OC = p["conv1_w9"].shape[1]

    # --- ConvTranspose2d(2,2): one (H*W, Cin) @ (Cin, 4*Cu) matmul per image; output written
    #     in (N, H, 2, W, 2*Cu) layout so the interleave below is a free row-major reshape ---
    u5 = pl.pallas_call(
        upsample_kernel,
        out_shape=jax.ShapeDtypeStruct((N, H, 2, W, 2 * Cu), jnp.float32),
        grid=(N,),
        in_specs=[pl.BlockSpec((1, H, W, Cin), lambda n: (n, 0, 0, 0)),
                  pl.BlockSpec((Cin, 4 * Cu), lambda n: (0, 0)),
                  pl.BlockSpec((1, 4 * Cu), lambda n: (0, 0))],
        out_specs=pl.BlockSpec((1, H, 2, W, 2 * Cu), lambda n: (n, 0, 0, 0, 0)),
        compiler_params=pltpu.CompilerParams(dimension_semantics=("parallel",)),
    )(x, p["up_w_mat"], p["up_b4"])
    u = u5.reshape(N, H2, W2, Cu)        # free reshape; sub-pixel interleave already in memory

    # --- fused concat + halo + conv1 (im2col dot) + BN1 stat partials ---
    h1, s1, q1 = _conv1_call(u, r, p["conv1_w9"], storage_dtype)
    scale1, bias1 = _bn_affine(s1, q1, p["bn1_gamma"], p["bn1_beta"], N * H2 * W2)

    # --- fused BN1 affine + ReLU prologue + halo + conv2 (im2col dot) + BN2 stat partials ---
    h2, s2, q2 = _conv2_call(h1, scale1, bias1, p["conv2_w9"], storage_dtype)
    scale2, bias2 = _bn_affine(s2, q2, p["bn2_gamma"], p["bn2_beta"], N * H2 * W2)

    # --- final BN2 affine + ReLU ---
    out = pl.pallas_call(
        bn_relu_kernel,
        out_shape=jax.ShapeDtypeStruct((N, H2, W2, OC), jnp.float32),
        grid=(N,),
        in_specs=[pl.BlockSpec((1, H2, W2, OC), lambda n: (n, 0, 0, 0)),
                  pl.BlockSpec((1, OC), lambda n: (0, 0)),
                  pl.BlockSpec((1, OC), lambda n: (0, 0))],
        out_specs=pl.BlockSpec((1, H2, W2, OC), lambda n: (n, 0, 0, 0)),
        compiler_params=pltpu.CompilerParams(dimension_semantics=("parallel",)),
    )(h2, scale2, bias2)
    return jnp.transpose(out, (0, 3, 1, 2))              # NHWC -> NCHW


up_forward_jit = jax.jit(up_forward, static_argnames=("storage_dtype",))


# ----------------------------- pure-JAX reference ----------------------------

def _ref_conv3x3(x_nhwc, w):
    w_hwio = jnp.transpose(w, (2, 3, 1, 0))
    return jax.lax.conv_general_dilated(
        x_nhwc, w_hwio, window_strides=(1, 1), padding="SAME",
        dimension_numbers=("NHWC", "HWIO", "NHWC"))


def _ref_bn_relu(y, gamma, beta, eps=1e-5):
    mean = jnp.mean(y, axis=(0, 1, 2))
    var = jnp.mean((y - mean) ** 2, axis=(0, 1, 2))
    return jnp.maximum((y - mean) / jnp.sqrt(var + eps) * gamma + beta, 0.0)


def ref_up_forward(image_nchw, residual_nchw, p):
    x = jnp.transpose(image_nchw, (0, 2, 3, 1))
    r = jnp.transpose(residual_nchw, (0, 2, 3, 1))
    N, H, W, Cin = x.shape
    Cu = p["up_w"].shape[1]
    y = jnp.einsum("nhwc,cuij->nhiwju", x, p["up_w"]).reshape(N, 2 * H, 2 * W, Cu)
    y = y + p["up_b"]
    combine = jnp.concatenate([y, r], axis=-1)
    h = _ref_bn_relu(_ref_conv3x3(combine, p["conv1_w"]), p["bn1_gamma"], p["bn1_beta"])
    h = _ref_bn_relu(_ref_conv3x3(h, p["conv2_w"]), p["bn2_gamma"], p["bn2_beta"])
    return jnp.transpose(h, (0, 3, 1, 2))


# ----------------------------- main -------------------------------------------

if __name__ == "__main__":
    in_channels, out_channels = 8, 4          # Up(in_channels=8, out_channels=4)
    N, Hs, Ws = 2, 8, 8                       # image spatial 8x8 -> upsampled 16x16
    Cu = in_channels // 2

    key = jax.random.PRNGKey(0)
    ks = jax.random.split(key, 10)
    params = {
        "up_w":     0.1 * jax.random.normal(ks[0], (in_channels, Cu, 2, 2), jnp.float32),
        "up_b":     0.1 * jax.random.normal(ks[1], (Cu,), jnp.float32),
        "conv1_w":  0.1 * jax.random.normal(ks[2], (out_channels, in_channels, 3, 3), jnp.float32),
        "bn1_gamma": 1.0 + 0.1 * jax.random.normal(ks[3], (out_channels,), jnp.float32),
        "bn1_beta":  0.1 * jax.random.normal(ks[4], (out_channels,), jnp.float32),
        "conv2_w":  0.1 * jax.random.normal(ks[5], (out_channels, out_channels, 3, 3), jnp.float32),
        "bn2_gamma": 1.0 + 0.1 * jax.random.normal(ks[6], (out_channels,), jnp.float32),
        "bn2_beta":  0.1 * jax.random.normal(ks[7], (out_channels,), jnp.float32),
    }
    prep = prepare_params(params)             # weight relayouts hoisted out of the hot path

    image = jax.random.normal(ks[8], (N, in_channels, Hs, Ws), jnp.float32)         # NCHW
    residual = jax.random.normal(ks[9], (N, Cu, 2 * Hs, 2 * Ws), jnp.float32)       # NCHW

    ref = jax.block_until_ready(ref_up_forward(image, residual, params))

    # f32 path: strict parity with the pure-JAX reference.
    out = jax.block_until_ready(up_forward_jit(image, residual, prep))
    assert out.shape == (N, out_channels, 2 * Hs, 2 * Ws), out.shape
    assert jnp.allclose(out, ref, atol=1e-4, rtol=1e-4), float(jnp.max(jnp.abs(out - ref)))

    # bf16 activation storage (halves h1/h2 HBM traffic); in-kernel math and BN stats stay f32.
    out_bf16 = jax.block_until_ready(
        up_forward_jit(image, residual, prep, storage_dtype=jnp.bfloat16))
    assert out_bf16.shape == out.shape
    assert bool(jnp.all(jnp.isfinite(out_bf16)))
    assert float(jnp.max(jnp.abs(out_bf16 - ref))) < 0.3

    print("KERNEL_OK")
</pallas_src>

<mosaic_0001>
module attributes {stable_mosaic.version = 11 : i64} {
  func.func @upsample_kernel(%arg0: i32, %arg1: memref<1x8x8x8xf32, #tpu.memory_space<vmem>>, %arg2: memref<8x16xf32, #tpu.memory_space<vmem>>, %arg3: memref<1x16xf32, #tpu.memory_space<vmem>>, %arg4: memref<1x8x2x8x8xf32, #tpu.memory_space<vmem>>) attributes {dimension_semantics = [#tpu.dimension_semantics<parallel>], iteration_bounds = array<i64: 2>, scalar_prefetch = 0 : i64, scratch_operands = 0 : i64, tpu.core_type = #tpu.core_type<tc>, window_params = [{transform_indices = @transform_0, window_bounds = array<i64: 1, 8, 8, 8>}, {pipeline_mode = #tpu.pipeline_mode<synchronous>, transform_indices = @transform_1, window_bounds = array<i64: 8, 16>}, {pipeline_mode = #tpu.pipeline_mode<synchronous>, transform_indices = @transform_2, window_bounds = array<i64: 1, 16>}, {transform_indices = @transform_3, window_bounds = array<i64: 1, 8, 2, 8, 8>}]} {
    %c0 = arith.constant 0 : index
    %c0_0 = arith.constant 0 : index
    %c0_1 = arith.constant 0 : index
    %c0_2 = arith.constant 0 : index
    %0 = vector.load %arg1[%c0, %c0_0, %c0_1, %c0_2] : memref<1x8x8x8xf32, #tpu.memory_space<vmem>>, vector<1x8x8x8xf32>
    %1 = vector.shape_cast %0 : vector<1x8x8x8xf32> to vector<8x8x8xf32>
    %2 = vector.shape_cast %1 : vector<8x8x8xf32> to vector<64x8xf32>
    %c0_3 = arith.constant 0 : index
    %c0_4 = arith.constant 0 : index
    %3 = vector.load %arg2[%c0_3, %c0_4] : memref<8x16xf32, #tpu.memory_space<vmem>>, vector<8x16xf32>
    %cst = arith.constant dense<0.000000e+00> : vector<64x16xf32>
    %4 = tpu.matmul %2, %3, %cst {dimension_numbers = #tpu.dot_dimension_numbers<[1], [0], [0], [1], [0, 0, 1, 1], [], []>} : vector<64x8xf32>, vector<8x16xf32>, vector<64x16xf32> -> vector<64x16xf32>
    %c0_5 = arith.constant 0 : index
    %c0_6 = arith.constant 0 : index
    %5 = vector.load %arg3[%c0_5, %c0_6] : memref<1x16xf32, #tpu.memory_space<vmem>>, vector<1x16xf32>
    %6 = vector.shape_cast %5 : vector<1x16xf32> to vector<16xf32>
    %7 = vector.shape_cast %6 : vector<16xf32> to vector<1x16xf32>
    %8 = vector.broadcast %7 : vector<1x16xf32> to vector<64x16xf32>
    %9 = arith.addf %4, %8 : vector<64x16xf32>
    %10 = vector.extract_strided_slice %9 {offsets = [0, 0], sizes = [64, 8], strides = [1, 1]} : vector<64x16xf32> to vector<64x8xf32>
    %11 = vector.shape_cast %10 : vector<64x8xf32> to vector<8x8x8xf32>
    %c0_7 = arith.constant 0 : index
    %c0_8 = arith.constant 0 : index
    %c0_9 = arith.constant 0 : index
    %c0_10 = arith.constant 0 : index
    %c0_11 = arith.constant 0 : index
    %12 = vector.load %arg4[%c0_7, %c0_8, %c0_9, %c0_10, %c0_11] : memref<1x8x2x8x8xf32, #tpu.memory_space<vmem>>, vector<1x8x1x8x8xf32>
    %13 = vector.shape_cast %12 : vector<1x8x1x8x8xf32> to vector<8x8x8xf32>
    %14 = vector.shape_cast %11 : vector<8x8x8xf32> to vector<1x8x1x8x8xf32>
    tpu.vector_store %arg4[%c0_7, %c0_8, %c0_9, %c0_10, %c0_11], %14 {strides = array<i32>} : memref<1x8x2x8x8xf32, #tpu.memory_space<vmem>>, vector<1x8x1x8x8xf32>,
    %15 = vector.extract_strided_slice %9 {offsets = [0, 8], sizes = [64, 8], strides = [1, 1]} : vector<64x16xf32> to vector<64x8xf32>
    %16 = vector.shape_cast %15 : vector<64x8xf32> to vector<8x8x8xf32>
    %c0_12 = arith.constant 0 : index
    %c0_13 = arith.constant 0 : index
    %c1 = arith.constant 1 : index
    %c0_14 = arith.constant 0 : index
    %c0_15 = arith.constant 0 : index
    %17 = vector.load %arg4[%c0_12, %c0_13, %c1, %c0_14, %c0_15] : memref<1x8x2x8x8xf32, #tpu.memory_space<vmem>>, vector<1x8x1x8x8xf32>
    %18 = vector.shape_cast %17 : vector<1x8x1x8x8xf32> to vector<8x8x8xf32>
    %19 = vector.shape_cast %16 : vector<8x8x8xf32> to vector<1x8x1x8x8xf32>
    tpu.vector_store %arg4[%c0_12, %c0_13, %c1, %c0_14, %c0_15], %19 {strides = array<i32>} : memref<1x8x2x8x8xf32, #tpu.memory_space<vmem>>, vector<1x8x1x8x8xf32>,
    return
  }
  func.func @transform_0(%arg0: i32) -> (i32, i32, i32, i32) {
    %c0_i32 = arith.constant 0 : i32
    %c0_i32_0 = arith.constant 0 : i32
    %c0_i32_1 = arith.constant 0 : i32
    %c0_i32_2 = arith.constant 0 : i32
    return %arg0, %c0_i32, %c0_i32_0, %c0_i32_1 : i32, i32, i32, i32
  }
  func.func @transform_1(%arg0: i32) -> (i32, i32) {
    %c0_i32 = arith.constant 0 : i32
    %c0_i32_0 = arith.constant 0 : i32
    %c0_i32_1 = arith.constant 0 : i32
    return %c0_i32, %c0_i32_0 : i32, i32
  }
  func.func @transform_2(%arg0: i32) -> (i32, i32) {
    %c0_i32 = arith.constant 0 : i32
    %c0_i32_0 = arith.constant 0 : i32
    %c0_i32_1 = arith.constant 0 : i32
    return %c0_i32, %c0_i32_0 : i32, i32
  }
  func.func @transform_3(%arg0: i32) -> (i32, i32, i32, i32, i32) {
    %c0_i32 = arith.constant 0 : i32
    %c0_i32_0 = arith.constant 0 : i32
    %c0_i32_1 = arith.constant 0 : i32
    %c0_i32_2 = arith.constant 0 : i32
    %c0_i32_3 = arith.constant 0 : i32
    return %arg0, %c0_i32, %c0_i32_0, %c0_i32_1, %c0_i32_2 : i32, i32, i32, i32, i32
  }
}

module attributes {stable_mosaic.version = 11 : i64} {
  func.func @concat_conv1_kernel(%arg0: i32, %arg1: memref<1x16x16x4xf32, #tpu.memory_space<vmem>>, %arg2: memref<1x16x16x4xf32, #tpu.memory_space<vmem>>, %arg3: memref<72x4xf32, #tpu.memory_space<vmem>>, %arg4: memref<1x16x16x4xf32, #tpu.memory_space<vmem>>, %arg5: memref<1x1x4xf32, #tpu.memory_space<vmem>>, %arg6: memref<1x1x4xf32, #tpu.memory_space<vmem>>, %arg7: memref<18x18x8xf32, #tpu.memory_space<vmem>>, %arg8: memref<256x72xf32, #tpu.memory_space<vmem>>) attributes {dimension_semantics = [#tpu.dimension_semantics<parallel>], iteration_bounds = array<i64: 2>, scalar_prefetch = 0 : i64, scratch_operands = 2 : i64, tpu.core_type = #tpu.core_type<tc>, window_params = [{transform_indices = @transform_0, window_bounds = array<i64: 1, 16, 16, 4>}, {transform_indices = @transform_1, window_bounds = array<i64: 1, 16, 16, 4>}, {pipeline_mode = #tpu.pipeline_mode<synchronous>, transform_indices = @transform_2, window_bounds = array<i64: 72, 4>}, {transform_indices = @transform_3, window_bounds = array<i64: 1, 16, 16, 4>}, {transform_indices = @transform_4, window_bounds = array<i64: 1, 1, 4>}, {transform_indices = @transform_5, window_bounds = array<i64: 1, 1, 4>}]} {
    %cst = arith.constant 0.000000e+00 : f32
    %0 = vector.broadcast %cst : f32 to vector<1x18x8xf32>
    %c0 = arith.constant 0 : index
    %c0_0 = arith.constant 0 : index
    %c0_1 = arith.constant 0 : index
    %1 = vector.load %arg7[%c0, %c0_0, %c0_1] : memref<18x18x8xf32, #tpu.memory_space<vmem>>, vector<1x18x8xf32>
    tpu.vector_store %arg7[%c0, %c0_0, %c0_1], %0 {strides = array<i32>} : memref<18x18x8xf32, #tpu.memory_space<vmem>>, vector<1x18x8xf32>,
    %cst_2 = arith.constant 0.000000e+00 : f32
    %2 = vector.broadcast %cst_2 : f32 to vector<1x18x8xf32>
    %c17 = arith.constant 17 : index
    %c0_3 = arith.constant 0 : index
    %c0_4 = arith.constant 0 : index
    %3 = vector.load %arg7[%c17, %c0_3, %c0_4] : memref<18x18x8xf32, #tpu.memory_space<vmem>>, vector<1x18x8xf32>
    tpu.vector_store %arg7[%c17, %c0_3, %c0_4], %2 {strides = array<i32>} : memref<18x18x8xf32, #tpu.memory_space<vmem>>, vector<1x18x8xf32>,
    %cst_5 = arith.constant 0.000000e+00 : f32
    %4 = vector.broadcast %cst_5 : f32 to vector<18x1x8xf32>
    %c0_6 = arith.constant 0 : index
    %c0_7 = arith.constant 0 : index
    %c0_8 = arith.constant 0 : index
    %5 = vector.load %arg7[%c0_6, %c0_7, %c0_8] : memref<18x18x8xf32, #tpu.memory_space<vmem>>, vector<18x1x8xf32>
    tpu.vector_store %arg7[%c0_6, %c0_7, %c0_8], %4 {strides = array<i32>} : memref<18x18x8xf32, #tpu.memory_space<vmem>>, vector<18x1x8xf32>,
    %cst_9 = arith.constant 0.000000e+00 : f32
    %6 = vector.broadcast %cst_9 : f32 to vector<18x1x8xf32>
    %c0_10 = arith.constant 0 : index
    %c17_11 = arith.constant 17 : index
    %c0_12 = arith.constant 0 : index
    %7 = vector.load %arg7[%c0_10, %c17_11, %c0_12] : memref<18x18x8xf32, #tpu.memory_space<vmem>>, vector<18x1x8xf32>
    tpu.vector_store %arg7[%c0_10, %c17_11, %c0_12], %6 {strides = array<i32>} : memref<18x18x8xf32, #tpu.memory_space<vmem>>, vector<18x1x8xf32>,
    %c0_13 = arith.constant 0 : index
    %c0_14 = arith.constant 0 : index
    %c0_15 = arith.constant 0 : index
    %c0_16 = arith.constant 0 : index
    %8 = vector.load %arg1[%c0_13, %c0_14, %c0_15, %c0_16] : memref<1x16x16x4xf32, #tpu.memory_space<vmem>>, vector<1x16x16x4xf32>
    %9 = vector.shape_cast %8 : vector<1x16x16x4xf32> to vector<16x16x4xf32>
    %c1 = arith.constant 1 : index
    %c1_17 = arith.constant 1 : index
    %c0_18 = arith.constant 0 : index
    %10 = vector.load %arg7[%c1, %c1_17, %c0_18] : memref<18x18x8xf32, #tpu.memory_space<vmem>>, vector<16x16x4xf32>
    tpu.vector_store %arg7[%c1, %c1_17, %c0_18], %9 {strides = array<i32>} : memref<18x18x8xf32, #tpu.memory_space<vmem>>, vector<16x16x4xf32>,
    %c0_19 = arith.constant 0 : index
    %c0_20 = arith.constant 0 : index
    %c0_21 = arith.constant 0 : index
    %c0_22 = arith.constant 0 : index
    %11 = vector.load %arg2[%c0_19, %c0_20, %c0_21, %c0_22] : memref<1x16x16x4xf32, #tpu.memory_space<vmem>>, vector<1x16x16x4xf32>
    %12 = vector.shape_cast %11 : vector<1x16x16x4xf32> to vector<16x16x4xf32>
    %c1_23 = arith.constant 1 : index
    %c1_24 = arith.constant 1 : index
    %c4 = arith.constant 4 : index
    %13 = vector.load %arg7[%c1_23, %c1_24, %c4] : memref<18x18x8xf32, #tpu.memory_space<vmem>>, vector<16x16x4xf32>
    tpu.vector_store %arg7[%c1_23, %c1_24, %c4], %12 {strides = array<i32>} : memref<18x18x8xf32, #tpu.memory_space<vmem>>, vector<16x16x4xf32>,
    %c0_25 = arith.constant 0 : index
    %c0_26 = arith.constant 0 : index
    %c0_27 = arith.constant 0 : index
    %14 = vector.load %arg7[%c0_25, %c0_26, %c0_27] : memref<18x18x8xf32, #tpu.memory_space<vmem>>, vector<16x16x8xf32>
    %15 = vector.shape_cast %14 : vector<16x16x8xf32> to vector<256x8xf32>
    %c0_28 = arith.constant 0 : index
    %c0_29 = arith.constant 0 : index
    %16 = vector.load %arg8[%c0_28, %c0_29] : memref<256x72xf32, #tpu.memory_space<vmem>>, vector<256x8xf32>
    tpu.vector_store %arg8[%c0_28, %c0_29], %15 {strides = array<i32>} : memref<256x72xf32, #tpu.memory_space<vmem>>, vector<256x8xf32>,
    %c0_30 = arith.constant 0 : index
    %c1_31 = arith.constant 1 : index
    %c0_32 = arith.constant 0 : index
    %17 = vector.load %arg7[%c0_30, %c1_31, %c0_32] : memref<18x18x8xf32, #tpu.memory_space<vmem>>, vector<16x16x8xf32>
    %18 = vector.shape_cast %17 : vector<16x16x8xf32> to vector<256x8xf32>
    %c0_33 = arith.constant 0 : index
    %c8 = arith.constant 8 : index
    %19 = vector.load %arg8[%c0_33, %c8] : memref<256x72xf32, #tpu.memory_space<vmem>>, vector<256x8xf32>
    tpu.vector_store %arg8[%c0_33, %c8], %18 {strides = array<i32>} : memref<256x72xf32, #tpu.memory_space<vmem>>, vector<256x8xf32>,
    %c0_34 = arith.constant 0 : index
    %c2 = arith.constant 2 : index
    %c0_35 = arith.constant 0 : index
    %20 = vector.load %arg7[%c0_34, %c2, %c0_35] : memref<18x18x8xf32, #tpu.memory_space<vmem>>, vector<16x16x8xf32>
    %21 = vector.shape_cast %20 : vector<16x16x8xf32> to vector<256x8xf32>
    %c0_36 = arith.constant 0 : index
    %c16 = arith.constant 16 : index
    %22 = vector.load %arg8[%c0_36, %c16] : memref<256x72xf32, #tpu.memory_space<vmem>>, vector<256x8xf32>
    tpu.vector_store %arg8[%c0_36, %c16], %21 {strides = array<i32>} : memref<256x72xf32, #tpu.memory_space<vmem>>, vector<256x8xf32>,
    %c1_37 = arith.constant 1 : index
    %c0_38 = arith.constant 0 : index
    %c0_39 = arith.constant 0 : index
    %23 = vector.load %arg7[%c1_37, %c0_38, %c0_39] : memref<18x18x8xf32, #tpu.memory_space<vmem>>, vector<16x16x8xf32>
    %24 = vector.shape_cast %23 : vector<16x16x8xf32> to vector<256x8xf32>
    %c0_40 = arith.constant 0 : index
    %c24 = arith.constant 24 : index
    %25 = vector.load %arg8[%c0_40, %c24] : memref<256x72xf32, #tpu.memory_space<vmem>>, vector<256x8xf32>
    tpu.vector_store %arg8[%c0_40, %c24], %24 {strides = array<i32>} : memref<256x72xf32, #tpu.memory_space<vmem>>, vector<256x8xf32>,
    %c1_41 = arith.constant 1 : index
    %c1_42 = arith.constant 1 : index
    %c0_43 = arith.constant 0 : index
    %26 = vector.load %arg7[%c1_41, %c1_42, %c0_43] : memref<18x18x8xf32, #tpu.memory_space<vmem>>, vector<16x16x8xf32>
    %27 = vector.shape_cast %26 : vector<16x16x8xf32> to vector<256x8xf32>
    %c0_44 = arith.constant 0 : index
    %c32 = arith.constant 32 : index
    %28 = vector.load %arg8[%c0_44, %c32] : memref<256x72xf32, #tpu.memory_space<vmem>>, vector<256x8xf32>
    tpu.vector_store %arg8[%c0_44, %c32], %27 {strides = array<i32>} : memref<256x72xf32, #tpu.memory_space<vmem>>, vector<256x8xf32>,
    %c1_45 = arith.constant 1 : index
    %c2_46 = arith.constant 2 : index
    %c0_47 = arith.constant 0 : index
    %29 = vector.load %arg7[%c1_45, %c2_46, %c0_47] : memref<18x18x8xf32, #tpu.memory_space<vmem>>, vector<16x16x8xf32>
    %30 = vector.shape_cast %29 : vector<16x16x8xf32> to vector<256x8xf32>
    %c0_48 = arith.constant 0 : index
    %c40 = arith.constant 40 : index
    %31 = vector.load %arg8[%c0_48, %c40] : memref<256x72xf32, #tpu.memory_space<vmem>>, vector<256x8xf32>
    tpu.vector_store %arg8[%c0_48, %c40], %30 {strides = array<i32>} : memref<256x72xf32, #tpu.memory_space<vmem>>, vector<256x8xf32>,
    %c2_49 = arith.constant 2 : index
    %c0_50 = arith.constant 0 : index
    %c0_51 = arith.constant 0 : index
    %32 = vector.load %arg7[%c2_49, %c0_50, %c0_51] : memref<18x18x8xf32, #tpu.memory_space<vmem>>, vector<16x16x8xf32>
    %33 = vector.shape_cast %32 : vector<16x16x8xf32> to vector<256x8xf32>
    %c0_52 = arith.constant 0 : index
    %c48 = arith.constant 48 : index
    %34 = vector.load %arg8[%c0_52, %c48] : memref<256x72xf32, #tpu.memory_space<vmem>>, vector<256x8xf32>
    tpu.vector_store %arg8[%c0_52, %c48], %33 {strides = array<i32>} : memref<256x72xf32, #tpu.memory_space<vmem>>, vector<256x8xf32>,
    %c2_53 = arith.constant 2 : index
    %c1_54 = arith.constant 1 : index
    %c0_55 = arith.constant 0 : index
    %35 = vector.load %arg7[%c2_53, %c1_54, %c0_55] : memref<18x18x8xf32, #tpu.memory_space<vmem>>, vector<16x16x8xf32>
    %36 = vector.shape_cast %35 : vector<16x16x8xf32> to vector<256x8xf32>
    %c0_56 = arith.constant 0 : index
    %c56 = arith.constant 56 : index
    %37 = vector.load %arg8[%c0_56, %c56] : memref<256x72xf32, #tpu.memory_space<vmem>>, vector<256x8xf32>
    tpu.vector_store %arg8[%c0_56, %c56], %36 {strides = array<i32>} : memref<256x72xf32, #tpu.memory_space<vmem>>, vector<256x8xf32>,
    %c2_57 = arith.constant 2 : index
    %c2_58 = arith.constant 2 : index
    %c0_59 = arith.constant 0 : index
    %38 = vector.load %arg7[%c2_57, %c2_58, %c0_59] : memref<18x18x8xf32, #tpu.memory_space<vmem>>, vector<16x16x8xf32>
    %39 = vector.shape_cast %38 : vector<16x16x8xf32> to vector<256x8xf32>
    %c0_60 = arith.constant 0 : index
    %c64 = arith.constant 64 : index
    %40 = vector.load %arg8[%c0_60, %c64] : memref<256x72xf32, #tpu.memory_space<vmem>>, vector<256x8xf32>
    tpu.vector_store %arg8[%c0_60, %c64], %39 {strides = array<i32>} : memref<256x72xf32, #tpu.memory_space<vmem>>, vector<256x8xf32>,
    %c0_61 = arith.constant 0 : index
    %c0_62 = arith.constant 0 : index
    %41 = vector.load %arg8[%c0_61, %c0_62] : memref<256x72xf32, #tpu.memory_space<vmem>>, vector<256x72xf32>
    %c0_63 = arith.constant 0 : index
    %c0_64 = arith.constant 0 : index
    %42 = vector.load %arg3[%c0_63, %c0_64] : memref<72x4xf32, #tpu.memory_space<vmem>>, vector<72x4xf32>
    %cst_65 = arith.constant dense<0.000000e+00> : vector<256x4xf32>
    %43 = tpu.matmul %41, %42, %cst_65 {dimension_numbers = #tpu.dot_dimension_numbers<[1], [0], [0], [1], [0, 0, 1, 1], [], []>} : vector<256x72xf32>, vector<72x4xf32>, vector<256x4xf32> -> vector<256x4xf32>
    %44 = vector.shape_cast %43 : vector<256x4xf32> to vector<16x16x4xf32>
    %c0_66 = arith.constant 0 : index
    %c0_67 = arith.constant 0 : index
    %c0_68 = arith.constant 0 : index
    %c0_69 = arith.constant 0 : index
    %45 = vector.load %arg4[%c0_66, %c0_67, %c0_68, %c0_69] : memref<1x16x16x4xf32, #tpu.memory_space<vmem>>, vector<1x16x16x4xf32>
    %46 = vector.shape_cast %45 : vector<1x16x16x4xf32> to vector<16x16x4xf32>
    %47 = vector.shape_cast %44 : vector<16x16x4xf32> to vector<1x16x16x4xf32>
    tpu.vector_store %arg4[%c0_66, %c0_67, %c0_68, %c0_69], %47 {strides = array<i32>} : memref<1x16x16x4xf32, #tpu.memory_space<vmem>>, vector<1x16x16x4xf32>,
    %cst_70 = arith.constant dense<0.000000e+00> : vector<4xf32>
    %48 = vector.multi_reduction <add>, %43, %cst_70 [0] : vector<256x4xf32> to vector<4xf32>
    %49 = vector.shape_cast %48 : vector<4xf32> to vector<1x4xf32>
    %c0_71 = arith.constant 0 : index
    %c0_72 = arith.constant 0 : index
    %c0_73 = arith.constant 0 : index
    %50 = vector.load %arg5[%c0_71, %c0_72, %c0_73] : memref<1x1x4xf32, #tpu.memory_space<vmem>>, vector<1x1x4xf32>
    %51 = vector.shape_cast %50 : vector<1x1x4xf32> to vector<1x4xf32>
    %52 = vector.shape_cast %49 : vector<1x4xf32> to vector<1x1x4xf32>
    tpu.vector_store %arg5[%c0_71, %c0_72, %c0_73], %52 {strides = array<i32>} : memref<1x1x4xf32, #tpu.memory_space<vmem>>, vector<1x1x4xf32>,
    %53 = arith.mulf %43, %43 : vector<256x4xf32>
    %cst_74 = arith.constant dense<0.000000e+00> : vector<4xf32>
    %54 = vector.multi_reduction <add>, %53, %cst_74 [0] : vector<256x4xf32> to vector<4xf32>
    %55 = vector.shape_cast %54 : vector<4xf32> to vector<1x4xf32>
    %c0_75 = arith.constant 0 : index
    %c0_76 = arith.constant 0 : index
    %c0_77 = arith.constant 0 : index
    %56 = vector.load %arg6[%c0_75, %c0_76, %c0_77] : memref<1x1x4xf32, #tpu.memory_space<vmem>>, vector<1x1x4xf32>
    %57 = vector.shape_cast %56 : vector<1x1x4xf32> to vector<1x4xf32>
    %58 = vector.shape_cast %55 : vector<1x4xf32> to vector<1x1x4xf32>
    tpu.vector_store %arg6[%c0_75, %c0_76, %c0_77], %58 {strides = array<i32>} : memref<1x1x4xf32, #tpu.memory_space<vmem>>, vector<1x1x4xf32>,
    return
  }
  func.func @transform_0(%arg0: i32) -> (i32, i32, i32, i32) {
    %c0_i32 = arith.constant 0 : i32
    %c0_i32_0 = arith.constant 0 : i32
    %c0_i32_1 = arith.constant 0 : i32
    %c0_i32_2 = arith.constant 0 : i32
    return %arg0, %c0_i32, %c0_i32_0, %c0_i32_1 : i32, i32, i32, i32
  }
  func.func @transform_1(%arg0: i32) -> (i32, i32, i32, i32) {
    %c0_i32 = arith.constant 0 : i32
    %c0_i32_0 = arith.constant 0 : i32
    %c0_i32_1 = arith.constant 0 : i32
    %c0_i32_2 = arith.constant 0 : i32
    return %arg0, %c0_i32, %c0_i32_0, %c0_i32_1 : i32, i32, i32, i32
  }
  func.func @transform_2(%arg0: i32) -> (i32, i32) {
    %c0_i32 = arith.constant 0 : i32
    %c0_i32_0 = arith.constant 0 : i32
    %c0_i32_1 = arith.constant 0 : i32
    return %c0_i32, %c0_i32_0 : i32, i32
  }
  func.func @transform_3(%arg0: i32) -> (i32, i32, i32, i32) {
    %c0_i32 = arith.constant 0 : i32
    %c0_i32_0 = arith.constant 0 : i32
    %c0_i32_1 = arith.constant 0 : i32
    %c0_i32_2 = arith.constant 0 : i32
    return %arg0, %c0_i32, %c0_i32_0, %c0_i32_1 : i32, i32, i32, i32
  }
  func.func @transform_4(%arg0: i32) -> (i32, i32, i32) {
    %c0_i32 = arith.constant 0 : i32
    %c0_i32_0 = arith.constant 0 : i32
    %c0_i32_1 = arith.constant 0 : i32
    return %arg0, %c0_i32, %c0_i32_0 : i32, i32, i32
  }
  func.func @transform_5(%arg0: i32) -> (i32, i32, i32) {
    %c0_i32 = arith.constant 0 : i32
    %c0_i32_0 = arith.constant 0 : i32
    %c0_i32_1 = arith.constant 0 : i32
    return %arg0, %c0_i32, %c0_i32_0 : i32, i32, i32
  }
}

module attributes {stable_mosaic.version = 11 : i64} {
  func.func @bn_relu_kernel(%arg0: i32, %arg1: memref<1x16x16x4xf32, #tpu.memory_space<vmem>>, %arg2: memref<1x4xf32, #tpu.memory_space<vmem>>, %arg3: memref<1x4xf32, #tpu.memory_space<vmem>>, %arg4: memref<1x16x16x4xf32, #tpu.memory_space<vmem>>) attributes {dimension_semantics = [#tpu.dimension_semantics<parallel>], iteration_bounds = array<i64: 2>, scalar_prefetch = 0 : i64, scratch_operands = 0 : i64, tpu.core_type = #tpu.core_type<tc>, window_params = [{transform_indices = @transform_0, window_bounds = array<i64: 1, 16, 16, 4>}, {pipeline_mode = #tpu.pipeline_mode<synchronous>, transform_indices = @transform_1, window_bounds = array<i64: 1, 4>}, {pipeline_mode = #tpu.pipeline_mode<synchronous>, transform_indices = @transform_2, window_bounds = array<i64: 1, 4>}, {transform_indices = @transform_3, window_bounds = array<i64: 1, 16, 16, 4>}]} {
    %c0 = arith.constant 0 : index
    %c0_0 = arith.constant 0 : index
    %c0_1 = arith.constant 0 : index
    %c0_2 = arith.constant 0 : index
    %0 = vector.load %arg1[%c0, %c0_0, %c0_1, %c0_2] : memref<1x16x16x4xf32, #tpu.memory_space<vmem>>, vector<1x16x16x4xf32>
    %c0_3 = arith.constant 0 : index
    %c0_4 = arith.constant 0 : index
    %1 = vector.load %arg2[%c0_3, %c0_4] : memref<1x4xf32, #tpu.memory_space<vmem>>, vector<1x4xf32>
    %2 = vector.shape_cast %1 : vector<1x4xf32> to vector<4xf32>
    %3 = vector.shape_cast %2 : vector<4xf32> to vector<1x1x1x4xf32>
    %4 = vector.broadcast %3 : vector<1x1x1x4xf32> to vector<1x16x16x4xf32>
    %5 = arith.mulf %0, %4 : vector<1x16x16x4xf32>
    %c0_5 = arith.constant 0 : index
    %c0_6 = arith.constant 0 : index
    %6 = vector.load %arg3[%c0_5, %c0_6] : memref<1x4xf32, #tpu.memory_space<vmem>>, vector<1x4xf32>
    %7 = vector.shape_cast %6 : vector<1x4xf32> to vector<4xf32>
    %8 = vector.shape_cast %7 : vector<4xf32> to vector<1x1x1x4xf32>
    %9 = vector.broadcast %8 : vector<1x1x1x4xf32> to vector<1x16x16x4xf32>
    %10 = arith.addf %5, %9 : vector<1x16x16x4xf32>
    %cst = arith.constant 0.000000e+00 : f32
    %11 = vector.broadcast %cst : f32 to vector<1x16x16x4xf32>
    %12 = arith.maximumf %10, %11 : vector<1x16x16x4xf32>
    %c0_7 = arith.constant 0 : index
    %c0_8 = arith.constant 0 : index
    %c0_9 = arith.constant 0 : index
    %c0_10 = arith.constant 0 : index
    %13 = vector.load %arg4[%c0_7, %c0_8, %c0_9, %c0_10] : memref<1x16x16x4xf32, #tpu.memory_space<vmem>>, vector<1x16x16x4xf32>
    tpu.vector_store %arg4[%c0_7, %c0_8, %c0_9, %c0_10], %12 {strides = array<i32>} : memref<1x16x16x4xf32, #tpu.memory_space<vmem>>, vector<1x16x16x4xf32>,
    return
  }
  func.func @transform_0(%arg0: i32) -> (i32, i32, i32, i32) {
    %c0_i32 = arith.constant 0 : i32
    %c0_i32_0 = arith.constant 0 : i32
    %c0_i32_1 = arith.constant 0 : i32
    %c0_i32_2 = arith.constant 0 : i32
    return %arg0, %c0_i32, %c0_i32_0, %c0_i32_1 : i32, i32, i32, i32
  }
  func.func @transform_1(%arg0: i32) -> (i32, i32) {
    %c0_i32 = arith.constant 0 : i32
    %c0_i32_0 = arith.constant 0 : i32
    %c0_i32_1 = arith.constant 0 : i32
    return %c0_i32, %c0_i32_0 : i32, i32
  }
  func.func @transform_2(%arg0: i32) -> (i32, i32) {
    %c0_i32 = arith.constant 0 : i32
    %c0_i32_0 = arith.constant 0 : i32
    %c0_i32_1 = arith.constant 0 : i32
    return %c0_i32, %c0_i32_0 : i32, i32
  }
  func.func @transform_3(%arg0: i32) -> (i32, i32, i32, i32) {
    %c0_i32 = arith.constant 0 : i32
    %c0_i32_0 = arith.constant 0 : i32
    %c0_i32_1 = arith.constant 0 : i32
    %c0_i32_2 = arith.constant 0 : i32
    return %arg0, %c0_i32, %c0_i32_0, %c0_i32_1 : i32, i32, i32, i32
  }
}

module attributes {stable_mosaic.version = 11 : i64} {
  func.func @bn_relu_conv2_kernel(%arg0: i32, %arg1: memref<1x16x16x4xf32, #tpu.memory_space<vmem>>, %arg2: memref<1x4xf32, #tpu.memory_space<vmem>>, %arg3: memref<1x4xf32, #tpu.memory_space<vmem>>, %arg4: memref<36x4xf32, #tpu.memory_space<vmem>>, %arg5: memref<1x16x16x4xf32, #tpu.memory_space<vmem>>, %arg6: memref<1x1x4xf32, #tpu.memory_space<vmem>>, %arg7: memref<1x1x4xf32, #tpu.memory_space<vmem>>, %arg8: memref<18x18x4xf32, #tpu.memory_space<vmem>>, %arg9: memref<256x36xf32, #tpu.memory_space<vmem>>) attributes {dimension_semantics = [#tpu.dimension_semantics<parallel>], iteration_bounds = array<i64: 2>, scalar_prefetch = 0 : i64, scratch_operands = 2 : i64, tpu.core_type = #tpu.core_type<tc>, window_params = [{transform_indices = @transform_0, window_bounds = array<i64: 1, 16, 16, 4>}, {pipeline_mode = #tpu.pipeline_mode<synchronous>, transform_indices = @transform_1, window_bounds = array<i64: 1, 4>}, {pipeline_mode = #tpu.pipeline_mode<synchronous>, transform_indices = @transform_2, window_bounds = array<i64: 1, 4>}, {pipeline_mode = #tpu.pipeline_mode<synchronous>, transform_indices = @transform_3, window_bounds = array<i64: 36, 4>}, {transform_indices = @transform_4, window_bounds = array<i64: 1, 16, 16, 4>}, {transform_indices = @transform_5, window_bounds = array<i64: 1, 1, 4>}, {transform_indices = @transform_6, window_bounds = array<i64: 1, 1, 4>}]} {
    %cst = arith.constant 0.000000e+00 : f32
    %0 = vector.broadcast %cst : f32 to vector<1x18x4xf32>
    %c0 = arith.constant 0 : index
    %c0_0 = arith.constant 0 : index
    %c0_1 = arith.constant 0 : index
    %1 = vector.load %arg8[%c0, %c0_0, %c0_1] : memref<18x18x4xf32, #tpu.memory_space<vmem>>, vector<1x18x4xf32>
    tpu.vector_store %arg8[%c0, %c0_0, %c0_1], %0 {strides = array<i32>} : memref<18x18x4xf32, #tpu.memory_space<vmem>>, vector<1x18x4xf32>,
    %cst_2 = arith.constant 0.000000e+00 : f32
    %2 = vector.broadcast %cst_2 : f32 to vector<1x18x4xf32>
    %c17 = arith.constant 17 : index
    %c0_3 = arith.constant 0 : index
    %c0_4 = arith.constant 0 : index
    %3 = vector.load %arg8[%c17, %c0_3, %c0_4] : memref<18x18x4xf32, #tpu.memory_space<vmem>>, vector<1x18x4xf32>
    tpu.vector_store %arg8[%c17, %c0_3, %c0_4], %2 {strides = array<i32>} : memref<18x18x4xf32, #tpu.memory_space<vmem>>, vector<1x18x4xf32>,
    %cst_5 = arith.constant 0.000000e+00 : f32
    %4 = vector.broadcast %cst_5 : f32 to vector<18x1x4xf32>
    %c0_6 = arith.constant 0 : index
    %c0_7 = arith.constant 0 : index
    %c0_8 = arith.constant 0 : index
    %5 = vector.load %arg8[%c0_6, %c0_7, %c0_8] : memref<18x18x4xf32, #tpu.memory_space<vmem>>, vector<18x1x4xf32>
    tpu.vector_store %arg8[%c0_6, %c0_7, %c0_8], %4 {strides = array<i32>} : memref<18x18x4xf32, #tpu.memory_space<vmem>>, vector<18x1x4xf32>,
    %cst_9 = arith.constant 0.000000e+00 : f32
    %6 = vector.broadcast %cst_9 : f32 to vector<18x1x4xf32>
    %c0_10 = arith.constant 0 : index
    %c17_11 = arith.constant 17 : index
    %c0_12 = arith.constant 0 : index
    %7 = vector.load %arg8[%c0_10, %c17_11, %c0_12] : memref<18x18x4xf32, #tpu.memory_space<vmem>>, vector<18x1x4xf32>
    tpu.vector_store %arg8[%c0_10, %c17_11, %c0_12], %6 {strides = array<i32>} : memref<18x18x4xf32, #tpu.memory_space<vmem>>, vector<18x1x4xf32>,
    %c0_13 = arith.constant 0 : index
    %c0_14 = arith.constant 0 : index
    %c0_15 = arith.constant 0 : index
    %c0_16 = arith.constant 0 : index
    %8 = vector.load %arg1[%c0_13, %c0_14, %c0_15, %c0_16] : memref<1x16x16x4xf32, #tpu.memory_space<vmem>>, vector<1x16x16x4xf32>
    %9 = vector.shape_cast %8 : vector<1x16x16x4xf32> to vector<16x16x4xf32>
    %c0_17 = arith.constant 0 : index
    %c0_18 = arith.constant 0 : index
    %10 = vector.load %arg2[%c0_17, %c0_18] : memref<1x4xf32, #tpu.memory_space<vmem>>, vector<1x4xf32>
    %11 = vector.shape_cast %10 : vector<1x4xf32> to vector<4xf32>
    %12 = vector.shape_cast %11 : vector<4xf32> to vector<1x1x4xf32>
    %13 = vector.broadcast %12 : vector<1x1x4xf32> to vector<16x16x4xf32>
    %14 = arith.mulf %9, %13 : vector<16x16x4xf32>
    %c0_19 = arith.constant 0 : index
    %c0_20 = arith.constant 0 : index
    %15 = vector.load %arg3[%c0_19, %c0_20] : memref<1x4xf32, #tpu.memory_space<vmem>>, vector<1x4xf32>
    %16 = vector.shape_cast %15 : vector<1x4xf32> to vector<4xf32>
    %17 = vector.shape_cast %16 : vector<4xf32> to vector<1x1x4xf32>
    %18 = vector.broadcast %17 : vector<1x1x4xf32> to vector<16x16x4xf32>
    %19 = arith.addf %14, %18 : vector<16x16x4xf32>
    %cst_21 = arith.constant 0.000000e+00 : f32
    %20 = vector.broadcast %cst_21 : f32 to vector<16x16x4xf32>
    %21 = arith.maximumf %19, %20 : vector<16x16x4xf32>
    %c1 = arith.constant 1 : index
    %c1_22 = arith.constant 1 : index
    %c0_23 = arith.constant 0 : index
    %22 = vector.load %arg8[%c1, %c1_22, %c0_23] : memref<18x18x4xf32, #tpu.memory_space<vmem>>, vector<16x16x4xf32>
    tpu.vector_store %arg8[%c1, %c1_22, %c0_23], %21 {strides = array<i32>} : memref<18x18x4xf32, #tpu.memory_space<vmem>>, vector<16x16x4xf32>,
    %c0_24 = arith.constant 0 : index
    %c0_25 = arith.constant 0 : index
    %c0_26 = arith.constant 0 : index
    %23 = vector.load %arg8[%c0_24, %c0_25, %c0_26] : memref<18x18x4xf32, #tpu.memory_space<vmem>>, vector<16x16x4xf32>
    %24 = vector.shape_cast %23 : vector<16x16x4xf32> to vector<256x4xf32>
    %c0_27 = arith.constant 0 : index
    %c0_28 = arith.constant 0 : index
    %25 = vector.load %arg9[%c0_27, %c0_28] : memref<256x36xf32, #tpu.memory_space<vmem>>, vector<256x4xf32>
    tpu.vector_store %arg9[%c0_27, %c0_28], %24 {strides = array<i32>} : memref<256x36xf32, #tpu.memory_space<vmem>>, vector<256x4xf32>,
    %c0_29 = arith.constant 0 : index
    %c1_30 = arith.constant 1 : index
    %c0_31 = arith.constant 0 : index
    %26 = vector.load %arg8[%c0_29, %c1_30, %c0_31] : memref<18x18x4xf32, #tpu.memory_space<vmem>>, vector<16x16x4xf32>
    %27 = vector.shape_cast %26 : vector<16x16x4xf32> to vector<256x4xf32>
    %c0_32 = arith.constant 0 : index
    %c4 = arith.constant 4 : index
    %28 = vector.load %arg9[%c0_32, %c4] : memref<256x36xf32, #tpu.memory_space<vmem>>, vector<256x4xf32>
    tpu.vector_store %arg9[%c0_32, %c4], %27 {strides = array<i32>} : memref<256x36xf32, #tpu.memory_space<vmem>>, vector<256x4xf32>,
    %c0_33 = arith.constant 0 : index
    %c2 = arith.constant 2 : index
    %c0_34 = arith.constant 0 : index
    %29 = vector.load %arg8[%c0_33, %c2, %c0_34] : memref<18x18x4xf32, #tpu.memory_space<vmem>>, vector<16x16x4xf32>
    %30 = vector.shape_cast %29 : vector<16x16x4xf32> to vector<256x4xf32>
    %c0_35 = arith.constant 0 : index
    %c8 = arith.constant 8 : index
    %31 = vector.load %arg9[%c0_35, %c8] : memref<256x36xf32, #tpu.memory_space<vmem>>, vector<256x4xf32>
    tpu.vector_store %arg9[%c0_35, %c8], %30 {strides = array<i32>} : memref<256x36xf32, #tpu.memory_space<vmem>>, vector<256x4xf32>,
    %c1_36 = arith.constant 1 : index
    %c0_37 = arith.constant 0 : index
    %c0_38 = arith.constant 0 : index
    %32 = vector.load %arg8[%c1_36, %c0_37, %c0_38] : memref<18x18x4xf32, #tpu.memory_space<vmem>>, vector<16x16x4xf32>
    %33 = vector.shape_cast %32 : vector<16x16x4xf32> to vector<256x4xf32>
    %c0_39 = arith.constant 0 : index
    %c12 = arith.constant 12 : index
    %34 = vector.load %arg9[%c0_39, %c12] : memref<256x36xf32, #tpu.memory_space<vmem>>, vector<256x4xf32>
    tpu.vector_store %arg9[%c0_39, %c12], %33 {strides = array<i32>} : memref<256x36xf32, #tpu.memory_space<vmem>>, vector<256x4xf32>,
    %c1_40 = arith.constant 1 : index
    %c1_41 = arith.constant 1 : index
    %c0_42 = arith.constant 0 : index
    %35 = vector.load %arg8[%c1_40, %c1_41, %c0_42] : memref<18x18x4xf32, #tpu.memory_space<vmem>>, vector<16x16x4xf32>
    %36 = vector.shape_cast %35 : vector<16x16x4xf32> to vector<256x4xf32>
    %c0_43 = arith.constant 0 : index
    %c16 = arith.constant 16 : index
    %37 = vector.load %arg9[%c0_43, %c16] : memref<256x36xf32, #tpu.memory_space<vmem>>, vector<256x4xf32>
    tpu.vector_store %arg9[%c0_43, %c16], %36 {strides = array<i32>} : memref<256x36xf32, #tpu.memory_space<vmem>>, vector<256x4xf32>,
    %c1_44 = arith.constant 1 : index
    %c2_45 = arith.constant 2 : index
    %c0_46 = arith.constant 0 : index
    %38 = vector.load %arg8[%c1_44, %c2_45, %c0_46] : memref<18x18x4xf32, #tpu.memory_space<vmem>>, vector<16x16x4xf32>
    %39 = vector.shape_cast %38 : vector<16x16x4xf32> to vector<256x4xf32>
    %c0_47 = arith.constant 0 : index
    %c20 = arith.constant 20 : index
    %40 = vector.load %arg9[%c0_47, %c20] : memref<256x36xf32, #tpu.memory_space<vmem>>, vector<256x4xf32>
    tpu.vector_store %arg9[%c0_47, %c20], %39 {strides = array<i32>} : memref<256x36xf32, #tpu.memory_space<vmem>>, vector<256x4xf32>,
    %c2_48 = arith.constant 2 : index
    %c0_49 = arith.constant 0 : index
    %c0_50 = arith.constant 0 : index
    %41 = vector.load %arg8[%c2_48, %c0_49, %c0_50] : memref<18x18x4xf32, #tpu.memory_space<vmem>>, vector<16x16x4xf32>
    %42 = vector.shape_cast %41 : vector<16x16x4xf32> to vector<256x4xf32>
    %c0_51 = arith.constant 0 : index
    %c24 = arith.constant 24 : index
    %43 = vector.load %arg9[%c0_51, %c24] : memref<256x36xf32, #tpu.memory_space<vmem>>, vector<256x4xf32>
    tpu.vector_store %arg9[%c0_51, %c24], %42 {strides = array<i32>} : memref<256x36xf32, #tpu.memory_space<vmem>>, vector<256x4xf32>,
    %c2_52 = arith.constant 2 : index
    %c1_53 = arith.constant 1 : index
    %c0_54 = arith.constant 0 : index
    %44 = vector.load %arg8[%c2_52, %c1_53, %c0_54] : memref<18x18x4xf32, #tpu.memory_space<vmem>>, vector<16x16x4xf32>
    %45 = vector.shape_cast %44 : vector<16x16x4xf32> to vector<256x4xf32>
    %c0_55 = arith.constant 0 : index
    %c28 = arith.constant 28 : index
    %46 = vector.load %arg9[%c0_55, %c28] : memref<256x36xf32, #tpu.memory_space<vmem>>, vector<256x4xf32>
    tpu.vector_store %arg9[%c0_55, %c28], %45 {strides = array<i32>} : memref<256x36xf32, #tpu.memory_space<vmem>>, vector<256x4xf32>,
    %c2_56 = arith.constant 2 : index
    %c2_57 = arith.constant 2 : index
    %c0_58 = arith.constant 0 : index
    %47 = vector.load %arg8[%c2_56, %c2_57, %c0_58] : memref<18x18x4xf32, #tpu.memory_space<vmem>>, vector<16x16x4xf32>
    %48 = vector.shape_cast %47 : vector<16x16x4xf32> to vector<256x4xf32>
    %c0_59 = arith.constant 0 : index
    %c32 = arith.constant 32 : index
    %49 = vector.load %arg9[%c0_59, %c32] : memref<256x36xf32, #tpu.memory_space<vmem>>, vector<256x4xf32>
    tpu.vector_store %arg9[%c0_59, %c32], %48 {strides = array<i32>} : memref<256x36xf32, #tpu.memory_space<vmem>>, vector<256x4xf32>,
    %c0_60 = arith.constant 0 : index
    %c0_61 = arith.constant 0 : index
    %50 = vector.load %arg9[%c0_60, %c0_61] : memref<256x36xf32, #tpu.memory_space<vmem>>, vector<256x36xf32>
    %c0_62 = arith.constant 0 : index
    %c0_63 = arith.constant 0 : index
    %51 = vector.load %arg4[%c0_62, %c0_63] : memref<36x4xf32, #tpu.memory_space<vmem>>, vector<36x4xf32>
    %cst_64 = arith.constant dense<0.000000e+00> : vector<256x4xf32>
    %52 = tpu.matmul %50, %51, %cst_64 {dimension_numbers = #tpu.dot_dimension_numbers<[1], [0], [0], [1], [0, 0, 1, 1], [], []>} : vector<256x36xf32>, vector<36x4xf32>, vector<256x4xf32> -> vector<256x4xf32>
    %53 = vector.shape_cast %52 : vector<256x4xf32> to vector<16x16x4xf32>
    %c0_65 = arith.constant 0 : index
    %c0_66 = arith.constant 0 : index
    %c0_67 = arith.constant 0 : index
    %c0_68 = arith.constant 0 : index
    %54 = vector.load %arg5[%c0_65, %c0_66, %c0_67, %c0_68] : memref<1x16x16x4xf32, #tpu.memory_space<vmem>>, vector<1x16x16x4xf32>
    %55 = vector.shape_cast %54 : vector<1x16x16x4xf32> to vector<16x16x4xf32>
    %56 = vector.shape_cast %53 : vector<16x16x4xf32> to vector<1x16x16x4xf32>
    tpu.vector_store %arg5[%c0_65, %c0_66, %c0_67, %c0_68], %56 {strides = array<i32>} : memref<1x16x16x4xf32, #tpu.memory_space<vmem>>, vector<1x16x16x4xf32>,
    %cst_69 = arith.constant dense<0.000000e+00> : vector<4xf32>
    %57 = vector.multi_reduction <add>, %52, %cst_69 [0] : vector<256x4xf32> to vector<4xf32>
    %58 = vector.shape_cast %57 : vector<4xf32> to vector<1x4xf32>
    %c0_70 = arith.constant 0 : index
    %c0_71 = arith.constant 0 : index
    %c0_72 = arith.constant 0 : index
    %59 = vector.load %arg6[%c0_70, %c0_71, %c0_72] : memref<1x1x4xf32, #tpu.memory_space<vmem>>, vector<1x1x4xf32>
    %60 = vector.shape_cast %59 : vector<1x1x4xf32> to vector<1x4xf32>
    %61 = vector.shape_cast %58 : vector<1x4xf32> to vector<1x1x4xf32>
    tpu.vector_store %arg6[%c0_70, %c0_71, %c0_72], %61 {strides = array<i32>} : memref<1x1x4xf32, #tpu.memory_space<vmem>>, vector<1x1x4xf32>,
    %62 = arith.mulf %52, %52 : vector<256x4xf32>
    %cst_73 = arith.constant dense<0.000000e+00> : vector<4xf32>
    %63 = vector.multi_reduction <add>, %62, %cst_73 [0] : vector<256x4xf32> to vector<4xf32>
    %64 = vector.shape_cast %63 : vector<4xf32> to vector<1x4xf32>
    %c0_74 = arith.constant 0 : index
    %c0_75 = arith.constant 0 : index
    %c0_76 = arith.constant 0 : index
    %65 = vector.load %arg7[%c0_74, %c0_75, %c0_76] : memref<1x1x4xf32, #tpu.memory_space<vmem>>, vector<1x1x4xf32>
    %66 = vector.shape_cast %65 : vector<1x1x4xf32> to vector<1x4xf32>
    %67 = vector.shape_cast %64 : vector<1x4xf32> to vector<1x1x4xf32>
    tpu.vector_store %arg7[%c0_74, %c0_75, %c0_76], %67 {strides = array<i32>} : memref<1x1x4xf32, #tpu.memory_space<vmem>>, vector<1x1x4xf32>,
    return
  }
  func.func @transform_0(%arg0: i32) -> (i32, i32, i32, i32) {
    %c0_i32 = arith.constant 0 : i32
    %c0_i32_0 = arith.constant 0 : i32
    %c0_i32_1 = arith.constant 0 : i32
    %c0_i32_2 = arith.constant 0 : i32
    return %arg0, %c0_i32, %c0_i32_0, %c0_i32_1 : i32, i32, i32, i32
  }
  func.func @transform_1(%arg0: i32) -> (i32, i32) {
    %c0_i32 = arith.constant 0 : i32
    %c0_i32_0 = arith.constant 0 : i32
    %c0_i32_1 = arith.constant 0 : i32
    return %c0_i32, %c0_i32_0 : i32, i32
  }
  func.func @transform_2(%arg0: i32) -> (i32, i32) {
    %c0_i32 = arith.constant 0 : i32
    %c0_i32_0 = arith.constant 0 : i32
    %c0_i32_1 = arith.constant 0 : i32
    return %c0_i32, %c0_i32_0 : i32, i32
  }
  func.func @transform_3(%arg0: i32) -> (i32, i32) {
    %c0_i32 = arith.constant 0 : i32
    %c0_i32_0 = arith.constant 0 : i32
    %c0_i32_1 = arith.constant 0 : i32
    return %c0_i32, %c0_i32_0 : i32, i32
  }
  func.func @transform_4(%arg0: i32) -> (i32, i32, i32, i32) {
    %c0_i32 = arith.constant 0 : i32
    %c0_i32_0 = arith.constant 0 : i32
    %c0_i32_1 = arith.constant 0 : i32
    %c0_i32_2 = arith.constant 0 : i32
    return %arg0, %c0_i32, %c0_i32_0, %c0_i32_1 : i32, i32, i32, i32
  }
  func.func @transform_5(%arg0: i32) -> (i32, i32, i32) {
    %c0_i32 = arith.constant 0 : i32
    %c0_i32_0 = arith.constant 0 : i32
    %c0_i32_1 = arith.constant 0 : i32
    return %arg0, %c0_i32, %c0_i32_0 : i32, i32, i32
  }
  func.func @transform_6(%arg0: i32) -> (i32, i32, i32) {
    %c0_i32 = arith.constant 0 : i32
    %c0_i32_0 = arith.constant 0 : i32
    %c0_i32_1 = arith.constant 0 : i32
    return %arg0, %c0_i32, %c0_i32_0 : i32, i32, i32
  }
}

</mosaic_0001>

<llo_original>
// kernel: up_forward.4
$region0: #{up_forward.4}
  #allocation0 [shape = 'u32[]', space=smem, size = 0x4, offset = 0x4, fixed_abs, tag = 'smem constant byte address 0x4 - core index']
  #allocation1 [shape = 'u32[144,128]{1,0:T(1,128)}', space=vmem, size = 0x12000, scoped, tag = 'internal scratch']
  %s0 = inlined_call_operand.vmem [shape: f32[2,8,8,8], index: 0, kind: input, shape index: {}]
  %s1 = inlined_call_operand.vmem [shape: f32[8,16], index: 1, kind: input, shape index: {}]
  %s2 = inlined_call_operand.vmem [shape: f32[1,16], index: 2, kind: input, shape index: {}]
  %s3 = inlined_call_operand.vmem [shape: f32[2,8,2,8,8], index: 3, kind: output, shape index: {}]
  %s4 = sld [smem:[#allocation0]]
  $region45: #{up_forward.4} parent=0
    _
  %s6 = ssub.s32 1, %s4
  %s7 = scalar_select 0, %s6, %s4
  loop: start=0, step=1, limit=4
  $region2: #{up_forward.4} parent=0 // loop_pre_header
    _
  $region3: #{up_forward.4} parent=0 // loop_header
    %s9 = sphi 0, %s13
    %p10 = scmp.ge.s32.totalorder %s9, 4
    %s19 = sphi 0, %s21
    %s22 = sphi 0, %s19
    %s23 = sphi 0, %s22
    %s39 = sphi 0, %s23
    %s43 = sphi 0, %s43
    %s45 = sphi 0, %s43
    %s46 = sphi 0, %s45
    %s60 = sphi 0, %s46
    %s64 = sphi 0, %s64
    %s66 = sphi 0, %s64
    %s67 = sphi 0, %s66
    %s81 = sphi 0, %s67
    %s87 = sphi 0, %s89
    %s90 = sphi 0, %s87
    %s91 = sphi 0, %s90
    %s107 = sphi 0, %s91
  $region4: #{up_forward.4} parent=0 // loop_header_branch
    %12 = sbr.rel (%p10) target = $region8
  $region5: #{up_forward.4} parent=0 // loop_body
    %s14 = ssub.s32 %s9, 1
    %s15 = ssub.s32 %s9, 2
    %s16 = sadd.s32 %s9, 1
    %s17 = ssub.s32 %s9, %s16
    %p18 = scmp.eq.s32.totalorder %s17, 0
    %s20 = sadd.s32 %s19, 1
    %s21 = scalar_select %p18, %s19, %s20
    %p24 = pneg %p18
    %p25 = scmp.eq.s32.totalorder %s9, 1
    %p26 = por %p24, %p25
    %p27 = scmp.ne.s32.totalorder %s19, %s22
    %p28 = scmp.eq.s32.totalorder %s9, 0
    %p29 = por %p27, %p28
    %p30 = scmp.ne.s32.totalorder %s19, %s22
    %p31 = scmp.eq.s32.totalorder %s14, 1
    %p32 = por %p30, %p31
    %p33 = scmp.ne.s32.totalorder %s22, %s23
    %p34 = scmp.eq.s32.totalorder %s14, 0
    %p35 = por %p33, %p34
    %p36 = scmp.ne.s32.totalorder %s22, %s23
    %p37 = scmp.eq.s32.totalorder %s15, 1
    %p38 = por %p36, %p37
    %p40 = scmp.ne.s32.totalorder %s23, %s39
    %p41 = scmp.eq.s32.totalorder %s15, 0
    %p42 = por %p40, %p41
    %s44 = sadd.s32 %s43, 1
    %p47 = scmp.eq.s32.totalorder %s9, 1
    %p48 = scmp.ne.s32.totalorder %s43, %s45
    %p49 = scmp.eq.s32.totalorder %s9, 0
    %p50 = por %p48, %p49
    %p51 = scmp.ne.s32.totalorder %s43, %s45
    %p52 = scmp.eq.s32.totalorder %s14, 1
    %p53 = por %p51, %p52
    %p54 = scmp.ne.s32.totalorder %s45, %s46
    %p55 = scmp.eq.s32.totalorder %s14, 0
    %p56 = por %p54, %p55
    %p57 = scmp.ne.s32.totalorder %s45, %s46
    %p58 = scmp.eq.s32.totalorder %s15, 1
    %p59 = por %p57, %p58
    %p61 = scmp.ne.s32.totalorder %s46, %s60
    %p62 = scmp.eq.s32.totalorder %s15, 0
    %p63 = por %p61, %p62
    %s65 = sadd.s32 %s64, 1
    %p68 = scmp.eq.s32.totalorder %s9, 1
    %p69 = scmp.ne.s32.totalorder %s64, %s66
    %p70 = scmp.eq.s32.totalorder %s9, 0
    %p71 = por %p69, %p70
    %p72 = scmp.ne.s32.totalorder %s64, %s66
    %p73 = scmp.eq.s32.totalorder %s14, 1
    %p74 = por %p72, %p73
    %p75 = scmp.ne.s32.totalorder %s66, %s67
    %p76 = scmp.eq.s32.totalorder %s14, 0
    %p77 = por %p75, %p76
    %p78 = scmp.ne.s32.totalorder %s66, %s67
    %p79 = scmp.eq.s32.totalorder %s15, 1
    %p80 = por %p78, %p79
    %p82 = scmp.ne.s32.totalorder %s67, %s81
    %p83 = scmp.eq.s32.totalorder %s15, 0
    %p84 = por %p82, %p83
    %s85 = ssub.s32 %s9, %s16
    %p86 = scmp.eq.s32.totalorder %s85, 0
    %s88 = sadd.s32 %s87, 1
    %s89 = scalar_select %p86, %s87, %s88
    %p92 = pneg %p86
    %p93 = scmp.eq.s32.totalorder %s9, 1
    %p94 = por %p92, %p93
    %p95 = scmp.ne.s32.totalorder %s87, %s90
    %p96 = scmp.eq.s32.totalorder %s9, 0
    %p97 = por %p95, %p96
    %p98 = scmp.ne.s32.totalorder %s87, %s90
    %p99 = scmp.eq.s32.totalorder %s14, 1
    %p100 = por %p98, %p99
    %p101 = scmp.ne.s32.totalorder %s90, %s91
    %p102 = scmp.eq.s32.totalorder %s14, 0
    %p103 = por %p101, %p102
    %p104 = scmp.ne.s32.totalorder %s90, %s91
    %p105 = scmp.eq.s32.totalorder %s15, 1
    %p106 = por %p104, %p105
    %p108 = scmp.ne.s32.totalorder %s91, %s107
    %p109 = scmp.eq.s32.totalorder %s15, 0
    %p110 = por %p108, %p109
    %p111 = scmp.le.s32.totalorder 1, %s9
    %p112 = scmp.lt.s32.totalorder %s9, 3
    %p113 = pnand %p111, %p112
    %p114 = pneg %p113
    // Predicated region
    $region9: #{up_forward.4} parent=5 // pred_check
      _
    $region10: #{up_forward.4} parent=5 // pred_check_branch
      %116 = sbr.rel (%p113) target = $region12
    $region11: #{up_forward.4} parent=5 // pred_region
      %s117 = ssub.s32 %s9, 1
      // Predicated region
      $region13: #{up_forward.4} parent=11 // pred_check
        %p118 = pneg %p56
      $region14: #{up_forward.4} parent=11 // pred_check_branch
        %120 = sbr.rel (%p118) target = $region16
      $region15: #{up_forward.4} parent=11 // pred_region
        _
      $region16: #{up_forward.4} parent=11 // pred_fallthru
        _
      // Predicated region
      $region17: #{up_forward.4} parent=11 // pred_check
        %p121 = pneg %p77
      $region18: #{up_forward.4} parent=11 // pred_check_branch
        %123 = sbr.rel (%p121) target = $region20
      $region19: #{up_forward.4} parent=11 // pred_region
        _
      $region20: #{up_forward.4} parent=11 // pred_fallthru
        _
    $region12: #{up_forward.4} parent=5 // pred_fallthru
      _
    %p124 = scmp.lt.s32.totalorder %s9, 2
    // Predicated region
    $region21: #{up_forward.4} parent=5 // pred_check
      %p125 = pneg %p124
    $region22: #{up_forward.4} parent=5 // pred_check_branch
      %127 = sbr.rel (%p125) target = $region24
    $region23: #{up_forward.4} parent=5 // pred_region
      // Predicated region
      $region25: #{up_forward.4} parent=23 // pred_check
        %p128 = pneg %p29
      $region26: #{up_forward.4} parent=23 // pred_check_branch
        %130 = sbr.rel (%p128) target = $region28
      $region27: #{up_forward.4} parent=23 // pred_region
        %p131 = scmp.lt.s32.totalorder %s9, 1
        %s132 = scalar_select %p131, %s9, 1
        %s133 = smul.addr %s132, 8
        %s134 = smul.addr %s133, 8
        %s135 = scalar_lea.vmem %s0, %s134
      $region28: #{up_forward.4} parent=23 // pred_fallthru
        _
    $region24: #{up_forward.4} parent=5 // pred_fallthru
      _
    %p136 = scmp.le.s32.totalorder 1, %s9
    %p137 = scmp.lt.s32.totalorder %s9, 3
    %p138 = pnand %p136, %p137
    %p139 = pneg %p138
    // Predicated region
    $region29: #{up_forward.4} parent=5 // pred_check
      _
    $region30: #{up_forward.4} parent=5 // pred_check_branch
      %141 = sbr.rel (%p138) target = $region32
    $region31: #{up_forward.4} parent=5 // pred_region
      %s142 = ssub.s32 %s9, 1
      %p143 = scmp.lt.s32.totalorder %s14, 1
      %s144 = scalar_select %p143, %s14, 1
      %s145 = smul.addr %s144, 8
      %s146 = smul.addr %s145, 8
      %s147 = scalar_lea.vmem %s0, %s146
      %p148 = pneg %p35
      %p149 = pneg %p32
      %p150 = pneg %p56
      %p151 = pneg %p53
      %p152 = pneg %p77
      %p153 = pneg %p74
      %p154 = pneg %p103
      %p155 = pneg %p100
      %p156 = scmp.lt.s32.totalorder %s14, 1
      %s157 = scalar_select %p156, %s14, 1
      %s158 = smul.addr %s157, 16
      %s159 = smul.addr %s158, 8
      %s160 = scalar_lea.vmem %s3, %s159
      %p161 = scmp.lt.s32.totalorder %s14, 1
      %s162 = scalar_select %p161, %s14, 1
      %s163 = smul.addr %s162, 8
      %s164 = smul.addr %s163, 8
      %s165 = scalar_lea.vmem %s0, %s164
      %p166 = scmp.lt.s32.totalorder %s14, 1
      %s167 = scalar_select %p166, %s14, 1
      %s168 = smul.addr %s167, 16
      %s169 = smul.addr %s168, 8
      %s170 = scalar_lea.vmem %s3, %s169
      %v171 = vld [vmem:[%s165] sm:$0xff]
      %v172 = vld [vmem:[%s165 + $0x8] sm:$0xff]
      %v173 = vld [vmem:[%s165 + $0x10] sm:$0xff]
      %v174 = vld [vmem:[%s165 + $0x18] sm:$0xff]
      %v175 = vld [vmem:[%s165 + $0x20] sm:$0xff]
      %v176 = vld [vmem:[%s165 + $0x28] sm:$0xff]
      %v177 = vld [vmem:[%s165 + $0x30] sm:$0xff]
      %v178 = vld [vmem:[%s165 + $0x38] sm:$0xff]
      %v179 = vld [vmem:[%s1] sm:$0xff]
      %v180 = vld [vmem:[%s2] sm:$0x1]
      %v182 = vlaneseq
      %v183 = vshrl.u32 %v182, 7
      %v184 = vsub.s32 0, %v183
      %v185 = vrot.slane %v180, %v184
      %vm187 = vcmask 64512
      %v189 = vsel %vm187, %v171, 0
      %v192 = vsel %vm187, %v172, 0
      %v195 = vsel %vm187, %v173, 0
      %v198 = vsel %vm187, %v174, 0
      %v201 = vsel %vm187, %v175, 0
      %v204 = vsel %vm187, %v176, 0
      %v207 = vsel %vm187, %v177, 0
      %v210 = vsel %vm187, %v178, 0
      %212 = vmatprep.subr.mxu0 0.0
      %213 = vmatpush1.msra.mxu0 0.0
      %214 = vmatprep.subr.mxu0 0.0
      %215 = vmatpush1.msra.mxu0 0.0
      %216 = vmatprep.subr.mxu0 0.0
      %217 = vmatpush1.msra.mxu0 0.0
      %218 = vmatprep.subr.mxu0 0.0
      %219 = vmatpush1.msra.mxu0 0.0
      %220 = vmatprep.subr.mxu0 0.0
      %221 = vmatpush1.msra.mxu0 0.0
      %222 = vmatprep.subr.mxu0 0.0
      %223 = vmatpush1.msra.mxu0 0.0
      %224 = vmatprep.subr.mxu0 0.0
      %225 = vmatpush1.msra.mxu0 0.0
      %226 = vmatprep.subr.mxu0 0.0
      %227 = vmatpush1.msra.mxu0 0.0
      %228 = vmatprep.subr.mxu0 0.0
      %229 = vmatpush1.msra.mxu0 0.0
      %230 = vmatprep.subr.mxu0 0.0
      %231 = vmatpush1.msra.mxu0 0.0
      %232 = vmatprep.subr.mxu0 0.0
      %233 = vmatpush1.msra.mxu0 0.0
      %234 = vmatprep.subr.mxu0 0.0
      %235 = vmatpush1.msra.mxu0 0.0
      %236 = vmatprep.subr.mxu0 0.0
      %237 = vmatpush1.msra.mxu0 0.0
      %238 = vmatprep.subr.mxu0 0.0
      %239 = vmatpush1.msra.mxu0 0.0
      %240 = vmatprep.subr.mxu0 0.0
      %241 = vmatpush1.msra.mxu0 0.0
      %242 = vmatprep.subr.mxu0 0.0
      %243 = vmatpush1.msra.mxu0 %v179
      %244 = vmatprep.subr.mxu0 0.0
      %245 = vmatpush2.msra.mxu0 0.0
      %246 = vmatprep.subr.mxu0 0.0
      %247 = vmatpush2.msra.mxu0 0.0
      %248 = vmatprep.subr.mxu0 0.0
      %249 = vmatpush2.msra.mxu0 0.0
      %250 = vmatprep.subr.mxu0 0.0
      %251 = vmatpush2.msra.mxu0 0.0
      %252 = vmatprep.subr.mxu0 0.0
      %253 = vmatpush2.msra.mxu0 0.0
      %254 = vmatprep.subr.mxu0 0.0
      %255 = vmatpush2.msra.mxu0 0.0
      %256 = vmatprep.subr.mxu0 0.0
      %257 = vmatpush2.msra.mxu0 0.0
      %258 = vmatprep.subr.mxu0 0.0
      %259 = vmatpush2.msra.mxu0 0.0
      %260 = vmatprep.subr.mxu0 0.0
      %261 = vmatpush2.msra.mxu0 0.0
      %262 = vmatprep.subr.mxu0 0.0
      %263 = vmatpush2.msra.mxu0 0.0
      %264 = vmatprep.subr.mxu0 0.0
      %265 = vmatpush2.msra.mxu0 0.0
      %266 = vmatprep.subr.mxu0 0.0
      %267 = vmatpush2.msra.mxu0 0.0
      %268 = vmatprep.subr.mxu0 0.0
      %269 = vmatpush2.msra.mxu0 0.0
      %270 = vmatprep.subr.mxu0 0.0
      %271 = vmatpush2.msra.mxu0 0.0
      %272 = vmatprep.subr.mxu0 0.0
      %273 = vmatpush2.msra.mxu0 0.0
      %274 = vmatprep.subr.mxu0 0.0
      %275 = vmatpush2.msra.mxu0 0.0
      %276 = vmatprep.mubr.f32.mxu0 0.0
      %277 = vmatmul.mubr.f32.gmra.mxu0 %v189
      %v278 = vpop.f32.mrf.mxu0
      %v279 = vadd.f32 %v185, %v278
      %v280 = vpop.f32.mrf.mxu0
      %281 = vmatprep.mubr.f32.mxu0 0.0
      %282 = vmatmul.mubr.f32.gmra.mxu0 %v192
      %v283 = vpop.f32.mrf.mxu0
      %v284 = vadd.f32 %v185, %v283
      %v285 = vpop.f32.mrf.mxu0
      %286 = vmatprep.mubr.f32.mxu0 0.0
      %287 = vmatmul.mubr.f32.gmra.mxu0 %v195
      %v288 = vpop.f32.mrf.mxu0
      %v289 = vadd.f32 %v185, %v288
      %v290 = vpop.f32.mrf.mxu0
      %291 = vmatprep.mubr.f32.mxu0 0.0
      %292 = vmatmul.mubr.f32.gmra.mxu0 %v198
      %v293 = vpop.f32.mrf.mxu0
      %v294 = vadd.f32 %v185, %v293
      %v295 = vpop.f32.mrf.mxu0
      %296 = vmatprep.mubr.f32.mxu0 0.0
      %297 = vmatmul.mubr.f32.gmra.mxu0 %v201
      %v298 = vpop.f32.mrf.mxu0
      %v299 = vadd.f32 %v185, %v298
      %v300 = vpop.f32.mrf.mxu0
      %301 = vmatprep.mubr.f32.mxu0 0.0
      %302 = vmatmul.mubr.f32.gmra.mxu0 %v204
      %v303 = vpop.f32.mrf.mxu0
      %v304 = vadd.f32 %v185, %v303
      %v305 = vpop.f32.mrf.mxu0
      %306 = vmatprep.mubr.f32.mxu0 0.0
      %307 = vmatmul.mubr.f32.gmra.mxu0 %v207
      %v308 = vpop.f32.mrf.mxu0
      %v309 = vadd.f32 %v185, %v308
      %v310 = vpop.f32.mrf.mxu0
      %311 = vmatprep.mubr.f32.mxu0 0.0
      %312 = vmatmul.mubr.f32.gmra.mxu0 %v210
      %v313 = vpop.f32.mrf.mxu0
      %v314 = vadd.f32 %v185, %v313
      %v315 = vpop.f32.mrf.mxu0
      %316 = vdwg.mxu0
      %317 = vst.msk [vmem:[%s170] sm:$0xff] %vm187, %v279
      %318 = vst.msk [vmem:[%s170 + $0x10] sm:$0xff] %vm187, %v284
      %319 = vst.msk [vmem:[%s170 + $0x20] sm:$0xff] %vm187, %v289
      %320 = vst.msk [vmem:[%s170 + $0x30] sm:$0xff] %vm187, %v294
      %321 = vst.msk [vmem:[%s170 + $0x40] sm:$0xff] %vm187, %v299
      %322 = vst.msk [vmem:[%s170 + $0x50] sm:$0xff] %vm187, %v304
      %323 = vst.msk [vmem:[%s170 + $0x60] sm:$0xff] %vm187, %v309
      %324 = vst.msk [vmem:[%s170 + $0x70] sm:$0xff] %vm187, %v314
      %333 = vrot.lane.b32.xlu0 %v279, 120
      %v334 = vpop.permute.xlu0 %333
      %335 = vrot.lane.b32.xlu0 %v284, 120
      %v336 = vpop.permute.xlu0 %335
      %337 = vrot.lane.b32.xlu0 %v289, 120
      %v338 = vpop.permute.xlu0 %337
      %339 = vrot.lane.b32.xlu0 %v294, 120
      %v340 = vpop.permute.xlu0 %339
      %341 = vrot.lane.b32.xlu0 %v299, 120
      %v342 = vpop.permute.xlu0 %341
      %343 = vrot.lane.b32.xlu0 %v304, 120
      %v344 = vpop.permute.xlu0 %343
      %345 = vrot.lane.b32.xlu0 %v309, 120
      %v346 = vpop.permute.xlu0 %345
      %347 = vrot.lane.b32.xlu0 %v314, 120
      %v348 = vpop.permute.xlu0 %347
      %s357 = scalar_lea.vmem %s170, 8
      %358 = vst.msk [vmem:[%s357] sm:$0xff] %vm187, %v334
      %359 = vst.msk [vmem:[%s357 + $0x10] sm:$0xff] %vm187, %v336
      %360 = vst.msk [vmem:[%s357 + $0x20] sm:$0xff] %vm187, %v338
      %361 = vst.msk [vmem:[%s357 + $0x30] sm:$0xff] %vm187, %v340
      %362 = vst.msk [vmem:[%s357 + $0x40] sm:$0xff] %vm187, %v342
      %363 = vst.msk [vmem:[%s357 + $0x50] sm:$0xff] %vm187, %v344
      %364 = vst.msk [vmem:[%s357 + $0x60] sm:$0xff] %vm187, %v346
      %365 = vst.msk [vmem:[%s357 + $0x70] sm:$0xff] %vm187, %v348
      %p366 = scmp.lt.s32.totalorder %s14, 1
      %s367 = scalar_select %p366, %s14, 1
      %s368 = smul.addr %s367, 16
      %s369 = smul.addr %s368, 8
      %s370 = scalar_lea.vmem %s3, %s369
      // Predicated region
      $region33: #{up_forward.4} parent=31 // pred_check
        %p371 = pneg %p100
      $region34: #{up_forward.4} parent=31 // pred_check_branch
        %373 = sbr.rel (%p371) target = $region36
      $region35: #{up_forward.4} parent=31 // pred_region
        _
      $region36: #{up_forward.4} parent=31 // pred_fallthru
        _
    $region32: #{up_forward.4} parent=5 // pred_fallthru
      _
    %p374 = scmp.le.s32.totalorder 2, %s9
    // Predicated region
    $region37: #{up_forward.4} parent=5 // pred_check
      %p375 = pneg %p374
    $region38: #{up_forward.4} parent=5 // pred_check_branch
      %377 = sbr.rel (%p375) target = $region40
    $region39: #{up_forward.4} parent=5 // pred_region
      %s378 = ssub.s32 %s9, 2
      // Predicated region
      $region41: #{up_forward.4} parent=39 // pred_check
        %p379 = pneg %p106
      $region42: #{up_forward.4} parent=39 // pred_check_branch
        %381 = sbr.rel (%p379) target = $region44
      $region43: #{up_forward.4} parent=39 // pred_region
        %p382 = scmp.lt.s32.totalorder %s15, 1
        %s383 = scalar_select %p382, %s15, 1
        %s384 = smul.addr %s383, 16
        %s385 = smul.addr %s384, 8
        %s386 = scalar_lea.vmem %s3, %s385
      $region44: #{up_forward.4} parent=39 // pred_fallthru
        _
    $region40: #{up_forward.4} parent=5 // pred_fallthru
      _
  $region6: #{up_forward.4} parent=0 // loop_footer
    %s13 = sadd.s32 1, %s9
  $region7: #{up_forward.4} parent=0 // loop_footer_branch
    %8 = sbr.rel target = $region3
  $region8: #{up_forward.4} parent=0 // loop_exit
    _

// kernel: up_forward.7
$region0: #{up_forward.7}
  #allocation0 [shape = 'u32[]', space=smem, size = 0x4, offset = 0x4, fixed_abs, tag = 'smem constant byte address 0x4 - core index']
  #allocation1 [shape = 'u32[144,128]{1,0:T(1,128)}', space=vmem, size = 0x12000, scoped, tag = 'internal scratch']
  %s0 = inlined_call_operand.vmem [shape: f32[2,16,16,4], index: 0, kind: input, shape index: {}]
  %s1 = inlined_call_operand.vmem [shape: f32[1,4], index: 1, kind: input, shape index: {}]
  %s2 = inlined_call_operand.vmem [shape: f32[1,4], index: 2, kind: input, shape index: {}]
  %s3 = inlined_call_operand.vmem [shape: f32[2,16,16,4], index: 3, kind: output, shape index: {}]
  %s4 = sld [smem:[#allocation0]]
  $region45: #{up_forward.7} parent=0
    _
  %s6 = ssub.s32 1, %s4
  %s7 = scalar_select 0, %s6, %s4
  loop: start=0, step=1, limit=4
  $region2: #{up_forward.7} parent=0 // loop_pre_header
    _
  $region3: #{up_forward.7} parent=0 // loop_header
    %s9 = sphi 0, %s13
    %p10 = scmp.ge.s32.totalorder %s9, 4
    %s19 = sphi 0, %s21
    %s22 = sphi 0, %s19
    %s23 = sphi 0, %s22
    %s39 = sphi 0, %s23
    %s43 = sphi 0, %s43
    %s45 = sphi 0, %s43
    %s46 = sphi 0, %s45
    %s60 = sphi 0, %s46
    %s64 = sphi 0, %s64
    %s66 = sphi 0, %s64
    %s67 = sphi 0, %s66
    %s81 = sphi 0, %s67
    %s87 = sphi 0, %s89
    %s90 = sphi 0, %s87
    %s91 = sphi 0, %s90
    %s107 = sphi 0, %s91
  $region4: #{up_forward.7} parent=0 // loop_header_branch
    %12 = sbr.rel (%p10) target = $region8
  $region5: #{up_forward.7} parent=0 // loop_body
    %s14 = ssub.s32 %s9, 1
    %s15 = ssub.s32 %s9, 2
    %s16 = sadd.s32 %s9, 1
    %s17 = ssub.s32 %s9, %s16
    %p18 = scmp.eq.s32.totalorder %s17, 0
    %s20 = sadd.s32 %s19, 1
    %s21 = scalar_select %p18, %s19, %s20
    %p24 = pneg %p18
    %p25 = scmp.eq.s32.totalorder %s9, 1
    %p26 = por %p24, %p25
    %p27 = scmp.ne.s32.totalorder %s19, %s22
    %p28 = scmp.eq.s32.totalorder %s9, 0
    %p29 = por %p27, %p28
    %p30 = scmp.ne.s32.totalorder %s19, %s22
    %p31 = scmp.eq.s32.totalorder %s14, 1
    %p32 = por %p30, %p31
    %p33 = scmp.ne.s32.totalorder %s22, %s23
    %p34 = scmp.eq.s32.totalorder %s14, 0
    %p35 = por %p33, %p34
    %p36 = scmp.ne.s32.totalorder %s22, %s23
    %p37 = scmp.eq.s32.totalorder %s15, 1
    %p38 = por %p36, %p37
    %p40 = scmp.ne.s32.totalorder %s23, %s39
    %p41 = scmp.eq.s32.totalorder %s15, 0
    %p42 = por %p40, %p41
    %s44 = sadd.s32 %s43, 1
    %p47 = scmp.eq.s32.totalorder %s9, 1
    %p48 = scmp.ne.s32.totalorder %s43, %s45
    %p49 = scmp.eq.s32.totalorder %s9, 0
    %p50 = por %p48, %p49
    %p51 = scmp.ne.s32.totalorder %s43, %s45
    %p52 = scmp.eq.s32.totalorder %s14, 1
    %p53 = por %p51, %p52
    %p54 = scmp.ne.s32.totalorder %s45, %s46
    %p55 = scmp.eq.s32.totalorder %s14, 0
    %p56 = por %p54, %p55
    %p57 = scmp.ne.s32.totalorder %s45, %s46
    %p58 = scmp.eq.s32.totalorder %s15, 1
    %p59 = por %p57, %p58
    %p61 = scmp.ne.s32.totalorder %s46, %s60
    %p62 = scmp.eq.s32.totalorder %s15, 0
    %p63 = por %p61, %p62
    %s65 = sadd.s32 %s64, 1
    %p68 = scmp.eq.s32.totalorder %s9, 1
    %p69 = scmp.ne.s32.totalorder %s64, %s66
    %p70 = scmp.eq.s32.totalorder %s9, 0
    %p71 = por %p69, %p70
    %p72 = scmp.ne.s32.totalorder %s64, %s66
    %p73 = scmp.eq.s32.totalorder %s14, 1
    %p74 = por %p72, %p73
    %p75 = scmp.ne.s32.totalorder %s66, %s67
    %p76 = scmp.eq.s32.totalorder %s14, 0
    %p77 = por %p75, %p76
    %p78 = scmp.ne.s32.totalorder %s66, %s67
    %p79 = scmp.eq.s32.totalorder %s15, 1
    %p80 = por %p78, %p79
    %p82 = scmp.ne.s32.totalorder %s67, %s81
    %p83 = scmp.eq.s32.totalorder %s15, 0
    %p84 = por %p82, %p83
    %s85 = ssub.s32 %s9, %s16
    %p86 = scmp.eq.s32.totalorder %s85, 0
    %s88 = sadd.s32 %s87, 1
    %s89 = scalar_select %p86, %s87, %s88
    %p92 = pneg %p86
    %p93 = scmp.eq.s32.totalorder %s9, 1
    %p94 = por %p92, %p93
    %p95 = scmp.ne.s32.totalorder %s87, %s90
    %p96 = scmp.eq.s32.totalorder %s9, 0
    %p97 = por %p95, %p96
    %p98 = scmp.ne.s32.totalorder %s87, %s90
    %p99 = scmp.eq.s32.totalorder %s14, 1
    %p100 = por %p98, %p99
    %p101 = scmp.ne.s32.totalorder %s90, %s91
    %p102 = scmp.eq.s32.totalorder %s14, 0
    %p103 = por %p101, %p102
    %p104 = scmp.ne.s32.totalorder %s90, %s91
    %p105 = scmp.eq.s32.totalorder %s15, 1
    %p106 = por %p104, %p105
    %p108 = scmp.ne.s32.totalorder %s91, %s107
    %p109 = scmp.eq.s32.totalorder %s15, 0
    %p110 = por %p108, %p109
    %p111 = scmp.le.s32.totalorder 1, %s9
    %p112 = scmp.lt.s32.totalorder %s9, 3
    %p113 = pnand %p111, %p112
    %p114 = pneg %p113
    // Predicated region
    $region9: #{up_forward.7} parent=5 // pred_check
      _
    $region10: #{up_forward.7} parent=5 // pred_check_branch
      %116 = sbr.rel (%p113) target = $region12
    $region11: #{up_forward.7} parent=5 // pred_region
      %s117 = ssub.s32 %s9, 1
      // Predicated region
      $region13: #{up_forward.7} parent=11 // pred_check
        %p118 = pneg %p56
      $region14: #{up_forward.7} parent=11 // pred_check_branch
        %120 = sbr.rel (%p118) target = $region16
      $region15: #{up_forward.7} parent=11 // pred_region
        _
      $region16: #{up_forward.7} parent=11 // pred_fallthru
        _
      // Predicated region
      $region17: #{up_forward.7} parent=11 // pred_check
        %p121 = pneg %p77
      $region18: #{up_forward.7} parent=11 // pred_check_branch
        %123 = sbr.rel (%p121) target = $region20
      $region19: #{up_forward.7} parent=11 // pred_region
        _
      $region20: #{up_forward.7} parent=11 // pred_fallthru
        _
    $region12: #{up_forward.7} parent=5 // pred_fallthru
      _
    %p124 = scmp.lt.s32.totalorder %s9, 2
    // Predicated region
    $region21: #{up_forward.7} parent=5 // pred_check
      %p125 = pneg %p124
    $region22: #{up_forward.7} parent=5 // pred_check_branch
      %127 = sbr.rel (%p125) target = $region24
    $region23: #{up_forward.7} parent=5 // pred_region
      // Predicated region
      $region25: #{up_forward.7} parent=23 // pred_check
        %p128 = pneg %p29
      $region26: #{up_forward.7} parent=23 // pred_check_branch
        %130 = sbr.rel (%p128) target = $region28
      $region27: #{up_forward.7} parent=23 // pred_region
        %p131 = scmp.lt.s32.totalorder %s9, 1
        %s132 = scalar_select %p131, %s9, 1
        %s133 = smul.addr %s132, 32
        %s134 = smul.addr %s133, 8
        %s135 = scalar_lea.vmem %s0, %s134
      $region28: #{up_forward.7} parent=23 // pred_fallthru
        _
    $region24: #{up_forward.7} parent=5 // pred_fallthru
      _
    %p136 = scmp.le.s32.totalorder 1, %s9
    %p137 = scmp.lt.s32.totalorder %s9, 3
    %p138 = pnand %p136, %p137
    %p139 = pneg %p138
    // Predicated region
    $region29: #{up_forward.7} parent=5 // pred_check
      _
    $region30: #{up_forward.7} parent=5 // pred_check_branch
      %141 = sbr.rel (%p138) target = $region32
    $region31: #{up_forward.7} parent=5 // pred_region
      %s142 = ssub.s32 %s9, 1
      %p143 = scmp.lt.s32.totalorder %s14, 1
      %s144 = scalar_select %p143, %s14, 1
      %s145 = smul.addr %s144, 32
      %s146 = smul.addr %s145, 8
      %s147 = scalar_lea.vmem %s0, %s146
      %p148 = pneg %p35
      %p149 = pneg %p32
      %p150 = pneg %p56
      %p151 = pneg %p53
      %p152 = pneg %p77
      %p153 = pneg %p74
      %p154 = pneg %p103
      %p155 = pneg %p100
      %p156 = scmp.lt.s32.totalorder %s14, 1
      %s157 = scalar_select %p156, %s14, 1
      %s158 = smul.addr %s157, 32
      %s159 = smul.addr %s158, 8
      %s160 = scalar_lea.vmem %s3, %s159
      %p161 = scmp.lt.s32.totalorder %s14, 1
      %s162 = scalar_select %p161, %s14, 1
      %s163 = smul.addr %s162, 32
      %s164 = smul.addr %s163, 8
      %s165 = scalar_lea.vmem %s0, %s164
      %p166 = scmp.lt.s32.totalorder %s14, 1
      %s167 = scalar_select %p166, %s14, 1
      %s168 = smul.addr %s167, 32
      %s169 = smul.addr %s168, 8
      %s170 = scalar_lea.vmem %s3, %s169
      %v171 = vld [vmem:[%s165] sm:$0xff]
      %v172 = vld [vmem:[%s165 + $0x8] sm:$0xff]
      %v173 = vld [vmem:[%s165 + $0x10] sm:$0xff]
      %v174 = vld [vmem:[%s165 + $0x18] sm:$0xff]
      %v175 = vld [vmem:[%s165 + $0x20] sm:$0xff]
      %v176 = vld [vmem:[%s165 + $0x28] sm:$0xff]
      %v177 = vld [vmem:[%s165 + $0x30] sm:$0xff]
      %v178 = vld [vmem:[%s165 + $0x38] sm:$0xff]
      %v179 = vld [vmem:[%s165 + $0x40] sm:$0xff]
      %v180 = vld [vmem:[%s165 + $0x48] sm:$0xff]
      %v181 = vld [vmem:[%s165 + $0x50] sm:$0xff]
      %v182 = vld [vmem:[%s165 + $0x58] sm:$0xff]
      %v183 = vld [vmem:[%s165 + $0x60] sm:$0xff]
      %v184 = vld [vmem:[%s165 + $0x68] sm:$0xff]
      %v185 = vld [vmem:[%s165 + $0x70] sm:$0xff]
      %v186 = vld [vmem:[%s165 + $0x78] sm:$0xff]
      %v187 = vld [vmem:[%s165 + $0x80] sm:$0xff]
      %v188 = vld [vmem:[%s165 + $0x88] sm:$0xff]
      %v189 = vld [vmem:[%s165 + $0x90] sm:$0xff]
      %v190 = vld [vmem:[%s165 + $0x98] sm:$0xff]
      %v191 = vld [vmem:[%s165 + $0xa0] sm:$0xff]
      %v192 = vld [vmem:[%s165 + $0xa8] sm:$0xff]
      %v193 = vld [vmem:[%s165 + $0xb0] sm:$0xff]
      %v194 = vld [vmem:[%s165 + $0xb8] sm:$0xff]
      %v195 = vld [vmem:[%s165 + $0xc0] sm:$0xff]
      %v196 = vld [vmem:[%s165 + $0xc8] sm:$0xff]
      %v197 = vld [vmem:[%s165 + $0xd0] sm:$0xff]
      %v198 = vld [vmem:[%s165 + $0xd8] sm:$0xff]
      %v199 = vld [vmem:[%s165 + $0xe0] sm:$0xff]
      %v200 = vld [vmem:[%s165 + $0xe8] sm:$0xff]
      %v201 = vld [vmem:[%s165 + $0xf0] sm:$0xff]
      %v202 = vld [vmem:[%s165 + $0xf8] sm:$0xff]
      %v203 = vld [vmem:[%s1] sm:$0x1]
      %v205 = vlaneseq
      %v206 = vshrl.u32 %v205, 7
      %v207 = vsub.s32 0, %v206
      %v208 = vrot.slane %v203, %v207
      %v210 = vmul.f32 %v171, %v208
      %v211 = vmul.f32 %v172, %v208
      %v212 = vmul.f32 %v173, %v208
      %v213 = vmul.f32 %v174, %v208
      %v214 = vmul.f32 %v175, %v208
      %v215 = vmul.f32 %v176, %v208
      %v216 = vmul.f32 %v177, %v208
      %v217 = vmul.f32 %v178, %v208
      %v218 = vmul.f32 %v179, %v208
      %v219 = vmul.f32 %v180, %v208
      %v220 = vmul.f32 %v181, %v208
      %v221 = vmul.f32 %v182, %v208
      %v222 = vmul.f32 %v183, %v208
      %v223 = vmul.f32 %v184, %v208
      %v224 = vmul.f32 %v185, %v208
      %v225 = vmul.f32 %v186, %v208
      %v226 = vmul.f32 %v187, %v208
      %v227 = vmul.f32 %v188, %v208
      %v228 = vmul.f32 %v189, %v208
      %v229 = vmul.f32 %v190, %v208
      %v230 = vmul.f32 %v191, %v208
      %v231 = vmul.f32 %v192, %v208
      %v232 = vmul.f32 %v193, %v208
      %v233 = vmul.f32 %v194, %v208
      %v234 = vmul.f32 %v195, %v208
      %v235 = vmul.f32 %v196, %v208
      %v236 = vmul.f32 %v197, %v208
      %v237 = vmul.f32 %v198, %v208
      %v238 = vmul.f32 %v199, %v208
      %v239 = vmul.f32 %v200, %v208
      %v240 = vmul.f32 %v201, %v208
      %v241 = vmul.f32 %v202, %v208
      %v242 = vld [vmem:[%s2] sm:$0x1]
      %v244 = vlaneseq
      %v245 = vshrl.u32 %v244, 7
      %v246 = vsub.s32 0, %v245
      %v247 = vrot.slane %v242, %v246
      %v249 = vadd.f32 %v210, %v247
      %v250 = vadd.f32 %v211, %v247
      %v251 = vadd.f32 %v212, %v247
      %v252 = vadd.f32 %v213, %v247
      %v253 = vadd.f32 %v214, %v247
      %v254 = vadd.f32 %v215, %v247
      %v255 = vadd.f32 %v216, %v247
      %v256 = vadd.f32 %v217, %v247
      %v257 = vadd.f32 %v218, %v247
      %v258 = vadd.f32 %v219, %v247
      %v259 = vadd.f32 %v220, %v247
      %v260 = vadd.f32 %v221, %v247
      %v261 = vadd.f32 %v222, %v247
      %v262 = vadd.f32 %v223, %v247
      %v263 = vadd.f32 %v224, %v247
      %v264 = vadd.f32 %v225, %v247
      %v265 = vadd.f32 %v226, %v247
      %v266 = vadd.f32 %v227, %v247
      %v267 = vadd.f32 %v228, %v247
      %v268 = vadd.f32 %v229, %v247
      %v269 = vadd.f32 %v230, %v247
      %v270 = vadd.f32 %v231, %v247
      %v271 = vadd.f32 %v232, %v247
      %v272 = vadd.f32 %v233, %v247
      %v273 = vadd.f32 %v234, %v247
      %v274 = vadd.f32 %v235, %v247
      %v275 = vadd.f32 %v236, %v247
      %v276 = vadd.f32 %v237, %v247
      %v277 = vadd.f32 %v238, %v247
      %v278 = vadd.f32 %v239, %v247
      %v279 = vadd.f32 %v240, %v247
      %v280 = vadd.f32 %v241, %v247
      %v281 = vmax.f32 %v249, 0.0
      %v282 = vmax.f32 %v250, 0.0
      %v283 = vmax.f32 %v251, 0.0
      %v284 = vmax.f32 %v252, 0.0
      %v285 = vmax.f32 %v253, 0.0
      %v286 = vmax.f32 %v254, 0.0
      %v287 = vmax.f32 %v255, 0.0
      %v288 = vmax.f32 %v256, 0.0
      %v289 = vmax.f32 %v257, 0.0
      %v290 = vmax.f32 %v258, 0.0
      %v291 = vmax.f32 %v259, 0.0
      %v292 = vmax.f32 %v260, 0.0
      %v293 = vmax.f32 %v261, 0.0
      %v294 = vmax.f32 %v262, 0.0
      %v295 = vmax.f32 %v263, 0.0
      %v296 = vmax.f32 %v264, 0.0
      %v297 = vmax.f32 %v265, 0.0
      %v298 = vmax.f32 %v266, 0.0
      %v299 = vmax.f32 %v267, 0.0
      %v300 = vmax.f32 %v268, 0.0
      %v301 = vmax.f32 %v269, 0.0
      %v302 = vmax.f32 %v270, 0.0
      %v303 = vmax.f32 %v271, 0.0
      %v304 = vmax.f32 %v272, 0.0
      %v305 = vmax.f32 %v273, 0.0
      %v306 = vmax.f32 %v274, 0.0
      %v307 = vmax.f32 %v275, 0.0
      %v308 = vmax.f32 %v276, 0.0
      %v309 = vmax.f32 %v277, 0.0
      %v310 = vmax.f32 %v278, 0.0
      %v311 = vmax.f32 %v279, 0.0
      %v312 = vmax.f32 %v280, 0.0
      %vm313 = vcmask 31744
      %314 = vst.msk [vmem:[%s170] sm:$0xff] %vm313, %v281
      %315 = vst.msk [vmem:[%s170 + $0x8] sm:$0xff] %vm313, %v282
      %316 = vst.msk [vmem:[%s170 + $0x10] sm:$0xff] %vm313, %v283
      %317 = vst.msk [vmem:[%s170 + $0x18] sm:$0xff] %vm313, %v284
      %318 = vst.msk [vmem:[%s170 + $0x20] sm:$0xff] %vm313, %v285
      %319 = vst.msk [vmem:[%s170 + $0x28] sm:$0xff] %vm313, %v286
      %320 = vst.msk [vmem:[%s170 + $0x30] sm:$0xff] %vm313, %v287
      %321 = vst.msk [vmem:[%s170 + $0x38] sm:$0xff] %vm313, %v288
      %322 = vst.msk [vmem:[%s170 + $0x40] sm:$0xff] %vm313, %v289
      %323 = vst.msk [vmem:[%s170 + $0x48] sm:$0xff] %vm313, %v290
      %324 = vst.msk [vmem:[%s170 + $0x50] sm:$0xff] %vm313, %v291
      %325 = vst.msk [vmem:[%s170 + $0x58] sm:$0xff] %vm313, %v292
      %326 = vst.msk [vmem:[%s170 + $0x60] sm:$0xff] %vm313, %v293
      %327 = vst.msk [vmem:[%s170 + $0x68] sm:$0xff] %vm313, %v294
      %328 = vst.msk [vmem:[%s170 + $0x70] sm:$0xff] %vm313, %v295
      %329 = vst.msk [vmem:[%s170 + $0x78] sm:$0xff] %vm313, %v296
      %330 = vst.msk [vmem:[%s170 + $0x80] sm:$0xff] %vm313, %v297
      %331 = vst.msk [vmem:[%s170 + $0x88] sm:$0xff] %vm313, %v298
      %332 = vst.msk [vmem:[%s170 + $0x90] sm:$0xff] %vm313, %v299
      %333 = vst.msk [vmem:[%s170 + $0x98] sm:$0xff] %vm313, %v300
      %334 = vst.msk [vmem:[%s170 + $0xa0] sm:$0xff] %vm313, %v301
      %335 = vst.msk [vmem:[%s170 + $0xa8] sm:$0xff] %vm313, %v302
      %336 = vst.msk [vmem:[%s170 + $0xb0] sm:$0xff] %vm313, %v303
      %337 = vst.msk [vmem:[%s170 + $0xb8] sm:$0xff] %vm313, %v304
      %338 = vst.msk [vmem:[%s170 + $0xc0] sm:$0xff] %vm313, %v305
      %339 = vst.msk [vmem:[%s170 + $0xc8] sm:$0xff] %vm313, %v306
      %340 = vst.msk [vmem:[%s170 + $0xd0] sm:$0xff] %vm313, %v307
      %341 = vst.msk [vmem:[%s170 + $0xd8] sm:$0xff] %vm313, %v308
      %342 = vst.msk [vmem:[%s170 + $0xe0] sm:$0xff] %vm313, %v309
      %343 = vst.msk [vmem:[%s170 + $0xe8] sm:$0xff] %vm313, %v310
      %344 = vst.msk [vmem:[%s170 + $0xf0] sm:$0xff] %vm313, %v311
      %345 = vst.msk [vmem:[%s170 + $0xf8] sm:$0xff] %vm313, %v312
      %p346 = scmp.lt.s32.totalorder %s14, 1
      %s347 = scalar_select %p346, %s14, 1
      %s348 = smul.addr %s347, 32
      %s349 = smul.addr %s348, 8
      %s350 = scalar_lea.vmem %s3, %s349
      // Predicated region
      $region33: #{up_forward.7} parent=31 // pred_check
        %p351 = pneg %p100
      $region34: #{up_forward.7} parent=31 // pred_check_branch
        %353 = sbr.rel (%p351) target = $region36
      $region35: #{up_forward.7} parent=31 // pred_region
        _
      $region36: #{up_forward.7} parent=31 // pred_fallthru
        _
    $region32: #{up_forward.7} parent=5 // pred_fallthru
      _
    %p354 = scmp.le.s32.totalorder 2, %s9
    // Predicated region
    $region37: #{up_forward.7} parent=5 // pred_check
      %p355 = pneg %p354
    $region38: #{up_forward.7} parent=5 // pred_check_branch
      %357 = sbr.rel (%p355) target = $region40
    $region39: #{up_forward.7} parent=5 // pred_region
      %s358 = ssub.s32 %s9, 2
      // Predicated region
      $region41: #{up_forward.7} parent=39 // pred_check
        %p359 = pneg %p106
      $region42: #{up_forward.7} parent=39 // pred_check_branch
        %361 = sbr.rel (%p359) target = $region44
      $region43: #{up_forward.7} parent=39 // pred_region
        %p362 = scmp.lt.s32.totalorder %s15, 1
        %s363 = scalar_select %p362, %s15, 1
        %s364 = smul.addr %s363, 32
        %s365 = smul.addr %s364, 8
        %s366 = scalar_lea.vmem %s3, %s365
      $region44: #{up_forward.7} parent=39 // pred_fallthru
        _
    $region40: #{up_forward.7} parent=5 // pred_fallthru
      _
  $region6: #{up_forward.7} parent=0 // loop_footer
    %s13 = sadd.s32 1, %s9
  $region7: #{up_forward.7} parent=0 // loop_footer_branch
    %8 = sbr.rel target = $region3
  $region8: #{up_forward.7} parent=0 // loop_exit
    _

// kernel: up_forward.5
$region0: #{up_forward.5}
  #allocation0 [shape = 'u32[]', space=smem, size = 0x4, offset = 0x4, fixed_abs, tag = 'smem constant byte address 0x4 - core index']
  #allocation1 [shape = 'u32[144,128]{1,0:T(1,128)}', space=vmem, size = 0x12000, scoped, tag = 'internal scratch']
  #allocation2 [shape = 'f32[18,18,8]{2,1,0:T(8,128)}', space=vmem, size = 0x36000, scoped, tag = 'scratch operand']
  #allocation3 [shape = 'f32[256,72]{1,0:T(8,128)}', space=vmem, size = 0x20000, scoped, tag = 'scratch operand']
  %s0 = inlined_call_operand.vmem [shape: f32[2,16,16,4], index: 0, kind: input, shape index: {}]
  %s1 = inlined_call_operand.vmem [shape: f32[2,16,16,4], index: 1, kind: input, shape index: {}]
  %s2 = inlined_call_operand.vmem [shape: f32[72,4], index: 2, kind: input, shape index: {}]
  %s3 = inlined_call_operand.vmem [shape: f32[2,16,16,4], index: 3, kind: output, shape index: {0}]
  %s4 = inlined_call_operand.vmem [shape: f32[2,1,4], index: 4, kind: output, shape index: {1}]
  %s5 = inlined_call_operand.vmem [shape: f32[2,1,4], index: 5, kind: output, shape index: {2}]
  %6 = xla_tuple %s3, %s4, %s5
  %s7 = sld [smem:[#allocation0]]
  $region61: #{up_forward.5} parent=0
    _
  %s9 = ssub.s32 1, %s7
  %s10 = scalar_select 0, %s9, %s7
  loop: start=0, step=1, limit=4
  $region2: #{up_forward.5} parent=0 // loop_pre_header
    _
  $region3: #{up_forward.5} parent=0 // loop_header
    %s12 = sphi 0, %s16
    %p13 = scmp.ge.s32.totalorder %s12, 4
    %s22 = sphi 0, %s24
    %s25 = sphi 0, %s22
    %s26 = sphi 0, %s25
    %s42 = sphi 0, %s26
    %s48 = sphi 0, %s50
    %s51 = sphi 0, %s48
    %s52 = sphi 0, %s51
    %s68 = sphi 0, %s52
    %s72 = sphi 0, %s72
    %s74 = sphi 0, %s72
    %s75 = sphi 0, %s74
    %s89 = sphi 0, %s75
    %s95 = sphi 0, %s97
    %s98 = sphi 0, %s95
    %s99 = sphi 0, %s98
    %s115 = sphi 0, %s99
    %s121 = sphi 0, %s123
    %s124 = sphi 0, %s121
    %s125 = sphi 0, %s124
    %s141 = sphi 0, %s125
    %s147 = sphi 0, %s149
    %s150 = sphi 0, %s147
    %s151 = sphi 0, %s150
    %s167 = sphi 0, %s151
  $region4: #{up_forward.5} parent=0 // loop_header_branch
    %15 = sbr.rel (%p13) target = $region8
  $region5: #{up_forward.5} parent=0 // loop_body
    %s17 = ssub.s32 %s12, 1
    %s18 = ssub.s32 %s12, 2
    %s19 = sadd.s32 %s12, 1
    %s20 = ssub.s32 %s12, %s19
    %p21 = scmp.eq.s32.totalorder %s20, 0
    %s23 = sadd.s32 %s22, 1
    %s24 = scalar_select %p21, %s22, %s23
    %p27 = pneg %p21
    %p28 = scmp.eq.s32.totalorder %s12, 1
    %p29 = por %p27, %p28
    %p30 = scmp.ne.s32.totalorder %s22, %s25
    %p31 = scmp.eq.s32.totalorder %s12, 0
    %p32 = por %p30, %p31
    %p33 = scmp.ne.s32.totalorder %s22, %s25
    %p34 = scmp.eq.s32.totalorder %s17, 1
    %p35 = por %p33, %p34
    %p36 = scmp.ne.s32.totalorder %s25, %s26
    %p37 = scmp.eq.s32.totalorder %s17, 0
    %p38 = por %p36, %p37
    %p39 = scmp.ne.s32.totalorder %s25, %s26
    %p40 = scmp.eq.s32.totalorder %s18, 1
    %p41 = por %p39, %p40
    %p43 = scmp.ne.s32.totalorder %s26, %s42
    %p44 = scmp.eq.s32.totalorder %s18, 0
    %p45 = por %p43, %p44
    %s46 = ssub.s32 %s12, %s19
    %p47 = scmp.eq.s32.totalorder %s46, 0
    %s49 = sadd.s32 %s48, 1
    %s50 = scalar_select %p47, %s48, %s49
    %p53 = pneg %p47
    %p54 = scmp.eq.s32.totalorder %s12, 1
    %p55 = por %p53, %p54
    %p56 = scmp.ne.s32.totalorder %s48, %s51
    %p57 = scmp.eq.s32.totalorder %s12, 0
    %p58 = por %p56, %p57
    %p59 = scmp.ne.s32.totalorder %s48, %s51
    %p60 = scmp.eq.s32.totalorder %s17, 1
    %p61 = por %p59, %p60
    %p62 = scmp.ne.s32.totalorder %s51, %s52
    %p63 = scmp.eq.s32.totalorder %s17, 0
    %p64 = por %p62, %p63
    %p65 = scmp.ne.s32.totalorder %s51, %s52
    %p66 = scmp.eq.s32.totalorder %s18, 1
    %p67 = por %p65, %p66
    %p69 = scmp.ne.s32.totalorder %s52, %s68
    %p70 = scmp.eq.s32.totalorder %s18, 0
    %p71 = por %p69, %p70
    %s73 = sadd.s32 %s72, 1
    %p76 = scmp.eq.s32.totalorder %s12, 1
    %p77 = scmp.ne.s32.totalorder %s72, %s74
    %p78 = scmp.eq.s32.totalorder %s12, 0
    %p79 = por %p77, %p78
    %p80 = scmp.ne.s32.totalorder %s72, %s74
    %p81 = scmp.eq.s32.totalorder %s17, 1
    %p82 = por %p80, %p81
    %p83 = scmp.ne.s32.totalorder %s74, %s75
    %p84 = scmp.eq.s32.totalorder %s17, 0
    %p85 = por %p83, %p84
    %p86 = scmp.ne.s32.totalorder %s74, %s75
    %p87 = scmp.eq.s32.totalorder %s18, 1
    %p88 = por %p86, %p87
    %p90 = scmp.ne.s32.totalorder %s75, %s89
    %p91 = scmp.eq.s32.totalorder %s18, 0
    %p92 = por %p90, %p91
    %s93 = ssub.s32 %s12, %s19
    %p94 = scmp.eq.s32.totalorder %s93, 0
    %s96 = sadd.s32 %s95, 1
    %s97 = scalar_select %p94, %s95, %s96
    %p100 = pneg %p94
    %p101 = scmp.eq.s32.totalorder %s12, 1
    %p102 = por %p100, %p101
    %p103 = scmp.ne.s32.totalorder %s95, %s98
    %p104 = scmp.eq.s32.totalorder %s12, 0
    %p105 = por %p103, %p104
    %p106 = scmp.ne.s32.totalorder %s95, %s98
    %p107 = scmp.eq.s32.totalorder %s17, 1
    %p108 = por %p106, %p107
    %p109 = scmp.ne.s32.totalorder %s98, %s99
    %p110 = scmp.eq.s32.totalorder %s17, 0
    %p111 = por %p109, %p110
    %p112 = scmp.ne.s32.totalorder %s98, %s99
    %p113 = scmp.eq.s32.totalorder %s18, 1
    %p114 = por %p112, %p113
    %p116 = scmp.ne.s32.totalorder %s99, %s115
    %p117 = scmp.eq.s32.totalorder %s18, 0
    %p118 = por %p116, %p117
    %s119 = ssub.s32 %s12, %s19
    %p120 = scmp.eq.s32.totalorder %s119, 0
    %s122 = sadd.s32 %s121, 1
    %s123 = scalar_select %p120, %s121, %s122
    %p126 = pneg %p120
    %p127 = scmp.eq.s32.totalorder %s12, 1
    %p128 = por %p126, %p127
    %p129 = scmp.ne.s32.totalorder %s121, %s124
    %p130 = scmp.eq.s32.totalorder %s12, 0
    %p131 = por %p129, %p130
    %p132 = scmp.ne.s32.totalorder %s121, %s124
    %p133 = scmp.eq.s32.totalorder %s17, 1
    %p134 = por %p132, %p133
    %p135 = scmp.ne.s32.totalorder %s124, %s125
    %p136 = scmp.eq.s32.totalorder %s17, 0
    %p137 = por %p135, %p136
    %p138 = scmp.ne.s32.totalorder %s124, %s125
    %p139 = scmp.eq.s32.totalorder %s18, 1
    %p140 = por %p138, %p139
    %p142 = scmp.ne.s32.totalorder %s125, %s141
    %p143 = scmp.eq.s32.totalorder %s18, 0
    %p144 = por %p142, %p143
    %s145 = ssub.s32 %s12, %s19
    %p146 = scmp.eq.s32.totalorder %s145, 0
    %s148 = sadd.s32 %s147, 1
    %s149 = scalar_select %p146, %s147, %s148
    %p152 = pneg %p146
    %p153 = scmp.eq.s32.totalorder %s12, 1
    %p154 = por %p152, %p153
    %p155 = scmp.ne.s32.totalorder %s147, %s150
    %p156 = scmp.eq.s32.totalorder %s12, 0
    %p157 = por %p155, %p156
    %p158 = scmp.ne.s32.totalorder %s147, %s150
    %p159 = scmp.eq.s32.totalorder %s17, 1
    %p160 = por %p158, %p159
    %p161 = scmp.ne.s32.totalorder %s150, %s151
    %p162 = scmp.eq.s32.totalorder %s17, 0
    %p163 = por %p161, %p162
    %p164 = scmp.ne.s32.totalorder %s150, %s151
    %p165 = scmp.eq.s32.totalorder %s18, 1
    %p166 = por %p164, %p165
    %p168 = scmp.ne.s32.totalorder %s151, %s167
    %p169 = scmp.eq.s32.totalorder %s18, 0
    %p170 = por %p168, %p169
    %p171 = scmp.le.s32.totalorder 1, %s12
    %p172 = scmp.lt.s32.totalorder %s12, 3
    %p173 = pnand %p171, %p172
    %p174 = pneg %p173
    // Predicated region
    $region9: #{up_forward.5} parent=5 // pred_check
      _
    $region10: #{up_forward.5} parent=5 // pred_check_branch
      %176 = sbr.rel (%p173) target = $region12
    $region11: #{up_forward.5} parent=5 // pred_region
      %s177 = ssub.s32 %s12, 1
      // Predicated region
      $region13: #{up_forward.5} parent=11 // pred_check
        %p178 = pneg %p85
      $region14: #{up_forward.5} parent=11 // pred_check_branch
        %180 = sbr.rel (%p178) target = $region16
      $region15: #{up_forward.5} parent=11 // pred_region
        _
      $region16: #{up_forward.5} parent=11 // pred_fallthru
        _
    $region12: #{up_forward.5} parent=5 // pred_fallthru
      _
    %p181 = scmp.lt.s32.totalorder %s12, 2
    // Predicated region
    $region17: #{up_forward.5} parent=5 // pred_check
      %p182 = pneg %p181
    $region18: #{up_forward.5} parent=5 // pred_check_branch
      %184 = sbr.rel (%p182) target = $region20
    $region19: #{up_forward.5} parent=5 // pred_region
      // Predicated region
      $region21: #{up_forward.5} parent=19 // pred_check
        %p185 = pneg %p32
      $region22: #{up_forward.5} parent=19 // pred_check_branch
        %187 = sbr.rel (%p185) target = $region24
      $region23: #{up_forward.5} parent=19 // pred_region
        %p188 = scmp.lt.s32.totalorder %s12, 1
        %s189 = scalar_select %p188, %s12, 1
        %s190 = smul.addr %s189, 32
        %s191 = smul.addr %s190, 8
        %s192 = scalar_lea.vmem %s0, %s191
      $region24: #{up_forward.5} parent=19 // pred_fallthru
        _
      // Predicated region
      $region25: #{up_forward.5} parent=19 // pred_check
        %p193 = pneg %p58
      $region26: #{up_forward.5} parent=19 // pred_check_branch
        %195 = sbr.rel (%p193) target = $region28
      $region27: #{up_forward.5} parent=19 // pred_region
        %p196 = scmp.lt.s32.totalorder %s12, 1
        %s197 = scalar_select %p196, %s12, 1
        %s198 = smul.addr %s197, 32
        %s199 = smul.addr %s198, 8
        %s200 = scalar_lea.vmem %s1, %s199
      $region28: #{up_forward.5} parent=19 // pred_fallthru
        _
    $region20: #{up_forward.5} parent=5 // pred_fallthru
      _
    %p201 = scmp.le.s32.totalorder 1, %s12
    %p202 = scmp.lt.s32.totalorder %s12, 3
    %p203 = pnand %p201, %p202
    %p204 = pneg %p203
    // Predicated region
    $region29: #{up_forward.5} parent=5 // pred_check
      _
    $region30: #{up_forward.5} parent=5 // pred_check_branch
      %206 = sbr.rel (%p203) target = $region32
    $region31: #{up_forward.5} parent=5 // pred_region
      %s207 = ssub.s32 %s12, 1
      %p208 = scmp.lt.s32.totalorder %s17, 1
      %s209 = scalar_select %p208, %s17, 1
      %s210 = smul.addr %s209, 32
      %s211 = smul.addr %s210, 8
      %s212 = scalar_lea.vmem %s0, %s211
      %p213 = pneg %p38
      %p214 = pneg %p35
      %p215 = scmp.lt.s32.totalorder %s17, 1
      %s216 = scalar_select %p215, %s17, 1
      %s217 = smul.addr %s216, 32
      %s218 = smul.addr %s217, 8
      %s219 = scalar_lea.vmem %s1, %s218
      %p220 = pneg %p64
      %p221 = pneg %p61
      %p222 = pneg %p85
      %p223 = pneg %p82
      %p224 = pneg %p111
      %p225 = pneg %p108
      %p226 = scmp.lt.s32.totalorder %s17, 1
      %s227 = scalar_select %p226, %s17, 1
      %s228 = smul.addr %s227, 32
      %s229 = smul.addr %s228, 8
      %s230 = scalar_lea.vmem %s3, %s229
      %p231 = pneg %p137
      %p232 = pneg %p134
      %p233 = scmp.lt.s32.totalorder %s17, 1
      %s234 = scalar_select %p233, %s17, 1
      %s235 = scalar_lea.vmem %s4, %s234
      %p236 = pneg %p163
      %p237 = pneg %p160
      %p238 = scmp.lt.s32.totalorder %s17, 1
      %s239 = scalar_select %p238, %s17, 1
      %s240 = scalar_lea.vmem %s5, %s239
      %p241 = scmp.lt.s32.totalorder %s17, 1
      %s242 = scalar_select %p241, %s17, 1
      %s243 = smul.addr %s242, 32
      %s244 = smul.addr %s243, 8
      %s245 = scalar_lea.vmem %s0, %s244
      %p246 = scmp.lt.s32.totalorder %s17, 1
      %s247 = scalar_select %p246, %s17, 1
      %s248 = smul.addr %s247, 32
      %s249 = smul.addr %s248, 8
      %s250 = scalar_lea.vmem %s1, %s249
      %p251 = scmp.lt.s32.totalorder %s17, 1
      %s252 = scalar_select %p251, %s17, 1
      %s253 = smul.addr %s252, 32
      %s254 = smul.addr %s253, 8
      %s255 = scalar_lea.vmem %s3, %s254
      %p256 = scmp.lt.s32.totalorder %s17, 1
      %s257 = scalar_select %p256, %s17, 1
      %s258 = scalar_lea.vmem %s4, %s257
      %p259 = scmp.lt.s32.totalorder %s17, 1
      %s260 = scalar_select %p259, %s17, 1
      %s261 = scalar_lea.vmem %s5, %s260
      %vm262 = vcmask 64512
      %263 = vst.msk [vmem:[#allocation2] sm:$0xff] %vm262, 0.0
      %264 = vst.msk [vmem:[#allocation2 + $0x8] sm:$0xff] %vm262, 0.0
      %vm265 = vcmask 58368
      %266 = vst.msk [vmem:[#allocation2 + $0x10] sm:$0x3] %vm265, 0.0
      %s267 = scalar_lea.vmem [#allocation2], 408
      %268 = vst.msk [vmem:[%s267] sm:$0xff] %vm262, 0.0
      %269 = vst.msk [vmem:[%s267 + $0x8] sm:$0xff] %vm262, 0.0
      %270 = vst.msk [vmem:[%s267 + $0x10] sm:$0x3] %vm265, 0.0
      %vm271 = vcmask 57344
      %272 = vst.msk [vmem:[#allocation2] sm:$0x1] %vm271, 0.0
      %273 = vst.msk [vmem:[#allocation2 + $0x18] sm:$0x1] %vm271, 0.0
      %274 = vst.msk [vmem:[#allocation2 + $0x30] sm:$0x1] %vm271, 0.0
      %275 = vst.msk [vmem:[#allocation2 + $0x48] sm:$0x1] %vm271, 0.0
      %276 = vst.msk [vmem:[#allocation2 + $0x60] sm:$0x1] %vm271, 0.0
      %277 = vst.msk [vmem:[#allocation2 + $0x78] sm:$0x1] %vm271, 0.0
      %278 = vst.msk [vmem:[#allocation2 + $0x90] sm:$0x1] %vm271, 0.0
      %279 = vst.msk [vmem:[#allocation2 + $0xa8] sm:$0x1] %vm271, 0.0
      %280 = vst.msk [vmem:[#allocation2 + $0xc0] sm:$0x1] %vm271, 0.0
      %281 = vst.msk [vmem:[#allocation2 + $0xd8] sm:$0x1] %vm271, 0.0
      %282 = vst.msk [vmem:[#allocation2 + $0xf0] sm:$0x1] %vm271, 0.0
      %283 = vst.msk [vmem:[#allocation2 + $0x108] sm:$0x1] %vm271, 0.0
      %284 = vst.msk [vmem:[#allocation2 + $0x120] sm:$0x1] %vm271, 0.0
      %285 = vst.msk [vmem:[#allocation2 + $0x138] sm:$0x1] %vm271, 0.0
      %286 = vst.msk [vmem:[#allocation2 + $0x150] sm:$0x1] %vm271, 0.0
      %287 = vst.msk [vmem:[#allocation2 + $0x168] sm:$0x1] %vm271, 0.0
      %288 = vst.msk [vmem:[#allocation2 + $0x180] sm:$0x1] %vm271, 0.0
      %289 = vst.msk [vmem:[#allocation2 + $0x198] sm:$0x1] %vm271, 0.0
      %290 = vst.msk [vmem:[#allocation2 + $0x11] sm:$0x1] %vm271, 0.0
      %291 = vst.msk [vmem:[#allocation2 + $0x29] sm:$0x1] %vm271, 0.0
      %292 = vst.msk [vmem:[#allocation2 + $0x41] sm:$0x1] %vm271, 0.0
      %293 = vst.msk [vmem:[#allocation2 + $0x59] sm:$0x1] %vm271, 0.0
      %294 = vst.msk [vmem:[#allocation2 + $0x71] sm:$0x1] %vm271, 0.0
      %295 = vst.msk [vmem:[#allocation2 + $0x89] sm:$0x1] %vm271, 0.0
      %296 = vst.msk [vmem:[#allocation2 + $0xa1] sm:$0x1] %vm271, 0.0
      %297 = vst.msk [vmem:[#allocation2 + $0xb9] sm:$0x1] %vm271, 0.0
      %298 = vst.msk [vmem:[#allocation2 + $0xd1] sm:$0x1] %vm271, 0.0
      %299 = vst.msk [vmem:[#allocation2 + $0xe9] sm:$0x1] %vm271, 0.0
      %300 = vst.msk [vmem:[#allocation2 + $0x101] sm:$0x1] %vm271, 0.0
      %301 = vst.msk [vmem:[#allocation2 + $0x119] sm:$0x1] %vm271, 0.0
      %302 = vst.msk [vmem:[#allocation2 + $0x131] sm:$0x1] %vm271, 0.0
      %303 = vst.msk [vmem:[#allocation2 + $0x149] sm:$0x1] %vm271, 0.0
      %304 = vst.msk [vmem:[#allocation2 + $0x161] sm:$0x1] %vm271, 0.0
      %305 = vst.msk [vmem:[#allocation2 + $0x179] sm:$0x1] %vm271, 0.0
      %306 = vst.msk [vmem:[#allocation2 + $0x191] sm:$0x1] %vm271, 0.0
      %307 = vst.msk [vmem:[#allocation2 + $0x1a9] sm:$0x1] %vm271, 0.0
      %v308 = vld [vmem:[%s245] sm:$0xff]
      %v309 = vld [vmem:[%s245 + $0x8] sm:$0xff]
      %v310 = vld [vmem:[%s245 + $0x10] sm:$0xff]
      %v311 = vld [vmem:[%s245 + $0x18] sm:$0xff]
      %v312 = vld [vmem:[%s245 + $0x20] sm:$0xff]
      %v313 = vld [vmem:[%s245 + $0x28] sm:$0xff]
      %v314 = vld [vmem:[%s245 + $0x30] sm:$0xff]
      %v315 = vld [vmem:[%s245 + $0x38] sm:$0xff]
      %v316 = vld [vmem:[%s245 + $0x40] sm:$0xff]
      %v317 = vld [vmem:[%s245 + $0x48] sm:$0xff]
      %v318 = vld [vmem:[%s245 + $0x50] sm:$0xff]
      %v319 = vld [vmem:[%s245 + $0x58] sm:$0xff]
      %v320 = vld [vmem:[%s245 + $0x60] sm:$0xff]
      %v321 = vld [vmem:[%s245 + $0x68] sm:$0xff]
      %v322 = vld [vmem:[%s245 + $0x70] sm:$0xff]
      %v323 = vld [vmem:[%s245 + $0x78] sm:$0xff]
      %v324 = vld [vmem:[%s245 + $0x80] sm:$0xff]
      %v325 = vld [vmem:[%s245 + $0x88] sm:$0xff]
      %v326 = vld [vmem:[%s245 + $0x90] sm:$0xff]
      %v327 = vld [vmem:[%s245 + $0x98] sm:$0xff]
      %v328 = vld [vmem:[%s245 + $0xa0] sm:$0xff]
      %v329 = vld [vmem:[%s245 + $0xa8] sm:$0xff]
      %v330 = vld [vmem:[%s245 + $0xb0] sm:$0xff]
      %v331 = vld [vmem:[%s245 + $0xb8] sm:$0xff]
      %v332 = vld [vmem:[%s245 + $0xc0] sm:$0xff]
      %v333 = vld [vmem:[%s245 + $0xc8] sm:$0xff]
      %v334 = vld [vmem:[%s245 + $0xd0] sm:$0xff]
      %v335 = vld [vmem:[%s245 + $0xd8] sm:$0xff]
      %v336 = vld [vmem:[%s245 + $0xe0] sm:$0xff]
      %v337 = vld [vmem:[%s245 + $0xe8] sm:$0xff]
      %v338 = vld [vmem:[%s245 + $0xf0] sm:$0xff]
      %v339 = vld [vmem:[%s245 + $0xf8] sm:$0xff]
      %s340 = scalar_lea.vmem [#allocation2], 24
      %vm341 = vcmask 31744
      %342 = vst.msk [vmem:[%s340 + $0x1] sm:$0xff] %vm341, %v308
      %343 = vst.msk [vmem:[%s340 + $0x9] sm:$0xff] %vm341, %v309
      %344 = vst.msk [vmem:[%s340 + $0x19] sm:$0xff] %vm341, %v310
      %345 = vst.msk [vmem:[%s340 + $0x21] sm:$0xff] %vm341, %v311
      %346 = vst.msk [vmem:[%s340 + $0x31] sm:$0xff] %vm341, %v312
      %347 = vst.msk [vmem:[%s340 + $0x39] sm:$0xff] %vm341, %v313
      %348 = vst.msk [vmem:[%s340 + $0x49] sm:$0xff] %vm341, %v314
      %349 = vst.msk [vmem:[%s340 + $0x51] sm:$0xff] %vm341, %v315
      %350 = vst.msk [vmem:[%s340 + $0x61] sm:$0xff] %vm341, %v316
      %351 = vst.msk [vmem:[%s340 + $0x69] sm:$0xff] %vm341, %v317
      %352 = vst.msk [vmem:[%s340 + $0x79] sm:$0xff] %vm341, %v318
      %353 = vst.msk [vmem:[%s340 + $0x81] sm:$0xff] %vm341, %v319
      %354 = vst.msk [vmem:[%s340 + $0x91] sm:$0xff] %vm341, %v320
      %355 = vst.msk [vmem:[%s340 + $0x99] sm:$0xff] %vm341, %v321
      %356 = vst.msk [vmem:[%s340 + $0xa9] sm:$0xff] %vm341, %v322
      %357 = vst.msk [vmem:[%s340 + $0xb1] sm:$0xff] %vm341, %v323
      %358 = vst.msk [vmem:[%s340 + $0xc1] sm:$0xff] %vm341, %v324
      %359 = vst.msk [vmem:[%s340 + $0xc9] sm:$0xff] %vm341, %v325
      %360 = vst.msk [vmem:[%s340 + $0xd9] sm:$0xff] %vm341, %v326
      %361 = vst.msk [vmem:[%s340 + $0xe1] sm:$0xff] %vm341, %v327
      %362 = vst.msk [vmem:[%s340 + $0xf1] sm:$0xff] %vm341, %v328
      %363 = vst.msk [vmem:[%s340 + $0xf9] sm:$0xff] %vm341, %v329
      %364 = vst.msk [vmem:[%s340 + $0x109] sm:$0xff] %vm341, %v330
      %365 = vst.msk [vmem:[%s340 + $0x111] sm:$0xff] %vm341, %v331
      %366 = vst.msk [vmem:[%s340 + $0x121] sm:$0xff] %vm341, %v332
      %367 = vst.msk [vmem:[%s340 + $0x129] sm:$0xff] %vm341, %v333
      %368 = vst.msk [vmem:[%s340 + $0x139] sm:$0xff] %vm341, %v334
      %369 = vst.msk [vmem:[%s340 + $0x141] sm:$0xff] %vm341, %v335
      %370 = vst.msk [vmem:[%s340 + $0x151] sm:$0xff] %vm341, %v336
      %371 = vst.msk [vmem:[%s340 + $0x159] sm:$0xff] %vm341, %v337
      %372 = vst.msk [vmem:[%s340 + $0x169] sm:$0xff] %vm341, %v338
      %373 = vst.msk [vmem:[%s340 + $0x171] sm:$0xff] %vm341, %v339
      %v374 = vld [vmem:[%s250] sm:$0xff]
      %v375 = vld [vmem:[%s250 + $0x8] sm:$0xff]
      %v376 = vld [vmem:[%s250 + $0x10] sm:$0xff]
      %v377 = vld [vmem:[%s250 + $0x18] sm:$0xff]
      %v378 = vld [vmem:[%s250 + $0x20] sm:$0xff]
      %v379 = vld [vmem:[%s250 + $0x28] sm:$0xff]
      %v380 = vld [vmem:[%s250 + $0x30] sm:$0xff]
      %v381 = vld [vmem:[%s250 + $0x38] sm:$0xff]
      %v382 = vld [vmem:[%s250 + $0x40] sm:$0xff]
      %v383 = vld [vmem:[%s250 + $0x48] sm:$0xff]
      %v384 = vld [vmem:[%s250 + $0x50] sm:$0xff]
      %v385 = vld [vmem:[%s250 + $0x58] sm:$0xff]
      %v386 = vld [vmem:[%s250 + $0x60] sm:$0xff]
      %v387 = vld [vmem:[%s250 + $0x68] sm:$0xff]
      %v388 = vld [vmem:[%s250 + $0x70] sm:$0xff]
      %v389 = vld [vmem:[%s250 + $0x78] sm:$0xff]
      %v390 = vld [vmem:[%s250 + $0x80] sm:$0xff]
      %v391 = vld [vmem:[%s250 + $0x88] sm:$0xff]
      %v392 = vld [vmem:[%s250 + $0x90] sm:$0xff]
      %v393 = vld [vmem:[%s250 + $0x98] sm:$0xff]
      %v394 = vld [vmem:[%s250 + $0xa0] sm:$0xff]
      %v395 = vld [vmem:[%s250 + $0xa8] sm:$0xff]
      %v396 = vld [vmem:[%s250 + $0xb0] sm:$0xff]
      %v397 = vld [vmem:[%s250 + $0xb8] sm:$0xff]
      %v398 = vld [vmem:[%s250 + $0xc0] sm:$0xff]
      %v399 = vld [vmem:[%s250 + $0xc8] sm:$0xff]
      %v400 = vld [vmem:[%s250 + $0xd0] sm:$0xff]
      %v401 = vld [vmem:[%s250 + $0xd8] sm:$0xff]
      %v402 = vld [vmem:[%s250 + $0xe0] sm:$0xff]
      %v403 = vld [vmem:[%s250 + $0xe8] sm:$0xff]
      %v404 = vld [vmem:[%s250 + $0xf0] sm:$0xff]
      %v405 = vld [vmem:[%s250 + $0xf8] sm:$0xff]
      %438 = vrot.lane.b32.xlu0 %v374, 4
      %v439 = vpop.permute.xlu0 %438
      %440 = vrot.lane.b32.xlu0 %v375, 4
      %v441 = vpop.permute.xlu0 %440
      %442 = vrot.lane.b32.xlu0 %v376, 4
      %v443 = vpop.permute.xlu0 %442
      %444 = vrot.lane.b32.xlu0 %v377, 4
      %v445 = vpop.permute.xlu0 %444
      %446 = vrot.lane.b32.xlu0 %v378, 4
      %v447 = vpop.permute.xlu0 %446
      %448 = vrot.lane.b32.xlu0 %v379, 4
      %v449 = vpop.permute.xlu0 %448
      %450 = vrot.lane.b32.xlu0 %v380, 4
      %v451 = vpop.permute.xlu0 %450
      %452 = vrot.lane.b32.xlu0 %v381, 4
      %v453 = vpop.permute.xlu0 %452
      %454 = vrot.lane.b32.xlu0 %v382, 4
      %v455 = vpop.permute.xlu0 %454
      %456 = vrot.lane.b32.xlu0 %v383, 4
      %v457 = vpop.permute.xlu0 %456
      %458 = vrot.lane.b32.xlu0 %v384, 4
      %v459 = vpop.permute.xlu0 %458
      %460 = vrot.lane.b32.xlu0 %v385, 4
      %v461 = vpop.permute.xlu0 %460
      %462 = vrot.lane.b32.xlu0 %v386, 4
      %v463 = vpop.permute.xlu0 %462
      %464 = vrot.lane.b32.xlu0 %v387, 4
      %v465 = vpop.permute.xlu0 %464
      %466 = vrot.lane.b32.xlu0 %v388, 4
      %v467 = vpop.permute.xlu0 %466
      %468 = vrot.lane.b32.xlu0 %v389, 4
      %v469 = vpop.permute.xlu0 %468
      %470 = vrot.lane.b32.xlu0 %v390, 4
      %v471 = vpop.permute.xlu0 %470
      %472 = vrot.lane.b32.xlu0 %v391, 4
      %v473 = vpop.permute.xlu0 %472
      %474 = vrot.lane.b32.xlu0 %v392, 4
      %v475 = vpop.permute.xlu0 %474
      %476 = vrot.lane.b32.xlu0 %v393, 4
      %v477 = vpop.permute.xlu0 %476
      %478 = vrot.lane.b32.xlu0 %v394, 4
      %v479 = vpop.permute.xlu0 %478
      %480 = vrot.lane.b32.xlu0 %v395, 4
      %v481 = vpop.permute.xlu0 %480
      %482 = vrot.lane.b32.xlu0 %v396, 4
      %v483 = vpop.permute.xlu0 %482
      %484 = vrot.lane.b32.xlu0 %v397, 4
      %v485 = vpop.permute.xlu0 %484
      %486 = vrot.lane.b32.xlu0 %v398, 4
      %v487 = vpop.permute.xlu0 %486
      %488 = vrot.lane.b32.xlu0 %v399, 4
      %v489 = vpop.permute.xlu0 %488
      %490 = vrot.lane.b32.xlu0 %v400, 4
      %v491 = vpop.permute.xlu0 %490
      %492 = vrot.lane.b32.xlu0 %v401, 4
      %v493 = vpop.permute.xlu0 %492
      %494 = vrot.lane.b32.xlu0 %v402, 4
      %v495 = vpop.permute.xlu0 %494
      %496 = vrot.lane.b32.xlu0 %v403, 4
      %v497 = vpop.permute.xlu0 %496
      %498 = vrot.lane.b32.xlu0 %v404, 4
      %v499 = vpop.permute.xlu0 %498
      %500 = vrot.lane.b32.xlu0 %v405, 4
      %v501 = vpop.permute.xlu0 %500
      %vm534 = vcmask 64544
      %535 = vst.msk [vmem:[%s340 + $0x1] sm:$0xff] %vm534, %v439
      %536 = vst.msk [vmem:[%s340 + $0x9] sm:$0xff] %vm534, %v441
      %537 = vst.msk [vmem:[%s340 + $0x19] sm:$0xff] %vm534, %v443
      %538 = vst.msk [vmem:[%s340 + $0x21] sm:$0xff] %vm534, %v445
      %539 = vst.msk [vmem:[%s340 + $0x31] sm:$0xff] %vm534, %v447
      %540 = vst.msk [vmem:[%s340 + $0x39] sm:$0xff] %vm534, %v449
      %541 = vst.msk [vmem:[%s340 + $0x49] sm:$0xff] %vm534, %v451
      %542 = vst.msk [vmem:[%s340 + $0x51] sm:$0xff] %vm534, %v453
      %543 = vst.msk [vmem:[%s340 + $0x61] sm:$0xff] %vm534, %v455
      %544 = vst.msk [vmem:[%s340 + $0x69] sm:$0xff] %vm534, %v457
      %545 = vst.msk [vmem:[%s340 + $0x79] sm:$0xff] %vm534, %v459
      %546 = vst.msk [vmem:[%s340 + $0x81] sm:$0xff] %vm534, %v461
      %547 = vst.msk [vmem:[%s340 + $0x91] sm:$0xff] %vm534, %v463
      %548 = vst.msk [vmem:[%s340 + $0x99] sm:$0xff] %vm534, %v465
      %549 = vst.msk [vmem:[%s340 + $0xa9] sm:$0xff] %vm534, %v467
      %550 = vst.msk [vmem:[%s340 + $0xb1] sm:$0xff] %vm534, %v469
      %551 = vst.msk [vmem:[%s340 + $0xc1] sm:$0xff] %vm534, %v471
      %552 = vst.msk [vmem:[%s340 + $0xc9] sm:$0xff] %vm534, %v473
      %553 = vst.msk [vmem:[%s340 + $0xd9] sm:$0xff] %vm534, %v475
      %554 = vst.msk [vmem:[%s340 + $0xe1] sm:$0xff] %vm534, %v477
      %555 = vst.msk [vmem:[%s340 + $0xf1] sm:$0xff] %vm534, %v479
      %556 = vst.msk [vmem:[%s340 + $0xf9] sm:$0xff] %vm534, %v481
      %557 = vst.msk [vmem:[%s340 + $0x109] sm:$0xff] %vm534, %v483
      %558 = vst.msk [vmem:[%s340 + $0x111] sm:$0xff] %vm534, %v485
      %559 = vst.msk [vmem:[%s340 + $0x121] sm:$0xff] %vm534, %v487
      %560 = vst.msk [vmem:[%s340 + $0x129] sm:$0xff] %vm534, %v489
      %561 = vst.msk [vmem:[%s340 + $0x139] sm:$0xff] %vm534, %v491
      %562 = vst.msk [vmem:[%s340 + $0x141] sm:$0xff] %vm534, %v493
      %563 = vst.msk [vmem:[%s340 + $0x151] sm:$0xff] %vm534, %v495
      %564 = vst.msk [vmem:[%s340 + $0x159] sm:$0xff] %vm534, %v497
      %565 = vst.msk [vmem:[%s340 + $0x169] sm:$0xff] %vm534, %v499
      %566 = vst.msk [vmem:[%s340 + $0x171] sm:$0xff] %vm534, %v501
      %v567 = vld [vmem:[#allocation2] sm:$0xff]
      %v568 = vld [vmem:[#allocation2 + $0x8] sm:$0xff]
      %v569 = vld [vmem:[#allocation2 + $0x18] sm:$0xff]
      %v570 = vld [vmem:[#allocation2 + $0x20] sm:$0xff]
      %v571 = vld [vmem:[#allocation2 + $0x30] sm:$0xff]
      %v572 = vld [vmem:[#allocation2 + $0x38] sm:$0xff]
      %v573 = vld [vmem:[#allocation2 + $0x48] sm:$0xff]
      %v574 = vld [vmem:[#allocation2 + $0x50] sm:$0xff]
      %v575 = vld [vmem:[#allocation2 + $0x60] sm:$0xff]
      %v576 = vld [vmem:[#allocation2 + $0x68] sm:$0xff]
      %v577 = vld [vmem:[#allocation2 + $0x78] sm:$0xff]
      %v578 = vld [vmem:[#allocation2 + $0x80] sm:$0xff]
      %v579 = vld [vmem:[#allocation2 + $0x90] sm:$0xff]
      %v580 = vld [vmem:[#allocation2 + $0x98] sm:$0xff]
      %v581 = vld [vmem:[#allocation2 + $0xa8] sm:$0xff]
      %v582 = vld [vmem:[#allocation2 + $0xb0] sm:$0xff]
      %v583 = vld [vmem:[#allocation2 + $0xc0] sm:$0xff]
      %v584 = vld [vmem:[#allocation2 + $0xc8] sm:$0xff]
      %v585 = vld [vmem:[#allocation2 + $0xd8] sm:$0xff]
      %v586 = vld [vmem:[#allocation2 + $0xe0] sm:$0xff]
      %v587 = vld [vmem:[#allocation2 + $0xf0] sm:$0xff]
      %v588 = vld [vmem:[#allocation2 + $0xf8] sm:$0xff]
      %v589 = vld [vmem:[#allocation2 + $0x108] sm:$0xff]
      %v590 = vld [vmem:[#allocation2 + $0x110] sm:$0xff]
      %v591 = vld [vmem:[#allocation2 + $0x120] sm:$0xff]
      %v592 = vld [vmem:[#allocation2 + $0x128] sm:$0xff]
      %v593 = vld [vmem:[#allocation2 + $0x138] sm:$0xff]
      %v594 = vld [vmem:[#allocation2 + $0x140] sm:$0xff]
      %v595 = vld [vmem:[#allocation2 + $0x150] sm:$0xff]
      %v596 = vld [vmem:[#allocation2 + $0x158] sm:$0xff]
      %v597 = vld [vmem:[#allocation2 + $0x168] sm:$0xff]
      %v598 = vld [vmem:[#allocation2 + $0x170] sm:$0xff]
      %599 = vst.msk [vmem:[#allocation3] sm:$0xff] %vm262, %v567
      %600 = vst.msk [vmem:[#allocation3 + $0x8] sm:$0xff] %vm262, %v568
      %601 = vst.msk [vmem:[#allocation3 + $0x10] sm:$0xff] %vm262, %v569
      %602 = vst.msk [vmem:[#allocation3 + $0x18] sm:$0xff] %vm262, %v570
      %603 = vst.msk [vmem:[#allocation3 + $0x20] sm:$0xff] %vm262, %v571
      %604 = vst.msk [vmem:[#allocation3 + $0x28] sm:$0xff] %vm262, %v572
      %605 = vst.msk [vmem:[#allocation3 + $0x30] sm:$0xff] %vm262, %v573
      %606 = vst.msk [vmem:[#allocation3 + $0x38] sm:$0xff] %vm262, %v574
      %607 = vst.msk [vmem:[#allocation3 + $0x40] sm:$0xff] %vm262, %v575
      %608 = vst.msk [vmem:[#allocation3 + $0x48] sm:$0xff] %vm262, %v576
      %609 = vst.msk [vmem:[#allocation3 + $0x50] sm:$0xff] %vm262, %v577
      %610 = vst.msk [vmem:[#allocation3 + $0x58] sm:$0xff] %vm262, %v578
      %611 = vst.msk [vmem:[#allocation3 + $0x60] sm:$0xff] %vm262, %v579
      %612 = vst.msk [vmem:[#allocation3 + $0x68] sm:$0xff] %vm262, %v580
      %613 = vst.msk [vmem:[#allocation3 + $0x70] sm:$0xff] %vm262, %v581
      %614 = vst.msk [vmem:[#allocation3 + $0x78] sm:$0xff] %vm262, %v582
      %615 = vst.msk [vmem:[#allocation3 + $0x80] sm:$0xff] %vm262, %v583
      %616 = vst.msk [vmem:[#allocation3 + $0x88] sm:$0xff] %vm262, %v584
      %617 = vst.msk [vmem:[#allocation3 + $0x90] sm:$0xff] %vm262, %v585
      %618 = vst.msk [vmem:[#allocation3 + $0x98] sm:$0xff] %vm262, %v586
      %619 = vst.msk [vmem:[#allocation3 + $0xa0] sm:$0xff] %vm262, %v587
      %620 = vst.msk [vmem:[#allocation3 + $0xa8] sm:$0xff] %vm262, %v588
      %621 = vst.msk [vmem:[#allocation3 + $0xb0] sm:$0xff] %vm262, %v589
      %622 = vst.msk [vmem:[#allocation3 + $0xb8] sm:$0xff] %vm262, %v590
      %623 = vst.msk [vmem:[#allocation3 + $0xc0] sm:$0xff] %vm262, %v591
      %624 = vst.msk [vmem:[#allocation3 + $0xc8] sm:$0xff] %vm262, %v592
      %625 = vst.msk [vmem:[#allocation3 + $0xd0] sm:$0xff] %vm262, %v593
      %626 = vst.msk [vmem:[#allocation3 + $0xd8] sm:$0xff] %vm262, %v594
      %627 = vst.msk [vmem:[#allocation3 + $0xe0] sm:$0xff] %vm262, %v595
      %628 = vst.msk [vmem:[#allocation3 + $0xe8] sm:$0xff] %vm262, %v596
      %629 = vst.msk [vmem:[#allocation3 + $0xf0] sm:$0xff] %vm262, %v597
      %630 = vst.msk [vmem:[#allocation3 + $0xf8] sm:$0xff] %vm262, %v598
      %v631 = vld [vmem:[#allocation2 + $0x1] sm:$0xff]
      %v632 = vld [vmem:[#allocation2 + $0x9] sm:$0xff]
      %v633 = vld [vmem:[#allocation2 + $0x19] sm:$0xff]
      %v634 = vld [vmem:[#allocation2 + $0x21] sm:$0xff]
      %v635 = vld [vmem:[#allocation2 + $0x31] sm:$0xff]
      %v636 = vld [vmem:[#allocation2 + $0x39] sm:$0xff]
      %v637 = vld [vmem:[#allocation2 + $0x49] sm:$0xff]
      %v638 = vld [vmem:[#allocation2 + $0x51] sm:$0xff]
      %v639 = vld [vmem:[#allocation2 + $0x61] sm:$0xff]
      %v640 = vld [vmem:[#allocation2 + $0x69] sm:$0xff]
      %v641 = vld [vmem:[#allocation2 + $0x79] sm:$0xff]
      %v642 = vld [vmem:[#allocation2 + $0x81] sm:$0xff]
      %v643 = vld [vmem:[#allocation2 + $0x91] sm:$0xff]
      %v644 = vld [vmem:[#allocation2 + $0x99] sm:$0xff]
      %v645 = vld [vmem:[#allocation2 + $0xa9] sm:$0xff]
      %v646 = vld [vmem:[#allocation2 + $0xb1] sm:$0xff]
      %v647 = vld [vmem:[#allocation2 + $0xc1] sm:$0xff]
      %v648 = vld [vmem:[#allocation2 + $0xc9] sm:$0xff]
      %v649 = vld [vmem:[#allocation2 + $0xd9] sm:$0xff]
      %v650 = vld [vmem:[#allocation2 + $0xe1] sm:$0xff]
      %v651 = vld [vmem:[#allocation2 + $0xf1] sm:$0xff]
      %v652 = vld [vmem:[#allocation2 + $0xf9] sm:$0xff]
      %v653 = vld [vmem:[#allocation2 + $0x109] sm:$0xff]
      %v654 = vld [vmem:[#allocation2 + $0x111] sm:$0xff]
      %v655 = vld [vmem:[#allocation2 + $0x121] sm:$0xff]
      %v656 = vld [vmem:[#allocation2 + $0x129] sm:$0xff]
      %v657 = vld [vmem:[#allocation2 + $0x139] sm:$0xff]
      %v658 = vld [vmem:[#allocation2 + $0x141] sm:$0xff]
      %v659 = vld [vmem:[#allocation2 + $0x151] sm:$0xff]
      %v660 = vld [vmem:[#allocation2 + $0x159] sm:$0xff]
      %v661 = vld [vmem:[#allocation2 + $0x169] sm:$0xff]
      %v662 = vld [vmem:[#allocation2 + $0x171] sm:$0xff]
      %695 = vrot.lane.b32.xlu0 %v631, 8
      %v696 = vpop.permute.xlu0 %695
      %697 = vrot.lane.b32.xlu0 %v632, 8
      %v698 = vpop.permute.xlu0 %697
      %699 = vrot.lane.b32.xlu0 %v633, 8
      %v700 = vpop.permute.xlu0 %699
      %701 = vrot.lane.b32.xlu0 %v634, 8
      %v702 = vpop.permute.xlu0 %701
      %703 = vrot.lane.b32.xlu0 %v635, 8
      %v704 = vpop.permute.xlu0 %703
      %705 = vrot.lane.b32.xlu0 %v636, 8
      %v706 = vpop.permute.xlu0 %705
      %707 = vrot.lane.b32.xlu0 %v637, 8
      %v708 = vpop.permute.xlu0 %707
      %709 = vrot.lane.b32.xlu0 %v638, 8
      %v710 = vpop.permute.xlu0 %709
      %711 = vrot.lane.b32.xlu0 %v639, 8
      %v712 = vpop.permute.xlu0 %711
      %713 = vrot.lane.b32.xlu0 %v640, 8
      %v714 = vpop.permute.xlu0 %713
      %715 = vrot.lane.b32.xlu0 %v641, 8
      %v716 = vpop.permute.xlu0 %715
      %717 = vrot.lane.b32.xlu0 %v642, 8
      %v718 = vpop.permute.xlu0 %717
      %719 = vrot.lane.b32.xlu0 %v643, 8
      %v720 = vpop.permute.xlu0 %719
      %721 = vrot.lane.b32.xlu0 %v644, 8
      %v722 = vpop.permute.xlu0 %721
      %723 = vrot.lane.b32.xlu0 %v645, 8
      %v724 = vpop.permute.xlu0 %723
      %725 = vrot.lane.b32.xlu0 %v646, 8
      %v726 = vpop.permute.xlu0 %725
      %727 = vrot.lane.b32.xlu0 %v647, 8
      %v728 = vpop.permute.xlu0 %727
      %729 = vrot.lane.b32.xlu0 %v648, 8
      %v730 = vpop.permute.xlu0 %729
      %731 = vrot.lane.b32.xlu0 %v649, 8
      %v732 = vpop.permute.xlu0 %731
      %733 = vrot.lane.b32.xlu0 %v650, 8
      %v734 = vpop.permute.xlu0 %733
      %735 = vrot.lane.b32.xlu0 %v651, 8
      %v736 = vpop.permute.xlu0 %735
      %737 = vrot.lane.b32.xlu0 %v652, 8
      %v738 = vpop.permute.xlu0 %737
      %739 = vrot.lane.b32.xlu0 %v653, 8
      %v740 = vpop.permute.xlu0 %739
      %741 = vrot.lane.b32.xlu0 %v654, 8
      %v742 = vpop.permute.xlu0 %741
      %743 = vrot.lane.b32.xlu0 %v655, 8
      %v744 = vpop.permute.xlu0 %743
      %745 = vrot.lane.b32.xlu0 %v656, 8
      %v746 = vpop.permute.xlu0 %745
      %747 = vrot.lane.b32.xlu0 %v657, 8
      %v748 = vpop.permute.xlu0 %747
      %749 = vrot.lane.b32.xlu0 %v658, 8
      %v750 = vpop.permute.xlu0 %749
      %751 = vrot.lane.b32.xlu0 %v659, 8
      %v752 = vpop.permute.xlu0 %751
      %753 = vrot.lane.b32.xlu0 %v660, 8
      %v754 = vpop.permute.xlu0 %753
      %755 = vrot.lane.b32.xlu0 %v661, 8
      %v756 = vpop.permute.xlu0 %755
      %757 = vrot.lane.b32.xlu0 %v662, 8
      %v758 = vpop.permute.xlu0 %757
      %vm791 = vcmask 130112
      %792 = vst.msk [vmem:[#allocation3] sm:$0xff] %vm791, %v696
      %793 = vst.msk [vmem:[#allocation3 + $0x8] sm:$0xff] %vm791, %v698
      %794 = vst.msk [vmem:[#allocation3 + $0x10] sm:$0xff] %vm791, %v700
      %795 = vst.msk [vmem:[#allocation3 + $0x18] sm:$0xff] %vm791, %v702
      %796 = vst.msk [vmem:[#allocation3 + $0x20] sm:$0xff] %vm791, %v704
      %797 = vst.msk [vmem:[#allocation3 + $0x28] sm:$0xff] %vm791, %v706
      %798 = vst.msk [vmem:[#allocation3 + $0x30] sm:$0xff] %vm791, %v708
      %799 = vst.msk [vmem:[#allocation3 + $0x38] sm:$0xff] %vm791, %v710
      %800 = vst.msk [vmem:[#allocation3 + $0x40] sm:$0xff] %vm791, %v712
      %801 = vst.msk [vmem:[#allocation3 + $0x48] sm:$0xff] %vm791, %v714
      %802 = vst.msk [vmem:[#allocation3 + $0x50] sm:$0xff] %vm791, %v716
      %803 = vst.msk [vmem:[#allocation3 + $0x58] sm:$0xff] %vm791, %v718
      %804 = vst.msk [vmem:[#allocation3 + $0x60] sm:$0xff] %vm791, %v720
      %805 = vst.msk [vmem:[#allocation3 + $0x68] sm:$0xff] %vm791, %v722
      %806 = vst.msk [vmem:[#allocation3 + $0x70] sm:$0xff] %vm791, %v724
      %807 = vst.msk [vmem:[#allocation3 + $0x78] sm:$0xff] %vm791, %v726
      %808 = vst.msk [vmem:[#allocation3 + $0x80] sm:$0xff] %vm791, %v728
      %809 = vst.msk [vmem:[#allocation3 + $0x88] sm:$0xff] %vm791, %v730
      %810 = vst.msk [vmem:[#allocation3 + $0x90] sm:$0xff] %vm791, %v732
      %811 = vst.msk [vmem:[#allocation3 + $0x98] sm:$0xff] %vm791, %v734
      %812 = vst.msk [vmem:[#allocation3 + $0xa0] sm:$0xff] %vm791, %v736
      %813 = vst.msk [vmem:[#allocation3 + $0xa8] sm:$0xff] %vm791, %v738
      %814 = vst.msk [vmem:[#allocation3 + $0xb0] sm:$0xff] %vm791, %v740
      %815 = vst.msk [vmem:[#allocation3 + $0xb8] sm:$0xff] %vm791, %v742
      %816 = vst.msk [vmem:[#allocation3 + $0xc0] sm:$0xff] %vm791, %v744
      %817 = vst.msk [vmem:[#allocation3 + $0xc8] sm:$0xff] %vm791, %v746
      %818 = vst.msk [vmem:[#allocation3 + $0xd0] sm:$0xff] %vm791, %v748
      %819 = vst.msk [vmem:[#allocation3 + $0xd8] sm:$0xff] %vm791, %v750
      %820 = vst.msk [vmem:[#allocation3 + $0xe0] sm:$0xff] %vm791, %v752
      %821 = vst.msk [vmem:[#allocation3 + $0xe8] sm:$0xff] %vm791, %v754
      %822 = vst.msk [vmem:[#allocation3 + $0xf0] sm:$0xff] %vm791, %v756
      %823 = vst.msk [vmem:[#allocation3 + $0xf8] sm:$0xff] %vm791, %v758
      %v824 = vld [vmem:[#allocation2 + $0x2] sm:$0xff]
      %v825 = vld [vmem:[#allocation2 + $0xa] sm:$0xff]
      %v826 = vld [vmem:[#allocation2 + $0x1a] sm:$0xff]
      %v827 = vld [vmem:[#allocation2 + $0x22] sm:$0xff]
      %v828 = vld [vmem:[#allocation2 + $0x32] sm:$0xff]
      %v829 = vld [vmem:[#allocation2 + $0x3a] sm:$0xff]
      %v830 = vld [vmem:[#allocation2 + $0x4a] sm:$0xff]
      %v831 = vld [vmem:[#allocation2 + $0x52] sm:$0xff]
      %v832 = vld [vmem:[#allocation2 + $0x62] sm:$0xff]
      %v833 = vld [vmem:[#allocation2 + $0x6a] sm:$0xff]
      %v834 = vld [vmem:[#allocation2 + $0x7a] sm:$0xff]
      %v835 = vld [vmem:[#allocation2 + $0x82] sm:$0xff]
      %v836 = vld [vmem:[#allocation2 + $0x92] sm:$0xff]
      %v837 = vld [vmem:[#allocation2 + $0x9a] sm:$0xff]
      %v838 = vld [vmem:[#allocation2 + $0xaa] sm:$0xff]
      %v839 = vld [vmem:[#allocation2 + $0xb2] sm:$0xff]
      %v840 = vld [vmem:[#allocation2 + $0xc2] sm:$0xff]
      %v841 = vld [vmem:[#allocation2 + $0xca] sm:$0xff]
      %v842 = vld [vmem:[#allocation2 + $0xda] sm:$0xff]
      %v843 = vld [vmem:[#allocation2 + $0xe2] sm:$0xff]
      %v844 = vld [vmem:[#allocation2 + $0xf2] sm:$0xff]
      %v845 = vld [vmem:[#allocation2 + $0xfa] sm:$0xff]
      %v846 = vld [vmem:[#allocation2 + $0x10a] sm:$0xff]
      %v847 = vld [vmem:[#allocation2 + $0x112] sm:$0xff]
      %v848 = vld [vmem:[#allocation2 + $0x122] sm:$0xff]
      %v849 = vld [vmem:[#allocation2 + $0x12a] sm:$0xff]
      %v850 = vld [vmem:[#allocation2 + $0x13a] sm:$0xff]
      %v851 = vld [vmem:[#allocation2 + $0x142] sm:$0xff]
      %v852 = vld [vmem:[#allocation2 + $0x152] sm:$0xff]
      %v853 = vld [vmem:[#allocation2 + $0x15a] sm:$0xff]
      %v854 = vld [vmem:[#allocation2 + $0x16a] sm:$0xff]
      %v855 = vld [vmem:[#allocation2 + $0x172] sm:$0xff]
      %888 = vrot.lane.b32.xlu0 %v824, 16
      %v889 = vpop.permute.xlu0 %888
      %890 = vrot.lane.b32.xlu0 %v825, 16
      %v891 = vpop.permute.xlu0 %890
      %892 = vrot.lane.b32.xlu0 %v826, 16
      %v893 = vpop.permute.xlu0 %892
      %894 = vrot.lane.b32.xlu0 %v827, 16
      %v895 = vpop.permute.xlu0 %894
      %896 = vrot.lane.b32.xlu0 %v828, 16
      %v897 = vpop.permute.xlu0 %896
      %898 = vrot.lane.b32.xlu0 %v829, 16
      %v899 = vpop.permute.xlu0 %898
      %900 = vrot.lane.b32.xlu0 %v830, 16
      %v901 = vpop.permute.xlu0 %900
      %902 = vrot.lane.b32.xlu0 %v831, 16
      %v903 = vpop.permute.xlu0 %902
      %904 = vrot.lane.b32.xlu0 %v832, 16
      %v905 = vpop.permute.xlu0 %904
      %906 = vrot.lane.b32.xlu0 %v833, 16
      %v907 = vpop.permute.xlu0 %906
      %908 = vrot.lane.b32.xlu0 %v834, 16
      %v909 = vpop.permute.xlu0 %908
      %910 = vrot.lane.b32.xlu0 %v835, 16
      %v911 = vpop.permute.xlu0 %910
      %912 = vrot.lane.b32.xlu0 %v836, 16
      %v913 = vpop.permute.xlu0 %912
      %914 = vrot.lane.b32.xlu0 %v837, 16
      %v915 = vpop.permute.xlu0 %914
      %916 = vrot.lane.b32.xlu0 %v838, 16
      %v917 = vpop.permute.xlu0 %916
      %918 = vrot.lane.b32.xlu0 %v839, 16
      %v919 = vpop.permute.xlu0 %918
      %920 = vrot.lane.b32.xlu0 %v840, 16
      %v921 = vpop.permute.xlu0 %920
      %922 = vrot.lane.b32.xlu0 %v841, 16
      %v923 = vpop.permute.xlu0 %922
      %924 = vrot.lane.b32.xlu0 %v842, 16
      %v925 = vpop.permute.xlu0 %924
      %926 = vrot.lane.b32.xlu0 %v843, 16
      %v927 = vpop.permute.xlu0 %926
      %928 = vrot.lane.b32.xlu0 %v844, 16
      %v929 = vpop.permute.xlu0 %928
      %930 = vrot.lane.b32.xlu0 %v845, 16
      %v931 = vpop.permute.xlu0 %930
      %932 = vrot.lane.b32.xlu0 %v846, 16
      %v933 = vpop.permute.xlu0 %932
      %934 = vrot.lane.b32.xlu0 %v847, 16
      %v935 = vpop.permute.xlu0 %934
      %936 = vrot.lane.b32.xlu0 %v848, 16
      %v937 = vpop.permute.xlu0 %936
      %938 = vrot.lane.b32.xlu0 %v849, 16
      %v939 = vpop.permute.xlu0 %938
      %940 = vrot.lane.b32.xlu0 %v850, 16
      %v941 = vpop.permute.xlu0 %940
      %942 = vrot.lane.b32.xlu0 %v851, 16
      %v943 = vpop.permute.xlu0 %942
      %944 = vrot.lane.b32.xlu0 %v852, 16
      %v945 = vpop.permute.xlu0 %944
      %946 = vrot.lane.b32.xlu0 %v853, 16
      %v947 = vpop.permute.xlu0 %946
      %948 = vrot.lane.b32.xlu0 %v854, 16
      %v949 = vpop.permute.xlu0 %948
      %950 = vrot.lane.b32.xlu0 %v855, 16
      %v951 = vpop.permute.xlu0 %950
      %vm984 = vcmask 195712
      %985 = vst.msk [vmem:[#allocation3] sm:$0xff] %vm984, %v889
      %986 = vst.msk [vmem:[#allocation3 + $0x8] sm:$0xff] %vm984, %v891
      %987 = vst.msk [vmem:[#allocation3 + $0x10] sm:$0xff] %vm984, %v893
      %988 = vst.msk [vmem:[#allocation3 + $0x18] sm:$0xff] %vm984, %v895
      %989 = vst.msk [vmem:[#allocation3 + $0x20] sm:$0xff] %vm984, %v897
      %990 = vst.msk [vmem:[#allocation3 + $0x28] sm:$0xff] %vm984, %v899
      %991 = vst.msk [vmem:[#allocation3 + $0x30] sm:$0xff] %vm984, %v901
      %992 = vst.msk [vmem:[#allocation3 + $0x38] sm:$0xff] %vm984, %v903
      %993 = vst.msk [vmem:[#allocation3 + $0x40] sm:$0xff] %vm984, %v905
      %994 = vst.msk [vmem:[#allocation3 + $0x48] sm:$0xff] %vm984, %v907
      %995 = vst.msk [vmem:[#allocation3 + $0x50] sm:$0xff] %vm984, %v909
      %996 = vst.msk [vmem:[#allocation3 + $0x58] sm:$0xff] %vm984, %v911
      %997 = vst.msk [vmem:[#allocation3 + $0x60] sm:$0xff] %vm984, %v913
      %998 = vst.msk [vmem:[#allocation3 + $0x68] sm:$0xff] %vm984, %v915
      %999 = vst.msk [vmem:[#allocation3 + $0x70] sm:$0xff] %vm984, %v917
      %1000 = vst.msk [vmem:[#allocation3 + $0x78] sm:$0xff] %vm984, %v919
      %1001 = vst.msk [vmem:[#allocation3 + $0x80] sm:$0xff] %vm984, %v921
      %1002 = vst.msk [vmem:[#allocation3 + $0x88] sm:$0xff] %vm984, %v923
      %1003 = vst.msk [vmem:[#allocation3 + $0x90] sm:$0xff] %vm984, %v925
      %1004 = vst.msk [vmem:[#allocation3 + $0x98] sm:$0xff] %vm984, %v927
      %1005 = vst.msk [vmem:[#allocation3 + $0xa0] sm:$0xff] %vm984, %v929
      %1006 = vst.msk [vmem:[#allocation3 + $0xa8] sm:$0xff] %vm984, %v931
      %1007 = vst.msk [vmem:[#allocation3 + $0xb0] sm:$0xff] %vm984, %v933
      %1008 = vst.msk [vmem:[#allocation3 + $0xb8] sm:$0xff] %vm984, %v935
      %1009 = vst.msk [vmem:[#allocation3 + $0xc0] sm:$0xff] %vm984, %v937
      %1010 = vst.msk [vmem:[#allocation3 + $0xc8] sm:$0xff] %vm984, %v939
      %1011 = vst.msk [vmem:[#allocation3 + $0xd0] sm:$0xff] %vm984, %v941
      %1012 = vst.msk [vmem:[#allocation3 + $0xd8] sm:$0xff] %vm984, %v943
      %1013 = vst.msk [vmem:[#allocation3 + $0xe0] sm:$0xff] %vm984, %v945
      %1014 = vst.msk [vmem:[#allocation3 + $0xe8] sm:$0xff] %vm984, %v947
      %1015 = vst.msk [vmem:[#allocation3 + $0xf0] sm:$0xff] %vm984, %v949
      %1016 = vst.msk [vmem:[#allocation3 + $0xf8] sm:$0xff] %vm984, %v951
      %v1017 = vld [vmem:[%s340] sm:$0xff]
      %v1018 = vld [vmem:[%s340 + $0x8] sm:$0xff]
      %v1019 = vld [vmem:[%s340 + $0x18] sm:$0xff]
      %v1020 = vld [vmem:[%s340 + $0x20] sm:$0xff]
      %v1021 = vld [vmem:[%s340 + $0x30] sm:$0xff]
      %v1022 = vld [vmem:[%s340 + $0x38] sm:$0xff]
      %v1023 = vld [vmem:[%s340 + $0x48] sm:$0xff]
      %v1024 = vld [vmem:[%s340 + $0x50] sm:$0xff]
      %v1025 = vld [vmem:[%s340 + $0x60] sm:$0xff]
      %v1026 = vld [vmem:[%s340 + $0x68] sm:$0xff]
      %v1027 = vld [vmem:[%s340 + $0x78] sm:$0xff]
      %v1028 = vld [vmem:[%s340 + $0x80] sm:$0xff]
      %v1029 = vld [vmem:[%s340 + $0x90] sm:$0xff]
      %v1030 = vld [vmem:[%s340 + $0x98] sm:$0xff]
      %v1031 = vld [vmem:[%s340 + $0xa8] sm:$0xff]
      %v1032 = vld [vmem:[%s340 + $0xb0] sm:$0xff]
      %v1033 = vld [vmem:[%s340 + $0xc0] sm:$0xff]
      %v1034 = vld [vmem:[%s340 + $0xc8] sm:$0xff]
      %v1035 = vld [vmem:[%s340 + $0xd8] sm:$0xff]
      %v1036 = vld [vmem:[%s340 + $0xe0] sm:$0xff]
      %v1037 = vld [vmem:[%s340 + $0xf0] sm:$0xff]
      %v1038 = vld [vmem:[%s340 + $0xf8] sm:$0xff]
      %v1039 = vld [vmem:[%s340 + $0x108] sm:$0xff]
      %v1040 = vld [vmem:[%s340 + $0x110] sm:$0xff]
      %v1041 = vld [vmem:[%s340 + $0x120] sm:$0xff]
      %v1042 = vld [vmem:[%s340 + $0x128] sm:$0xff]
      %v1043 = vld [vmem:[%s340 + $0x138] sm:$0xff]
      %v1044 = vld [vmem:[%s340 + $0x140] sm:$0xff]
      %v1045 = vld [vmem:[%s340 + $0x150] sm:$0xff]
      %v1046 = vld [vmem:[%s340 + $0x158] sm:$0xff]
      %v1047 = vld [vmem:[%s340 + $0x168] sm:$0xff]
      %v1048 = vld [vmem:[%s340 + $0x170] sm:$0xff]
      %1081 = vrot.lane.b32.xlu0 %v1017, 24
      %v1082 = vpop.permute.xlu0 %1081
      %1083 = vrot.lane.b32.xlu0 %v1018, 24
      %v1084 = vpop.permute.xlu0 %1083
      %1085 = vrot.lane.b32.xlu0 %v1019, 24
      %v1086 = vpop.permute.xlu0 %1085
      %1087 = vrot.lane.b32.xlu0 %v1020, 24
      %v1088 = vpop.permute.xlu0 %1087
      %1089 = vrot.lane.b32.xlu0 %v1021, 24
      %v1090 = vpop.permute.xlu0 %1089
      %1091 = vrot.lane.b32.xlu0 %v1022, 24
      %v1092 = vpop.permute.xlu0 %1091
      %1093 = vrot.lane.b32.xlu0 %v1023, 24
      %v1094 = vpop.permute.xlu0 %1093
      %1095 = vrot.lane.b32.xlu0 %v1024, 24
      %v1096 = vpop.permute.xlu0 %1095
      %1097 = vrot.lane.b32.xlu0 %v1025, 24
      %v1098 = vpop.permute.xlu0 %1097
      %1099 = vrot.lane.b32.xlu0 %v1026, 24
      %v1100 = vpop.permute.xlu0 %1099
      %1101 = vrot.lane.b32.xlu0 %v1027, 24
      %v1102 = vpop.permute.xlu0 %1101
      %1103 = vrot.lane.b32.xlu0 %v1028, 24
      %v1104 = vpop.permute.xlu0 %1103
      %1105 = vrot.lane.b32.xlu0 %v1029, 24
      %v1106 = vpop.permute.xlu0 %1105
      %1107 = vrot.lane.b32.xlu0 %v1030, 24
      %v1108 = vpop.permute.xlu0 %1107
      %1109 = vrot.lane.b32.xlu0 %v1031, 24
      %v1110 = vpop.permute.xlu0 %1109
      %1111 = vrot.lane.b32.xlu0 %v1032, 24
      %v1112 = vpop.permute.xlu0 %1111
      %1113 = vrot.lane.b32.xlu0 %v1033, 24
      %v1114 = vpop.permute.xlu0 %1113
      %1115 = vrot.lane.b32.xlu0 %v1034, 24
      %v1116 = vpop.permute.xlu0 %1115
      %1117 = vrot.lane.b32.xlu0 %v1035, 24
      %v1118 = vpop.permute.xlu0 %1117
      %1119 = vrot.lane.b32.xlu0 %v1036, 24
      %v1120 = vpop.permute.xlu0 %1119
      %1121 = vrot.lane.b32.xlu0 %v1037, 24
      %v1122 = vpop.permute.xlu0 %1121
      %1123 = vrot.lane.b32.xlu0 %v1038, 24
      %v1124 = vpop.permute.xlu0 %1123
      %1125 = vrot.lane.b32.xlu0 %v1039, 24
      %v1126 = vpop.permute.xlu0 %1125
      %1127 = vrot.lane.b32.xlu0 %v1040, 24
      %v1128 = vpop.permute.xlu0 %1127
      %1129 = vrot.lane.b32.xlu0 %v1041, 24
      %v1130 = vpop.permute.xlu0 %1129
      %1131 = vrot.lane.b32.xlu0 %v1042, 24
      %v1132 = vpop.permute.xlu0 %1131
      %1133 = vrot.lane.b32.xlu0 %v1043, 24
      %v1134 = vpop.permute.xlu0 %1133
      %1135 = vrot.lane.b32.xlu0 %v1044, 24
      %v1136 = vpop.permute.xlu0 %1135
      %1137 = vrot.lane.b32.xlu0 %v1045, 24
      %v1138 = vpop.permute.xlu0 %1137
      %1139 = vrot.lane.b32.xlu0 %v1046, 24
      %v1140 = vpop.permute.xlu0 %1139
      %1141 = vrot.lane.b32.xlu0 %v1047, 24
      %v1142 = vpop.permute.xlu0 %1141
      %1143 = vrot.lane.b32.xlu0 %v1048, 24
      %v1144 = vpop.permute.xlu0 %1143
      %vm1177 = vcmask 261312
      %1178 = vst.msk [vmem:[#allocation3] sm:$0xff] %vm1177, %v1082
      %1179 = vst.msk [vmem:[#allocation3 + $0x8] sm:$0xff] %vm1177, %v1084
      %1180 = vst.msk [vmem:[#allocation3 + $0x10] sm:$0xff] %vm1177, %v1086
      %1181 = vst.msk [vmem:[#allocation3 + $0x18] sm:$0xff] %vm1177, %v1088
      %1182 = vst.msk [vmem:[#allocation3 + $0x20] sm:$0xff] %vm1177, %v1090
      %1183 = vst.msk [vmem:[#allocation3 + $0x28] sm:$0xff] %vm1177, %v1092
      %1184 = vst.msk [vmem:[#allocation3 + $0x30] sm:$0xff] %vm1177, %v1094
      %1185 = vst.msk [vmem:[#allocation3 + $0x38] sm:$0xff] %vm1177, %v1096
      %1186 = vst.msk [vmem:[#allocation3 + $0x40] sm:$0xff] %vm1177, %v1098
      %1187 = vst.msk [vmem:[#allocation3 + $0x48] sm:$0xff] %vm1177, %v1100
      %1188 = vst.msk [vmem:[#allocation3 + $0x50] sm:$0xff] %vm1177, %v1102
      %1189 = vst.msk [vmem:[#allocation3 + $0x58] sm:$0xff] %vm1177, %v1104
      %1190 = vst.msk [vmem:[#allocation3 + $0x60] sm:$0xff] %vm1177, %v1106
      %1191 = vst.msk [vmem:[#allocation3 + $0x68] sm:$0xff] %vm1177, %v1108
      %1192 = vst.msk [vmem:[#allocation3 + $0x70] sm:$0xff] %vm1177, %v1110
      %1193 = vst.msk [vmem:[#allocation3 + $0x78] sm:$0xff] %vm1177, %v1112
      %1194 = vst.msk [vmem:[#allocation3 + $0x80] sm:$0xff] %vm1177, %v1114
      %1195 = vst.msk [vmem:[#allocation3 + $0x88] sm:$0xff] %vm1177, %v1116
      %1196 = vst.msk [vmem:[#allocation3 + $0x90] sm:$0xff] %vm1177, %v1118
      %1197 = vst.msk [vmem:[#allocation3 + $0x98] sm:$0xff] %vm1177, %v1120
      %1198 = vst.msk [vmem:[#allocation3 + $0xa0] sm:$0xff] %vm1177, %v1122
      %1199 = vst.msk [vmem:[#allocation3 + $0xa8] sm:$0xff] %vm1177, %v1124
      %1200 = vst.msk [vmem:[#allocation3 + $0xb0] sm:$0xff] %vm1177, %v1126
      %1201 = vst.msk [vmem:[#allocation3 + $0xb8] sm:$0xff] %vm1177, %v1128
      %1202 = vst.msk [vmem:[#allocation3 + $0xc0] sm:$0xff] %vm1177, %v1130
      %1203 = vst.msk [vmem:[#allocation3 + $0xc8] sm:$0xff] %vm1177, %v1132
      %1204 = vst.msk [vmem:[#allocation3 + $0xd0] sm:$0xff] %vm1177, %v1134
      %1205 = vst.msk [vmem:[#allocation3 + $0xd8] sm:$0xff] %vm1177, %v1136
      %1206 = vst.msk [vmem:[#allocation3 + $0xe0] sm:$0xff] %vm1177, %v1138
      %1207 = vst.msk [vmem:[#allocation3 + $0xe8] sm:$0xff] %vm1177, %v1140
      %1208 = vst.msk [vmem:[#allocation3 + $0xf0] sm:$0xff] %vm1177, %v1142
      %1209 = vst.msk [vmem:[#allocation3 + $0xf8] sm:$0xff] %vm1177, %v1144
      %v1210 = vld [vmem:[%s340 + $0x1] sm:$0xff]
      %v1211 = vld [vmem:[%s340 + $0x9] sm:$0xff]
      %v1212 = vld [vmem:[%s340 + $0x19] sm:$0xff]
      %v1213 = vld [vmem:[%s340 + $0x21] sm:$0xff]
      %v1214 = vld [vmem:[%s340 + $0x31] sm:$0xff]
      %v1215 = vld [vmem:[%s340 + $0x39] sm:$0xff]
      %v1216 = vld [vmem:[%s340 + $0x49] sm:$0xff]
      %v1217 = vld [vmem:[%s340 + $0x51] sm:$0xff]
      %v1218 = vld [vmem:[%s340 + $0x61] sm:$0xff]
      %v1219 = vld [vmem:[%s340 + $0x69] sm:$0xff]
      %v1220 = vld [vmem:[%s340 + $0x79] sm:$0xff]
      %v1221 = vld [vmem:[%s340 + $0x81] sm:$0xff]
      %v1222 = vld [vmem:[%s340 + $0x91] sm:$0xff]
      %v1223 = vld [vmem:[%s340 + $0x99] sm:$0xff]
      %v1224 = vld [vmem:[%s340 + $0xa9] sm:$0xff]
      %v1225 = vld [vmem:[%s340 + $0xb1] sm:$0xff]
      %v1226 = vld [vmem:[%s340 + $0xc1] sm:$0xff]
      %v1227 = vld [vmem:[%s340 + $0xc9] sm:$0xff]
      %v1228 = vld [vmem:[%s340 + $0xd9] sm:$0xff]
      %v1229 = vld [vmem:[%s340 + $0xe1] sm:$0xff]
      %v1230 = vld [vmem:[%s340 + $0xf1] sm:$0xff]
      %v1231 = vld [vmem:[%s340 + $0xf9] sm:$0xff]
      %v1232 = vld [vmem:[%s340 + $0x109] sm:$0xff]
      %v1233 = vld [vmem:[%s340 + $0x111] sm:$0xff]
      %v1234 = vld [vmem:[%s340 + $0x121] sm:$0xff]
      %v1235 = vld [vmem:[%s340 + $0x129] sm:$0xff]
      %v1236 = vld [vmem:[%s340 + $0x139] sm:$0xff]
      %v1237 = vld [vmem:[%s340 + $0x141] sm:$0xff]
      %v1238 = vld [vmem:[%s340 + $0x151] sm:$0xff]
      %v1239 = vld [vmem:[%s340 + $0x159] sm:$0xff]
      %v1240 = vld [vmem:[%s340 + $0x169] sm:$0xff]
      %v1241 = vld [vmem:[%s340 + $0x171] sm:$0xff]
      %1274 = vrot.lane.b32.xlu0 %v1210, 32
      %v1275 = vpop.permute.xlu0 %1274
      %1276 = vrot.lane.b32.xlu0 %v1211, 32
      %v1277 = vpop.permute.xlu0 %1276
      %1278 = vrot.lane.b32.xlu0 %v1212, 32
      %v1279 = vpop.permute.xlu0 %1278
      %1280 = vrot.lane.b32.xlu0 %v1213, 32
      %v1281 = vpop.permute.xlu0 %1280
      %1282 = vrot.lane.b32.xlu0 %v1214, 32
      %v1283 = vpop.permute.xlu0 %1282
      %1284 = vrot.lane.b32.xlu0 %v1215, 32
      %v1285 = vpop.permute.xlu0 %1284
      %1286 = vrot.lane.b32.xlu0 %v1216, 32
      %v1287 = vpop.permute.xlu0 %1286
      %1288 = vrot.lane.b32.xlu0 %v1217, 32
      %v1289 = vpop.permute.xlu0 %1288
      %1290 = vrot.lane.b32.xlu0 %v1218, 32
      %v1291 = vpop.permute.xlu0 %1290
      %1292 = vrot.lane.b32.xlu0 %v1219, 32
      %v1293 = vpop.permute.xlu0 %1292
      %1294 = vrot.lane.b32.xlu0 %v1220, 32
      %v1295 = vpop.permute.xlu0 %1294
      %1296 = vrot.lane.b32.xlu0 %v1221, 32
      %v1297 = vpop.permute.xlu0 %1296
      %1298 = vrot.lane.b32.xlu0 %v1222, 32
      %v1299 = vpop.permute.xlu0 %1298
      %1300 = vrot.lane.b32.xlu0 %v1223, 32
      %v1301 = vpop.permute.xlu0 %1300
      %1302 = vrot.lane.b32.xlu0 %v1224, 32
      %v1303 = vpop.permute.xlu0 %1302
      %1304 = vrot.lane.b32.xlu0 %v1225, 32
      %v1305 = vpop.permute.xlu0 %1304
      %1306 = vrot.lane.b32.xlu0 %v1226, 32
      %v1307 = vpop.permute.xlu0 %1306
      %1308 = vrot.lane.b32.xlu0 %v1227, 32
      %v1309 = vpop.permute.xlu0 %1308
      %1310 = vrot.lane.b32.xlu0 %v1228, 32
      %v1311 = vpop.permute.xlu0 %1310
      %1312 = vrot.lane.b32.xlu0 %v1229, 32
      %v1313 = vpop.permute.xlu0 %1312
      %1314 = vrot.lane.b32.xlu0 %v1230, 32
      %v1315 = vpop.permute.xlu0 %1314
      %1316 = vrot.lane.b32.xlu0 %v1231, 32
      %v1317 = vpop.permute.xlu0 %1316
      %1318 = vrot.lane.b32.xlu0 %v1232, 32
      %v1319 = vpop.permute.xlu0 %1318
      %1320 = vrot.lane.b32.xlu0 %v1233, 32
      %v1321 = vpop.permute.xlu0 %1320
      %1322 = vrot.lane.b32.xlu0 %v1234, 32
      %v1323 = vpop.permute.xlu0 %1322
      %1324 = vrot.lane.b32.xlu0 %v1235, 32
      %v1325 = vpop.permute.xlu0 %1324
      %1326 = vrot.lane.b32.xlu0 %v1236, 32
      %v1327 = vpop.permute.xlu0 %1326
      %1328 = vrot.lane.b32.xlu0 %v1237, 32
      %v1329 = vpop.permute.xlu0 %1328
      %1330 = vrot.lane.b32.xlu0 %v1238, 32
      %v1331 = vpop.permute.xlu0 %1330
      %1332 = vrot.lane.b32.xlu0 %v1239, 32
      %v1333 = vpop.permute.xlu0 %1332
      %1334 = vrot.lane.b32.xlu0 %v1240, 32
      %v1335 = vpop.permute.xlu0 %1334
      %1336 = vrot.lane.b32.xlu0 %v1241, 32
      %v1337 = vpop.permute.xlu0 %1336
      %vm1370 = vcmask 326912
      %1371 = vst.msk [vmem:[#allocation3] sm:$0xff] %vm1370, %v1275
      %1372 = vst.msk [vmem:[#allocation3 + $0x8] sm:$0xff] %vm1370, %v1277
      %1373 = vst.msk [vmem:[#allocation3 + $0x10] sm:$0xff] %vm1370, %v1279
      %1374 = vst.msk [vmem:[#allocation3 + $0x18] sm:$0xff] %vm1370, %v1281
      %1375 = vst.msk [vmem:[#allocation3 + $0x20] sm:$0xff] %vm1370, %v1283
      %1376 = vst.msk [vmem:[#allocation3 + $0x28] sm:$0xff] %vm1370, %v1285
      %1377 = vst.msk [vmem:[#allocation3 + $0x30] sm:$0xff] %vm1370, %v1287
      %1378 = vst.msk [vmem:[#allocation3 + $0x38] sm:$0xff] %vm1370, %v1289
      %1379 = vst.msk [vmem:[#allocation3 + $0x40] sm:$0xff] %vm1370, %v1291
      %1380 = vst.msk [vmem:[#allocation3 + $0x48] sm:$0xff] %vm1370, %v1293
      %1381 = vst.msk [vmem:[#allocation3 + $0x50] sm:$0xff] %vm1370, %v1295
      %1382 = vst.msk [vmem:[#allocation3 + $0x58] sm:$0xff] %vm1370, %v1297
      %1383 = vst.msk [vmem:[#allocation3 + $0x60] sm:$0xff] %vm1370, %v1299
      %1384 = vst.msk [vmem:[#allocation3 + $0x68] sm:$0xff] %vm1370, %v1301
      %1385 = vst.msk [vmem:[#allocation3 + $0x70] sm:$0xff] %vm1370, %v1303
      %1386 = vst.msk [vmem:[#allocation3 + $0x78] sm:$0xff] %vm1370, %v1305
      %1387 = vst.msk [vmem:[#allocation3 + $0x80] sm:$0xff] %vm1370, %v1307
      %1388 = vst.msk [vmem:[#allocation3 + $0x88] sm:$0xff] %vm1370, %v1309
      %1389 = vst.msk [vmem:[#allocation3 + $0x90] sm:$0xff] %vm1370, %v1311
      %1390 = vst.msk [vmem:[#allocation3 + $0x98] sm:$0xff] %vm1370, %v1313
      %1391 = vst.msk [vmem:[#allocation3 + $0xa0] sm:$0xff] %vm1370, %v1315
      %1392 = vst.msk [vmem:[#allocation3 + $0xa8] sm:$0xff] %vm1370, %v1317
      %1393 = vst.msk [vmem:[#allocation3 + $0xb0] sm:$0xff] %vm1370, %v1319
      %1394 = vst.msk [vmem:[#allocation3 + $0xb8] sm:$0xff] %vm1370, %v1321
      %1395 = vst.msk [vmem:[#allocation3 + $0xc0] sm:$0xff] %vm1370, %v1323
      %1396 = vst.msk [vmem:[#allocation3 + $0xc8] sm:$0xff] %vm1370, %v1325
      %1397 = vst.msk [vmem:[#allocation3 + $0xd0] sm:$0xff] %vm1370, %v1327
      %1398 = vst.msk [vmem:[#allocation3 + $0xd8] sm:$0xff] %vm1370, %v1329
      %1399 = vst.msk [vmem:[#allocation3 + $0xe0] sm:$0xff] %vm1370, %v1331
      %1400 = vst.msk [vmem:[#allocation3 + $0xe8] sm:$0xff] %vm1370, %v1333
      %1401 = vst.msk [vmem:[#allocation3 + $0xf0] sm:$0xff] %vm1370, %v1335
      %1402 = vst.msk [vmem:[#allocation3 + $0xf8] sm:$0xff] %vm1370, %v1337
      %v1403 = vld [vmem:[%s340 + $0x2] sm:$0xff]
      %v1404 = vld [vmem:[%s340 + $0xa] sm:$0xff]
      %v1405 = vld [vmem:[%s340 + $0x1a] sm:$0xff]
      %v1406 = vld [vmem:[%s340 + $0x22] sm:$0xff]
      %v1407 = vld [vmem:[%s340 + $0x32] sm:$0xff]
      %v1408 = vld [vmem:[%s340 + $0x3a] sm:$0xff]
      %v1409 = vld [vmem:[%s340 + $0x4a] sm:$0xff]
      %v1410 = vld [vmem:[%s340 + $0x52] sm:$0xff]
      %v1411 = vld [vmem:[%s340 + $0x62] sm:$0xff]
      %v1412 = vld [vmem:[%s340 + $0x6a] sm:$0xff]
      %v1413 = vld [vmem:[%s340 + $0x7a] sm:$0xff]
      %v1414 = vld [vmem:[%s340 + $0x82] sm:$0xff]
      %v1415 = vld [vmem:[%s340 + $0x92] sm:$0xff]
      %v1416 = vld [vmem:[%s340 + $0x9a] sm:$0xff]
      %v1417 = vld [vmem:[%s340 + $0xaa] sm:$0xff]
      %v1418 = vld [vmem:[%s340 + $0xb2] sm:$0xff]
      %v1419 = vld [vmem:[%s340 + $0xc2] sm:$0xff]
      %v1420 = vld [vmem:[%s340 + $0xca] sm:$0xff]
      %v1421 = vld [vmem:[%s340 + $0xda] sm:$0xff]
      %v1422 = vld [vmem:[%s340 + $0xe2] sm:$0xff]
      %v1423 = vld [vmem:[%s340 + $0xf2] sm:$0xff]
      %v1424 = vld [vmem:[%s340 + $0xfa] sm:$0xff]
      %v1425 = vld [vmem:[%s340 + $0x10a] sm:$0xff]
      %v1426 = vld [vmem:[%s340 + $0x112] sm:$0xff]
      %v1427 = vld [vmem:[%s340 + $0x122] sm:$0xff]
      %v1428 = vld [vmem:[%s340 + $0x12a] sm:$0xff]
      %v1429 = vld [vmem:[%s340 + $0x13a] sm:$0xff]
      %v1430 = vld [vmem:[%s340 + $0x142] sm:$0xff]
      %v1431 = vld [vmem:[%s340 + $0x152] sm:$0xff]
      %v1432 = vld [vmem:[%s340 + $0x15a] sm:$0xff]
      %v1433 = vld [vmem:[%s340 + $0x16a] sm:$0xff]
      %v1434 = vld [vmem:[%s340 + $0x172] sm:$0xff]
      %1467 = vrot.lane.b32.xlu0 %v1403, 40
      %v1468 = vpop.permute.xlu0 %1467
      %1469 = vrot.lane.b32.xlu0 %v1404, 40
      %v1470 = vpop.permute.xlu0 %1469
      %1471 = vrot.lane.b32.xlu0 %v1405, 40
      %v1472 = vpop.permute.xlu0 %1471
      %1473 = vrot.lane.b32.xlu0 %v1406, 40
      %v1474 = vpop.permute.xlu0 %1473
      %1475 = vrot.lane.b32.xlu0 %v1407, 40
      %v1476 = vpop.permute.xlu0 %1475
      %1477 = vrot.lane.b32.xlu0 %v1408, 40
      %v1478 = vpop.permute.xlu0 %1477
      %1479 = vrot.lane.b32.xlu0 %v1409, 40
      %v1480 = vpop.permute.xlu0 %1479
      %1481 = vrot.lane.b32.xlu0 %v1410, 40
      %v1482 = vpop.permute.xlu0 %1481
      %1483 = vrot.lane.b32.xlu0 %v1411, 40
      %v1484 = vpop.permute.xlu0 %1483
      %1485 = vrot.lane.b32.xlu0 %v1412, 40
      %v1486 = vpop.permute.xlu0 %1485
      %1487 = vrot.lane.b32.xlu0 %v1413, 40
      %v1488 = vpop.permute.xlu0 %1487
      %1489 = vrot.lane.b32.xlu0 %v1414, 40
      %v1490 = vpop.permute.xlu0 %1489
      %1491 = vrot.lane.b32.xlu0 %v1415, 40
      %v1492 = vpop.permute.xlu0 %1491
      %1493 = vrot.lane.b32.xlu0 %v1416, 40
      %v1494 = vpop.permute.xlu0 %1493
      %1495 = vrot.lane.b32.xlu0 %v1417, 40
      %v1496 = vpop.permute.xlu0 %1495
      %1497 = vrot.lane.b32.xlu0 %v1418, 40
      %v1498 = vpop.permute.xlu0 %1497
      %1499 = vrot.lane.b32.xlu0 %v1419, 40
      %v1500 = vpop.permute.xlu0 %1499
      %1501 = vrot.lane.b32.xlu0 %v1420, 40
      %v1502 = vpop.permute.xlu0 %1501
      %1503 = vrot.lane.b32.xlu0 %v1421, 40
      %v1504 = vpop.permute.xlu0 %1503
      %1505 = vrot.lane.b32.xlu0 %v1422, 40
      %v1506 = vpop.permute.xlu0 %1505
      %1507 = vrot.lane.b32.xlu0 %v1423, 40
      %v1508 = vpop.permute.xlu0 %1507
      %1509 = vrot.lane.b32.xlu0 %v1424, 40
      %v1510 = vpop.permute.xlu0 %1509
      %1511 = vrot.lane.b32.xlu0 %v1425, 40
      %v1512 = vpop.permute.xlu0 %1511
      %1513 = vrot.lane.b32.xlu0 %v1426, 40
      %v1514 = vpop.permute.xlu0 %1513
      %1515 = vrot.lane.b32.xlu0 %v1427, 40
      %v1516 = vpop.permute.xlu0 %1515
      %1517 = vrot.lane.b32.xlu0 %v1428, 40
      %v1518 = vpop.permute.xlu0 %1517
      %1519 = vrot.lane.b32.xlu0 %v1429, 40
      %v1520 = vpop.permute.xlu0 %1519
      %1521 = vrot.lane.b32.xlu0 %v1430, 40
      %v1522 = vpop.permute.xlu0 %1521
      %1523 = vrot.lane.b32.xlu0 %v1431, 40
      %v1524 = vpop.permute.xlu0 %1523
      %1525 = vrot.lane.b32.xlu0 %v1432, 40
      %v1526 = vpop.permute.xlu0 %1525
      %1527 = vrot.lane.b32.xlu0 %v1433, 40
      %v1528 = vpop.permute.xlu0 %1527
      %1529 = vrot.lane.b32.xlu0 %v1434, 40
      %v1530 = vpop.permute.xlu0 %1529
      %vm1563 = vcmask 392512
      %1564 = vst.msk [vmem:[#allocation3] sm:$0xff] %vm1563, %v1468
      %1565 = vst.msk [vmem:[#allocation3 + $0x8] sm:$0xff] %vm1563, %v1470
      %1566 = vst.msk [vmem:[#allocation3 + $0x10] sm:$0xff] %vm1563, %v1472
      %1567 = vst.msk [vmem:[#allocation3 + $0x18] sm:$0xff] %vm1563, %v1474
      %1568 = vst.msk [vmem:[#allocation3 + $0x20] sm:$0xff] %vm1563, %v1476
      %1569 = vst.msk [vmem:[#allocation3 + $0x28] sm:$0xff] %vm1563, %v1478
      %1570 = vst.msk [vmem:[#allocation3 + $0x30] sm:$0xff] %vm1563, %v1480
      %1571 = vst.msk [vmem:[#allocation3 + $0x38] sm:$0xff] %vm1563, %v1482
      %1572 = vst.msk [vmem:[#allocation3 + $0x40] sm:$0xff] %vm1563, %v1484
      %1573 = vst.msk [vmem:[#allocation3 + $0x48] sm:$0xff] %vm1563, %v1486
      %1574 = vst.msk [vmem:[#allocation3 + $0x50] sm:$0xff] %vm1563, %v1488
      %1575 = vst.msk [vmem:[#allocation3 + $0x58] sm:$0xff] %vm1563, %v1490
      %1576 = vst.msk [vmem:[#allocation3 + $0x60] sm:$0xff] %vm1563, %v1492
      %1577 = vst.msk [vmem:[#allocation3 + $0x68] sm:$0xff] %vm1563, %v1494
      %1578 = vst.msk [vmem:[#allocation3 + $0x70] sm:$0xff] %vm1563, %v1496
      %1579 = vst.msk [vmem:[#allocation3 + $0x78] sm:$0xff] %vm1563, %v1498
      %1580 = vst.msk [vmem:[#allocation3 + $0x80] sm:$0xff] %vm1563, %v1500
      %1581 = vst.msk [vmem:[#allocation3 + $0x88] sm:$0xff] %vm1563, %v1502
      %1582 = vst.msk [vmem:[#allocation3 + $0x90] sm:$0xff] %vm1563, %v1504
      %1583 = vst.msk [vmem:[#allocation3 + $0x98] sm:$0xff] %vm1563, %v1506
      %1584 = vst.msk [vmem:[#allocation3 + $0xa0] sm:$0xff] %vm1563, %v1508
      %1585 = vst.msk [vmem:[#allocation3 + $0xa8] sm:$0xff] %vm1563, %v1510
      %1586 = vst.msk [vmem:[#allocation3 + $0xb0] sm:$0xff] %vm1563, %v1512
      %1587 = vst.msk [vmem:[#allocation3 + $0xb8] sm:$0xff] %vm1563, %v1514
      %1588 = vst.msk [vmem:[#allocation3 + $0xc0] sm:$0xff] %vm1563, %v1516
      %1589 = vst.msk [vmem:[#allocation3 + $0xc8] sm:$0xff] %vm1563, %v1518
      %1590 = vst.msk [vmem:[#allocation3 + $0xd0] sm:$0xff] %vm1563, %v1520
      %1591 = vst.msk [vmem:[#allocation3 + $0xd8] sm:$0xff] %vm1563, %v1522
      %1592 = vst.msk [vmem:[#allocation3 + $0xe0] sm:$0xff] %vm1563, %v1524
      %1593 = vst.msk [vmem:[#allocation3 + $0xe8] sm:$0xff] %vm1563, %v1526
      %1594 = vst.msk [vmem:[#allocation3 + $0xf0] sm:$0xff] %vm1563, %v1528
      %1595 = vst.msk [vmem:[#allocation3 + $0xf8] sm:$0xff] %vm1563, %v1530
      %s1596 = scalar_lea.vmem [#allocation2], 48
      %v1597 = vld [vmem:[%s1596] sm:$0xff]
      %v1598 = vld [vmem:[%s1596 + $0x8] sm:$0xff]
      %v1599 = vld [vmem:[%s1596 + $0x18] sm:$0xff]
      %v1600 = vld [vmem:[%s1596 + $0x20] sm:$0xff]
      %v1601 = vld [vmem:[%s1596 + $0x30] sm:$0xff]
      %v1602 = vld [vmem:[%s1596 + $0x38] sm:$0xff]
      %v1603 = vld [vmem:[%s1596 + $0x48] sm:$0xff]
      %v1604 = vld [vmem:[%s1596 + $0x50] sm:$0xff]
      %v1605 = vld [vmem:[%s1596 + $0x60] sm:$0xff]
      %v1606 = vld [vmem:[%s1596 + $0x68] sm:$0xff]
      %v1607 = vld [vmem:[%s1596 + $0x78] sm:$0xff]
      %v1608 = vld [vmem:[%s1596 + $0x80] sm:$0xff]
      %v1609 = vld [vmem:[%s1596 + $0x90] sm:$0xff]
      %v1610 = vld [vmem:[%s1596 + $0x98] sm:$0xff]
      %v1611 = vld [vmem:[%s1596 + $0xa8] sm:$0xff]
      %v1612 = vld [vmem:[%s1596 + $0xb0] sm:$0xff]
      %v1613 = vld [vmem:[%s1596 + $0xc0] sm:$0xff]
      %v1614 = vld [vmem:[%s1596 + $0xc8] sm:$0xff]
      %v1615 = vld [vmem:[%s1596 + $0xd8] sm:$0xff]
      %v1616 = vld [vmem:[%s1596 + $0xe0] sm:$0xff]
      %v1617 = vld [vmem:[%s1596 + $0xf0] sm:$0xff]
      %v1618 = vld [vmem:[%s1596 + $0xf8] sm:$0xff]
      %v1619 = vld [vmem:[%s1596 + $0x108] sm:$0xff]
      %v1620 = vld [vmem:[%s1596 + $0x110] sm:$0xff]
      %v1621 = vld [vmem:[%s1596 + $0x120] sm:$0xff]
      %v1622 = vld [vmem:[%s1596 + $0x128] sm:$0xff]
      %v1623 = vld [vmem:[%s1596 + $0x138] sm:$0xff]
      %v1624 = vld [vmem:[%s1596 + $0x140] sm:$0xff]
      %v1625 = vld [vmem:[%s1596 + $0x150] sm:$0xff]
      %v1626 = vld [vmem:[%s1596 + $0x158] sm:$0xff]
      %v1627 = vld [vmem:[%s1596 + $0x168] sm:$0xff]
      %v1628 = vld [vmem:[%s1596 + $0x170] sm:$0xff]
      %1661 = vrot.lane.b32.xlu0 %v1597, 48
      %v1662 = vpop.permute.xlu0 %1661
      %1663 = vrot.lane.b32.xlu0 %v1598, 48
      %v1664 = vpop.permute.xlu0 %1663
      %1665 = vrot.lane.b32.xlu0 %v1599, 48
      %v1666 = vpop.permute.xlu0 %1665
      %1667 = vrot.lane.b32.xlu0 %v1600, 48
      %v1668 = vpop.permute.xlu0 %1667
      %1669 = vrot.lane.b32.xlu0 %v1601, 48
      %v1670 = vpop.permute.xlu0 %1669
      %1671 = vrot.lane.b32.xlu0 %v1602, 48
      %v1672 = vpop.permute.xlu0 %1671
      %1673 = vrot.lane.b32.xlu0 %v1603, 48
      %v1674 = vpop.permute.xlu0 %1673
      %1675 = vrot.lane.b32.xlu0 %v1604, 48
      %v1676 = vpop.permute.xlu0 %1675
      %1677 = vrot.lane.b32.xlu0 %v1605, 48
      %v1678 = vpop.permute.xlu0 %1677
      %1679 = vrot.lane.b32.xlu0 %v1606, 48
      %v1680 = vpop.permute.xlu0 %1679
      %1681 = vrot.lane.b32.xlu0 %v1607, 48
      %v1682 = vpop.permute.xlu0 %1681
      %1683 = vrot.lane.b32.xlu0 %v1608, 48
      %v1684 = vpop.permute.xlu0 %1683
      %1685 = vrot.lane.b32.xlu0 %v1609, 48
      %v1686 = vpop.permute.xlu0 %1685
      %1687 = vrot.lane.b32.xlu0 %v1610, 48
      %v1688 = vpop.permute.xlu0 %1687
      %1689 = vrot.lane.b32.xlu0 %v1611, 48
      %v1690 = vpop.permute.xlu0 %1689
      %1691 = vrot.lane.b32.xlu0 %v1612, 48
      %v1692 = vpop.permute.xlu0 %1691
      %1693 = vrot.lane.b32.xlu0 %v1613, 48
      %v1694 = vpop.permute.xlu0 %1693
      %1695 = vrot.lane.b32.xlu0 %v1614, 48
      %v1696 = vpop.permute.xlu0 %1695
      %1697 = vrot.lane.b32.xlu0 %v1615, 48
      %v1698 = vpop.permute.xlu0 %1697
      %1699 = vrot.lane.b32.xlu0 %v1616, 48
      %v1700 = vpop.permute.xlu0 %1699
      %1701 = vrot.lane.b32.xlu0 %v1617, 48
      %v1702 = vpop.permute.xlu0 %1701
      %1703 = vrot.lane.b32.xlu0 %v1618, 48
      %v1704 = vpop.permute.xlu0 %1703
      %1705 = vrot.lane.b32.xlu0 %v1619, 48
      %v1706 = vpop.permute.xlu0 %1705
      %1707 = vrot.lane.b32.xlu0 %v1620, 48
      %v1708 = vpop.permute.xlu0 %1707
      %1709 = vrot.lane.b32.xlu0 %v1621, 48
      %v1710 = vpop.permute.xlu0 %1709
      %1711 = vrot.lane.b32.xlu0 %v1622, 48
      %v1712 = vpop.permute.xlu0 %1711
      %1713 = vrot.lane.b32.xlu0 %v1623, 48
      %v1714 = vpop.permute.xlu0 %1713
      %1715 = vrot.lane.b32.xlu0 %v1624, 48
      %v1716 = vpop.permute.xlu0 %1715
      %1717 = vrot.lane.b32.xlu0 %v1625, 48
      %v1718 = vpop.permute.xlu0 %1717
      %1719 = vrot.lane.b32.xlu0 %v1626, 48
      %v1720 = vpop.permute.xlu0 %1719
      %1721 = vrot.lane.b32.xlu0 %v1627, 48
      %v1722 = vpop.permute.xlu0 %1721
      %1723 = vrot.lane.b32.xlu0 %v1628, 48
      %v1724 = vpop.permute.xlu0 %1723
      %vm1757 = vcmask 458112
      %1758 = vst.msk [vmem:[#allocation3] sm:$0xff] %vm1757, %v1662
      %1759 = vst.msk [vmem:[#allocation3 + $0x8] sm:$0xff] %vm1757, %v1664
      %1760 = vst.msk [vmem:[#allocation3 + $0x10] sm:$0xff] %vm1757, %v1666
      %1761 = vst.msk [vmem:[#allocation3 + $0x18] sm:$0xff] %vm1757, %v1668
      %1762 = vst.msk [vmem:[#allocation3 + $0x20] sm:$0xff] %vm1757, %v1670
      %1763 = vst.msk [vmem:[#allocation3 + $0x28] sm:$0xff] %vm1757, %v1672
      %1764 = vst.msk [vmem:[#allocation3 + $0x30] sm:$0xff] %vm1757, %v1674
      %1765 = vst.msk [vmem:[#allocation3 + $0x38] sm:$0xff] %vm1757, %v1676
      %1766 = vst.msk [vmem:[#allocation3 + $0x40] sm:$0xff] %vm1757, %v1678
      %1767 = vst.msk [vmem:[#allocation3 + $0x48] sm:$0xff] %vm1757, %v1680
      %1768 = vst.msk [vmem:[#allocation3 + $0x50] sm:$0xff] %vm1757, %v1682
      %1769 = vst.msk [vmem:[#allocation3 + $0x58] sm:$0xff] %vm1757, %v1684
      %1770 = vst.msk [vmem:[#allocation3 + $0x60] sm:$0xff] %vm1757, %v1686
      %1771 = vst.msk [vmem:[#allocation3 + $0x68] sm:$0xff] %vm1757, %v1688
      %1772 = vst.msk [vmem:[#allocation3 + $0x70] sm:$0xff] %vm1757, %v1690
      %1773 = vst.msk [vmem:[#allocation3 + $0x78] sm:$0xff] %vm1757, %v1692
      %1774 = vst.msk [vmem:[#allocation3 + $0x80] sm:$0xff] %vm1757, %v1694
      %1775 = vst.msk [vmem:[#allocation3 + $0x88] sm:$0xff] %vm1757, %v1696
      %1776 = vst.msk [vmem:[#allocation3 + $0x90] sm:$0xff] %vm1757, %v1698
      %1777 = vst.msk [vmem:[#allocation3 + $0x98] sm:$0xff] %vm1757, %v1700
      %1778 = vst.msk [vmem:[#allocation3 + $0xa0] sm:$0xff] %vm1757, %v1702
      %1779 = vst.msk [vmem:[#allocation3 + $0xa8] sm:$0xff] %vm1757, %v1704
      %1780 = vst.msk [vmem:[#allocation3 + $0xb0] sm:$0xff] %vm1757, %v1706
      %1781 = vst.msk [vmem:[#allocation3 + $0xb8] sm:$0xff] %vm1757, %v1708
      %1782 = vst.msk [vmem:[#allocation3 + $0xc0] sm:$0xff] %vm1757, %v1710
      %1783 = vst.msk [vmem:[#allocation3 + $0xc8] sm:$0xff] %vm1757, %v1712
      %1784 = vst.msk [vmem:[#allocation3 + $0xd0] sm:$0xff] %vm1757, %v1714
      %1785 = vst.msk [vmem:[#allocation3 + $0xd8] sm:$0xff] %vm1757, %v1716
      %1786 = vst.msk [vmem:[#allocation3 + $0xe0] sm:$0xff] %vm1757, %v1718
      %1787 = vst.msk [vmem:[#allocation3 + $0xe8] sm:$0xff] %vm1757, %v1720
      %1788 = vst.msk [vmem:[#allocation3 + $0xf0] sm:$0xff] %vm1757, %v1722
      %1789 = vst.msk [vmem:[#allocation3 + $0xf8] sm:$0xff] %vm1757, %v1724
      %v1790 = vld [vmem:[%s1596 + $0x1] sm:$0xff]
      %v1791 = vld [vmem:[%s1596 + $0x9] sm:$0xff]
      %v1792 = vld [vmem:[%s1596 + $0x19] sm:$0xff]
      %v1793 = vld [vmem:[%s1596 + $0x21] sm:$0xff]
      %v1794 = vld [vmem:[%s1596 + $0x31] sm:$0xff]
      %v1795 = vld [vmem:[%s1596 + $0x39] sm:$0xff]
      %v1796 = vld [vmem:[%s1596 + $0x49] sm:$0xff]
      %v1797 = vld [vmem:[%s1596 + $0x51] sm:$0xff]
      %v1798 = vld [vmem:[%s1596 + $0x61] sm:$0xff]
      %v1799 = vld [vmem:[%s1596 + $0x69] sm:$0xff]
      %v1800 = vld [vmem:[%s1596 + $0x79] sm:$0xff]
      %v1801 = vld [vmem:[%s1596 + $0x81] sm:$0xff]
      %v1802 = vld [vmem:[%s1596 + $0x91] sm:$0xff]
      %v1803 = vld [vmem:[%s1596 + $0x99] sm:$0xff]
      %v1804 = vld [vmem:[%s1596 + $0xa9] sm:$0xff]
      %v1805 = vld [vmem:[%s1596 + $0xb1] sm:$0xff]
      %v1806 = vld [vmem:[%s1596 + $0xc1] sm:$0xff]
      %v1807 = vld [vmem:[%s1596 + $0xc9] sm:$0xff]
      %v1808 = vld [vmem:[%s1596 + $0xd9] sm:$0xff]
      %v1809 = vld [vmem:[%s1596 + $0xe1] sm:$0xff]
      %v1810 = vld [vmem:[%s1596 + $0xf1] sm:$0xff]
      %v1811 = vld [vmem:[%s1596 + $0xf9] sm:$0xff]
      %v1812 = vld [vmem:[%s1596 + $0x109] sm:$0xff]
      %v1813 = vld [vmem:[%s1596 + $0x111] sm:$0xff]
      %v1814 = vld [vmem:[%s1596 + $0x121] sm:$0xff]
      %v1815 = vld [vmem:[%s1596 + $0x129] sm:$0xff]
      %v1816 = vld [vmem:[%s1596 + $0x139] sm:$0xff]
      %v1817 = vld [vmem:[%s1596 + $0x141] sm:$0xff]
      %v1818 = vld [vmem:[%s1596 + $0x151] sm:$0xff]
      %v1819 = vld [vmem:[%s1596 + $0x159] sm:$0xff]
      %v1820 = vld [vmem:[%s1596 + $0x169] sm:$0xff]
      %v1821 = vld [vmem:[%s1596 + $0x171] sm:$0xff]
      %1854 = vrot.lane.b32.xlu0 %v1790, 56
      %v1855 = vpop.permute.xlu0 %1854
      %1856 = vrot.lane.b32.xlu0 %v1791, 56
      %v1857 = vpop.permute.xlu0 %1856
      %1858 = vrot.lane.b32.xlu0 %v1792, 56
      %v1859 = vpop.permute.xlu0 %1858
      %1860 = vrot.lane.b32.xlu0 %v1793, 56
      %v1861 = vpop.permute.xlu0 %1860
      %1862 = vrot.lane.b32.xlu0 %v1794, 56
      %v1863 = vpop.permute.xlu0 %1862
      %1864 = vrot.lane.b32.xlu0 %v1795, 56
      %v1865 = vpop.permute.xlu0 %1864
      %1866 = vrot.lane.b32.xlu0 %v1796, 56
      %v1867 = vpop.permute.xlu0 %1866
      %1868 = vrot.lane.b32.xlu0 %v1797, 56
      %v1869 = vpop.permute.xlu0 %1868
      %1870 = vrot.lane.b32.xlu0 %v1798, 56
      %v1871 = vpop.permute.xlu0 %1870
      %1872 = vrot.lane.b32.xlu0 %v1799, 56
      %v1873 = vpop.permute.xlu0 %1872
      %1874 = vrot.lane.b32.xlu0 %v1800, 56
      %v1875 = vpop.permute.xlu0 %1874
      %1876 = vrot.lane.b32.xlu0 %v1801, 56
      %v1877 = vpop.permute.xlu0 %1876
      %1878 = vrot.lane.b32.xlu0 %v1802, 56
      %v1879 = vpop.permute.xlu0 %1878
      %1880 = vrot.lane.b32.xlu0 %v1803, 56
      %v1881 = vpop.permute.xlu0 %1880
      %1882 = vrot.lane.b32.xlu0 %v1804, 56
      %v1883 = vpop.permute.xlu0 %1882
      %1884 = vrot.lane.b32.xlu0 %v1805, 56
      %v1885 = vpop.permute.xlu0 %1884
      %1886 = vrot.lane.b32.xlu0 %v1806, 56
      %v1887 = vpop.permute.xlu0 %1886
      %1888 = vrot.lane.b32.xlu0 %v1807, 56
      %v1889 = vpop.permute.xlu0 %1888
      %1890 = vrot.lane.b32.xlu0 %v1808, 56
      %v1891 = vpop.permute.xlu0 %1890
      %1892 = vrot.lane.b32.xlu0 %v1809, 56
      %v1893 = vpop.permute.xlu0 %1892
      %1894 = vrot.lane.b32.xlu0 %v1810, 56
      %v1895 = vpop.permute.xlu0 %1894
      %1896 = vrot.lane.b32.xlu0 %v1811, 56
      %v1897 = vpop.permute.xlu0 %1896
      %1898 = vrot.lane.b32.xlu0 %v1812, 56
      %v1899 = vpop.permute.xlu0 %1898
      %1900 = vrot.lane.b32.xlu0 %v1813, 56
      %v1901 = vpop.permute.xlu0 %1900
      %1902 = vrot.lane.b32.xlu0 %v1814, 56
      %v1903 = vpop.permute.xlu0 %1902
      %1904 = vrot.lane.b32.xlu0 %v1815, 56
      %v1905 = vpop.permute.xlu0 %1904
      %1906 = vrot.lane.b32.xlu0 %v1816, 56
      %v1907 = vpop.permute.xlu0 %1906
      %1908 = vrot.lane.b32.xlu0 %v1817, 56
      %v1909 = vpop.permute.xlu0 %1908
      %1910 = vrot.lane.b32.xlu0 %v1818, 56
      %v1911 = vpop.permute.xlu0 %1910
      %1912 = vrot.lane.b32.xlu0 %v1819, 56
      %v1913 = vpop.permute.xlu0 %1912
      %1914 = vrot.lane.b32.xlu0 %v1820, 56
      %v1915 = vpop.permute.xlu0 %1914
      %1916 = vrot.lane.b32.xlu0 %v1821, 56
      %v1917 = vpop.permute.xlu0 %1916
      %vm1950 = vcmask 523712
      %1951 = vst.msk [vmem:[#allocation3] sm:$0xff] %vm1950, %v1855
      %1952 = vst.msk [vmem:[#allocation3 + $0x8] sm:$0xff] %vm1950, %v1857
      %1953 = vst.msk [vmem:[#allocation3 + $0x10] sm:$0xff] %vm1950, %v1859
      %1954 = vst.msk [vmem:[#allocation3 + $0x18] sm:$0xff] %vm1950, %v1861
      %1955 = vst.msk [vmem:[#allocation3 + $0x20] sm:$0xff] %vm1950, %v1863
      %1956 = vst.msk [vmem:[#allocation3 + $0x28] sm:$0xff] %vm1950, %v1865
      %1957 = vst.msk [vmem:[#allocation3 + $0x30] sm:$0xff] %vm1950, %v1867
      %1958 = vst.msk [vmem:[#allocation3 + $0x38] sm:$0xff] %vm1950, %v1869
      %1959 = vst.msk [vmem:[#allocation3 + $0x40] sm:$0xff] %vm1950, %v1871
      %1960 = vst.msk [vmem:[#allocation3 + $0x48] sm:$0xff] %vm1950, %v1873
      %1961 = vst.msk [vmem:[#allocation3 + $0x50] sm:$0xff] %vm1950, %v1875
      %1962 = vst.msk [vmem:[#allocation3 + $0x58] sm:$0xff] %vm1950, %v1877
      %1963 = vst.msk [vmem:[#allocation3 + $0x60] sm:$0xff] %vm1950, %v1879
      %1964 = vst.msk [vmem:[#allocation3 + $0x68] sm:$0xff] %vm1950, %v1881
      %1965 = vst.msk [vmem:[#allocation3 + $0x70] sm:$0xff] %vm1950, %v1883
      %1966 = vst.msk [vmem:[#allocation3 + $0x78] sm:$0xff] %vm1950, %v1885
      %1967 = vst.msk [vmem:[#allocation3 + $0x80] sm:$0xff] %vm1950, %v1887
      %1968 = vst.msk [vmem:[#allocation3 + $0x88] sm:$0xff] %vm1950, %v1889
      %1969 = vst.msk [vmem:[#allocation3 + $0x90] sm:$0xff] %vm1950, %v1891
      %1970 = vst.msk [vmem:[#allocation3 + $0x98] sm:$0xff] %vm1950, %v1893
      %1971 = vst.msk [vmem:[#allocation3 + $0xa0] sm:$0xff] %vm1950, %v1895
      %1972 = vst.msk [vmem:[#allocation3 + $0xa8] sm:$0xff] %vm1950, %v1897
      %1973 = vst.msk [vmem:[#allocation3 + $0xb0] sm:$0xff] %vm1950, %v1899
      %1974 = vst.msk [vmem:[#allocation3 + $0xb8] sm:$0xff] %vm1950, %v1901
      %1975 = vst.msk [vmem:[#allocation3 + $0xc0] sm:$0xff] %vm1950, %v1903
      %1976 = vst.msk [vmem:[#allocation3 + $0xc8] sm:$0xff] %vm1950, %v1905
      %1977 = vst.msk [vmem:[#allocation3 + $0xd0] sm:$0xff] %vm1950, %v1907
      %1978 = vst.msk [vmem:[#allocation3 + $0xd8] sm:$0xff] %vm1950, %v1909
      %1979 = vst.msk [vmem:[#allocation3 + $0xe0] sm:$0xff] %vm1950, %v1911
      %1980 = vst.msk [vmem:[#allocation3 + $0xe8] sm:$0xff] %vm1950, %v1913
      %1981 = vst.msk [vmem:[#allocation3 + $0xf0] sm:$0xff] %vm1950, %v1915
      %1982 = vst.msk [vmem:[#allocation3 + $0xf8] sm:$0xff] %vm1950, %v1917
      %v1983 = vld [vmem:[%s1596 + $0x2] sm:$0xff]
      %v1984 = vld [vmem:[%s1596 + $0xa] sm:$0xff]
      %v1985 = vld [vmem:[%s1596 + $0x1a] sm:$0xff]
      %v1986 = vld [vmem:[%s1596 + $0x22] sm:$0xff]
      %v1987 = vld [vmem:[%s1596 + $0x32] sm:$0xff]
      %v1988 = vld [vmem:[%s1596 + $0x3a] sm:$0xff]
      %v1989 = vld [vmem:[%s1596 + $0x4a] sm:$0xff]
      %v1990 = vld [vmem:[%s1596 + $0x52] sm:$0xff]
      %v1991 = vld [vmem:[%s1596 + $0x62] sm:$0xff]
      %v1992 = vld [vmem:[%s1596 + $0x6a] sm:$0xff]
      %v1993 = vld [vmem:[%s1596 + $0x7a] sm:$0xff]
      %v1994 = vld [vmem:[%s1596 + $0x82] sm:$0xff]
      %v1995 = vld [vmem:[%s1596 + $0x92] sm:$0xff]
      %v1996 = vld [vmem:[%s1596 + $0x9a] sm:$0xff]
      %v1997 = vld [vmem:[%s1596 + $0xaa] sm:$0xff]
      %v1998 = vld [vmem:[%s1596 + $0xb2] sm:$0xff]
      %v1999 = vld [vmem:[%s1596 + $0xc2] sm:$0xff]
      %v2000 = vld [vmem:[%s1596 + $0xca] sm:$0xff]
      %v2001 = vld [vmem:[%s1596 + $0xda] sm:$0xff]
      %v2002 = vld [vmem:[%s1596 + $0xe2] sm:$0xff]
      %v2003 = vld [vmem:[%s1596 + $0xf2] sm:$0xff]
      %v2004 = vld [vmem:[%s1596 + $0xfa] sm:$0xff]
      %v2005 = vld [vmem:[%s1596 + $0x10a] sm:$0xff]
      %v2006 = vld [vmem:[%s1596 + $0x112] sm:$0xff]
      %v2007 = vld [vmem:[%s1596 + $0x122] sm:$0xff]
      %v2008 = vld [vmem:[%s1596 + $0x12a] sm:$0xff]
      %v2009 = vld [vmem:[%s1596 + $0x13a] sm:$0xff]
      %v2010 = vld [vmem:[%s1596 + $0x142] sm:$0xff]
      %v2011 = vld [vmem:[%s1596 + $0x152] sm:$0xff]
      %v2012 = vld [vmem:[%s1596 + $0x15a] sm:$0xff]
      %v2013 = vld [vmem:[%s1596 + $0x16a] sm:$0xff]
      %v2014 = vld [vmem:[%s1596 + $0x172] sm:$0xff]
      %2047 = vrot.lane.b32.xlu0 %v1983, 64
      %v2048 = vpop.permute.xlu0 %2047
      %2049 = vrot.lane.b32.xlu0 %v1984, 64
      %v2050 = vpop.permute.xlu0 %2049
      %2051 = vrot.lane.b32.xlu0 %v1985, 64
      %v2052 = vpop.permute.xlu0 %2051
      %2053 = vrot.lane.b32.xlu0 %v1986, 64
      %v2054 = vpop.permute.xlu0 %2053
      %2055 = vrot.lane.b32.xlu0 %v1987, 64
      %v2056 = vpop.permute.xlu0 %2055
      %2057 = vrot.lane.b32.xlu0 %v1988, 64
      %v2058 = vpop.permute.xlu0 %2057
      %2059 = vrot.lane.b32.xlu0 %v1989, 64
      %v2060 = vpop.permute.xlu0 %2059
      %2061 = vrot.lane.b32.xlu0 %v1990, 64
      %v2062 = vpop.permute.xlu0 %2061
      %2063 = vrot.lane.b32.xlu0 %v1991, 64
      %v2064 = vpop.permute.xlu0 %2063
      %2065 = vrot.lane.b32.xlu0 %v1992, 64
      %v2066 = vpop.permute.xlu0 %2065
      %2067 = vrot.lane.b32.xlu0 %v1993, 64
      %v2068 = vpop.permute.xlu0 %2067
      %2069 = vrot.lane.b32.xlu0 %v1994, 64
      %v2070 = vpop.permute.xlu0 %2069
      %2071 = vrot.lane.b32.xlu0 %v1995, 64
      %v2072 = vpop.permute.xlu0 %2071
      %2073 = vrot.lane.b32.xlu0 %v1996, 64
      %v2074 = vpop.permute.xlu0 %2073
      %2075 = vrot.lane.b32.xlu0 %v1997, 64
      %v2076 = vpop.permute.xlu0 %2075
      %2077 = vrot.lane.b32.xlu0 %v1998, 64
      %v2078 = vpop.permute.xlu0 %2077
      %2079 = vrot.lane.b32.xlu0 %v1999, 64
      %v2080 = vpop.permute.xlu0 %2079
      %2081 = vrot.lane.b32.xlu0 %v2000, 64
      %v2082 = vpop.permute.xlu0 %2081
      %2083 = vrot.lane.b32.xlu0 %v2001, 64
      %v2084 = vpop.permute.xlu0 %2083
      %2085 = vrot.lane.b32.xlu0 %v2002, 64
      %v2086 = vpop.permute.xlu0 %2085
      %2087 = vrot.lane.b32.xlu0 %v2003, 64
      %v2088 = vpop.permute.xlu0 %2087
      %2089 = vrot.lane.b32.xlu0 %v2004, 64
      %v2090 = vpop.permute.xlu0 %2089
      %2091 = vrot.lane.b32.xlu0 %v2005, 64
      %v2092 = vpop.permute.xlu0 %2091
      %2093 = vrot.lane.b32.xlu0 %v2006, 64
      %v2094 = vpop.permute.xlu0 %2093
      %2095 = vrot.lane.b32.xlu0 %v2007, 64
      %v2096 = vpop.permute.xlu0 %2095
      %2097 = vrot.lane.b32.xlu0 %v2008, 64
      %v2098 = vpop.permute.xlu0 %2097
      %2099 = vrot.lane.b32.xlu0 %v2009, 64
      %v2100 = vpop.permute.xlu0 %2099
      %2101 = vrot.lane.b32.xlu0 %v2010, 64
      %v2102 = vpop.permute.xlu0 %2101
      %2103 = vrot.lane.b32.xlu0 %v2011, 64
      %v2104 = vpop.permute.xlu0 %2103
      %2105 = vrot.lane.b32.xlu0 %v2012, 64
      %v2106 = vpop.permute.xlu0 %2105
      %2107 = vrot.lane.b32.xlu0 %v2013, 64
      %v2108 = vpop.permute.xlu0 %2107
      %2109 = vrot.lane.b32.xlu0 %v2014, 64
      %v2110 = vpop.permute.xlu0 %2109
      %vm2143 = vcmask 589312
      %2144 = vst.msk [vmem:[#allocation3] sm:$0xff] %vm2143, %v2048
      %2145 = vst.msk [vmem:[#allocation3 + $0x8] sm:$0xff] %vm2143, %v2050
      %2146 = vst.msk [vmem:[#allocation3 + $0x10] sm:$0xff] %vm2143, %v2052
      %2147 = vst.msk [vmem:[#allocation3 + $0x18] sm:$0xff] %vm2143, %v2054
      %2148 = vst.msk [vmem:[#allocation3 + $0x20] sm:$0xff] %vm2143, %v2056
      %2149 = vst.msk [vmem:[#allocation3 + $0x28] sm:$0xff] %vm2143, %v2058
      %2150 = vst.msk [vmem:[#allocation3 + $0x30] sm:$0xff] %vm2143, %v2060
      %2151 = vst.msk [vmem:[#allocation3 + $0x38] sm:$0xff] %vm2143, %v2062
      %2152 = vst.msk [vmem:[#allocation3 + $0x40] sm:$0xff] %vm2143, %v2064
      %2153 = vst.msk [vmem:[#allocation3 + $0x48] sm:$0xff] %vm2143, %v2066
      %2154 = vst.msk [vmem:[#allocation3 + $0x50] sm:$0xff] %vm2143, %v2068
      %2155 = vst.msk [vmem:[#allocation3 + $0x58] sm:$0xff] %vm2143, %v2070
      %2156 = vst.msk [vmem:[#allocation3 + $0x60] sm:$0xff] %vm2143, %v2072
      %2157 = vst.msk [vmem:[#allocation3 + $0x68] sm:$0xff] %vm2143, %v2074
      %2158 = vst.msk [vmem:[#allocation3 + $0x70] sm:$0xff] %vm2143, %v2076
      %2159 = vst.msk [vmem:[#allocation3 + $0x78] sm:$0xff] %vm2143, %v2078
      %2160 = vst.msk [vmem:[#allocation3 + $0x80] sm:$0xff] %vm2143, %v2080
      %2161 = vst.msk [vmem:[#allocation3 + $0x88] sm:$0xff] %vm2143, %v2082
      %2162 = vst.msk [vmem:[#allocation3 + $0x90] sm:$0xff] %vm2143, %v2084
      %2163 = vst.msk [vmem:[#allocation3 + $0x98] sm:$0xff] %vm2143, %v2086
      %2164 = vst.msk [vmem:[#allocation3 + $0xa0] sm:$0xff] %vm2143, %v2088
      %2165 = vst.msk [vmem:[#allocation3 + $0xa8] sm:$0xff] %vm2143, %v2090
      %2166 = vst.msk [vmem:[#allocation3 + $0xb0] sm:$0xff] %vm2143, %v2092
      %2167 = vst.msk [vmem:[#allocation3 + $0xb8] sm:$0xff] %vm2143, %v2094
      %2168 = vst.msk [vmem:[#allocation3 + $0xc0] sm:$0xff] %vm2143, %v2096
      %2169 = vst.msk [vmem:[#allocation3 + $0xc8] sm:$0xff] %vm2143, %v2098
      %2170 = vst.msk [vmem:[#allocation3 + $0xd0] sm:$0xff] %vm2143, %v2100
      %2171 = vst.msk [vmem:[#allocation3 + $0xd8] sm:$0xff] %vm2143, %v2102
      %2172 = vst.msk [vmem:[#allocation3 + $0xe0] sm:$0xff] %vm2143, %v2104
      %2173 = vst.msk [vmem:[#allocation3 + $0xe8] sm:$0xff] %vm2143, %v2106
      %2174 = vst.msk [vmem:[#allocation3 + $0xf0] sm:$0xff] %vm2143, %v2108
      %2175 = vst.msk [vmem:[#allocation3 + $0xf8] sm:$0xff] %vm2143, %v2110
      %v2176 = vld [vmem:[#allocation3] sm:$0xff]
      %v2177 = vld [vmem:[#allocation3 + $0x8] sm:$0xff]
      %v2178 = vld [vmem:[#allocation3 + $0x10] sm:$0xff]
      %v2179 = vld [vmem:[#allocation3 + $0x18] sm:$0xff]
      %v2180 = vld [vmem:[#allocation3 + $0x20] sm:$0xff]
      %v2181 = vld [vmem:[#allocation3 + $0x28] sm:$0xff]
      %v2182 = vld [vmem:[#allocation3 + $0x30] sm:$0xff]
      %v2183 = vld [vmem:[#allocation3 + $0x38] sm:$0xff]
      %v2184 = vld [vmem:[#allocation3 + $0x40] sm:$0xff]
      %v2185 = vld [vmem:[#allocation3 + $0x48] sm:$0xff]
      %v2186 = vld [vmem:[#allocation3 + $0x50] sm:$0xff]
      %v2187 = vld [vmem:[#allocation3 + $0x58] sm:$0xff]
      %v2188 = vld [vmem:[#allocation3 + $0x60] sm:$0xff]
      %v2189 = vld [vmem:[#allocation3 + $0x68] sm:$0xff]
      %v2190 = vld [vmem:[#allocation3 + $0x70] sm:$0xff]
      %v2191 = vld [vmem:[#allocation3 + $0x78] sm:$0xff]
      %v2192 = vld [vmem:[#allocation3 + $0x80] sm:$0xff]
      %v2193 = vld [vmem:[#allocation3 + $0x88] sm:$0xff]
      %v2194 = vld [vmem:[#allocation3 + $0x90] sm:$0xff]
      %v2195 = vld [vmem:[#allocation3 + $0x98] sm:$0xff]
      %v2196 = vld [vmem:[#allocation3 + $0xa0] sm:$0xff]
      %v2197 = vld [vmem:[#allocation3 + $0xa8] sm:$0xff]
      %v2198 = vld [vmem:[#allocation3 + $0xb0] sm:$0xff]
      %v2199 = vld [vmem:[#allocation3 + $0xb8] sm:$0xff]
      %v2200 = vld [vmem:[#allocation3 + $0xc0] sm:$0xff]
      %v2201 = vld [vmem:[#allocation3 + $0xc8] sm:$0xff]
      %v2202 = vld [vmem:[#allocation3 + $0xd0] sm:$0xff]
      %v2203 = vld [vmem:[#allocation3 + $0xd8] sm:$0xff]
      %v2204 = vld [vmem:[#allocation3 + $0xe0] sm:$0xff]
      %v2205 = vld [vmem:[#allocation3 + $0xe8] sm:$0xff]
      %v2206 = vld [vmem:[#allocation3 + $0xf0] sm:$0xff]
      %v2207 = vld [vmem:[#allocation3 + $0xf8] sm:$0xff]
      %v2208 = vld [vmem:[%s2] sm:$0xff]
      %v2209 = vld [vmem:[%s2 + $0x8] sm:$0xff]
      %v2210 = vld [vmem:[%s2 + $0x10] sm:$0xff]
      %v2211 = vld [vmem:[%s2 + $0x18] sm:$0xff]
      %v2212 = vld [vmem:[%s2 + $0x20] sm:$0xff]
      %v2213 = vld [vmem:[%s2 + $0x28] sm:$0xff]
      %v2214 = vld [vmem:[%s2 + $0x30] sm:$0xff]
      %v2215 = vld [vmem:[%s2 + $0x38] sm:$0xff]
      %v2216 = vld [vmem:[%s2 + $0x40] sm:$0xff]
      %vm2217 = vcmask 588800
      %v2219 = vsel %vm2217, %v2176, 0
      %v2222 = vsel %vm2217, %v2177, 0
      %v2225 = vsel %vm2217, %v2178, 0
      %v2228 = vsel %vm2217, %v2179, 0
      %v2231 = vsel %vm2217, %v2180, 0
      %v2234 = vsel %vm2217, %v2181, 0
      %v2237 = vsel %vm2217, %v2182, 0
      %v2240 = vsel %vm2217, %v2183, 0
      %v2243 = vsel %vm2217, %v2184, 0
      %v2246 = vsel %vm2217, %v2185, 0
      %v2249 = vsel %vm2217, %v2186, 0
      %v2252 = vsel %vm2217, %v2187, 0
      %v2255 = vsel %vm2217, %v2188, 0
      %v2258 = vsel %vm2217, %v2189, 0
      %v2261 = vsel %vm2217, %v2190, 0
      %v2264 = vsel %vm2217, %v2191, 0
      %v2267 = vsel %vm2217, %v2192, 0
      %v2270 = vsel %vm2217, %v2193, 0
      %v2273 = vsel %vm2217, %v2194, 0
      %v2276 = vsel %vm2217, %v2195, 0
      %v2279 = vsel %vm2217, %v2196, 0
      %v2282 = vsel %vm2217, %v2197, 0
      %v2285 = vsel %vm2217, %v2198, 0
      %v2288 = vsel %vm2217, %v2199, 0
      %v2291 = vsel %vm2217, %v2200, 0
      %v2294 = vsel %vm2217, %v2201, 0
      %v2297 = vsel %vm2217, %v2202, 0
      %v2300 = vsel %vm2217, %v2203, 0
      %v2303 = vsel %vm2217, %v2204, 0
      %v2306 = vsel %vm2217, %v2205, 0
      %v2309 = vsel %vm2217, %v2206, 0
      %v2312 = vsel %vm2217, %v2207, 0
      %2314 = vmatprep.subr.mxu0 0.0
      %2315 = vmatpush1.msra.mxu0 0.0
      %2316 = vmatprep.subr.mxu0 0.0
      %2317 = vmatpush1.msra.mxu0 0.0
      %2318 = vmatprep.subr.mxu0 0.0
      %2319 = vmatpush1.msra.mxu0 0.0
      %2320 = vmatprep.subr.mxu0 0.0
      %2321 = vmatpush1.msra.mxu0 0.0
      %2322 = vmatprep.subr.mxu0 0.0
      %2323 = vmatpush1.msra.mxu0 0.0
      %2324 = vmatprep.subr.mxu0 0.0
      %2325 = vmatpush1.msra.mxu0 0.0
      %2326 = vmatprep.subr.mxu0 0.0
      %2327 = vmatpush1.msra.mxu0 0.0
      %2328 = vmatprep.subr.mxu0 0.0
      %2329 = vmatpush1.msra.mxu0 %v2216
      %2330 = vmatprep.subr.mxu0 0.0
      %2331 = vmatpush1.msra.mxu0 %v2215
      %2332 = vmatprep.subr.mxu0 0.0
      %2333 = vmatpush1.msra.mxu0 %v2214
      %2334 = vmatprep.subr.mxu0 0.0
      %2335 = vmatpush1.msra.mxu0 %v2213
      %2336 = vmatprep.subr.mxu0 0.0
      %2337 = vmatpush1.msra.mxu0 %v2212
      %2338 = vmatprep.subr.mxu0 0.0
      %2339 = vmatpush1.msra.mxu0 %v2211
      %2340 = vmatprep.subr.mxu0 0.0
      %2341 = vmatpush1.msra.mxu0 %v2210
      %2342 = vmatprep.subr.mxu0 0.0
      %2343 = vmatpush1.msra.mxu0 %v2209
      %2344 = vmatprep.subr.mxu0 0.0
      %2345 = vmatpush1.msra.mxu0 %v2208
      %2346 = vmatprep.subr.mxu0 0.0
      %2347 = vmatpush2.msra.mxu0 0.0
      %2348 = vmatprep.subr.mxu0 0.0
      %2349 = vmatpush2.msra.mxu0 0.0
      %2350 = vmatprep.subr.mxu0 0.0
      %2351 = vmatpush2.msra.mxu0 0.0
      %2352 = vmatprep.subr.mxu0 0.0
      %2353 = vmatpush2.msra.mxu0 0.0
      %2354 = vmatprep.subr.mxu0 0.0
      %2355 = vmatpush2.msra.mxu0 0.0
      %2356 = vmatprep.subr.mxu0 0.0
      %2357 = vmatpush2.msra.mxu0 0.0
      %2358 = vmatprep.subr.mxu0 0.0
      %2359 = vmatpush2.msra.mxu0 0.0
      %2360 = vmatprep.subr.mxu0 0.0
      %2361 = vmatpush2.msra.mxu0 0.0
      %2362 = vmatprep.subr.mxu0 0.0
      %2363 = vmatpush2.msra.mxu0 0.0
      %2364 = vmatprep.subr.mxu0 0.0
      %2365 = vmatpush2.msra.mxu0 0.0
      %2366 = vmatprep.subr.mxu0 0.0
      %2367 = vmatpush2.msra.mxu0 0.0
      %2368 = vmatprep.subr.mxu0 0.0
      %2369 = vmatpush2.msra.mxu0 0.0
      %2370 = vmatprep.subr.mxu0 0.0
      %2371 = vmatpush2.msra.mxu0 0.0
      %2372 = vmatprep.subr.mxu0 0.0
      %2373 = vmatpush2.msra.mxu0 0.0
      %2374 = vmatprep.subr.mxu0 0.0
      %2375 = vmatpush2.msra.mxu0 0.0
      %2376 = vmatprep.subr.mxu0 0.0
      %2377 = vmatpush2.msra.mxu0 0.0
      %2378 = vmatprep.mubr.f32.mxu0 0.0
      %2379 = vmatmul.mubr.f32.gmra.mxu0 %v2219
      %v2380 = vpop.f32.mrf.mxu0
      %v2381 = vadd.f32 0.0, %v2380
      %v2382 = vpop.f32.mrf.mxu0
      %2383 = vmatprep.mubr.f32.mxu0 0.0
      %2384 = vmatmul.mubr.f32.gmra.mxu0 %v2222
      %v2385 = vpop.f32.mrf.mxu0
      %v2386 = vadd.f32 0.0, %v2385
      %v2387 = vpop.f32.mrf.mxu0
      %2388 = vmatprep.mubr.f32.mxu0 0.0
      %2389 = vmatmul.mubr.f32.gmra.mxu0 %v2225
      %v2390 = vpop.f32.mrf.mxu0
      %v2391 = vadd.f32 0.0, %v2390
      %v2392 = vpop.f32.mrf.mxu0
      %2393 = vmatprep.mubr.f32.mxu0 0.0
      %2394 = vmatmul.mubr.f32.gmra.mxu0 %v2228
      %v2395 = vpop.f32.mrf.mxu0
      %v2396 = vadd.f32 0.0, %v2395
      %v2397 = vpop.f32.mrf.mxu0
      %2398 = vmatprep.mubr.f32.mxu0 0.0
      %2399 = vmatmul.mubr.f32.gmra.mxu0 %v2231
      %v2400 = vpop.f32.mrf.mxu0
      %v2401 = vadd.f32 0.0, %v2400
      %v2402 = vpop.f32.mrf.mxu0
      %2403 = vmatprep.mubr.f32.mxu0 0.0
      %2404 = vmatmul.mubr.f32.gmra.mxu0 %v2234
      %v2405 = vpop.f32.mrf.mxu0
      %v2406 = vadd.f32 0.0, %v2405
      %v2407 = vpop.f32.mrf.mxu0
      %2408 = vmatprep.mubr.f32.mxu0 0.0
      %2409 = vmatmul.mubr.f32.gmra.mxu0 %v2237
      %v2410 = vpop.f32.mrf.mxu0
      %v2411 = vadd.f32 0.0, %v2410
      %v2412 = vpop.f32.mrf.mxu0
      %2413 = vmatprep.mubr.f32.mxu0 0.0
      %2414 = vmatmul.mubr.f32.gmra.mxu0 %v2240
      %v2415 = vpop.f32.mrf.mxu0
      %v2416 = vadd.f32 0.0, %v2415
      %v2417 = vpop.f32.mrf.mxu0
      %2418 = vmatprep.mubr.f32.mxu0 0.0
      %2419 = vmatmul.mubr.f32.gmra.mxu0 %v2243
      %v2420 = vpop.f32.mrf.mxu0
      %v2421 = vadd.f32 0.0, %v2420
      %v2422 = vpop.f32.mrf.mxu0
      %2423 = vmatprep.mubr.f32.mxu0 0.0
      %2424 = vmatmul.mubr.f32.gmra.mxu0 %v2246
      %v2425 = vpop.f32.mrf.mxu0
      %v2426 = vadd.f32 0.0, %v2425
      %v2427 = vpop.f32.mrf.mxu0
      %2428 = vmatprep.mubr.f32.mxu0 0.0
      %2429 = vmatmul.mubr.f32.gmra.mxu0 %v2249
      %v2430 = vpop.f32.mrf.mxu0
      %v2431 = vadd.f32 0.0, %v2430
      %v2432 = vpop.f32.mrf.mxu0
      %2433 = vmatprep.mubr.f32.mxu0 0.0
      %2434 = vmatmul.mubr.f32.gmra.mxu0 %v2252
      %v2435 = vpop.f32.mrf.mxu0
      %v2436 = vadd.f32 0.0, %v2435
      %v2437 = vpop.f32.mrf.mxu0
      %2438 = vmatprep.mubr.f32.mxu0 0.0
      %2439 = vmatmul.mubr.f32.gmra.mxu0 %v2255
      %v2440 = vpop.f32.mrf.mxu0
      %v2441 = vadd.f32 0.0, %v2440
      %v2442 = vpop.f32.mrf.mxu0
      %2443 = vmatprep.mubr.f32.mxu0 0.0
      %2444 = vmatmul.mubr.f32.gmra.mxu0 %v2258
      %v2445 = vpop.f32.mrf.mxu0
      %v2446 = vadd.f32 0.0, %v2445
      %v2447 = vpop.f32.mrf.mxu0
      %2448 = vmatprep.mubr.f32.mxu0 0.0
      %2449 = vmatmul.mubr.f32.gmra.mxu0 %v2261
      %v2450 = vpop.f32.mrf.mxu0
      %v2451 = vadd.f32 0.0, %v2450
      %v2452 = vpop.f32.mrf.mxu0
      %2453 = vmatprep.mubr.f32.mxu0 0.0
      %2454 = vmatmul.mubr.f32.gmra.mxu0 %v2264
      %v2455 = vpop.f32.mrf.mxu0
      %v2456 = vadd.f32 0.0, %v2455
      %v2457 = vpop.f32.mrf.mxu0
      %2458 = vmatprep.mubr.f32.mxu0 0.0
      %2459 = vmatmul.mubr.f32.gmra.mxu0 %v2267
      %v2460 = vpop.f32.mrf.mxu0
      %v2461 = vadd.f32 0.0, %v2460
      %v2462 = vpop.f32.mrf.mxu0
      %2463 = vmatprep.mubr.f32.mxu0 0.0
      %2464 = vmatmul.mubr.f32.gmra.mxu0 %v2270
      %v2465 = vpop.f32.mrf.mxu0
      %v2466 = vadd.f32 0.0, %v2465
      %v2467 = vpop.f32.mrf.mxu0
      %2468 = vmatprep.mubr.f32.mxu0 0.0
      %2469 = vmatmul.mubr.f32.gmra.mxu0 %v2273
      %v2470 = vpop.f32.mrf.mxu0
      %v2471 = vadd.f32 0.0, %v2470
      %v2472 = vpop.f32.mrf.mxu0
      %2473 = vmatprep.mubr.f32.mxu0 0.0
      %2474 = vmatmul.mubr.f32.gmra.mxu0 %v2276
      %v2475 = vpop.f32.mrf.mxu0
      %v2476 = vadd.f32 0.0, %v2475
      %v2477 = vpop.f32.mrf.mxu0
      %2478 = vmatprep.mubr.f32.mxu0 0.0
      %2479 = vmatmul.mubr.f32.gmra.mxu0 %v2279
      %v2480 = vpop.f32.mrf.mxu0
      %v2481 = vadd.f32 0.0, %v2480
      %v2482 = vpop.f32.mrf.mxu0
      %2483 = vmatprep.mubr.f32.mxu0 0.0
      %2484 = vmatmul.mubr.f32.gmra.mxu0 %v2282
      %v2485 = vpop.f32.mrf.mxu0
      %v2486 = vadd.f32 0.0, %v2485
      %v2487 = vpop.f32.mrf.mxu0
      %2488 = vmatprep.mubr.f32.mxu0 0.0
      %2489 = vmatmul.mubr.f32.gmra.mxu0 %v2285
      %v2490 = vpop.f32.mrf.mxu0
      %v2491 = vadd.f32 0.0, %v2490
      %v2492 = vpop.f32.mrf.mxu0
      %2493 = vmatprep.mubr.f32.mxu0 0.0
      %2494 = vmatmul.mubr.f32.gmra.mxu0 %v2288
      %v2495 = vpop.f32.mrf.mxu0
      %v2496 = vadd.f32 0.0, %v2495
      %v2497 = vpop.f32.mrf.mxu0
      %2498 = vmatprep.mubr.f32.mxu0 0.0
      %2499 = vmatmul.mubr.f32.gmra.mxu0 %v2291
      %v2500 = vpop.f32.mrf.mxu0
      %v2501 = vadd.f32 0.0, %v2500
      %v2502 = vpop.f32.mrf.mxu0
      %2503 = vmatprep.mubr.f32.mxu0 0.0
      %2504 = vmatmul.mubr.f32.gmra.mxu0 %v2294
      %v2505 = vpop.f32.mrf.mxu0
      %v2506 = vadd.f32 0.0, %v2505
      %v2507 = vpop.f32.mrf.mxu0
      %2508 = vmatprep.mubr.f32.mxu0 0.0
      %2509 = vmatmul.mubr.f32.gmra.mxu0 %v2297
      %v2510 = vpop.f32.mrf.mxu0
      %v2511 = vadd.f32 0.0, %v2510
      %v2512 = vpop.f32.mrf.mxu0
      %2513 = vmatprep.mubr.f32.mxu0 0.0
      %2514 = vmatmul.mubr.f32.gmra.mxu0 %v2300
      %v2515 = vpop.f32.mrf.mxu0
      %v2516 = vadd.f32 0.0, %v2515
      %v2517 = vpop.f32.mrf.mxu0
      %2518 = vmatprep.mubr.f32.mxu0 0.0
      %2519 = vmatmul.mubr.f32.gmra.mxu0 %v2303
      %v2520 = vpop.f32.mrf.mxu0
      %v2521 = vadd.f32 0.0, %v2520
      %v2522 = vpop.f32.mrf.mxu0
      %2523 = vmatprep.mubr.f32.mxu0 0.0
      %2524 = vmatmul.mubr.f32.gmra.mxu0 %v2306
      %v2525 = vpop.f32.mrf.mxu0
      %v2526 = vadd.f32 0.0, %v2525
      %v2527 = vpop.f32.mrf.mxu0
      %2528 = vmatprep.mubr.f32.mxu0 0.0
      %2529 = vmatmul.mubr.f32.gmra.mxu0 %v2309
      %v2530 = vpop.f32.mrf.mxu0
      %v2531 = vadd.f32 0.0, %v2530
      %v2532 = vpop.f32.mrf.mxu0
      %2533 = vmatprep.mubr.f32.mxu0 0.0
      %2534 = vmatmul.mubr.f32.gmra.mxu0 %v2312
      %v2535 = vpop.f32.mrf.mxu0
      %v2536 = vadd.f32 0.0, %v2535
      %v2537 = vpop.f32.mrf.mxu0
      %2538 = vdwg.mxu0
      %2539 = vst.msk [vmem:[%s255] sm:$0xff] %vm341, %v2381
      %2540 = vst.msk [vmem:[%s255 + $0x8] sm:$0xff] %vm341, %v2386
      %2541 = vst.msk [vmem:[%s255 + $0x10] sm:$0xff] %vm341, %v2391
      %2542 = vst.msk [vmem:[%s255 + $0x18] sm:$0xff] %vm341, %v2396
      %2543 = vst.msk [vmem:[%s255 + $0x20] sm:$0xff] %vm341, %v2401
      %2544 = vst.msk [vmem:[%s255 + $0x28] sm:$0xff] %vm341, %v2406
      %2545 = vst.msk [vmem:[%s255 + $0x30] sm:$0xff] %vm341, %v2411
      %2546 = vst.msk [vmem:[%s255 + $0x38] sm:$0xff] %vm341, %v2416
      %2547 = vst.msk [vmem:[%s255 + $0x40] sm:$0xff] %vm341, %v2421
      %2548 = vst.msk [vmem:[%s255 + $0x48] sm:$0xff] %vm341, %v2426
      %2549 = vst.msk [vmem:[%s255 + $0x50] sm:$0xff] %vm341, %v2431
      %2550 = vst.msk [vmem:[%s255 + $0x58] sm:$0xff] %vm341, %v2436
      %2551 = vst.msk [vmem:[%s255 + $0x60] sm:$0xff] %vm341, %v2441
      %2552 = vst.msk [vmem:[%s255 + $0x68] sm:$0xff] %vm341, %v2446
      %2553 = vst.msk [vmem:[%s255 + $0x70] sm:$0xff] %vm341, %v2451
      %2554 = vst.msk [vmem:[%s255 + $0x78] sm:$0xff] %vm341, %v2456
      %2555 = vst.msk [vmem:[%s255 + $0x80] sm:$0xff] %vm341, %v2461
      %2556 = vst.msk [vmem:[%s255 + $0x88] sm:$0xff] %vm341, %v2466
      %2557 = vst.msk [vmem:[%s255 + $0x90] sm:$0xff] %vm341, %v2471
      %2558 = vst.msk [vmem:[%s255 + $0x98] sm:$0xff] %vm341, %v2476
      %2559 = vst.msk [vmem:[%s255 + $0xa0] sm:$0xff] %vm341, %v2481
      %2560 = vst.msk [vmem:[%s255 + $0xa8] sm:$0xff] %vm341, %v2486
      %2561 = vst.msk [vmem:[%s255 + $0xb0] sm:$0xff] %vm341, %v2491
      %2562 = vst.msk [vmem:[%s255 + $0xb8] sm:$0xff] %vm341, %v2496
      %2563 = vst.msk [vmem:[%s255 + $0xc0] sm:$0xff] %vm341, %v2501
      %2564 = vst.msk [vmem:[%s255 + $0xc8] sm:$0xff] %vm341, %v2506
      %2565 = vst.msk [vmem:[%s255 + $0xd0] sm:$0xff] %vm341, %v2511
      %2566 = vst.msk [vmem:[%s255 + $0xd8] sm:$0xff] %vm341, %v2516
      %2567 = vst.msk [vmem:[%s255 + $0xe0] sm:$0xff] %vm341, %v2521
      %2568 = vst.msk [vmem:[%s255 + $0xe8] sm:$0xff] %vm341, %v2526
      %2569 = vst.msk [vmem:[%s255 + $0xf0] sm:$0xff] %vm341, %v2531
      %2570 = vst.msk [vmem:[%s255 + $0xf8] sm:$0xff] %vm341, %v2536
      %v2571 = vsel %vm341, %v2381, 0.0
      %v2572 = vsel %vm341, %v2386, 0.0
      %v2573 = vadd.f32 %v2571, %v2572
      %v2574 = vsel %vm341, %v2391, 0.0
      %v2575 = vadd.f32 %v2573, %v2574
      %v2576 = vsel %vm341, %v2396, 0.0
      %v2577 = vadd.f32 %v2575, %v2576
      %v2578 = vsel %vm341, %v2401, 0.0
      %v2579 = vadd.f32 %v2577, %v2578
      %v2580 = vsel %vm341, %v2406, 0.0
      %v2581 = vadd.f32 %v2579, %v2580
      %v2582 = vsel %vm341, %v2411, 0.0
      %v2583 = vadd.f32 %v2581, %v2582
      %v2584 = vsel %vm341, %v2416, 0.0
      %v2585 = vadd.f32 %v2583, %v2584
      %v2586 = vsel %vm341, %v2421, 0.0
      %v2587 = vadd.f32 %v2585, %v2586
      %v2588 = vsel %vm341, %v2426, 0.0
      %v2589 = vadd.f32 %v2587, %v2588
      %v2590 = vsel %vm341, %v2431, 0.0
      %v2591 = vadd.f32 %v2589, %v2590
      %v2592 = vsel %vm341, %v2436, 0.0
      %v2593 = vadd.f32 %v2591, %v2592
      %v2594 = vsel %vm341, %v2441, 0.0
      %v2595 = vadd.f32 %v2593, %v2594
      %v2596 = vsel %vm341, %v2446, 0.0
      %v2597 = vadd.f32 %v2595, %v2596
      %v2598 = vsel %vm341, %v2451, 0.0
      %v2599 = vadd.f32 %v2597, %v2598
      %v2600 = vsel %vm341, %v2456, 0.0
      %v2601 = vadd.f32 %v2599, %v2600
      %v2602 = vsel %vm341, %v2461, 0.0
      %v2603 = vadd.f32 %v2601, %v2602
      %v2604 = vsel %vm341, %v2466, 0.0
      %v2605 = vadd.f32 %v2603, %v2604
      %v2606 = vsel %vm341, %v2471, 0.0
      %v2607 = vadd.f32 %v2605, %v2606
      %v2608 = vsel %vm341, %v2476, 0.0
      %v2609 = vadd.f32 %v2607, %v2608
      %v2610 = vsel %vm341, %v2481, 0.0
      %v2611 = vadd.f32 %v2609, %v2610
      %v2612 = vsel %vm341, %v2486, 0.0
      %v2613 = vadd.f32 %v2611, %v2612
      %v2614 = vsel %vm341, %v2491, 0.0
      %v2615 = vadd.f32 %v2613, %v2614
      %v2616 = vsel %vm341, %v2496, 0.0
      %v2617 = vadd.f32 %v2615, %v2616
      %v2618 = vsel %vm341, %v2501, 0.0
      %v2619 = vadd.f32 %v2617, %v2618
      %v2620 = vsel %vm341, %v2506, 0.0
      %v2621 = vadd.f32 %v2619, %v2620
      %v2622 = vsel %vm341, %v2511, 0.0
      %v2623 = vadd.f32 %v2621, %v2622
      %v2624 = vsel %vm341, %v2516, 0.0
      %v2625 = vadd.f32 %v2623, %v2624
      %v2626 = vsel %vm341, %v2521, 0.0
      %v2627 = vadd.f32 %v2625, %v2626
      %v2628 = vsel %vm341, %v2526, 0.0
      %v2629 = vadd.f32 %v2627, %v2628
      %v2630 = vsel %vm341, %v2531, 0.0
      %v2631 = vadd.f32 %v2629, %v2630
      %v2632 = vsel %vm341, %v2536, 0.0
      %v2633 = vadd.f32 %v2631, %v2632
      %v2634 = vrot.slane %v2633, 4
      %v2635 = vadd.f32 %v2633, %v2634
      %v2636 = vrot.slane %v2635, 2
      %v2637 = vadd.f32 %v2635, %v2636
      %v2638 = vrot.slane %v2637, 1
      %v2639 = vadd.f32 %v2637, %v2638
      %vm2640 = vcmask 24576
      %2641 = vst.msk [vmem:[%s258] sm:$0x1] %vm2640, %v2639
      %v2642 = vmul.f32 %v2381, %v2381
      %v2643 = vmul.f32 %v2386, %v2386
      %v2644 = vmul.f32 %v2391, %v2391
      %v2645 = vmul.f32 %v2396, %v2396
      %v2646 = vmul.f32 %v2401, %v2401
      %v2647 = vmul.f32 %v2406, %v2406
      %v2648 = vmul.f32 %v2411, %v2411
      %v2649 = vmul.f32 %v2416, %v2416
      %v2650 = vmul.f32 %v2421, %v2421
      %v2651 = vmul.f32 %v2426, %v2426
      %v2652 = vmul.f32 %v2431, %v2431
      %v2653 = vmul.f32 %v2436, %v2436
      %v2654 = vmul.f32 %v2441, %v2441
      %v2655 = vmul.f32 %v2446, %v2446
      %v2656 = vmul.f32 %v2451, %v2451
      %v2657 = vmul.f32 %v2456, %v2456
      %v2658 = vmul.f32 %v2461, %v2461
      %v2659 = vmul.f32 %v2466, %v2466
      %v2660 = vmul.f32 %v2471, %v2471
      %v2661 = vmul.f32 %v2476, %v2476
      %v2662 = vmul.f32 %v2481, %v2481
      %v2663 = vmul.f32 %v2486, %v2486
      %v2664 = vmul.f32 %v2491, %v2491
      %v2665 = vmul.f32 %v2496, %v2496
      %v2666 = vmul.f32 %v2501, %v2501
      %v2667 = vmul.f32 %v2506, %v2506
      %v2668 = vmul.f32 %v2511, %v2511
      %v2669 = vmul.f32 %v2516, %v2516
      %v2670 = vmul.f32 %v2521, %v2521
      %v2671 = vmul.f32 %v2526, %v2526
      %v2672 = vmul.f32 %v2531, %v2531
      %v2673 = vmul.f32 %v2536, %v2536
      %v2674 = vsel %vm341, %v2642, 0.0
      %v2675 = vsel %vm341, %v2643, 0.0
      %v2676 = vadd.f32 %v2674, %v2675
      %v2677 = vsel %vm341, %v2644, 0.0
      %v2678 = vadd.f32 %v2676, %v2677
      %v2679 = vsel %vm341, %v2645, 0.0
      %v2680 = vadd.f32 %v2678, %v2679
      %v2681 = vsel %vm341, %v2646, 0.0
      %v2682 = vadd.f32 %v2680, %v2681
      %v2683 = vsel %vm341, %v2647, 0.0
      %v2684 = vadd.f32 %v2682, %v2683
      %v2685 = vsel %vm341, %v2648, 0.0
      %v2686 = vadd.f32 %v2684, %v2685
      %v2687 = vsel %vm341, %v2649, 0.0
      %v2688 = vadd.f32 %v2686, %v2687
      %v2689 = vsel %vm341, %v2650, 0.0
      %v2690 = vadd.f32 %v2688, %v2689
      %v2691 = vsel %vm341, %v2651, 0.0
      %v2692 = vadd.f32 %v2690, %v2691
      %v2693 = vsel %vm341, %v2652, 0.0
      %v2694 = vadd.f32 %v2692, %v2693
      %v2695 = vsel %vm341, %v2653, 0.0
      %v2696 = vadd.f32 %v2694, %v2695
      %v2697 = vsel %vm341, %v2654, 0.0
      %v2698 = vadd.f32 %v2696, %v2697
      %v2699 = vsel %vm341, %v2655, 0.0
      %v2700 = vadd.f32 %v2698, %v2699
      %v2701 = vsel %vm341, %v2656, 0.0
      %v2702 = vadd.f32 %v2700, %v2701
      %v2703 = vsel %vm341, %v2657, 0.0
      %v2704 = vadd.f32 %v2702, %v2703
      %v2705 = vsel %vm341, %v2658, 0.0
      %v2706 = vadd.f32 %v2704, %v2705
      %v2707 = vsel %vm341, %v2659, 0.0
      %v2708 = vadd.f32 %v2706, %v2707
      %v2709 = vsel %vm341, %v2660, 0.0
      %v2710 = vadd.f32 %v2708, %v2709
      %v2711 = vsel %vm341, %v2661, 0.0
      %v2712 = vadd.f32 %v2710, %v2711
      %v2713 = vsel %vm341, %v2662, 0.0
      %v2714 = vadd.f32 %v2712, %v2713
      %v2715 = vsel %vm341, %v2663, 0.0
      %v2716 = vadd.f32 %v2714, %v2715
      %v2717 = vsel %vm341, %v2664, 0.0
      %v2718 = vadd.f32 %v2716, %v2717
      %v2719 = vsel %vm341, %v2665, 0.0
      %v2720 = vadd.f32 %v2718, %v2719
      %v2721 = vsel %vm341, %v2666, 0.0
      %v2722 = vadd.f32 %v2720, %v2721
      %v2723 = vsel %vm341, %v2667, 0.0
      %v2724 = vadd.f32 %v2722, %v2723
      %v2725 = vsel %vm341, %v2668, 0.0
      %v2726 = vadd.f32 %v2724, %v2725
      %v2727 = vsel %vm341, %v2669, 0.0
      %v2728 = vadd.f32 %v2726, %v2727
      %v2729 = vsel %vm341, %v2670, 0.0
      %v2730 = vadd.f32 %v2728, %v2729
      %v2731 = vsel %vm341, %v2671, 0.0
      %v2732 = vadd.f32 %v2730, %v2731
      %v2733 = vsel %vm341, %v2672, 0.0
      %v2734 = vadd.f32 %v2732, %v2733
      %v2735 = vsel %vm341, %v2673, 0.0
      %v2736 = vadd.f32 %v2734, %v2735
      %v2737 = vrot.slane %v2736, 4
      %v2738 = vadd.f32 %v2736, %v2737
      %v2739 = vrot.slane %v2738, 2
      %v2740 = vadd.f32 %v2738, %v2739
      %v2741 = vrot.slane %v2740, 1
      %v2742 = vadd.f32 %v2740, %v2741
      %2743 = vst.msk [vmem:[%s261] sm:$0x1] %vm2640, %v2742
      %p2744 = scmp.lt.s32.totalorder %s17, 1
      %s2745 = scalar_select %p2744, %s17, 1
      %s2746 = smul.addr %s2745, 32
      %s2747 = smul.addr %s2746, 8
      %s2748 = scalar_lea.vmem %s3, %s2747
      %p2749 = scmp.lt.s32.totalorder %s17, 1
      %s2750 = scalar_select %p2749, %s17, 1
      %s2751 = scalar_lea.vmem %s4, %s2750
      %p2752 = scmp.lt.s32.totalorder %s17, 1
      %s2753 = scalar_select %p2752, %s17, 1
      %s2754 = scalar_lea.vmem %s5, %s2753
      // Predicated region
      $region33: #{up_forward.5} parent=31 // pred_check
        %p2755 = pneg %p108
      $region34: #{up_forward.5} parent=31 // pred_check_branch
        %2757 = sbr.rel (%p2755) target = $region36
      $region35: #{up_forward.5} parent=31 // pred_region
        _
      $region36: #{up_forward.5} parent=31 // pred_fallthru
        _
      // Predicated region
      $region37: #{up_forward.5} parent=31 // pred_check
        %p2758 = pneg %p134
      $region38: #{up_forward.5} parent=31 // pred_check_branch
        %2760 = sbr.rel (%p2758) target = $region40
      $region39: #{up_forward.5} parent=31 // pred_region
        _
      $region40: #{up_forward.5} parent=31 // pred_fallthru
        _
      // Predicated region
      $region41: #{up_forward.5} parent=31 // pred_check
        %p2761 = pneg %p160
      $region42: #{up_forward.5} parent=31 // pred_check_branch
        %2763 = sbr.rel (%p2761) target = $region44
      $region43: #{up_forward.5} parent=31 // pred_region
        _
      $region44: #{up_forward.5} parent=31 // pred_fallthru
        _
    $region32: #{up_forward.5} parent=5 // pred_fallthru
      _
    %p2764 = scmp.le.s32.totalorder 2, %s12
    // Predicated region
    $region45: #{up_forward.5} parent=5 // pred_check
      %p2765 = pneg %p2764
    $region46: #{up_forward.5} parent=5 // pred_check_branch
      %2767 = sbr.rel (%p2765) target = $region48
    $region47: #{up_forward.5} parent=5 // pred_region
      %s2768 = ssub.s32 %s12, 2
      // Predicated region
      $region49: #{up_forward.5} parent=47 // pred_check
        %p2769 = pneg %p114
      $region50: #{up_forward.5} parent=47 // pred_check_branch
        %2771 = sbr.rel (%p2769) target = $region52
      $region51: #{up_forward.5} parent=47 // pred_region
        %p2772 = scmp.lt.s32.totalorder %s18, 1
        %s2773 = scalar_select %p2772, %s18, 1
        %s2774 = smul.addr %s2773, 32
        %s2775 = smul.addr %s2774, 8
        %s2776 = scalar_lea.vmem %s3, %s2775
      $region52: #{up_forward.5} parent=47 // pred_fallthru
        _
      // Predicated region
      $region53: #{up_forward.5} parent=47 // pred_check
        %p2777 = pneg %p140
      $region54: #{up_forward.5} parent=47 // pred_check_branch
        %2779 = sbr.rel (%p2777) target = $region56
      $region55: #{up_forward.5} parent=47 // pred_region
        %p2780 = scmp.lt.s32.totalorder %s18, 1
        %s2781 = scalar_select %p2780, %s18, 1
        %s2782 = scalar_lea.vmem %s4, %s2781
      $region56: #{up_forward.5} parent=47 // pred_fallthru
        _
      // Predicated region
      $region57: #{up_forward.5} parent=47 // pred_check
        %p2783 = pneg %p166
      $region58: #{up_forward.5} parent=47 // pred_check_branch
        %2785 = sbr.rel (%p2783) target = $region60
      $region59: #{up_forward.5} parent=47 // pred_region
        %p2786 = scmp.lt.s32.totalorder %s18, 1
        %s2787 = scalar_select %p2786, %s18, 1
        %s2788 = scalar_lea.vmem %s5, %s2787
      $region60: #{up_forward.5} parent=47 // pred_fallthru
        _
    $region48: #{up_forward.5} parent=5 // pred_fallthru
      _
  $region6: #{up_forward.5} parent=0 // loop_footer
    %s16 = sadd.s32 1, %s12
  $region7: #{up_forward.5} parent=0 // loop_footer_branch
    %11 = sbr.rel target = $region3
  $region8: #{up_forward.5} parent=0 // loop_exit
    _

// kernel: up_forward.6
$region0: #{up_forward.6}
  #allocation0 [shape = 'u32[]', space=smem, size = 0x4, offset = 0x4, fixed_abs, tag = 'smem constant byte address 0x4 - core index']
  #allocation1 [shape = 'u32[144,128]{1,0:T(1,128)}', space=vmem, size = 0x12000, scoped, tag = 'internal scratch']
  #allocation2 [shape = 'f32[18,18,4]{2,1,0:T(8,128)}', space=vmem, size = 0x36000, scoped, tag = 'scratch operand']
  #allocation3 [shape = 'f32[256,36]{1,0:T(8,128)}', space=vmem, size = 0x20000, scoped, tag = 'scratch operand']
  %s0 = inlined_call_operand.vmem [shape: f32[2,16,16,4], index: 0, kind: input, shape index: {}]
  %s1 = inlined_call_operand.vmem [shape: f32[1,4], index: 1, kind: input, shape index: {}]
  %s2 = inlined_call_operand.vmem [shape: f32[1,4], index: 2, kind: input, shape index: {}]
  %s3 = inlined_call_operand.vmem [shape: f32[36,4], index: 3, kind: input, shape index: {}]
  %s4 = inlined_call_operand.vmem [shape: f32[2,16,16,4], index: 4, kind: output, shape index: {0}]
  %s5 = inlined_call_operand.vmem [shape: f32[2,1,4], index: 5, kind: output, shape index: {1}]
  %s6 = inlined_call_operand.vmem [shape: f32[2,1,4], index: 6, kind: output, shape index: {2}]
  %7 = xla_tuple %s4, %s5, %s6
  %s8 = sld [smem:[#allocation0]]
  $region65: #{up_forward.6} parent=0
    _
  %s10 = ssub.s32 1, %s8
  %s11 = scalar_select 0, %s10, %s8
  loop: start=0, step=1, limit=4
  $region2: #{up_forward.6} parent=0 // loop_pre_header
    _
  $region3: #{up_forward.6} parent=0 // loop_header
    %s13 = sphi 0, %s17
    %p14 = scmp.ge.s32.totalorder %s13, 4
    %s23 = sphi 0, %s25
    %s26 = sphi 0, %s23
    %s27 = sphi 0, %s26
    %s43 = sphi 0, %s27
    %s47 = sphi 0, %s47
    %s49 = sphi 0, %s47
    %s50 = sphi 0, %s49
    %s64 = sphi 0, %s50
    %s68 = sphi 0, %s68
    %s70 = sphi 0, %s68
    %s71 = sphi 0, %s70
    %s85 = sphi 0, %s71
    %s89 = sphi 0, %s89
    %s91 = sphi 0, %s89
    %s92 = sphi 0, %s91
    %s106 = sphi 0, %s92
    %s112 = sphi 0, %s114
    %s115 = sphi 0, %s112
    %s116 = sphi 0, %s115
    %s132 = sphi 0, %s116
    %s138 = sphi 0, %s140
    %s141 = sphi 0, %s138
    %s142 = sphi 0, %s141
    %s158 = sphi 0, %s142
    %s164 = sphi 0, %s166
    %s167 = sphi 0, %s164
    %s168 = sphi 0, %s167
    %s184 = sphi 0, %s168
  $region4: #{up_forward.6} parent=0 // loop_header_branch
    %16 = sbr.rel (%p14) target = $region8
  $region5: #{up_forward.6} parent=0 // loop_body
    %s18 = ssub.s32 %s13, 1
    %s19 = ssub.s32 %s13, 2
    %s20 = sadd.s32 %s13, 1
    %s21 = ssub.s32 %s13, %s20
    %p22 = scmp.eq.s32.totalorder %s21, 0
    %s24 = sadd.s32 %s23, 1
    %s25 = scalar_select %p22, %s23, %s24
    %p28 = pneg %p22
    %p29 = scmp.eq.s32.totalorder %s13, 1
    %p30 = por %p28, %p29
    %p31 = scmp.ne.s32.totalorder %s23, %s26
    %p32 = scmp.eq.s32.totalorder %s13, 0
    %p33 = por %p31, %p32
    %p34 = scmp.ne.s32.totalorder %s23, %s26
    %p35 = scmp.eq.s32.totalorder %s18, 1
    %p36 = por %p34, %p35
    %p37 = scmp.ne.s32.totalorder %s26, %s27
    %p38 = scmp.eq.s32.totalorder %s18, 0
    %p39 = por %p37, %p38
    %p40 = scmp.ne.s32.totalorder %s26, %s27
    %p41 = scmp.eq.s32.totalorder %s19, 1
    %p42 = por %p40, %p41
    %p44 = scmp.ne.s32.totalorder %s27, %s43
    %p45 = scmp.eq.s32.totalorder %s19, 0
    %p46 = por %p44, %p45
    %s48 = sadd.s32 %s47, 1
    %p51 = scmp.eq.s32.totalorder %s13, 1
    %p52 = scmp.ne.s32.totalorder %s47, %s49
    %p53 = scmp.eq.s32.totalorder %s13, 0
    %p54 = por %p52, %p53
    %p55 = scmp.ne.s32.totalorder %s47, %s49
    %p56 = scmp.eq.s32.totalorder %s18, 1
    %p57 = por %p55, %p56
    %p58 = scmp.ne.s32.totalorder %s49, %s50
    %p59 = scmp.eq.s32.totalorder %s18, 0
    %p60 = por %p58, %p59
    %p61 = scmp.ne.s32.totalorder %s49, %s50
    %p62 = scmp.eq.s32.totalorder %s19, 1
    %p63 = por %p61, %p62
    %p65 = scmp.ne.s32.totalorder %s50, %s64
    %p66 = scmp.eq.s32.totalorder %s19, 0
    %p67 = por %p65, %p66
    %s69 = sadd.s32 %s68, 1
    %p72 = scmp.eq.s32.totalorder %s13, 1
    %p73 = scmp.ne.s32.totalorder %s68, %s70
    %p74 = scmp.eq.s32.totalorder %s13, 0
    %p75 = por %p73, %p74
    %p76 = scmp.ne.s32.totalorder %s68, %s70
    %p77 = scmp.eq.s32.totalorder %s18, 1
    %p78 = por %p76, %p77
    %p79 = scmp.ne.s32.totalorder %s70, %s71
    %p80 = scmp.eq.s32.totalorder %s18, 0
    %p81 = por %p79, %p80
    %p82 = scmp.ne.s32.totalorder %s70, %s71
    %p83 = scmp.eq.s32.totalorder %s19, 1
    %p84 = por %p82, %p83
    %p86 = scmp.ne.s32.totalorder %s71, %s85
    %p87 = scmp.eq.s32.totalorder %s19, 0
    %p88 = por %p86, %p87
    %s90 = sadd.s32 %s89, 1
    %p93 = scmp.eq.s32.totalorder %s13, 1
    %p94 = scmp.ne.s32.totalorder %s89, %s91
    %p95 = scmp.eq.s32.totalorder %s13, 0
    %p96 = por %p94, %p95
    %p97 = scmp.ne.s32.totalorder %s89, %s91
    %p98 = scmp.eq.s32.totalorder %s18, 1
    %p99 = por %p97, %p98
    %p100 = scmp.ne.s32.totalorder %s91, %s92
    %p101 = scmp.eq.s32.totalorder %s18, 0
    %p102 = por %p100, %p101
    %p103 = scmp.ne.s32.totalorder %s91, %s92
    %p104 = scmp.eq.s32.totalorder %s19, 1
    %p105 = por %p103, %p104
    %p107 = scmp.ne.s32.totalorder %s92, %s106
    %p108 = scmp.eq.s32.totalorder %s19, 0
    %p109 = por %p107, %p108
    %s110 = ssub.s32 %s13, %s20
    %p111 = scmp.eq.s32.totalorder %s110, 0
    %s113 = sadd.s32 %s112, 1
    %s114 = scalar_select %p111, %s112, %s113
    %p117 = pneg %p111
    %p118 = scmp.eq.s32.totalorder %s13, 1
    %p119 = por %p117, %p118
    %p120 = scmp.ne.s32.totalorder %s112, %s115
    %p121 = scmp.eq.s32.totalorder %s13, 0
    %p122 = por %p120, %p121
    %p123 = scmp.ne.s32.totalorder %s112, %s115
    %p124 = scmp.eq.s32.totalorder %s18, 1
    %p125 = por %p123, %p124
    %p126 = scmp.ne.s32.totalorder %s115, %s116
    %p127 = scmp.eq.s32.totalorder %s18, 0
    %p128 = por %p126, %p127
    %p129 = scmp.ne.s32.totalorder %s115, %s116
    %p130 = scmp.eq.s32.totalorder %s19, 1
    %p131 = por %p129, %p130
    %p133 = scmp.ne.s32.totalorder %s116, %s132
    %p134 = scmp.eq.s32.totalorder %s19, 0
    %p135 = por %p133, %p134
    %s136 = ssub.s32 %s13, %s20
    %p137 = scmp.eq.s32.totalorder %s136, 0
    %s139 = sadd.s32 %s138, 1
    %s140 = scalar_select %p137, %s138, %s139
    %p143 = pneg %p137
    %p144 = scmp.eq.s32.totalorder %s13, 1
    %p145 = por %p143, %p144
    %p146 = scmp.ne.s32.totalorder %s138, %s141
    %p147 = scmp.eq.s32.totalorder %s13, 0
    %p148 = por %p146, %p147
    %p149 = scmp.ne.s32.totalorder %s138, %s141
    %p150 = scmp.eq.s32.totalorder %s18, 1
    %p151 = por %p149, %p150
    %p152 = scmp.ne.s32.totalorder %s141, %s142
    %p153 = scmp.eq.s32.totalorder %s18, 0
    %p154 = por %p152, %p153
    %p155 = scmp.ne.s32.totalorder %s141, %s142
    %p156 = scmp.eq.s32.totalorder %s19, 1
    %p157 = por %p155, %p156
    %p159 = scmp.ne.s32.totalorder %s142, %s158
    %p160 = scmp.eq.s32.totalorder %s19, 0
    %p161 = por %p159, %p160
    %s162 = ssub.s32 %s13, %s20
    %p163 = scmp.eq.s32.totalorder %s162, 0
    %s165 = sadd.s32 %s164, 1
    %s166 = scalar_select %p163, %s164, %s165
    %p169 = pneg %p163
    %p170 = scmp.eq.s32.totalorder %s13, 1
    %p171 = por %p169, %p170
    %p172 = scmp.ne.s32.totalorder %s164, %s167
    %p173 = scmp.eq.s32.totalorder %s13, 0
    %p174 = por %p172, %p173
    %p175 = scmp.ne.s32.totalorder %s164, %s167
    %p176 = scmp.eq.s32.totalorder %s18, 1
    %p177 = por %p175, %p176
    %p178 = scmp.ne.s32.totalorder %s167, %s168
    %p179 = scmp.eq.s32.totalorder %s18, 0
    %p180 = por %p178, %p179
    %p181 = scmp.ne.s32.totalorder %s167, %s168
    %p182 = scmp.eq.s32.totalorder %s19, 1
    %p183 = por %p181, %p182
    %p185 = scmp.ne.s32.totalorder %s168, %s184
    %p186 = scmp.eq.s32.totalorder %s19, 0
    %p187 = por %p185, %p186
    %p188 = scmp.le.s32.totalorder 1, %s13
    %p189 = scmp.lt.s32.totalorder %s13, 3
    %p190 = pnand %p188, %p189
    %p191 = pneg %p190
    // Predicated region
    $region9: #{up_forward.6} parent=5 // pred_check
      _
    $region10: #{up_forward.6} parent=5 // pred_check_branch
      %193 = sbr.rel (%p190) target = $region12
    $region11: #{up_forward.6} parent=5 // pred_region
      %s194 = ssub.s32 %s13, 1
      // Predicated region
      $region13: #{up_forward.6} parent=11 // pred_check
        %p195 = pneg %p60
      $region14: #{up_forward.6} parent=11 // pred_check_branch
        %197 = sbr.rel (%p195) target = $region16
      $region15: #{up_forward.6} parent=11 // pred_region
        _
      $region16: #{up_forward.6} parent=11 // pred_fallthru
        _
      // Predicated region
      $region17: #{up_forward.6} parent=11 // pred_check
        %p198 = pneg %p81
      $region18: #{up_forward.6} parent=11 // pred_check_branch
        %200 = sbr.rel (%p198) target = $region20
      $region19: #{up_forward.6} parent=11 // pred_region
        _
      $region20: #{up_forward.6} parent=11 // pred_fallthru
        _
      // Predicated region
      $region21: #{up_forward.6} parent=11 // pred_check
        %p201 = pneg %p102
      $region22: #{up_forward.6} parent=11 // pred_check_branch
        %203 = sbr.rel (%p201) target = $region24
      $region23: #{up_forward.6} parent=11 // pred_region
        _
      $region24: #{up_forward.6} parent=11 // pred_fallthru
        _
    $region12: #{up_forward.6} parent=5 // pred_fallthru
      _
    %p204 = scmp.lt.s32.totalorder %s13, 2
    // Predicated region
    $region25: #{up_forward.6} parent=5 // pred_check
      %p205 = pneg %p204
    $region26: #{up_forward.6} parent=5 // pred_check_branch
      %207 = sbr.rel (%p205) target = $region28
    $region27: #{up_forward.6} parent=5 // pred_region
      // Predicated region
      $region29: #{up_forward.6} parent=27 // pred_check
        %p208 = pneg %p33
      $region30: #{up_forward.6} parent=27 // pred_check_branch
        %210 = sbr.rel (%p208) target = $region32
      $region31: #{up_forward.6} parent=27 // pred_region
        %p211 = scmp.lt.s32.totalorder %s13, 1
        %s212 = scalar_select %p211, %s13, 1
        %s213 = smul.addr %s212, 32
        %s214 = smul.addr %s213, 8
        %s215 = scalar_lea.vmem %s0, %s214
      $region32: #{up_forward.6} parent=27 // pred_fallthru
        _
    $region28: #{up_forward.6} parent=5 // pred_fallthru
      _
    %p216 = scmp.le.s32.totalorder 1, %s13
    %p217 = scmp.lt.s32.totalorder %s13, 3
    %p218 = pnand %p216, %p217
    %p219 = pneg %p218
    // Predicated region
    $region33: #{up_forward.6} parent=5 // pred_check
      _
    $region34: #{up_forward.6} parent=5 // pred_check_branch
      %221 = sbr.rel (%p218) target = $region36
    $region35: #{up_forward.6} parent=5 // pred_region
      %s222 = ssub.s32 %s13, 1
      %p223 = scmp.lt.s32.totalorder %s18, 1
      %s224 = scalar_select %p223, %s18, 1
      %s225 = smul.addr %s224, 32
      %s226 = smul.addr %s225, 8
      %s227 = scalar_lea.vmem %s0, %s226
      %p228 = pneg %p39
      %p229 = pneg %p36
      %p230 = pneg %p60
      %p231 = pneg %p57
      %p232 = pneg %p81
      %p233 = pneg %p78
      %p234 = pneg %p102
      %p235 = pneg %p99
      %p236 = pneg %p128
      %p237 = pneg %p125
      %p238 = scmp.lt.s32.totalorder %s18, 1
      %s239 = scalar_select %p238, %s18, 1
      %s240 = smul.addr %s239, 32
      %s241 = smul.addr %s240, 8
      %s242 = scalar_lea.vmem %s4, %s241
      %p243 = pneg %p154
      %p244 = pneg %p151
      %p245 = scmp.lt.s32.totalorder %s18, 1
      %s246 = scalar_select %p245, %s18, 1
      %s247 = scalar_lea.vmem %s5, %s246
      %p248 = pneg %p180
      %p249 = pneg %p177
      %p250 = scmp.lt.s32.totalorder %s18, 1
      %s251 = scalar_select %p250, %s18, 1
      %s252 = scalar_lea.vmem %s6, %s251
      %p253 = scmp.lt.s32.totalorder %s18, 1
      %s254 = scalar_select %p253, %s18, 1
      %s255 = smul.addr %s254, 32
      %s256 = smul.addr %s255, 8
      %s257 = scalar_lea.vmem %s0, %s256
      %p258 = scmp.lt.s32.totalorder %s18, 1
      %s259 = scalar_select %p258, %s18, 1
      %s260 = smul.addr %s259, 32
      %s261 = smul.addr %s260, 8
      %s262 = scalar_lea.vmem %s4, %s261
      %p263 = scmp.lt.s32.totalorder %s18, 1
      %s264 = scalar_select %p263, %s18, 1
      %s265 = scalar_lea.vmem %s5, %s264
      %p266 = scmp.lt.s32.totalorder %s18, 1
      %s267 = scalar_select %p266, %s18, 1
      %s268 = scalar_lea.vmem %s6, %s267
      %vm269 = vcmask 31744
      %270 = vst.msk [vmem:[#allocation2] sm:$0xff] %vm269, 0.0
      %271 = vst.msk [vmem:[#allocation2 + $0x8] sm:$0xff] %vm269, 0.0
      %vm272 = vcmask 25600
      %273 = vst.msk [vmem:[#allocation2 + $0x10] sm:$0x3] %vm272, 0.0
      %s274 = scalar_lea.vmem [#allocation2], 408
      %275 = vst.msk [vmem:[%s274] sm:$0xff] %vm269, 0.0
      %276 = vst.msk [vmem:[%s274 + $0x8] sm:$0xff] %vm269, 0.0
      %277 = vst.msk [vmem:[%s274 + $0x10] sm:$0x3] %vm272, 0.0
      %vm278 = vcmask 24576
      %279 = vst.msk [vmem:[#allocation2] sm:$0x1] %vm278, 0.0
      %280 = vst.msk [vmem:[#allocation2 + $0x18] sm:$0x1] %vm278, 0.0
      %281 = vst.msk [vmem:[#allocation2 + $0x30] sm:$0x1] %vm278, 0.0
      %282 = vst.msk [vmem:[#allocation2 + $0x48] sm:$0x1] %vm278, 0.0
      %283 = vst.msk [vmem:[#allocation2 + $0x60] sm:$0x1] %vm278, 0.0
      %284 = vst.msk [vmem:[#allocation2 + $0x78] sm:$0x1] %vm278, 0.0
      %285 = vst.msk [vmem:[#allocation2 + $0x90] sm:$0x1] %vm278, 0.0
      %286 = vst.msk [vmem:[#allocation2 + $0xa8] sm:$0x1] %vm278, 0.0
      %287 = vst.msk [vmem:[#allocation2 + $0xc0] sm:$0x1] %vm278, 0.0
      %288 = vst.msk [vmem:[#allocation2 + $0xd8] sm:$0x1] %vm278, 0.0
      %289 = vst.msk [vmem:[#allocation2 + $0xf0] sm:$0x1] %vm278, 0.0
      %290 = vst.msk [vmem:[#allocation2 + $0x108] sm:$0x1] %vm278, 0.0
      %291 = vst.msk [vmem:[#allocation2 + $0x120] sm:$0x1] %vm278, 0.0
      %292 = vst.msk [vmem:[#allocation2 + $0x138] sm:$0x1] %vm278, 0.0
      %293 = vst.msk [vmem:[#allocation2 + $0x150] sm:$0x1] %vm278, 0.0
      %294 = vst.msk [vmem:[#allocation2 + $0x168] sm:$0x1] %vm278, 0.0
      %295 = vst.msk [vmem:[#allocation2 + $0x180] sm:$0x1] %vm278, 0.0
      %296 = vst.msk [vmem:[#allocation2 + $0x198] sm:$0x1] %vm278, 0.0
      %297 = vst.msk [vmem:[#allocation2 + $0x11] sm:$0x1] %vm278, 0.0
      %298 = vst.msk [vmem:[#allocation2 + $0x29] sm:$0x1] %vm278, 0.0
      %299 = vst.msk [vmem:[#allocation2 + $0x41] sm:$0x1] %vm278, 0.0
      %300 = vst.msk [vmem:[#allocation2 + $0x59] sm:$0x1] %vm278, 0.0
      %301 = vst.msk [vmem:[#allocation2 + $0x71] sm:$0x1] %vm278, 0.0
      %302 = vst.msk [vmem:[#allocation2 + $0x89] sm:$0x1] %vm278, 0.0
      %303 = vst.msk [vmem:[#allocation2 + $0xa1] sm:$0x1] %vm278, 0.0
      %304 = vst.msk [vmem:[#allocation2 + $0xb9] sm:$0x1] %vm278, 0.0
      %305 = vst.msk [vmem:[#allocation2 + $0xd1] sm:$0x1] %vm278, 0.0
      %306 = vst.msk [vmem:[#allocation2 + $0xe9] sm:$0x1] %vm278, 0.0
      %307 = vst.msk [vmem:[#allocation2 + $0x101] sm:$0x1] %vm278, 0.0
      %308 = vst.msk [vmem:[#allocation2 + $0x119] sm:$0x1] %vm278, 0.0
      %309 = vst.msk [vmem:[#allocation2 + $0x131] sm:$0x1] %vm278, 0.0
      %310 = vst.msk [vmem:[#allocation2 + $0x149] sm:$0x1] %vm278, 0.0
      %311 = vst.msk [vmem:[#allocation2 + $0x161] sm:$0x1] %vm278, 0.0
      %312 = vst.msk [vmem:[#allocation2 + $0x179] sm:$0x1] %vm278, 0.0
      %313 = vst.msk [vmem:[#allocation2 + $0x191] sm:$0x1] %vm278, 0.0
      %314 = vst.msk [vmem:[#allocation2 + $0x1a9] sm:$0x1] %vm278, 0.0
      %v315 = vld [vmem:[%s257] sm:$0xff]
      %v316 = vld [vmem:[%s257 + $0x8] sm:$0xff]
      %v317 = vld [vmem:[%s257 + $0x10] sm:$0xff]
      %v318 = vld [vmem:[%s257 + $0x18] sm:$0xff]
      %v319 = vld [vmem:[%s257 + $0x20] sm:$0xff]
      %v320 = vld [vmem:[%s257 + $0x28] sm:$0xff]
      %v321 = vld [vmem:[%s257 + $0x30] sm:$0xff]
      %v322 = vld [vmem:[%s257 + $0x38] sm:$0xff]
      %v323 = vld [vmem:[%s257 + $0x40] sm:$0xff]
      %v324 = vld [vmem:[%s257 + $0x48] sm:$0xff]
      %v325 = vld [vmem:[%s257 + $0x50] sm:$0xff]
      %v326 = vld [vmem:[%s257 + $0x58] sm:$0xff]
      %v327 = vld [vmem:[%s257 + $0x60] sm:$0xff]
      %v328 = vld [vmem:[%s257 + $0x68] sm:$0xff]
      %v329 = vld [vmem:[%s257 + $0x70] sm:$0xff]
      %v330 = vld [vmem:[%s257 + $0x78] sm:$0xff]
      %v331 = vld [vmem:[%s257 + $0x80] sm:$0xff]
      %v332 = vld [vmem:[%s257 + $0x88] sm:$0xff]
      %v333 = vld [vmem:[%s257 + $0x90] sm:$0xff]
      %v334 = vld [vmem:[%s257 + $0x98] sm:$0xff]
      %v335 = vld [vmem:[%s257 + $0xa0] sm:$0xff]
      %v336 = vld [vmem:[%s257 + $0xa8] sm:$0xff]
      %v337 = vld [vmem:[%s257 + $0xb0] sm:$0xff]
      %v338 = vld [vmem:[%s257 + $0xb8] sm:$0xff]
      %v339 = vld [vmem:[%s257 + $0xc0] sm:$0xff]
      %v340 = vld [vmem:[%s257 + $0xc8] sm:$0xff]
      %v341 = vld [vmem:[%s257 + $0xd0] sm:$0xff]
      %v342 = vld [vmem:[%s257 + $0xd8] sm:$0xff]
      %v343 = vld [vmem:[%s257 + $0xe0] sm:$0xff]
      %v344 = vld [vmem:[%s257 + $0xe8] sm:$0xff]
      %v345 = vld [vmem:[%s257 + $0xf0] sm:$0xff]
      %v346 = vld [vmem:[%s257 + $0xf8] sm:$0xff]
      %v347 = vld [vmem:[%s1] sm:$0x1]
      %v349 = vlaneseq
      %v350 = vshrl.u32 %v349, 7
      %v351 = vsub.s32 0, %v350
      %v352 = vrot.slane %v347, %v351
      %v354 = vmul.f32 %v315, %v352
      %v355 = vmul.f32 %v316, %v352
      %v356 = vmul.f32 %v317, %v352
      %v357 = vmul.f32 %v318, %v352
      %v358 = vmul.f32 %v319, %v352
      %v359 = vmul.f32 %v320, %v352
      %v360 = vmul.f32 %v321, %v352
      %v361 = vmul.f32 %v322, %v352
      %v362 = vmul.f32 %v323, %v352
      %v363 = vmul.f32 %v324, %v352
      %v364 = vmul.f32 %v325, %v352
      %v365 = vmul.f32 %v326, %v352
      %v366 = vmul.f32 %v327, %v352
      %v367 = vmul.f32 %v328, %v352
      %v368 = vmul.f32 %v329, %v352
      %v369 = vmul.f32 %v330, %v352
      %v370 = vmul.f32 %v331, %v352
      %v371 = vmul.f32 %v332, %v352
      %v372 = vmul.f32 %v333, %v352
      %v373 = vmul.f32 %v334, %v352
      %v374 = vmul.f32 %v335, %v352
      %v375 = vmul.f32 %v336, %v352
      %v376 = vmul.f32 %v337, %v352
      %v377 = vmul.f32 %v338, %v352
      %v378 = vmul.f32 %v339, %v352
      %v379 = vmul.f32 %v340, %v352
      %v380 = vmul.f32 %v341, %v352
      %v381 = vmul.f32 %v342, %v352
      %v382 = vmul.f32 %v343, %v352
      %v383 = vmul.f32 %v344, %v352
      %v384 = vmul.f32 %v345, %v352
      %v385 = vmul.f32 %v346, %v352
      %v386 = vld [vmem:[%s2] sm:$0x1]
      %v388 = vlaneseq
      %v389 = vshrl.u32 %v388, 7
      %v390 = vsub.s32 0, %v389
      %v391 = vrot.slane %v386, %v390
      %v393 = vadd.f32 %v354, %v391
      %v394 = vadd.f32 %v355, %v391
      %v395 = vadd.f32 %v356, %v391
      %v396 = vadd.f32 %v357, %v391
      %v397 = vadd.f32 %v358, %v391
      %v398 = vadd.f32 %v359, %v391
      %v399 = vadd.f32 %v360, %v391
      %v400 = vadd.f32 %v361, %v391
      %v401 = vadd.f32 %v362, %v391
      %v402 = vadd.f32 %v363, %v391
      %v403 = vadd.f32 %v364, %v391
      %v404 = vadd.f32 %v365, %v391
      %v405 = vadd.f32 %v366, %v391
      %v406 = vadd.f32 %v367, %v391
      %v407 = vadd.f32 %v368, %v391
      %v408 = vadd.f32 %v369, %v391
      %v409 = vadd.f32 %v370, %v391
      %v410 = vadd.f32 %v371, %v391
      %v411 = vadd.f32 %v372, %v391
      %v412 = vadd.f32 %v373, %v391
      %v413 = vadd.f32 %v374, %v391
      %v414 = vadd.f32 %v375, %v391
      %v415 = vadd.f32 %v376, %v391
      %v416 = vadd.f32 %v377, %v391
      %v417 = vadd.f32 %v378, %v391
      %v418 = vadd.f32 %v379, %v391
      %v419 = vadd.f32 %v380, %v391
      %v420 = vadd.f32 %v381, %v391
      %v421 = vadd.f32 %v382, %v391
      %v422 = vadd.f32 %v383, %v391
      %v423 = vadd.f32 %v384, %v391
      %v424 = vadd.f32 %v385, %v391
      %v425 = vmax.f32 %v393, 0.0
      %v426 = vmax.f32 %v394, 0.0
      %v427 = vmax.f32 %v395, 0.0
      %v428 = vmax.f32 %v396, 0.0
      %v429 = vmax.f32 %v397, 0.0
      %v430 = vmax.f32 %v398, 0.0
      %v431 = vmax.f32 %v399, 0.0
      %v432 = vmax.f32 %v400, 0.0
      %v433 = vmax.f32 %v401, 0.0
      %v434 = vmax.f32 %v402, 0.0
      %v435 = vmax.f32 %v403, 0.0
      %v436 = vmax.f32 %v404, 0.0
      %v437 = vmax.f32 %v405, 0.0
      %v438 = vmax.f32 %v406, 0.0
      %v439 = vmax.f32 %v407, 0.0
      %v440 = vmax.f32 %v408, 0.0
      %v441 = vmax.f32 %v409, 0.0
      %v442 = vmax.f32 %v410, 0.0
      %v443 = vmax.f32 %v411, 0.0
      %v444 = vmax.f32 %v412, 0.0
      %v445 = vmax.f32 %v413, 0.0
      %v446 = vmax.f32 %v414, 0.0
      %v447 = vmax.f32 %v415, 0.0
      %v448 = vmax.f32 %v416, 0.0
      %v449 = vmax.f32 %v417, 0.0
      %v450 = vmax.f32 %v418, 0.0
      %v451 = vmax.f32 %v419, 0.0
      %v452 = vmax.f32 %v420, 0.0
      %v453 = vmax.f32 %v421, 0.0
      %v454 = vmax.f32 %v422, 0.0
      %v455 = vmax.f32 %v423, 0.0
      %v456 = vmax.f32 %v424, 0.0
      %s457 = scalar_lea.vmem [#allocation2], 24
      %458 = vst.msk [vmem:[%s457 + $0x1] sm:$0xff] %vm269, %v425
      %459 = vst.msk [vmem:[%s457 + $0x9] sm:$0xff] %vm269, %v426
      %460 = vst.msk [vmem:[%s457 + $0x19] sm:$0xff] %vm269, %v427
      %461 = vst.msk [vmem:[%s457 + $0x21] sm:$0xff] %vm269, %v428
      %462 = vst.msk [vmem:[%s457 + $0x31] sm:$0xff] %vm269, %v429
      %463 = vst.msk [vmem:[%s457 + $0x39] sm:$0xff] %vm269, %v430
      %464 = vst.msk [vmem:[%s457 + $0x49] sm:$0xff] %vm269, %v431
      %465 = vst.msk [vmem:[%s457 + $0x51] sm:$0xff] %vm269, %v432
      %466 = vst.msk [vmem:[%s457 + $0x61] sm:$0xff] %vm269, %v433
      %467 = vst.msk [vmem:[%s457 + $0x69] sm:$0xff] %vm269, %v434
      %468 = vst.msk [vmem:[%s457 + $0x79] sm:$0xff] %vm269, %v435
      %469 = vst.msk [vmem:[%s457 + $0x81] sm:$0xff] %vm269, %v436
      %470 = vst.msk [vmem:[%s457 + $0x91] sm:$0xff] %vm269, %v437
      %471 = vst.msk [vmem:[%s457 + $0x99] sm:$0xff] %vm269, %v438
      %472 = vst.msk [vmem:[%s457 + $0xa9] sm:$0xff] %vm269, %v439
      %473 = vst.msk [vmem:[%s457 + $0xb1] sm:$0xff] %vm269, %v440
      %474 = vst.msk [vmem:[%s457 + $0xc1] sm:$0xff] %vm269, %v441
      %475 = vst.msk [vmem:[%s457 + $0xc9] sm:$0xff] %vm269, %v442
      %476 = vst.msk [vmem:[%s457 + $0xd9] sm:$0xff] %vm269, %v443
      %477 = vst.msk [vmem:[%s457 + $0xe1] sm:$0xff] %vm269, %v444
      %478 = vst.msk [vmem:[%s457 + $0xf1] sm:$0xff] %vm269, %v445
      %479 = vst.msk [vmem:[%s457 + $0xf9] sm:$0xff] %vm269, %v446
      %480 = vst.msk [vmem:[%s457 + $0x109] sm:$0xff] %vm269, %v447
      %481 = vst.msk [vmem:[%s457 + $0x111] sm:$0xff] %vm269, %v448
      %482 = vst.msk [vmem:[%s457 + $0x121] sm:$0xff] %vm269, %v449
      %483 = vst.msk [vmem:[%s457 + $0x129] sm:$0xff] %vm269, %v450
      %484 = vst.msk [vmem:[%s457 + $0x139] sm:$0xff] %vm269, %v451
      %485 = vst.msk [vmem:[%s457 + $0x141] sm:$0xff] %vm269, %v452
      %486 = vst.msk [vmem:[%s457 + $0x151] sm:$0xff] %vm269, %v453
      %487 = vst.msk [vmem:[%s457 + $0x159] sm:$0xff] %vm269, %v454
      %488 = vst.msk [vmem:[%s457 + $0x169] sm:$0xff] %vm269, %v455
      %489 = vst.msk [vmem:[%s457 + $0x171] sm:$0xff] %vm269, %v456
      %v490 = vld [vmem:[#allocation2] sm:$0xff]
      %v491 = vld [vmem:[#allocation2 + $0x8] sm:$0xff]
      %v492 = vld [vmem:[#allocation2 + $0x18] sm:$0xff]
      %v493 = vld [vmem:[#allocation2 + $0x20] sm:$0xff]
      %v494 = vld [vmem:[#allocation2 + $0x30] sm:$0xff]
      %v495 = vld [vmem:[#allocation2 + $0x38] sm:$0xff]
      %v496 = vld [vmem:[#allocation2 + $0x48] sm:$0xff]
      %v497 = vld [vmem:[#allocation2 + $0x50] sm:$0xff]
      %v498 = vld [vmem:[#allocation2 + $0x60] sm:$0xff]
      %v499 = vld [vmem:[#allocation2 + $0x68] sm:$0xff]
      %v500 = vld [vmem:[#allocation2 + $0x78] sm:$0xff]
      %v501 = vld [vmem:[#allocation2 + $0x80] sm:$0xff]
      %v502 = vld [vmem:[#allocation2 + $0x90] sm:$0xff]
      %v503 = vld [vmem:[#allocation2 + $0x98] sm:$0xff]
      %v504 = vld [vmem:[#allocation2 + $0xa8] sm:$0xff]
      %v505 = vld [vmem:[#allocation2 + $0xb0] sm:$0xff]
      %v506 = vld [vmem:[#allocation2 + $0xc0] sm:$0xff]
      %v507 = vld [vmem:[#allocation2 + $0xc8] sm:$0xff]
      %v508 = vld [vmem:[#allocation2 + $0xd8] sm:$0xff]
      %v509 = vld [vmem:[#allocation2 + $0xe0] sm:$0xff]
      %v510 = vld [vmem:[#allocation2 + $0xf0] sm:$0xff]
      %v511 = vld [vmem:[#allocation2 + $0xf8] sm:$0xff]
      %v512 = vld [vmem:[#allocation2 + $0x108] sm:$0xff]
      %v513 = vld [vmem:[#allocation2 + $0x110] sm:$0xff]
      %v514 = vld [vmem:[#allocation2 + $0x120] sm:$0xff]
      %v515 = vld [vmem:[#allocation2 + $0x128] sm:$0xff]
      %v516 = vld [vmem:[#allocation2 + $0x138] sm:$0xff]
      %v517 = vld [vmem:[#allocation2 + $0x140] sm:$0xff]
      %v518 = vld [vmem:[#allocation2 + $0x150] sm:$0xff]
      %v519 = vld [vmem:[#allocation2 + $0x158] sm:$0xff]
      %v520 = vld [vmem:[#allocation2 + $0x168] sm:$0xff]
      %v521 = vld [vmem:[#allocation2 + $0x170] sm:$0xff]
      %522 = vst.msk [vmem:[#allocation3] sm:$0xff] %vm269, %v490
      %523 = vst.msk [vmem:[#allocation3 + $0x8] sm:$0xff] %vm269, %v491
      %524 = vst.msk [vmem:[#allocation3 + $0x10] sm:$0xff] %vm269, %v492
      %525 = vst.msk [vmem:[#allocation3 + $0x18] sm:$0xff] %vm269, %v493
      %526 = vst.msk [vmem:[#allocation3 + $0x20] sm:$0xff] %vm269, %v494
      %527 = vst.msk [vmem:[#allocation3 + $0x28] sm:$0xff] %vm269, %v495
      %528 = vst.msk [vmem:[#allocation3 + $0x30] sm:$0xff] %vm269, %v496
      %529 = vst.msk [vmem:[#allocation3 + $0x38] sm:$0xff] %vm269, %v497
      %530 = vst.msk [vmem:[#allocation3 + $0x40] sm:$0xff] %vm269, %v498
      %531 = vst.msk [vmem:[#allocation3 + $0x48] sm:$0xff] %vm269, %v499
      %532 = vst.msk [vmem:[#allocation3 + $0x50] sm:$0xff] %vm269, %v500
      %533 = vst.msk [vmem:[#allocation3 + $0x58] sm:$0xff] %vm269, %v501
      %534 = vst.msk [vmem:[#allocation3 + $0x60] sm:$0xff] %vm269, %v502
      %535 = vst.msk [vmem:[#allocation3 + $0x68] sm:$0xff] %vm269, %v503
      %536 = vst.msk [vmem:[#allocation3 + $0x70] sm:$0xff] %vm269, %v504
      %537 = vst.msk [vmem:[#allocation3 + $0x78] sm:$0xff] %vm269, %v505
      %538 = vst.msk [vmem:[#allocation3 + $0x80] sm:$0xff] %vm269, %v506
      %539 = vst.msk [vmem:[#allocation3 + $0x88] sm:$0xff] %vm269, %v507
      %540 = vst.msk [vmem:[#allocation3 + $0x90] sm:$0xff] %vm269, %v508
      %541 = vst.msk [vmem:[#allocation3 + $0x98] sm:$0xff] %vm269, %v509
      %542 = vst.msk [vmem:[#allocation3 + $0xa0] sm:$0xff] %vm269, %v510
      %543 = vst.msk [vmem:[#allocation3 + $0xa8] sm:$0xff] %vm269, %v511
      %544 = vst.msk [vmem:[#allocation3 + $0xb0] sm:$0xff] %vm269, %v512
      %545 = vst.msk [vmem:[#allocation3 + $0xb8] sm:$0xff] %vm269, %v513
      %546 = vst.msk [vmem:[#allocation3 + $0xc0] sm:$0xff] %vm269, %v514
      %547 = vst.msk [vmem:[#allocation3 + $0xc8] sm:$0xff] %vm269, %v515
      %548 = vst.msk [vmem:[#allocation3 + $0xd0] sm:$0xff] %vm269, %v516
      %549 = vst.msk [vmem:[#allocation3 + $0xd8] sm:$0xff] %vm269, %v517
      %550 = vst.msk [vmem:[#allocation3 + $0xe0] sm:$0xff] %vm269, %v518
      %551 = vst.msk [vmem:[#allocation3 + $0xe8] sm:$0xff] %vm269, %v519
      %552 = vst.msk [vmem:[#allocation3 + $0xf0] sm:$0xff] %vm269, %v520
      %553 = vst.msk [vmem:[#allocation3 + $0xf8] sm:$0xff] %vm269, %v521
      %v554 = vld [vmem:[#allocation2 + $0x1] sm:$0xff]
      %v555 = vld [vmem:[#allocation2 + $0x9] sm:$0xff]
      %v556 = vld [vmem:[#allocation2 + $0x19] sm:$0xff]
      %v557 = vld [vmem:[#allocation2 + $0x21] sm:$0xff]
      %v558 = vld [vmem:[#allocation2 + $0x31] sm:$0xff]
      %v559 = vld [vmem:[#allocation2 + $0x39] sm:$0xff]
      %v560 = vld [vmem:[#allocation2 + $0x49] sm:$0xff]
      %v561 = vld [vmem:[#allocation2 + $0x51] sm:$0xff]
      %v562 = vld [vmem:[#allocation2 + $0x61] sm:$0xff]
      %v563 = vld [vmem:[#allocation2 + $0x69] sm:$0xff]
      %v564 = vld [vmem:[#allocation2 + $0x79] sm:$0xff]
      %v565 = vld [vmem:[#allocation2 + $0x81] sm:$0xff]
      %v566 = vld [vmem:[#allocation2 + $0x91] sm:$0xff]
      %v567 = vld [vmem:[#allocation2 + $0x99] sm:$0xff]
      %v568 = vld [vmem:[#allocation2 + $0xa9] sm:$0xff]
      %v569 = vld [vmem:[#allocation2 + $0xb1] sm:$0xff]
      %v570 = vld [vmem:[#allocation2 + $0xc1] sm:$0xff]
      %v571 = vld [vmem:[#allocation2 + $0xc9] sm:$0xff]
      %v572 = vld [vmem:[#allocation2 + $0xd9] sm:$0xff]
      %v573 = vld [vmem:[#allocation2 + $0xe1] sm:$0xff]
      %v574 = vld [vmem:[#allocation2 + $0xf1] sm:$0xff]
      %v575 = vld [vmem:[#allocation2 + $0xf9] sm:$0xff]
      %v576 = vld [vmem:[#allocation2 + $0x109] sm:$0xff]
      %v577 = vld [vmem:[#allocation2 + $0x111] sm:$0xff]
      %v578 = vld [vmem:[#allocation2 + $0x121] sm:$0xff]
      %v579 = vld [vmem:[#allocation2 + $0x129] sm:$0xff]
      %v580 = vld [vmem:[#allocation2 + $0x139] sm:$0xff]
      %v581 = vld [vmem:[#allocation2 + $0x141] sm:$0xff]
      %v582 = vld [vmem:[#allocation2 + $0x151] sm:$0xff]
      %v583 = vld [vmem:[#allocation2 + $0x159] sm:$0xff]
      %v584 = vld [vmem:[#allocation2 + $0x169] sm:$0xff]
      %v585 = vld [vmem:[#allocation2 + $0x171] sm:$0xff]
      %618 = vrot.lane.b32.xlu0 %v554, 4
      %v619 = vpop.permute.xlu0 %618
      %620 = vrot.lane.b32.xlu0 %v555, 4
      %v621 = vpop.permute.xlu0 %620
      %622 = vrot.lane.b32.xlu0 %v556, 4
      %v623 = vpop.permute.xlu0 %622
      %624 = vrot.lane.b32.xlu0 %v557, 4
      %v625 = vpop.permute.xlu0 %624
      %626 = vrot.lane.b32.xlu0 %v558, 4
      %v627 = vpop.permute.xlu0 %626
      %628 = vrot.lane.b32.xlu0 %v559, 4
      %v629 = vpop.permute.xlu0 %628
      %630 = vrot.lane.b32.xlu0 %v560, 4
      %v631 = vpop.permute.xlu0 %630
      %632 = vrot.lane.b32.xlu0 %v561, 4
      %v633 = vpop.permute.xlu0 %632
      %634 = vrot.lane.b32.xlu0 %v562, 4
      %v635 = vpop.permute.xlu0 %634
      %636 = vrot.lane.b32.xlu0 %v563, 4
      %v637 = vpop.permute.xlu0 %636
      %638 = vrot.lane.b32.xlu0 %v564, 4
      %v639 = vpop.permute.xlu0 %638
      %640 = vrot.lane.b32.xlu0 %v565, 4
      %v641 = vpop.permute.xlu0 %640
      %642 = vrot.lane.b32.xlu0 %v566, 4
      %v643 = vpop.permute.xlu0 %642
      %644 = vrot.lane.b32.xlu0 %v567, 4
      %v645 = vpop.permute.xlu0 %644
      %646 = vrot.lane.b32.xlu0 %v568, 4
      %v647 = vpop.permute.xlu0 %646
      %648 = vrot.lane.b32.xlu0 %v569, 4
      %v649 = vpop.permute.xlu0 %648
      %650 = vrot.lane.b32.xlu0 %v570, 4
      %v651 = vpop.permute.xlu0 %650
      %652 = vrot.lane.b32.xlu0 %v571, 4
      %v653 = vpop.permute.xlu0 %652
      %654 = vrot.lane.b32.xlu0 %v572, 4
      %v655 = vpop.permute.xlu0 %654
      %656 = vrot.lane.b32.xlu0 %v573, 4
      %v657 = vpop.permute.xlu0 %656
      %658 = vrot.lane.b32.xlu0 %v574, 4
      %v659 = vpop.permute.xlu0 %658
      %660 = vrot.lane.b32.xlu0 %v575, 4
      %v661 = vpop.permute.xlu0 %660
      %662 = vrot.lane.b32.xlu0 %v576, 4
      %v663 = vpop.permute.xlu0 %662
      %664 = vrot.lane.b32.xlu0 %v577, 4
      %v665 = vpop.permute.xlu0 %664
      %666 = vrot.lane.b32.xlu0 %v578, 4
      %v667 = vpop.permute.xlu0 %666
      %668 = vrot.lane.b32.xlu0 %v579, 4
      %v669 = vpop.permute.xlu0 %668
      %670 = vrot.lane.b32.xlu0 %v580, 4
      %v671 = vpop.permute.xlu0 %670
      %672 = vrot.lane.b32.xlu0 %v581, 4
      %v673 = vpop.permute.xlu0 %672
      %674 = vrot.lane.b32.xlu0 %v582, 4
      %v675 = vpop.permute.xlu0 %674
      %676 = vrot.lane.b32.xlu0 %v583, 4
      %v677 = vpop.permute.xlu0 %676
      %678 = vrot.lane.b32.xlu0 %v584, 4
      %v679 = vpop.permute.xlu0 %678
      %680 = vrot.lane.b32.xlu0 %v585, 4
      %v681 = vpop.permute.xlu0 %680
      %vm714 = vcmask 64544
      %715 = vst.msk [vmem:[#allocation3] sm:$0xff] %vm714, %v619
      %716 = vst.msk [vmem:[#allocation3 + $0x8] sm:$0xff] %vm714, %v621
      %717 = vst.msk [vmem:[#allocation3 + $0x10] sm:$0xff] %vm714, %v623
      %718 = vst.msk [vmem:[#allocation3 + $0x18] sm:$0xff] %vm714, %v625
      %719 = vst.msk [vmem:[#allocation3 + $0x20] sm:$0xff] %vm714, %v627
      %720 = vst.msk [vmem:[#allocation3 + $0x28] sm:$0xff] %vm714, %v629
      %721 = vst.msk [vmem:[#allocation3 + $0x30] sm:$0xff] %vm714, %v631
      %722 = vst.msk [vmem:[#allocation3 + $0x38] sm:$0xff] %vm714, %v633
      %723 = vst.msk [vmem:[#allocation3 + $0x40] sm:$0xff] %vm714, %v635
      %724 = vst.msk [vmem:[#allocation3 + $0x48] sm:$0xff] %vm714, %v637
      %725 = vst.msk [vmem:[#allocation3 + $0x50] sm:$0xff] %vm714, %v639
      %726 = vst.msk [vmem:[#allocation3 + $0x58] sm:$0xff] %vm714, %v641
      %727 = vst.msk [vmem:[#allocation3 + $0x60] sm:$0xff] %vm714, %v643
      %728 = vst.msk [vmem:[#allocation3 + $0x68] sm:$0xff] %vm714, %v645
      %729 = vst.msk [vmem:[#allocation3 + $0x70] sm:$0xff] %vm714, %v647
      %730 = vst.msk [vmem:[#allocation3 + $0x78] sm:$0xff] %vm714, %v649
      %731 = vst.msk [vmem:[#allocation3 + $0x80] sm:$0xff] %vm714, %v651
      %732 = vst.msk [vmem:[#allocation3 + $0x88] sm:$0xff] %vm714, %v653
      %733 = vst.msk [vmem:[#allocation3 + $0x90] sm:$0xff] %vm714, %v655
      %734 = vst.msk [vmem:[#allocation3 + $0x98] sm:$0xff] %vm714, %v657
      %735 = vst.msk [vmem:[#allocation3 + $0xa0] sm:$0xff] %vm714, %v659
      %736 = vst.msk [vmem:[#allocation3 + $0xa8] sm:$0xff] %vm714, %v661
      %737 = vst.msk [vmem:[#allocation3 + $0xb0] sm:$0xff] %vm714, %v663
      %738 = vst.msk [vmem:[#allocation3 + $0xb8] sm:$0xff] %vm714, %v665
      %739 = vst.msk [vmem:[#allocation3 + $0xc0] sm:$0xff] %vm714, %v667
      %740 = vst.msk [vmem:[#allocation3 + $0xc8] sm:$0xff] %vm714, %v669
      %741 = vst.msk [vmem:[#allocation3 + $0xd0] sm:$0xff] %vm714, %v671
      %742 = vst.msk [vmem:[#allocation3 + $0xd8] sm:$0xff] %vm714, %v673
      %743 = vst.msk [vmem:[#allocation3 + $0xe0] sm:$0xff] %vm714, %v675
      %744 = vst.msk [vmem:[#allocation3 + $0xe8] sm:$0xff] %vm714, %v677
      %745 = vst.msk [vmem:[#allocation3 + $0xf0] sm:$0xff] %vm714, %v679
      %746 = vst.msk [vmem:[#allocation3 + $0xf8] sm:$0xff] %vm714, %v681
      %v747 = vld [vmem:[#allocation2 + $0x2] sm:$0xff]
      %v748 = vld [vmem:[#allocation2 + $0xa] sm:$0xff]
      %v749 = vld [vmem:[#allocation2 + $0x1a] sm:$0xff]
      %v750 = vld [vmem:[#allocation2 + $0x22] sm:$0xff]
      %v751 = vld [vmem:[#allocation2 + $0x32] sm:$0xff]
      %v752 = vld [vmem:[#allocation2 + $0x3a] sm:$0xff]
      %v753 = vld [vmem:[#allocation2 + $0x4a] sm:$0xff]
      %v754 = vld [vmem:[#allocation2 + $0x52] sm:$0xff]
      %v755 = vld [vmem:[#allocation2 + $0x62] sm:$0xff]
      %v756 = vld [vmem:[#allocation2 + $0x6a] sm:$0xff]
      %v757 = vld [vmem:[#allocation2 + $0x7a] sm:$0xff]
      %v758 = vld [vmem:[#allocation2 + $0x82] sm:$0xff]
      %v759 = vld [vmem:[#allocation2 + $0x92] sm:$0xff]
      %v760 = vld [vmem:[#allocation2 + $0x9a] sm:$0xff]
      %v761 = vld [vmem:[#allocation2 + $0xaa] sm:$0xff]
      %v762 = vld [vmem:[#allocation2 + $0xb2] sm:$0xff]
      %v763 = vld [vmem:[#allocation2 + $0xc2] sm:$0xff]
      %v764 = vld [vmem:[#allocation2 + $0xca] sm:$0xff]
      %v765 = vld [vmem:[#allocation2 + $0xda] sm:$0xff]
      %v766 = vld [vmem:[#allocation2 + $0xe2] sm:$0xff]
      %v767 = vld [vmem:[#allocation2 + $0xf2] sm:$0xff]
      %v768 = vld [vmem:[#allocation2 + $0xfa] sm:$0xff]
      %v769 = vld [vmem:[#allocation2 + $0x10a] sm:$0xff]
      %v770 = vld [vmem:[#allocation2 + $0x112] sm:$0xff]
      %v771 = vld [vmem:[#allocation2 + $0x122] sm:$0xff]
      %v772 = vld [vmem:[#allocation2 + $0x12a] sm:$0xff]
      %v773 = vld [vmem:[#allocation2 + $0x13a] sm:$0xff]
      %v774 = vld [vmem:[#allocation2 + $0x142] sm:$0xff]
      %v775 = vld [vmem:[#allocation2 + $0x152] sm:$0xff]
      %v776 = vld [vmem:[#allocation2 + $0x15a] sm:$0xff]
      %v777 = vld [vmem:[#allocation2 + $0x16a] sm:$0xff]
      %v778 = vld [vmem:[#allocation2 + $0x172] sm:$0xff]
      %811 = vrot.lane.b32.xlu0 %v747, 8
      %v812 = vpop.permute.xlu0 %811
      %813 = vrot.lane.b32.xlu0 %v748, 8
      %v814 = vpop.permute.xlu0 %813
      %815 = vrot.lane.b32.xlu0 %v749, 8
      %v816 = vpop.permute.xlu0 %815
      %817 = vrot.lane.b32.xlu0 %v750, 8
      %v818 = vpop.permute.xlu0 %817
      %819 = vrot.lane.b32.xlu0 %v751, 8
      %v820 = vpop.permute.xlu0 %819
      %821 = vrot.lane.b32.xlu0 %v752, 8
      %v822 = vpop.permute.xlu0 %821
      %823 = vrot.lane.b32.xlu0 %v753, 8
      %v824 = vpop.permute.xlu0 %823
      %825 = vrot.lane.b32.xlu0 %v754, 8
      %v826 = vpop.permute.xlu0 %825
      %827 = vrot.lane.b32.xlu0 %v755, 8
      %v828 = vpop.permute.xlu0 %827
      %829 = vrot.lane.b32.xlu0 %v756, 8
      %v830 = vpop.permute.xlu0 %829
      %831 = vrot.lane.b32.xlu0 %v757, 8
      %v832 = vpop.permute.xlu0 %831
      %833 = vrot.lane.b32.xlu0 %v758, 8
      %v834 = vpop.permute.xlu0 %833
      %835 = vrot.lane.b32.xlu0 %v759, 8
      %v836 = vpop.permute.xlu0 %835
      %837 = vrot.lane.b32.xlu0 %v760, 8
      %v838 = vpop.permute.xlu0 %837
      %839 = vrot.lane.b32.xlu0 %v761, 8
      %v840 = vpop.permute.xlu0 %839
      %841 = vrot.lane.b32.xlu0 %v762, 8
      %v842 = vpop.permute.xlu0 %841
      %843 = vrot.lane.b32.xlu0 %v763, 8
      %v844 = vpop.permute.xlu0 %843
      %845 = vrot.lane.b32.xlu0 %v764, 8
      %v846 = vpop.permute.xlu0 %845
      %847 = vrot.lane.b32.xlu0 %v765, 8
      %v848 = vpop.permute.xlu0 %847
      %849 = vrot.lane.b32.xlu0 %v766, 8
      %v850 = vpop.permute.xlu0 %849
      %851 = vrot.lane.b32.xlu0 %v767, 8
      %v852 = vpop.permute.xlu0 %851
      %853 = vrot.lane.b32.xlu0 %v768, 8
      %v854 = vpop.permute.xlu0 %853
      %855 = vrot.lane.b32.xlu0 %v769, 8
      %v856 = vpop.permute.xlu0 %855
      %857 = vrot.lane.b32.xlu0 %v770, 8
      %v858 = vpop.permute.xlu0 %857
      %859 = vrot.lane.b32.xlu0 %v771, 8
      %v860 = vpop.permute.xlu0 %859
      %861 = vrot.lane.b32.xlu0 %v772, 8
      %v862 = vpop.permute.xlu0 %861
      %863 = vrot.lane.b32.xlu0 %v773, 8
      %v864 = vpop.permute.xlu0 %863
      %865 = vrot.lane.b32.xlu0 %v774, 8
      %v866 = vpop.permute.xlu0 %865
      %867 = vrot.lane.b32.xlu0 %v775, 8
      %v868 = vpop.permute.xlu0 %867
      %869 = vrot.lane.b32.xlu0 %v776, 8
      %v870 = vpop.permute.xlu0 %869
      %871 = vrot.lane.b32.xlu0 %v777, 8
      %v872 = vpop.permute.xlu0 %871
      %873 = vrot.lane.b32.xlu0 %v778, 8
      %v874 = vpop.permute.xlu0 %873
      %vm907 = vcmask 97344
      %908 = vst.msk [vmem:[#allocation3] sm:$0xff] %vm907, %v812
      %909 = vst.msk [vmem:[#allocation3 + $0x8] sm:$0xff] %vm907, %v814
      %910 = vst.msk [vmem:[#allocation3 + $0x10] sm:$0xff] %vm907, %v816
      %911 = vst.msk [vmem:[#allocation3 + $0x18] sm:$0xff] %vm907, %v818
      %912 = vst.msk [vmem:[#allocation3 + $0x20] sm:$0xff] %vm907, %v820
      %913 = vst.msk [vmem:[#allocation3 + $0x28] sm:$0xff] %vm907, %v822
      %914 = vst.msk [vmem:[#allocation3 + $0x30] sm:$0xff] %vm907, %v824
      %915 = vst.msk [vmem:[#allocation3 + $0x38] sm:$0xff] %vm907, %v826
      %916 = vst.msk [vmem:[#allocation3 + $0x40] sm:$0xff] %vm907, %v828
      %917 = vst.msk [vmem:[#allocation3 + $0x48] sm:$0xff] %vm907, %v830
      %918 = vst.msk [vmem:[#allocation3 + $0x50] sm:$0xff] %vm907, %v832
      %919 = vst.msk [vmem:[#allocation3 + $0x58] sm:$0xff] %vm907, %v834
      %920 = vst.msk [vmem:[#allocation3 + $0x60] sm:$0xff] %vm907, %v836
      %921 = vst.msk [vmem:[#allocation3 + $0x68] sm:$0xff] %vm907, %v838
      %922 = vst.msk [vmem:[#allocation3 + $0x70] sm:$0xff] %vm907, %v840
      %923 = vst.msk [vmem:[#allocation3 + $0x78] sm:$0xff] %vm907, %v842
      %924 = vst.msk [vmem:[#allocation3 + $0x80] sm:$0xff] %vm907, %v844
      %925 = vst.msk [vmem:[#allocation3 + $0x88] sm:$0xff] %vm907, %v846
      %926 = vst.msk [vmem:[#allocation3 + $0x90] sm:$0xff] %vm907, %v848
      %927 = vst.msk [vmem:[#allocation3 + $0x98] sm:$0xff] %vm907, %v850
      %928 = vst.msk [vmem:[#allocation3 + $0xa0] sm:$0xff] %vm907, %v852
      %929 = vst.msk [vmem:[#allocation3 + $0xa8] sm:$0xff] %vm907, %v854
      %930 = vst.msk [vmem:[#allocation3 + $0xb0] sm:$0xff] %vm907, %v856
      %931 = vst.msk [vmem:[#allocation3 + $0xb8] sm:$0xff] %vm907, %v858
      %932 = vst.msk [vmem:[#allocation3 + $0xc0] sm:$0xff] %vm907, %v860
      %933 = vst.msk [vmem:[#allocation3 + $0xc8] sm:$0xff] %vm907, %v862
      %934 = vst.msk [vmem:[#allocation3 + $0xd0] sm:$0xff] %vm907, %v864
      %935 = vst.msk [vmem:[#allocation3 + $0xd8] sm:$0xff] %vm907, %v866
      %936 = vst.msk [vmem:[#allocation3 + $0xe0] sm:$0xff] %vm907, %v868
      %937 = vst.msk [vmem:[#allocation3 + $0xe8] sm:$0xff] %vm907, %v870
      %938 = vst.msk [vmem:[#allocation3 + $0xf0] sm:$0xff] %vm907, %v872
      %939 = vst.msk [vmem:[#allocation3 + $0xf8] sm:$0xff] %vm907, %v874
      %v940 = vld [vmem:[%s457] sm:$0xff]
      %v941 = vld [vmem:[%s457 + $0x8] sm:$0xff]
      %v942 = vld [vmem:[%s457 + $0x18] sm:$0xff]
      %v943 = vld [vmem:[%s457 + $0x20] sm:$0xff]
      %v944 = vld [vmem:[%s457 + $0x30] sm:$0xff]
      %v945 = vld [vmem:[%s457 + $0x38] sm:$0xff]
      %v946 = vld [vmem:[%s457 + $0x48] sm:$0xff]
      %v947 = vld [vmem:[%s457 + $0x50] sm:$0xff]
      %v948 = vld [vmem:[%s457 + $0x60] sm:$0xff]
      %v949 = vld [vmem:[%s457 + $0x68] sm:$0xff]
      %v950 = vld [vmem:[%s457 + $0x78] sm:$0xff]
      %v951 = vld [vmem:[%s457 + $0x80] sm:$0xff]
      %v952 = vld [vmem:[%s457 + $0x90] sm:$0xff]
      %v953 = vld [vmem:[%s457 + $0x98] sm:$0xff]
      %v954 = vld [vmem:[%s457 + $0xa8] sm:$0xff]
      %v955 = vld [vmem:[%s457 + $0xb0] sm:$0xff]
      %v956 = vld [vmem:[%s457 + $0xc0] sm:$0xff]
      %v957 = vld [vmem:[%s457 + $0xc8] sm:$0xff]
      %v958 = vld [vmem:[%s457 + $0xd8] sm:$0xff]
      %v959 = vld [vmem:[%s457 + $0xe0] sm:$0xff]
      %v960 = vld [vmem:[%s457 + $0xf0] sm:$0xff]
      %v961 = vld [vmem:[%s457 + $0xf8] sm:$0xff]
      %v962 = vld [vmem:[%s457 + $0x108] sm:$0xff]
      %v963 = vld [vmem:[%s457 + $0x110] sm:$0xff]
      %v964 = vld [vmem:[%s457 + $0x120] sm:$0xff]
      %v965 = vld [vmem:[%s457 + $0x128] sm:$0xff]
      %v966 = vld [vmem:[%s457 + $0x138] sm:$0xff]
      %v967 = vld [vmem:[%s457 + $0x140] sm:$0xff]
      %v968 = vld [vmem:[%s457 + $0x150] sm:$0xff]
      %v969 = vld [vmem:[%s457 + $0x158] sm:$0xff]
      %v970 = vld [vmem:[%s457 + $0x168] sm:$0xff]
      %v971 = vld [vmem:[%s457 + $0x170] sm:$0xff]
      %1004 = vrot.lane.b32.xlu0 %v940, 12
      %v1005 = vpop.permute.xlu0 %1004
      %1006 = vrot.lane.b32.xlu0 %v941, 12
      %v1007 = vpop.permute.xlu0 %1006
      %1008 = vrot.lane.b32.xlu0 %v942, 12
      %v1009 = vpop.permute.xlu0 %1008
      %1010 = vrot.lane.b32.xlu0 %v943, 12
      %v1011 = vpop.permute.xlu0 %1010
      %1012 = vrot.lane.b32.xlu0 %v944, 12
      %v1013 = vpop.permute.xlu0 %1012
      %1014 = vrot.lane.b32.xlu0 %v945, 12
      %v1015 = vpop.permute.xlu0 %1014
      %1016 = vrot.lane.b32.xlu0 %v946, 12
      %v1017 = vpop.permute.xlu0 %1016
      %1018 = vrot.lane.b32.xlu0 %v947, 12
      %v1019 = vpop.permute.xlu0 %1018
      %1020 = vrot.lane.b32.xlu0 %v948, 12
      %v1021 = vpop.permute.xlu0 %1020
      %1022 = vrot.lane.b32.xlu0 %v949, 12
      %v1023 = vpop.permute.xlu0 %1022
      %1024 = vrot.lane.b32.xlu0 %v950, 12
      %v1025 = vpop.permute.xlu0 %1024
      %1026 = vrot.lane.b32.xlu0 %v951, 12
      %v1027 = vpop.permute.xlu0 %1026
      %1028 = vrot.lane.b32.xlu0 %v952, 12
      %v1029 = vpop.permute.xlu0 %1028
      %1030 = vrot.lane.b32.xlu0 %v953, 12
      %v1031 = vpop.permute.xlu0 %1030
      %1032 = vrot.lane.b32.xlu0 %v954, 12
      %v1033 = vpop.permute.xlu0 %1032
      %1034 = vrot.lane.b32.xlu0 %v955, 12
      %v1035 = vpop.permute.xlu0 %1034
      %1036 = vrot.lane.b32.xlu0 %v956, 12
      %v1037 = vpop.permute.xlu0 %1036
      %1038 = vrot.lane.b32.xlu0 %v957, 12
      %v1039 = vpop.permute.xlu0 %1038
      %1040 = vrot.lane.b32.xlu0 %v958, 12
      %v1041 = vpop.permute.xlu0 %1040
      %1042 = vrot.lane.b32.xlu0 %v959, 12
      %v1043 = vpop.permute.xlu0 %1042
      %1044 = vrot.lane.b32.xlu0 %v960, 12
      %v1045 = vpop.permute.xlu0 %1044
      %1046 = vrot.lane.b32.xlu0 %v961, 12
      %v1047 = vpop.permute.xlu0 %1046
      %1048 = vrot.lane.b32.xlu0 %v962, 12
      %v1049 = vpop.permute.xlu0 %1048
      %1050 = vrot.lane.b32.xlu0 %v963, 12
      %v1051 = vpop.permute.xlu0 %1050
      %1052 = vrot.lane.b32.xlu0 %v964, 12
      %v1053 = vpop.permute.xlu0 %1052
      %1054 = vrot.lane.b32.xlu0 %v965, 12
      %v1055 = vpop.permute.xlu0 %1054
      %1056 = vrot.lane.b32.xlu0 %v966, 12
      %v1057 = vpop.permute.xlu0 %1056
      %1058 = vrot.lane.b32.xlu0 %v967, 12
      %v1059 = vpop.permute.xlu0 %1058
      %1060 = vrot.lane.b32.xlu0 %v968, 12
      %v1061 = vpop.permute.xlu0 %1060
      %1062 = vrot.lane.b32.xlu0 %v969, 12
      %v1063 = vpop.permute.xlu0 %1062
      %1064 = vrot.lane.b32.xlu0 %v970, 12
      %v1065 = vpop.permute.xlu0 %1064
      %1066 = vrot.lane.b32.xlu0 %v971, 12
      %v1067 = vpop.permute.xlu0 %1066
      %vm1100 = vcmask 130144
      %1101 = vst.msk [vmem:[#allocation3] sm:$0xff] %vm1100, %v1005
      %1102 = vst.msk [vmem:[#allocation3 + $0x8] sm:$0xff] %vm1100, %v1007
      %1103 = vst.msk [vmem:[#allocation3 + $0x10] sm:$0xff] %vm1100, %v1009
      %1104 = vst.msk [vmem:[#allocation3 + $0x18] sm:$0xff] %vm1100, %v1011
      %1105 = vst.msk [vmem:[#allocation3 + $0x20] sm:$0xff] %vm1100, %v1013
      %1106 = vst.msk [vmem:[#allocation3 + $0x28] sm:$0xff] %vm1100, %v1015
      %1107 = vst.msk [vmem:[#allocation3 + $0x30] sm:$0xff] %vm1100, %v1017
      %1108 = vst.msk [vmem:[#allocation3 + $0x38] sm:$0xff] %vm1100, %v1019
      %1109 = vst.msk [vmem:[#allocation3 + $0x40] sm:$0xff] %vm1100, %v1021
      %1110 = vst.msk [vmem:[#allocation3 + $0x48] sm:$0xff] %vm1100, %v1023
      %1111 = vst.msk [vmem:[#allocation3 + $0x50] sm:$0xff] %vm1100, %v1025
      %1112 = vst.msk [vmem:[#allocation3 + $0x58] sm:$0xff] %vm1100, %v1027
      %1113 = vst.msk [vmem:[#allocation3 + $0x60] sm:$0xff] %vm1100, %v1029
      %1114 = vst.msk [vmem:[#allocation3 + $0x68] sm:$0xff] %vm1100, %v1031
      %1115 = vst.msk [vmem:[#allocation3 + $0x70] sm:$0xff] %vm1100, %v1033
      %1116 = vst.msk [vmem:[#allocation3 + $0x78] sm:$0xff] %vm1100, %v1035
      %1117 = vst.msk [vmem:[#allocation3 + $0x80] sm:$0xff] %vm1100, %v1037
      %1118 = vst.msk [vmem:[#allocation3 + $0x88] sm:$0xff] %vm1100, %v1039
      %1119 = vst.msk [vmem:[#allocation3 + $0x90] sm:$0xff] %vm1100, %v1041
      %1120 = vst.msk [vmem:[#allocation3 + $0x98] sm:$0xff] %vm1100, %v1043
      %1121 = vst.msk [vmem:[#allocation3 + $0xa0] sm:$0xff] %vm1100, %v1045
      %1122 = vst.msk [vmem:[#allocation3 + $0xa8] sm:$0xff] %vm1100, %v1047
      %1123 = vst.msk [vmem:[#allocation3 + $0xb0] sm:$0xff] %vm1100, %v1049
      %1124 = vst.msk [vmem:[#allocation3 + $0xb8] sm:$0xff] %vm1100, %v1051
      %1125 = vst.msk [vmem:[#allocation3 + $0xc0] sm:$0xff] %vm1100, %v1053
      %1126 = vst.msk [vmem:[#allocation3 + $0xc8] sm:$0xff] %vm1100, %v1055
      %1127 = vst.msk [vmem:[#allocation3 + $0xd0] sm:$0xff] %vm1100, %v1057
      %1128 = vst.msk [vmem:[#allocation3 + $0xd8] sm:$0xff] %vm1100, %v1059
      %1129 = vst.msk [vmem:[#allocation3 + $0xe0] sm:$0xff] %vm1100, %v1061
      %1130 = vst.msk [vmem:[#allocation3 + $0xe8] sm:$0xff] %vm1100, %v1063
      %1131 = vst.msk [vmem:[#allocation3 + $0xf0] sm:$0xff] %vm1100, %v1065
      %1132 = vst.msk [vmem:[#allocation3 + $0xf8] sm:$0xff] %vm1100, %v1067
      %v1133 = vld [vmem:[%s457 + $0x1] sm:$0xff]
      %v1134 = vld [vmem:[%s457 + $0x9] sm:$0xff]
      %v1135 = vld [vmem:[%s457 + $0x19] sm:$0xff]
      %v1136 = vld [vmem:[%s457 + $0x21] sm:$0xff]
      %v1137 = vld [vmem:[%s457 + $0x31] sm:$0xff]
      %v1138 = vld [vmem:[%s457 + $0x39] sm:$0xff]
      %v1139 = vld [vmem:[%s457 + $0x49] sm:$0xff]
      %v1140 = vld [vmem:[%s457 + $0x51] sm:$0xff]
      %v1141 = vld [vmem:[%s457 + $0x61] sm:$0xff]
      %v1142 = vld [vmem:[%s457 + $0x69] sm:$0xff]
      %v1143 = vld [vmem:[%s457 + $0x79] sm:$0xff]
      %v1144 = vld [vmem:[%s457 + $0x81] sm:$0xff]
      %v1145 = vld [vmem:[%s457 + $0x91] sm:$0xff]
      %v1146 = vld [vmem:[%s457 + $0x99] sm:$0xff]
      %v1147 = vld [vmem:[%s457 + $0xa9] sm:$0xff]
      %v1148 = vld [vmem:[%s457 + $0xb1] sm:$0xff]
      %v1149 = vld [vmem:[%s457 + $0xc1] sm:$0xff]
      %v1150 = vld [vmem:[%s457 + $0xc9] sm:$0xff]
      %v1151 = vld [vmem:[%s457 + $0xd9] sm:$0xff]
      %v1152 = vld [vmem:[%s457 + $0xe1] sm:$0xff]
      %v1153 = vld [vmem:[%s457 + $0xf1] sm:$0xff]
      %v1154 = vld [vmem:[%s457 + $0xf9] sm:$0xff]
      %v1155 = vld [vmem:[%s457 + $0x109] sm:$0xff]
      %v1156 = vld [vmem:[%s457 + $0x111] sm:$0xff]
      %v1157 = vld [vmem:[%s457 + $0x121] sm:$0xff]
      %v1158 = vld [vmem:[%s457 + $0x129] sm:$0xff]
      %v1159 = vld [vmem:[%s457 + $0x139] sm:$0xff]
      %v1160 = vld [vmem:[%s457 + $0x141] sm:$0xff]
      %v1161 = vld [vmem:[%s457 + $0x151] sm:$0xff]
      %v1162 = vld [vmem:[%s457 + $0x159] sm:$0xff]
      %v1163 = vld [vmem:[%s457 + $0x169] sm:$0xff]
      %v1164 = vld [vmem:[%s457 + $0x171] sm:$0xff]
      %1197 = vrot.lane.b32.xlu0 %v1133, 16
      %v1198 = vpop.permute.xlu0 %1197
      %1199 = vrot.lane.b32.xlu0 %v1134, 16
      %v1200 = vpop.permute.xlu0 %1199
      %1201 = vrot.lane.b32.xlu0 %v1135, 16
      %v1202 = vpop.permute.xlu0 %1201
      %1203 = vrot.lane.b32.xlu0 %v1136, 16
      %v1204 = vpop.permute.xlu0 %1203
      %1205 = vrot.lane.b32.xlu0 %v1137, 16
      %v1206 = vpop.permute.xlu0 %1205
      %1207 = vrot.lane.b32.xlu0 %v1138, 16
      %v1208 = vpop.permute.xlu0 %1207
      %1209 = vrot.lane.b32.xlu0 %v1139, 16
      %v1210 = vpop.permute.xlu0 %1209
      %1211 = vrot.lane.b32.xlu0 %v1140, 16
      %v1212 = vpop.permute.xlu0 %1211
      %1213 = vrot.lane.b32.xlu0 %v1141, 16
      %v1214 = vpop.permute.xlu0 %1213
      %1215 = vrot.lane.b32.xlu0 %v1142, 16
      %v1216 = vpop.permute.xlu0 %1215
      %1217 = vrot.lane.b32.xlu0 %v1143, 16
      %v1218 = vpop.permute.xlu0 %1217
      %1219 = vrot.lane.b32.xlu0 %v1144, 16
      %v1220 = vpop.permute.xlu0 %1219
      %1221 = vrot.lane.b32.xlu0 %v1145, 16
      %v1222 = vpop.permute.xlu0 %1221
      %1223 = vrot.lane.b32.xlu0 %v1146, 16
      %v1224 = vpop.permute.xlu0 %1223
      %1225 = vrot.lane.b32.xlu0 %v1147, 16
      %v1226 = vpop.permute.xlu0 %1225
      %1227 = vrot.lane.b32.xlu0 %v1148, 16
      %v1228 = vpop.permute.xlu0 %1227
      %1229 = vrot.lane.b32.xlu0 %v1149, 16
      %v1230 = vpop.permute.xlu0 %1229
      %1231 = vrot.lane.b32.xlu0 %v1150, 16
      %v1232 = vpop.permute.xlu0 %1231
      %1233 = vrot.lane.b32.xlu0 %v1151, 16
      %v1234 = vpop.permute.xlu0 %1233
      %1235 = vrot.lane.b32.xlu0 %v1152, 16
      %v1236 = vpop.permute.xlu0 %1235
      %1237 = vrot.lane.b32.xlu0 %v1153, 16
      %v1238 = vpop.permute.xlu0 %1237
      %1239 = vrot.lane.b32.xlu0 %v1154, 16
      %v1240 = vpop.permute.xlu0 %1239
      %1241 = vrot.lane.b32.xlu0 %v1155, 16
      %v1242 = vpop.permute.xlu0 %1241
      %1243 = vrot.lane.b32.xlu0 %v1156, 16
      %v1244 = vpop.permute.xlu0 %1243
      %1245 = vrot.lane.b32.xlu0 %v1157, 16
      %v1246 = vpop.permute.xlu0 %1245
      %1247 = vrot.lane.b32.xlu0 %v1158, 16
      %v1248 = vpop.permute.xlu0 %1247
      %1249 = vrot.lane.b32.xlu0 %v1159, 16
      %v1250 = vpop.permute.xlu0 %1249
      %1251 = vrot.lane.b32.xlu0 %v1160, 16
      %v1252 = vpop.permute.xlu0 %1251
      %1253 = vrot.lane.b32.xlu0 %v1161, 16
      %v1254 = vpop.permute.xlu0 %1253
      %1255 = vrot.lane.b32.xlu0 %v1162, 16
      %v1256 = vpop.permute.xlu0 %1255
      %1257 = vrot.lane.b32.xlu0 %v1163, 16
      %v1258 = vpop.permute.xlu0 %1257
      %1259 = vrot.lane.b32.xlu0 %v1164, 16
      %v1260 = vpop.permute.xlu0 %1259
      %vm1293 = vcmask 162944
      %1294 = vst.msk [vmem:[#allocation3] sm:$0xff] %vm1293, %v1198
      %1295 = vst.msk [vmem:[#allocation3 + $0x8] sm:$0xff] %vm1293, %v1200
      %1296 = vst.msk [vmem:[#allocation3 + $0x10] sm:$0xff] %vm1293, %v1202
      %1297 = vst.msk [vmem:[#allocation3 + $0x18] sm:$0xff] %vm1293, %v1204
      %1298 = vst.msk [vmem:[#allocation3 + $0x20] sm:$0xff] %vm1293, %v1206
      %1299 = vst.msk [vmem:[#allocation3 + $0x28] sm:$0xff] %vm1293, %v1208
      %1300 = vst.msk [vmem:[#allocation3 + $0x30] sm:$0xff] %vm1293, %v1210
      %1301 = vst.msk [vmem:[#allocation3 + $0x38] sm:$0xff] %vm1293, %v1212
      %1302 = vst.msk [vmem:[#allocation3 + $0x40] sm:$0xff] %vm1293, %v1214
      %1303 = vst.msk [vmem:[#allocation3 + $0x48] sm:$0xff] %vm1293, %v1216
      %1304 = vst.msk [vmem:[#allocation3 + $0x50] sm:$0xff] %vm1293, %v1218
      %1305 = vst.msk [vmem:[#allocation3 + $0x58] sm:$0xff] %vm1293, %v1220
      %1306 = vst.msk [vmem:[#allocation3 + $0x60] sm:$0xff] %vm1293, %v1222
      %1307 = vst.msk [vmem:[#allocation3 + $0x68] sm:$0xff] %vm1293, %v1224
      %1308 = vst.msk [vmem:[#allocation3 + $0x70] sm:$0xff] %vm1293, %v1226
      %1309 = vst.msk [vmem:[#allocation3 + $0x78] sm:$0xff] %vm1293, %v1228
      %1310 = vst.msk [vmem:[#allocation3 + $0x80] sm:$0xff] %vm1293, %v1230
      %1311 = vst.msk [vmem:[#allocation3 + $0x88] sm:$0xff] %vm1293, %v1232
      %1312 = vst.msk [vmem:[#allocation3 + $0x90] sm:$0xff] %vm1293, %v1234
      %1313 = vst.msk [vmem:[#allocation3 + $0x98] sm:$0xff] %vm1293, %v1236
      %1314 = vst.msk [vmem:[#allocation3 + $0xa0] sm:$0xff] %vm1293, %v1238
      %1315 = vst.msk [vmem:[#allocation3 + $0xa8] sm:$0xff] %vm1293, %v1240
      %1316 = vst.msk [vmem:[#allocation3 + $0xb0] sm:$0xff] %vm1293, %v1242
      %1317 = vst.msk [vmem:[#allocation3 + $0xb8] sm:$0xff] %vm1293, %v1244
      %1318 = vst.msk [vmem:[#allocation3 + $0xc0] sm:$0xff] %vm1293, %v1246
      %1319 = vst.msk [vmem:[#allocation3 + $0xc8] sm:$0xff] %vm1293, %v1248
      %1320 = vst.msk [vmem:[#allocation3 + $0xd0] sm:$0xff] %vm1293, %v1250
      %1321 = vst.msk [vmem:[#allocation3 + $0xd8] sm:$0xff] %vm1293, %v1252
      %1322 = vst.msk [vmem:[#allocation3 + $0xe0] sm:$0xff] %vm1293, %v1254
      %1323 = vst.msk [vmem:[#allocation3 + $0xe8] sm:$0xff] %vm1293, %v1256
      %1324 = vst.msk [vmem:[#allocation3 + $0xf0] sm:$0xff] %vm1293, %v1258
      %1325 = vst.msk [vmem:[#allocation3 + $0xf8] sm:$0xff] %vm1293, %v1260
      %v1326 = vld [vmem:[%s457 + $0x2] sm:$0xff]
      %v1327 = vld [vmem:[%s457 + $0xa] sm:$0xff]
      %v1328 = vld [vmem:[%s457 + $0x1a] sm:$0xff]
      %v1329 = vld [vmem:[%s457 + $0x22] sm:$0xff]
      %v1330 = vld [vmem:[%s457 + $0x32] sm:$0xff]
      %v1331 = vld [vmem:[%s457 + $0x3a] sm:$0xff]
      %v1332 = vld [vmem:[%s457 + $0x4a] sm:$0xff]
      %v1333 = vld [vmem:[%s457 + $0x52] sm:$0xff]
      %v1334 = vld [vmem:[%s457 + $0x62] sm:$0xff]
      %v1335 = vld [vmem:[%s457 + $0x6a] sm:$0xff]
      %v1336 = vld [vmem:[%s457 + $0x7a] sm:$0xff]
      %v1337 = vld [vmem:[%s457 + $0x82] sm:$0xff]
      %v1338 = vld [vmem:[%s457 + $0x92] sm:$0xff]
      %v1339 = vld [vmem:[%s457 + $0x9a] sm:$0xff]
      %v1340 = vld [vmem:[%s457 + $0xaa] sm:$0xff]
      %v1341 = vld [vmem:[%s457 + $0xb2] sm:$0xff]
      %v1342 = vld [vmem:[%s457 + $0xc2] sm:$0xff]
      %v1343 = vld [vmem:[%s457 + $0xca] sm:$0xff]
      %v1344 = vld [vmem:[%s457 + $0xda] sm:$0xff]
      %v1345 = vld [vmem:[%s457 + $0xe2] sm:$0xff]
      %v1346 = vld [vmem:[%s457 + $0xf2] sm:$0xff]
      %v1347 = vld [vmem:[%s457 + $0xfa] sm:$0xff]
      %v1348 = vld [vmem:[%s457 + $0x10a] sm:$0xff]
      %v1349 = vld [vmem:[%s457 + $0x112] sm:$0xff]
      %v1350 = vld [vmem:[%s457 + $0x122] sm:$0xff]
      %v1351 = vld [vmem:[%s457 + $0x12a] sm:$0xff]
      %v1352 = vld [vmem:[%s457 + $0x13a] sm:$0xff]
      %v1353 = vld [vmem:[%s457 + $0x142] sm:$0xff]
      %v1354 = vld [vmem:[%s457 + $0x152] sm:$0xff]
      %v1355 = vld [vmem:[%s457 + $0x15a] sm:$0xff]
      %v1356 = vld [vmem:[%s457 + $0x16a] sm:$0xff]
      %v1357 = vld [vmem:[%s457 + $0x172] sm:$0xff]
      %1390 = vrot.lane.b32.xlu0 %v1326, 20
      %v1391 = vpop.permute.xlu0 %1390
      %1392 = vrot.lane.b32.xlu0 %v1327, 20
      %v1393 = vpop.permute.xlu0 %1392
      %1394 = vrot.lane.b32.xlu0 %v1328, 20
      %v1395 = vpop.permute.xlu0 %1394
      %1396 = vrot.lane.b32.xlu0 %v1329, 20
      %v1397 = vpop.permute.xlu0 %1396
      %1398 = vrot.lane.b32.xlu0 %v1330, 20
      %v1399 = vpop.permute.xlu0 %1398
      %1400 = vrot.lane.b32.xlu0 %v1331, 20
      %v1401 = vpop.permute.xlu0 %1400
      %1402 = vrot.lane.b32.xlu0 %v1332, 20
      %v1403 = vpop.permute.xlu0 %1402
      %1404 = vrot.lane.b32.xlu0 %v1333, 20
      %v1405 = vpop.permute.xlu0 %1404
      %1406 = vrot.lane.b32.xlu0 %v1334, 20
      %v1407 = vpop.permute.xlu0 %1406
      %1408 = vrot.lane.b32.xlu0 %v1335, 20
      %v1409 = vpop.permute.xlu0 %1408
      %1410 = vrot.lane.b32.xlu0 %v1336, 20
      %v1411 = vpop.permute.xlu0 %1410
      %1412 = vrot.lane.b32.xlu0 %v1337, 20
      %v1413 = vpop.permute.xlu0 %1412
      %1414 = vrot.lane.b32.xlu0 %v1338, 20
      %v1415 = vpop.permute.xlu0 %1414
      %1416 = vrot.lane.b32.xlu0 %v1339, 20
      %v1417 = vpop.permute.xlu0 %1416
      %1418 = vrot.lane.b32.xlu0 %v1340, 20
      %v1419 = vpop.permute.xlu0 %1418
      %1420 = vrot.lane.b32.xlu0 %v1341, 20
      %v1421 = vpop.permute.xlu0 %1420
      %1422 = vrot.lane.b32.xlu0 %v1342, 20
      %v1423 = vpop.permute.xlu0 %1422
      %1424 = vrot.lane.b32.xlu0 %v1343, 20
      %v1425 = vpop.permute.xlu0 %1424
      %1426 = vrot.lane.b32.xlu0 %v1344, 20
      %v1427 = vpop.permute.xlu0 %1426
      %1428 = vrot.lane.b32.xlu0 %v1345, 20
      %v1429 = vpop.permute.xlu0 %1428
      %1430 = vrot.lane.b32.xlu0 %v1346, 20
      %v1431 = vpop.permute.xlu0 %1430
      %1432 = vrot.lane.b32.xlu0 %v1347, 20
      %v1433 = vpop.permute.xlu0 %1432
      %1434 = vrot.lane.b32.xlu0 %v1348, 20
      %v1435 = vpop.permute.xlu0 %1434
      %1436 = vrot.lane.b32.xlu0 %v1349, 20
      %v1437 = vpop.permute.xlu0 %1436
      %1438 = vrot.lane.b32.xlu0 %v1350, 20
      %v1439 = vpop.permute.xlu0 %1438
      %1440 = vrot.lane.b32.xlu0 %v1351, 20
      %v1441 = vpop.permute.xlu0 %1440
      %1442 = vrot.lane.b32.xlu0 %v1352, 20
      %v1443 = vpop.permute.xlu0 %1442
      %1444 = vrot.lane.b32.xlu0 %v1353, 20
      %v1445 = vpop.permute.xlu0 %1444
      %1446 = vrot.lane.b32.xlu0 %v1354, 20
      %v1447 = vpop.permute.xlu0 %1446
      %1448 = vrot.lane.b32.xlu0 %v1355, 20
      %v1449 = vpop.permute.xlu0 %1448
      %1450 = vrot.lane.b32.xlu0 %v1356, 20
      %v1451 = vpop.permute.xlu0 %1450
      %1452 = vrot.lane.b32.xlu0 %v1357, 20
      %v1453 = vpop.permute.xlu0 %1452
      %vm1486 = vcmask 195744
      %1487 = vst.msk [vmem:[#allocation3] sm:$0xff] %vm1486, %v1391
      %1488 = vst.msk [vmem:[#allocation3 + $0x8] sm:$0xff] %vm1486, %v1393
      %1489 = vst.msk [vmem:[#allocation3 + $0x10] sm:$0xff] %vm1486, %v1395
      %1490 = vst.msk [vmem:[#allocation3 + $0x18] sm:$0xff] %vm1486, %v1397
      %1491 = vst.msk [vmem:[#allocation3 + $0x20] sm:$0xff] %vm1486, %v1399
      %1492 = vst.msk [vmem:[#allocation3 + $0x28] sm:$0xff] %vm1486, %v1401
      %1493 = vst.msk [vmem:[#allocation3 + $0x30] sm:$0xff] %vm1486, %v1403
      %1494 = vst.msk [vmem:[#allocation3 + $0x38] sm:$0xff] %vm1486, %v1405
      %1495 = vst.msk [vmem:[#allocation3 + $0x40] sm:$0xff] %vm1486, %v1407
      %1496 = vst.msk [vmem:[#allocation3 + $0x48] sm:$0xff] %vm1486, %v1409
      %1497 = vst.msk [vmem:[#allocation3 + $0x50] sm:$0xff] %vm1486, %v1411
      %1498 = vst.msk [vmem:[#allocation3 + $0x58] sm:$0xff] %vm1486, %v1413
      %1499 = vst.msk [vmem:[#allocation3 + $0x60] sm:$0xff] %vm1486, %v1415
      %1500 = vst.msk [vmem:[#allocation3 + $0x68] sm:$0xff] %vm1486, %v1417
      %1501 = vst.msk [vmem:[#allocation3 + $0x70] sm:$0xff] %vm1486, %v1419
      %1502 = vst.msk [vmem:[#allocation3 + $0x78] sm:$0xff] %vm1486, %v1421
      %1503 = vst.msk [vmem:[#allocation3 + $0x80] sm:$0xff] %vm1486, %v1423
      %1504 = vst.msk [vmem:[#allocation3 + $0x88] sm:$0xff] %vm1486, %v1425
      %1505 = vst.msk [vmem:[#allocation3 + $0x90] sm:$0xff] %vm1486, %v1427
      %1506 = vst.msk [vmem:[#allocation3 + $0x98] sm:$0xff] %vm1486, %v1429
      %1507 = vst.msk [vmem:[#allocation3 + $0xa0] sm:$0xff] %vm1486, %v1431
      %1508 = vst.msk [vmem:[#allocation3 + $0xa8] sm:$0xff] %vm1486, %v1433
      %1509 = vst.msk [vmem:[#allocation3 + $0xb0] sm:$0xff] %vm1486, %v1435
      %1510 = vst.msk [vmem:[#allocation3 + $0xb8] sm:$0xff] %vm1486, %v1437
      %1511 = vst.msk [vmem:[#allocation3 + $0xc0] sm:$0xff] %vm1486, %v1439
      %1512 = vst.msk [vmem:[#allocation3 + $0xc8] sm:$0xff] %vm1486, %v1441
      %1513 = vst.msk [vmem:[#allocation3 + $0xd0] sm:$0xff] %vm1486, %v1443
      %1514 = vst.msk [vmem:[#allocation3 + $0xd8] sm:$0xff] %vm1486, %v1445
      %1515 = vst.msk [vmem:[#allocation3 + $0xe0] sm:$0xff] %vm1486, %v1447
      %1516 = vst.msk [vmem:[#allocation3 + $0xe8] sm:$0xff] %vm1486, %v1449
      %1517 = vst.msk [vmem:[#allocation3 + $0xf0] sm:$0xff] %vm1486, %v1451
      %1518 = vst.msk [vmem:[#allocation3 + $0xf8] sm:$0xff] %vm1486, %v1453
      %s1519 = scalar_lea.vmem [#allocation2], 48
      %v1520 = vld [vmem:[%s1519] sm:$0xff]
      %v1521 = vld [vmem:[%s1519 + $0x8] sm:$0xff]
      %v1522 = vld [vmem:[%s1519 + $0x18] sm:$0xff]
      %v1523 = vld [vmem:[%s1519 + $0x20] sm:$0xff]
      %v1524 = vld [vmem:[%s1519 + $0x30] sm:$0xff]
      %v1525 = vld [vmem:[%s1519 + $0x38] sm:$0xff]
      %v1526 = vld [vmem:[%s1519 + $0x48] sm:$0xff]
      %v1527 = vld [vmem:[%s1519 + $0x50] sm:$0xff]
      %v1528 = vld [vmem:[%s1519 + $0x60] sm:$0xff]
      %v1529 = vld [vmem:[%s1519 + $0x68] sm:$0xff]
      %v1530 = vld [vmem:[%s1519 + $0x78] sm:$0xff]
      %v1531 = vld [vmem:[%s1519 + $0x80] sm:$0xff]
      %v1532 = vld [vmem:[%s1519 + $0x90] sm:$0xff]
      %v1533 = vld [vmem:[%s1519 + $0x98] sm:$0xff]
      %v1534 = vld [vmem:[%s1519 + $0xa8] sm:$0xff]
      %v1535 = vld [vmem:[%s1519 + $0xb0] sm:$0xff]
      %v1536 = vld [vmem:[%s1519 + $0xc0] sm:$0xff]
      %v1537 = vld [vmem:[%s1519 + $0xc8] sm:$0xff]
      %v1538 = vld [vmem:[%s1519 + $0xd8] sm:$0xff]
      %v1539 = vld [vmem:[%s1519 + $0xe0] sm:$0xff]
      %v1540 = vld [vmem:[%s1519 + $0xf0] sm:$0xff]
      %v1541 = vld [vmem:[%s1519 + $0xf8] sm:$0xff]
      %v1542 = vld [vmem:[%s1519 + $0x108] sm:$0xff]
      %v1543 = vld [vmem:[%s1519 + $0x110] sm:$0xff]
      %v1544 = vld [vmem:[%s1519 + $0x120] sm:$0xff]
      %v1545 = vld [vmem:[%s1519 + $0x128] sm:$0xff]
      %v1546 = vld [vmem:[%s1519 + $0x138] sm:$0xff]
      %v1547 = vld [vmem:[%s1519 + $0x140] sm:$0xff]
      %v1548 = vld [vmem:[%s1519 + $0x150] sm:$0xff]
      %v1549 = vld [vmem:[%s1519 + $0x158] sm:$0xff]
      %v1550 = vld [vmem:[%s1519 + $0x168] sm:$0xff]
      %v1551 = vld [vmem:[%s1519 + $0x170] sm:$0xff]
      %1584 = vrot.lane.b32.xlu0 %v1520, 24
      %v1585 = vpop.permute.xlu0 %1584
      %1586 = vrot.lane.b32.xlu0 %v1521, 24
      %v1587 = vpop.permute.xlu0 %1586
      %1588 = vrot.lane.b32.xlu0 %v1522, 24
      %v1589 = vpop.permute.xlu0 %1588
      %1590 = vrot.lane.b32.xlu0 %v1523, 24
      %v1591 = vpop.permute.xlu0 %1590
      %1592 = vrot.lane.b32.xlu0 %v1524, 24
      %v1593 = vpop.permute.xlu0 %1592
      %1594 = vrot.lane.b32.xlu0 %v1525, 24
      %v1595 = vpop.permute.xlu0 %1594
      %1596 = vrot.lane.b32.xlu0 %v1526, 24
      %v1597 = vpop.permute.xlu0 %1596
      %1598 = vrot.lane.b32.xlu0 %v1527, 24
      %v1599 = vpop.permute.xlu0 %1598
      %1600 = vrot.lane.b32.xlu0 %v1528, 24
      %v1601 = vpop.permute.xlu0 %1600
      %1602 = vrot.lane.b32.xlu0 %v1529, 24
      %v1603 = vpop.permute.xlu0 %1602
      %1604 = vrot.lane.b32.xlu0 %v1530, 24
      %v1605 = vpop.permute.xlu0 %1604
      %1606 = vrot.lane.b32.xlu0 %v1531, 24
      %v1607 = vpop.permute.xlu0 %1606
      %1608 = vrot.lane.b32.xlu0 %v1532, 24
      %v1609 = vpop.permute.xlu0 %1608
      %1610 = vrot.lane.b32.xlu0 %v1533, 24
      %v1611 = vpop.permute.xlu0 %1610
      %1612 = vrot.lane.b32.xlu0 %v1534, 24
      %v1613 = vpop.permute.xlu0 %1612
      %1614 = vrot.lane.b32.xlu0 %v1535, 24
      %v1615 = vpop.permute.xlu0 %1614
      %1616 = vrot.lane.b32.xlu0 %v1536, 24
      %v1617 = vpop.permute.xlu0 %1616
      %1618 = vrot.lane.b32.xlu0 %v1537, 24
      %v1619 = vpop.permute.xlu0 %1618
      %1620 = vrot.lane.b32.xlu0 %v1538, 24
      %v1621 = vpop.permute.xlu0 %1620
      %1622 = vrot.lane.b32.xlu0 %v1539, 24
      %v1623 = vpop.permute.xlu0 %1622
      %1624 = vrot.lane.b32.xlu0 %v1540, 24
      %v1625 = vpop.permute.xlu0 %1624
      %1626 = vrot.lane.b32.xlu0 %v1541, 24
      %v1627 = vpop.permute.xlu0 %1626
      %1628 = vrot.lane.b32.xlu0 %v1542, 24
      %v1629 = vpop.permute.xlu0 %1628
      %1630 = vrot.lane.b32.xlu0 %v1543, 24
      %v1631 = vpop.permute.xlu0 %1630
      %1632 = vrot.lane.b32.xlu0 %v1544, 24
      %v1633 = vpop.permute.xlu0 %1632
      %1634 = vrot.lane.b32.xlu0 %v1545, 24
      %v1635 = vpop.permute.xlu0 %1634
      %1636 = vrot.lane.b32.xlu0 %v1546, 24
      %v1637 = vpop.permute.xlu0 %1636
      %1638 = vrot.lane.b32.xlu0 %v1547, 24
      %v1639 = vpop.permute.xlu0 %1638
      %1640 = vrot.lane.b32.xlu0 %v1548, 24
      %v1641 = vpop.permute.xlu0 %1640
      %1642 = vrot.lane.b32.xlu0 %v1549, 24
      %v1643 = vpop.permute.xlu0 %1642
      %1644 = vrot.lane.b32.xlu0 %v1550, 24
      %v1645 = vpop.permute.xlu0 %1644
      %1646 = vrot.lane.b32.xlu0 %v1551, 24
      %v1647 = vpop.permute.xlu0 %1646
      %vm1680 = vcmask 228544
      %1681 = vst.msk [vmem:[#allocation3] sm:$0xff] %vm1680, %v1585
      %1682 = vst.msk [vmem:[#allocation3 + $0x8] sm:$0xff] %vm1680, %v1587
      %1683 = vst.msk [vmem:[#allocation3 + $0x10] sm:$0xff] %vm1680, %v1589
      %1684 = vst.msk [vmem:[#allocation3 + $0x18] sm:$0xff] %vm1680, %v1591
      %1685 = vst.msk [vmem:[#allocation3 + $0x20] sm:$0xff] %vm1680, %v1593
      %1686 = vst.msk [vmem:[#allocation3 + $0x28] sm:$0xff] %vm1680, %v1595
      %1687 = vst.msk [vmem:[#allocation3 + $0x30] sm:$0xff] %vm1680, %v1597
      %1688 = vst.msk [vmem:[#allocation3 + $0x38] sm:$0xff] %vm1680, %v1599
      %1689 = vst.msk [vmem:[#allocation3 + $0x40] sm:$0xff] %vm1680, %v1601
      %1690 = vst.msk [vmem:[#allocation3 + $0x48] sm:$0xff] %vm1680, %v1603
      %1691 = vst.msk [vmem:[#allocation3 + $0x50] sm:$0xff] %vm1680, %v1605
      %1692 = vst.msk [vmem:[#allocation3 + $0x58] sm:$0xff] %vm1680, %v1607
      %1693 = vst.msk [vmem:[#allocation3 + $0x60] sm:$0xff] %vm1680, %v1609
      %1694 = vst.msk [vmem:[#allocation3 + $0x68] sm:$0xff] %vm1680, %v1611
      %1695 = vst.msk [vmem:[#allocation3 + $0x70] sm:$0xff] %vm1680, %v1613
      %1696 = vst.msk [vmem:[#allocation3 + $0x78] sm:$0xff] %vm1680, %v1615
      %1697 = vst.msk [vmem:[#allocation3 + $0x80] sm:$0xff] %vm1680, %v1617
      %1698 = vst.msk [vmem:[#allocation3 + $0x88] sm:$0xff] %vm1680, %v1619
      %1699 = vst.msk [vmem:[#allocation3 + $0x90] sm:$0xff] %vm1680, %v1621
      %1700 = vst.msk [vmem:[#allocation3 + $0x98] sm:$0xff] %vm1680, %v1623
      %1701 = vst.msk [vmem:[#allocation3 + $0xa0] sm:$0xff] %vm1680, %v1625
      %1702 = vst.msk [vmem:[#allocation3 + $0xa8] sm:$0xff] %vm1680, %v1627
      %1703 = vst.msk [vmem:[#allocation3 + $0xb0] sm:$0xff] %vm1680, %v1629
      %1704 = vst.msk [vmem:[#allocation3 + $0xb8] sm:$0xff] %vm1680, %v1631
      %1705 = vst.msk [vmem:[#allocation3 + $0xc0] sm:$0xff] %vm1680, %v1633
      %1706 = vst.msk [vmem:[#allocation3 + $0xc8] sm:$0xff] %vm1680, %v1635
      %1707 = vst.msk [vmem:[#allocation3 + $0xd0] sm:$0xff] %vm1680, %v1637
      %1708 = vst.msk [vmem:[#allocation3 + $0xd8] sm:$0xff] %vm1680, %v1639
      %1709 = vst.msk [vmem:[#allocation3 + $0xe0] sm:$0xff] %vm1680, %v1641
      %1710 = vst.msk [vmem:[#allocation3 + $0xe8] sm:$0xff] %vm1680, %v1643
      %1711 = vst.msk [vmem:[#allocation3 + $0xf0] sm:$0xff] %vm1680, %v1645
      %1712 = vst.msk [vmem:[#allocation3 + $0xf8] sm:$0xff] %vm1680, %v1647
      %v1713 = vld [vmem:[%s1519 + $0x1] sm:$0xff]
      %v1714 = vld [vmem:[%s1519 + $0x9] sm:$0xff]
      %v1715 = vld [vmem:[%s1519 + $0x19] sm:$0xff]
      %v1716 = vld [vmem:[%s1519 + $0x21] sm:$0xff]
      %v1717 = vld [vmem:[%s1519 + $0x31] sm:$0xff]
      %v1718 = vld [vmem:[%s1519 + $0x39] sm:$0xff]
      %v1719 = vld [vmem:[%s1519 + $0x49] sm:$0xff]
      %v1720 = vld [vmem:[%s1519 + $0x51] sm:$0xff]
      %v1721 = vld [vmem:[%s1519 + $0x61] sm:$0xff]
      %v1722 = vld [vmem:[%s1519 + $0x69] sm:$0xff]
      %v1723 = vld [vmem:[%s1519 + $0x79] sm:$0xff]
      %v1724 = vld [vmem:[%s1519 + $0x81] sm:$0xff]
      %v1725 = vld [vmem:[%s1519 + $0x91] sm:$0xff]
      %v1726 = vld [vmem:[%s1519 + $0x99] sm:$0xff]
      %v1727 = vld [vmem:[%s1519 + $0xa9] sm:$0xff]
      %v1728 = vld [vmem:[%s1519 + $0xb1] sm:$0xff]
      %v1729 = vld [vmem:[%s1519 + $0xc1] sm:$0xff]
      %v1730 = vld [vmem:[%s1519 + $0xc9] sm:$0xff]
      %v1731 = vld [vmem:[%s1519 + $0xd9] sm:$0xff]
      %v1732 = vld [vmem:[%s1519 + $0xe1] sm:$0xff]
      %v1733 = vld [vmem:[%s1519 + $0xf1] sm:$0xff]
      %v1734 = vld [vmem:[%s1519 + $0xf9] sm:$0xff]
      %v1735 = vld [vmem:[%s1519 + $0x109] sm:$0xff]
      %v1736 = vld [vmem:[%s1519 + $0x111] sm:$0xff]
      %v1737 = vld [vmem:[%s1519 + $0x121] sm:$0xff]
      %v1738 = vld [vmem:[%s1519 + $0x129] sm:$0xff]
      %v1739 = vld [vmem:[%s1519 + $0x139] sm:$0xff]
      %v1740 = vld [vmem:[%s1519 + $0x141] sm:$0xff]
      %v1741 = vld [vmem:[%s1519 + $0x151] sm:$0xff]
      %v1742 = vld [vmem:[%s1519 + $0x159] sm:$0xff]
      %v1743 = vld [vmem:[%s1519 + $0x169] sm:$0xff]
      %v1744 = vld [vmem:[%s1519 + $0x171] sm:$0xff]
      %1777 = vrot.lane.b32.xlu0 %v1713, 28
      %v1778 = vpop.permute.xlu0 %1777
      %1779 = vrot.lane.b32.xlu0 %v1714, 28
      %v1780 = vpop.permute.xlu0 %1779
      %1781 = vrot.lane.b32.xlu0 %v1715, 28
      %v1782 = vpop.permute.xlu0 %1781
      %1783 = vrot.lane.b32.xlu0 %v1716, 28
      %v1784 = vpop.permute.xlu0 %1783
      %1785 = vrot.lane.b32.xlu0 %v1717, 28
      %v1786 = vpop.permute.xlu0 %1785
      %1787 = vrot.lane.b32.xlu0 %v1718, 28
      %v1788 = vpop.permute.xlu0 %1787
      %1789 = vrot.lane.b32.xlu0 %v1719, 28
      %v1790 = vpop.permute.xlu0 %1789
      %1791 = vrot.lane.b32.xlu0 %v1720, 28
      %v1792 = vpop.permute.xlu0 %1791
      %1793 = vrot.lane.b32.xlu0 %v1721, 28
      %v1794 = vpop.permute.xlu0 %1793
      %1795 = vrot.lane.b32.xlu0 %v1722, 28
      %v1796 = vpop.permute.xlu0 %1795
      %1797 = vrot.lane.b32.xlu0 %v1723, 28
      %v1798 = vpop.permute.xlu0 %1797
      %1799 = vrot.lane.b32.xlu0 %v1724, 28
      %v1800 = vpop.permute.xlu0 %1799
      %1801 = vrot.lane.b32.xlu0 %v1725, 28
      %v1802 = vpop.permute.xlu0 %1801
      %1803 = vrot.lane.b32.xlu0 %v1726, 28
      %v1804 = vpop.permute.xlu0 %1803
      %1805 = vrot.lane.b32.xlu0 %v1727, 28
      %v1806 = vpop.permute.xlu0 %1805
      %1807 = vrot.lane.b32.xlu0 %v1728, 28
      %v1808 = vpop.permute.xlu0 %1807
      %1809 = vrot.lane.b32.xlu0 %v1729, 28
      %v1810 = vpop.permute.xlu0 %1809
      %1811 = vrot.lane.b32.xlu0 %v1730, 28
      %v1812 = vpop.permute.xlu0 %1811
      %1813 = vrot.lane.b32.xlu0 %v1731, 28
      %v1814 = vpop.permute.xlu0 %1813
      %1815 = vrot.lane.b32.xlu0 %v1732, 28
      %v1816 = vpop.permute.xlu0 %1815
      %1817 = vrot.lane.b32.xlu0 %v1733, 28
      %v1818 = vpop.permute.xlu0 %1817
      %1819 = vrot.lane.b32.xlu0 %v1734, 28
      %v1820 = vpop.permute.xlu0 %1819
      %1821 = vrot.lane.b32.xlu0 %v1735, 28
      %v1822 = vpop.permute.xlu0 %1821
      %1823 = vrot.lane.b32.xlu0 %v1736, 28
      %v1824 = vpop.permute.xlu0 %1823
      %1825 = vrot.lane.b32.xlu0 %v1737, 28
      %v1826 = vpop.permute.xlu0 %1825
      %1827 = vrot.lane.b32.xlu0 %v1738, 28
      %v1828 = vpop.permute.xlu0 %1827
      %1829 = vrot.lane.b32.xlu0 %v1739, 28
      %v1830 = vpop.permute.xlu0 %1829
      %1831 = vrot.lane.b32.xlu0 %v1740, 28
      %v1832 = vpop.permute.xlu0 %1831
      %1833 = vrot.lane.b32.xlu0 %v1741, 28
      %v1834 = vpop.permute.xlu0 %1833
      %1835 = vrot.lane.b32.xlu0 %v1742, 28
      %v1836 = vpop.permute.xlu0 %1835
      %1837 = vrot.lane.b32.xlu0 %v1743, 28
      %v1838 = vpop.permute.xlu0 %1837
      %1839 = vrot.lane.b32.xlu0 %v1744, 28
      %v1840 = vpop.permute.xlu0 %1839
      %vm1873 = vcmask 261344
      %1874 = vst.msk [vmem:[#allocation3] sm:$0xff] %vm1873, %v1778
      %1875 = vst.msk [vmem:[#allocation3 + $0x8] sm:$0xff] %vm1873, %v1780
      %1876 = vst.msk [vmem:[#allocation3 + $0x10] sm:$0xff] %vm1873, %v1782
      %1877 = vst.msk [vmem:[#allocation3 + $0x18] sm:$0xff] %vm1873, %v1784
      %1878 = vst.msk [vmem:[#allocation3 + $0x20] sm:$0xff] %vm1873, %v1786
      %1879 = vst.msk [vmem:[#allocation3 + $0x28] sm:$0xff] %vm1873, %v1788
      %1880 = vst.msk [vmem:[#allocation3 + $0x30] sm:$0xff] %vm1873, %v1790
      %1881 = vst.msk [vmem:[#allocation3 + $0x38] sm:$0xff] %vm1873, %v1792
      %1882 = vst.msk [vmem:[#allocation3 + $0x40] sm:$0xff] %vm1873, %v1794
      %1883 = vst.msk [vmem:[#allocation3 + $0x48] sm:$0xff] %vm1873, %v1796
      %1884 = vst.msk [vmem:[#allocation3 + $0x50] sm:$0xff] %vm1873, %v1798
      %1885 = vst.msk [vmem:[#allocation3 + $0x58] sm:$0xff] %vm1873, %v1800
      %1886 = vst.msk [vmem:[#allocation3 + $0x60] sm:$0xff] %vm1873, %v1802
      %1887 = vst.msk [vmem:[#allocation3 + $0x68] sm:$0xff] %vm1873, %v1804
      %1888 = vst.msk [vmem:[#allocation3 + $0x70] sm:$0xff] %vm1873, %v1806
      %1889 = vst.msk [vmem:[#allocation3 + $0x78] sm:$0xff] %vm1873, %v1808
      %1890 = vst.msk [vmem:[#allocation3 + $0x80] sm:$0xff] %vm1873, %v1810
      %1891 = vst.msk [vmem:[#allocation3 + $0x88] sm:$0xff] %vm1873, %v1812
      %1892 = vst.msk [vmem:[#allocation3 + $0x90] sm:$0xff] %vm1873, %v1814
      %1893 = vst.msk [vmem:[#allocation3 + $0x98] sm:$0xff] %vm1873, %v1816
      %1894 = vst.msk [vmem:[#allocation3 + $0xa0] sm:$0xff] %vm1873, %v1818
      %1895 = vst.msk [vmem:[#allocation3 + $0xa8] sm:$0xff] %vm1873, %v1820
      %1896 = vst.msk [vmem:[#allocation3 + $0xb0] sm:$0xff] %vm1873, %v1822
      %1897 = vst.msk [vmem:[#allocation3 + $0xb8] sm:$0xff] %vm1873, %v1824
      %1898 = vst.msk [vmem:[#allocation3 + $0xc0] sm:$0xff] %vm1873, %v1826
      %1899 = vst.msk [vmem:[#allocation3 + $0xc8] sm:$0xff] %vm1873, %v1828
      %1900 = vst.msk [vmem:[#allocation3 + $0xd0] sm:$0xff] %vm1873, %v1830
      %1901 = vst.msk [vmem:[#allocation3 + $0xd8] sm:$0xff] %vm1873, %v1832
      %1902 = vst.msk [vmem:[#allocation3 + $0xe0] sm:$0xff] %vm1873, %v1834
      %1903 = vst.msk [vmem:[#allocation3 + $0xe8] sm:$0xff] %vm1873, %v1836
      %1904 = vst.msk [vmem:[#allocation3 + $0xf0] sm:$0xff] %vm1873, %v1838
      %1905 = vst.msk [vmem:[#allocation3 + $0xf8] sm:$0xff] %vm1873, %v1840
      %v1906 = vld [vmem:[%s1519 + $0x2] sm:$0xff]
      %v1907 = vld [vmem:[%s1519 + $0xa] sm:$0xff]
      %v1908 = vld [vmem:[%s1519 + $0x1a] sm:$0xff]
      %v1909 = vld [vmem:[%s1519 + $0x22] sm:$0xff]
      %v1910 = vld [vmem:[%s1519 + $0x32] sm:$0xff]
      %v1911 = vld [vmem:[%s1519 + $0x3a] sm:$0xff]
      %v1912 = vld [vmem:[%s1519 + $0x4a] sm:$0xff]
      %v1913 = vld [vmem:[%s1519 + $0x52] sm:$0xff]
      %v1914 = vld [vmem:[%s1519 + $0x62] sm:$0xff]
      %v1915 = vld [vmem:[%s1519 + $0x6a] sm:$0xff]
      %v1916 = vld [vmem:[%s1519 + $0x7a] sm:$0xff]
      %v1917 = vld [vmem:[%s1519 + $0x82] sm:$0xff]
      %v1918 = vld [vmem:[%s1519 + $0x92] sm:$0xff]
      %v1919 = vld [vmem:[%s1519 + $0x9a] sm:$0xff]
      %v1920 = vld [vmem:[%s1519 + $0xaa] sm:$0xff]
      %v1921 = vld [vmem:[%s1519 + $0xb2] sm:$0xff]
      %v1922 = vld [vmem:[%s1519 + $0xc2] sm:$0xff]
      %v1923 = vld [vmem:[%s1519 + $0xca] sm:$0xff]
      %v1924 = vld [vmem:[%s1519 + $0xda] sm:$0xff]
      %v1925 = vld [vmem:[%s1519 + $0xe2] sm:$0xff]
      %v1926 = vld [vmem:[%s1519 + $0xf2] sm:$0xff]
      %v1927 = vld [vmem:[%s1519 + $0xfa] sm:$0xff]
      %v1928 = vld [vmem:[%s1519 + $0x10a] sm:$0xff]
      %v1929 = vld [vmem:[%s1519 + $0x112] sm:$0xff]
      %v1930 = vld [vmem:[%s1519 + $0x122] sm:$0xff]
      %v1931 = vld [vmem:[%s1519 + $0x12a] sm:$0xff]
      %v1932 = vld [vmem:[%s1519 + $0x13a] sm:$0xff]
      %v1933 = vld [vmem:[%s1519 + $0x142] sm:$0xff]
      %v1934 = vld [vmem:[%s1519 + $0x152] sm:$0xff]
      %v1935 = vld [vmem:[%s1519 + $0x15a] sm:$0xff]
      %v1936 = vld [vmem:[%s1519 + $0x16a] sm:$0xff]
      %v1937 = vld [vmem:[%s1519 + $0x172] sm:$0xff]
      %1970 = vrot.lane.b32.xlu0 %v1906, 32
      %v1971 = vpop.permute.xlu0 %1970
      %1972 = vrot.lane.b32.xlu0 %v1907, 32
      %v1973 = vpop.permute.xlu0 %1972
      %1974 = vrot.lane.b32.xlu0 %v1908, 32
      %v1975 = vpop.permute.xlu0 %1974
      %1976 = vrot.lane.b32.xlu0 %v1909, 32
      %v1977 = vpop.permute.xlu0 %1976
      %1978 = vrot.lane.b32.xlu0 %v1910, 32
      %v1979 = vpop.permute.xlu0 %1978
      %1980 = vrot.lane.b32.xlu0 %v1911, 32
      %v1981 = vpop.permute.xlu0 %1980
      %1982 = vrot.lane.b32.xlu0 %v1912, 32
      %v1983 = vpop.permute.xlu0 %1982
      %1984 = vrot.lane.b32.xlu0 %v1913, 32
      %v1985 = vpop.permute.xlu0 %1984
      %1986 = vrot.lane.b32.xlu0 %v1914, 32
      %v1987 = vpop.permute.xlu0 %1986
      %1988 = vrot.lane.b32.xlu0 %v1915, 32
      %v1989 = vpop.permute.xlu0 %1988
      %1990 = vrot.lane.b32.xlu0 %v1916, 32
      %v1991 = vpop.permute.xlu0 %1990
      %1992 = vrot.lane.b32.xlu0 %v1917, 32
      %v1993 = vpop.permute.xlu0 %1992
      %1994 = vrot.lane.b32.xlu0 %v1918, 32
      %v1995 = vpop.permute.xlu0 %1994
      %1996 = vrot.lane.b32.xlu0 %v1919, 32
      %v1997 = vpop.permute.xlu0 %1996
      %1998 = vrot.lane.b32.xlu0 %v1920, 32
      %v1999 = vpop.permute.xlu0 %1998
      %2000 = vrot.lane.b32.xlu0 %v1921, 32
      %v2001 = vpop.permute.xlu0 %2000
      %2002 = vrot.lane.b32.xlu0 %v1922, 32
      %v2003 = vpop.permute.xlu0 %2002
      %2004 = vrot.lane.b32.xlu0 %v1923, 32
      %v2005 = vpop.permute.xlu0 %2004
      %2006 = vrot.lane.b32.xlu0 %v1924, 32
      %v2007 = vpop.permute.xlu0 %2006
      %2008 = vrot.lane.b32.xlu0 %v1925, 32
      %v2009 = vpop.permute.xlu0 %2008
      %2010 = vrot.lane.b32.xlu0 %v1926, 32
      %v2011 = vpop.permute.xlu0 %2010
      %2012 = vrot.lane.b32.xlu0 %v1927, 32
      %v2013 = vpop.permute.xlu0 %2012
      %2014 = vrot.lane.b32.xlu0 %v1928, 32
      %v2015 = vpop.permute.xlu0 %2014
      %2016 = vrot.lane.b32.xlu0 %v1929, 32
      %v2017 = vpop.permute.xlu0 %2016
      %2018 = vrot.lane.b32.xlu0 %v1930, 32
      %v2019 = vpop.permute.xlu0 %2018
      %2020 = vrot.lane.b32.xlu0 %v1931, 32
      %v2021 = vpop.permute.xlu0 %2020
      %2022 = vrot.lane.b32.xlu0 %v1932, 32
      %v2023 = vpop.permute.xlu0 %2022
      %2024 = vrot.lane.b32.xlu0 %v1933, 32
      %v2025 = vpop.permute.xlu0 %2024
      %2026 = vrot.lane.b32.xlu0 %v1934, 32
      %v2027 = vpop.permute.xlu0 %2026
      %2028 = vrot.lane.b32.xlu0 %v1935, 32
      %v2029 = vpop.permute.xlu0 %2028
      %2030 = vrot.lane.b32.xlu0 %v1936, 32
      %v2031 = vpop.permute.xlu0 %2030
      %2032 = vrot.lane.b32.xlu0 %v1937, 32
      %v2033 = vpop.permute.xlu0 %2032
      %vm2066 = vcmask 294144
      %2067 = vst.msk [vmem:[#allocation3] sm:$0xff] %vm2066, %v1971
      %2068 = vst.msk [vmem:[#allocation3 + $0x8] sm:$0xff] %vm2066, %v1973
      %2069 = vst.msk [vmem:[#allocation3 + $0x10] sm:$0xff] %vm2066, %v1975
      %2070 = vst.msk [vmem:[#allocation3 + $0x18] sm:$0xff] %vm2066, %v1977
      %2071 = vst.msk [vmem:[#allocation3 + $0x20] sm:$0xff] %vm2066, %v1979
      %2072 = vst.msk [vmem:[#allocation3 + $0x28] sm:$0xff] %vm2066, %v1981
      %2073 = vst.msk [vmem:[#allocation3 + $0x30] sm:$0xff] %vm2066, %v1983
      %2074 = vst.msk [vmem:[#allocation3 + $0x38] sm:$0xff] %vm2066, %v1985
      %2075 = vst.msk [vmem:[#allocation3 + $0x40] sm:$0xff] %vm2066, %v1987
      %2076 = vst.msk [vmem:[#allocation3 + $0x48] sm:$0xff] %vm2066, %v1989
      %2077 = vst.msk [vmem:[#allocation3 + $0x50] sm:$0xff] %vm2066, %v1991
      %2078 = vst.msk [vmem:[#allocation3 + $0x58] sm:$0xff] %vm2066, %v1993
      %2079 = vst.msk [vmem:[#allocation3 + $0x60] sm:$0xff] %vm2066, %v1995
      %2080 = vst.msk [vmem:[#allocation3 + $0x68] sm:$0xff] %vm2066, %v1997
      %2081 = vst.msk [vmem:[#allocation3 + $0x70] sm:$0xff] %vm2066, %v1999
      %2082 = vst.msk [vmem:[#allocation3 + $0x78] sm:$0xff] %vm2066, %v2001
      %2083 = vst.msk [vmem:[#allocation3 + $0x80] sm:$0xff] %vm2066, %v2003
      %2084 = vst.msk [vmem:[#allocation3 + $0x88] sm:$0xff] %vm2066, %v2005
      %2085 = vst.msk [vmem:[#allocation3 + $0x90] sm:$0xff] %vm2066, %v2007
      %2086 = vst.msk [vmem:[#allocation3 + $0x98] sm:$0xff] %vm2066, %v2009
      %2087 = vst.msk [vmem:[#allocation3 + $0xa0] sm:$0xff] %vm2066, %v2011
      %2088 = vst.msk [vmem:[#allocation3 + $0xa8] sm:$0xff] %vm2066, %v2013
      %2089 = vst.msk [vmem:[#allocation3 + $0xb0] sm:$0xff] %vm2066, %v2015
      %2090 = vst.msk [vmem:[#allocation3 + $0xb8] sm:$0xff] %vm2066, %v2017
      %2091 = vst.msk [vmem:[#allocation3 + $0xc0] sm:$0xff] %vm2066, %v2019
      %2092 = vst.msk [vmem:[#allocation3 + $0xc8] sm:$0xff] %vm2066, %v2021
      %2093 = vst.msk [vmem:[#allocation3 + $0xd0] sm:$0xff] %vm2066, %v2023
      %2094 = vst.msk [vmem:[#allocation3 + $0xd8] sm:$0xff] %vm2066, %v2025
      %2095 = vst.msk [vmem:[#allocation3 + $0xe0] sm:$0xff] %vm2066, %v2027
      %2096 = vst.msk [vmem:[#allocation3 + $0xe8] sm:$0xff] %vm2066, %v2029
      %2097 = vst.msk [vmem:[#allocation3 + $0xf0] sm:$0xff] %vm2066, %v2031
      %2098 = vst.msk [vmem:[#allocation3 + $0xf8] sm:$0xff] %vm2066, %v2033
      %v2099 = vld [vmem:[#allocation3] sm:$0xff]
      %v2100 = vld [vmem:[#allocation3 + $0x8] sm:$0xff]
      %v2101 = vld [vmem:[#allocation3 + $0x10] sm:$0xff]
      %v2102 = vld [vmem:[#allocation3 + $0x18] sm:$0xff]
      %v2103 = vld [vmem:[#allocation3 + $0x20] sm:$0xff]
      %v2104 = vld [vmem:[#allocation3 + $0x28] sm:$0xff]
      %v2105 = vld [vmem:[#allocation3 + $0x30] sm:$0xff]
      %v2106 = vld [vmem:[#allocation3 + $0x38] sm:$0xff]
      %v2107 = vld [vmem:[#allocation3 + $0x40] sm:$0xff]
      %v2108 = vld [vmem:[#allocation3 + $0x48] sm:$0xff]
      %v2109 = vld [vmem:[#allocation3 + $0x50] sm:$0xff]
      %v2110 = vld [vmem:[#allocation3 + $0x58] sm:$0xff]
      %v2111 = vld [vmem:[#allocation3 + $0x60] sm:$0xff]
      %v2112 = vld [vmem:[#allocation3 + $0x68] sm:$0xff]
      %v2113 = vld [vmem:[#allocation3 + $0x70] sm:$0xff]
      %v2114 = vld [vmem:[#allocation3 + $0x78] sm:$0xff]
      %v2115 = vld [vmem:[#allocation3 + $0x80] sm:$0xff]
      %v2116 = vld [vmem:[#allocation3 + $0x88] sm:$0xff]
      %v2117 = vld [vmem:[#allocation3 + $0x90] sm:$0xff]
      %v2118 = vld [vmem:[#allocation3 + $0x98] sm:$0xff]
      %v2119 = vld [vmem:[#allocation3 + $0xa0] sm:$0xff]
      %v2120 = vld [vmem:[#allocation3 + $0xa8] sm:$0xff]
      %v2121 = vld [vmem:[#allocation3 + $0xb0] sm:$0xff]
      %v2122 = vld [vmem:[#allocation3 + $0xb8] sm:$0xff]
      %v2123 = vld [vmem:[#allocation3 + $0xc0] sm:$0xff]
      %v2124 = vld [vmem:[#allocation3 + $0xc8] sm:$0xff]
      %v2125 = vld [vmem:[#allocation3 + $0xd0] sm:$0xff]
      %v2126 = vld [vmem:[#allocation3 + $0xd8] sm:$0xff]
      %v2127 = vld [vmem:[#allocation3 + $0xe0] sm:$0xff]
      %v2128 = vld [vmem:[#allocation3 + $0xe8] sm:$0xff]
      %v2129 = vld [vmem:[#allocation3 + $0xf0] sm:$0xff]
      %v2130 = vld [vmem:[#allocation3 + $0xf8] sm:$0xff]
      %v2131 = vld [vmem:[%s3] sm:$0xff]
      %v2132 = vld [vmem:[%s3 + $0x8] sm:$0xff]
      %v2133 = vld [vmem:[%s3 + $0x10] sm:$0xff]
      %v2134 = vld [vmem:[%s3 + $0x18] sm:$0xff]
      %v2135 = vld [vmem:[%s3 + $0x20] sm:$0xf]
      %vm2136 = vcmask 293888
      %v2138 = vsel %vm2136, %v2099, 0
      %v2141 = vsel %vm2136, %v2100, 0
      %v2144 = vsel %vm2136, %v2101, 0
      %v2147 = vsel %vm2136, %v2102, 0
      %v2150 = vsel %vm2136, %v2103, 0
      %v2153 = vsel %vm2136, %v2104, 0
      %v2156 = vsel %vm2136, %v2105, 0
      %v2159 = vsel %vm2136, %v2106, 0
      %v2162 = vsel %vm2136, %v2107, 0
      %v2165 = vsel %vm2136, %v2108, 0
      %v2168 = vsel %vm2136, %v2109, 0
      %v2171 = vsel %vm2136, %v2110, 0
      %v2174 = vsel %vm2136, %v2111, 0
      %v2177 = vsel %vm2136, %v2112, 0
      %v2180 = vsel %vm2136, %v2113, 0
      %v2183 = vsel %vm2136, %v2114, 0
      %v2186 = vsel %vm2136, %v2115, 0
      %v2189 = vsel %vm2136, %v2116, 0
      %v2192 = vsel %vm2136, %v2117, 0
      %v2195 = vsel %vm2136, %v2118, 0
      %v2198 = vsel %vm2136, %v2119, 0
      %v2201 = vsel %vm2136, %v2120, 0
      %v2204 = vsel %vm2136, %v2121, 0
      %v2207 = vsel %vm2136, %v2122, 0
      %v2210 = vsel %vm2136, %v2123, 0
      %v2213 = vsel %vm2136, %v2124, 0
      %v2216 = vsel %vm2136, %v2125, 0
      %v2219 = vsel %vm2136, %v2126, 0
      %v2222 = vsel %vm2136, %v2127, 0
      %v2225 = vsel %vm2136, %v2128, 0
      %v2228 = vsel %vm2136, %v2129, 0
      %v2231 = vsel %vm2136, %v2130, 0
      %vm2233 = vcmask 1043456
      %v2235 = vsel %vm2233, %v2135, 0
      %2237 = vmatprep.subr.mxu0 0.0
      %2238 = vmatpush1.msra.mxu0 0.0
      %2239 = vmatprep.subr.mxu0 0.0
      %2240 = vmatpush1.msra.mxu0 0.0
      %2241 = vmatprep.subr.mxu0 0.0
      %2242 = vmatpush1.msra.mxu0 0.0
      %2243 = vmatprep.subr.mxu0 0.0
      %2244 = vmatpush1.msra.mxu0 0.0
      %2245 = vmatprep.subr.mxu0 0.0
      %2246 = vmatpush1.msra.mxu0 0.0
      %2247 = vmatprep.subr.mxu0 0.0
      %2248 = vmatpush1.msra.mxu0 0.0
      %2249 = vmatprep.subr.mxu0 0.0
      %2250 = vmatpush1.msra.mxu0 0.0
      %2251 = vmatprep.subr.mxu0 0.0
      %2252 = vmatpush1.msra.mxu0 0.0
      %2253 = vmatprep.subr.mxu0 0.0
      %2254 = vmatpush1.msra.mxu0 0.0
      %2255 = vmatprep.subr.mxu0 0.0
      %2256 = vmatpush1.msra.mxu0 0.0
      %2257 = vmatprep.subr.mxu0 0.0
      %2258 = vmatpush1.msra.mxu0 0.0
      %2259 = vmatprep.subr.mxu0 0.0
      %2260 = vmatpush1.msra.mxu0 %v2235
      %2261 = vmatprep.subr.mxu0 0.0
      %2262 = vmatpush1.msra.mxu0 %v2134
      %2263 = vmatprep.subr.mxu0 0.0
      %2264 = vmatpush1.msra.mxu0 %v2133
      %2265 = vmatprep.subr.mxu0 0.0
      %2266 = vmatpush1.msra.mxu0 %v2132
      %2267 = vmatprep.subr.mxu0 0.0
      %2268 = vmatpush1.msra.mxu0 %v2131
      %2269 = vmatprep.subr.mxu0 0.0
      %2270 = vmatpush2.msra.mxu0 0.0
      %2271 = vmatprep.subr.mxu0 0.0
      %2272 = vmatpush2.msra.mxu0 0.0
      %2273 = vmatprep.subr.mxu0 0.0
      %2274 = vmatpush2.msra.mxu0 0.0
      %2275 = vmatprep.subr.mxu0 0.0
      %2276 = vmatpush2.msra.mxu0 0.0
      %2277 = vmatprep.subr.mxu0 0.0
      %2278 = vmatpush2.msra.mxu0 0.0
      %2279 = vmatprep.subr.mxu0 0.0
      %2280 = vmatpush2.msra.mxu0 0.0
      %2281 = vmatprep.subr.mxu0 0.0
      %2282 = vmatpush2.msra.mxu0 0.0
      %2283 = vmatprep.subr.mxu0 0.0
      %2284 = vmatpush2.msra.mxu0 0.0
      %2285 = vmatprep.subr.mxu0 0.0
      %2286 = vmatpush2.msra.mxu0 0.0
      %2287 = vmatprep.subr.mxu0 0.0
      %2288 = vmatpush2.msra.mxu0 0.0
      %2289 = vmatprep.subr.mxu0 0.0
      %2290 = vmatpush2.msra.mxu0 0.0
      %2291 = vmatprep.subr.mxu0 0.0
      %2292 = vmatpush2.msra.mxu0 0.0
      %2293 = vmatprep.subr.mxu0 0.0
      %2294 = vmatpush2.msra.mxu0 0.0
      %2295 = vmatprep.subr.mxu0 0.0
      %2296 = vmatpush2.msra.mxu0 0.0
      %2297 = vmatprep.subr.mxu0 0.0
      %2298 = vmatpush2.msra.mxu0 0.0
      %2299 = vmatprep.subr.mxu0 0.0
      %2300 = vmatpush2.msra.mxu0 0.0
      %2301 = vmatprep.mubr.f32.mxu0 0.0
      %2302 = vmatmul.mubr.f32.gmra.mxu0 %v2138
      %v2303 = vpop.f32.mrf.mxu0
      %v2304 = vadd.f32 0.0, %v2303
      %v2305 = vpop.f32.mrf.mxu0
      %2306 = vmatprep.mubr.f32.mxu0 0.0
      %2307 = vmatmul.mubr.f32.gmra.mxu0 %v2141
      %v2308 = vpop.f32.mrf.mxu0
      %v2309 = vadd.f32 0.0, %v2308
      %v2310 = vpop.f32.mrf.mxu0
      %2311 = vmatprep.mubr.f32.mxu0 0.0
      %2312 = vmatmul.mubr.f32.gmra.mxu0 %v2144
      %v2313 = vpop.f32.mrf.mxu0
      %v2314 = vadd.f32 0.0, %v2313
      %v2315 = vpop.f32.mrf.mxu0
      %2316 = vmatprep.mubr.f32.mxu0 0.0
      %2317 = vmatmul.mubr.f32.gmra.mxu0 %v2147
      %v2318 = vpop.f32.mrf.mxu0
      %v2319 = vadd.f32 0.0, %v2318
      %v2320 = vpop.f32.mrf.mxu0
      %2321 = vmatprep.mubr.f32.mxu0 0.0
      %2322 = vmatmul.mubr.f32.gmra.mxu0 %v2150
      %v2323 = vpop.f32.mrf.mxu0
      %v2324 = vadd.f32 0.0, %v2323
      %v2325 = vpop.f32.mrf.mxu0
      %2326 = vmatprep.mubr.f32.mxu0 0.0
      %2327 = vmatmul.mubr.f32.gmra.mxu0 %v2153
      %v2328 = vpop.f32.mrf.mxu0
      %v2329 = vadd.f32 0.0, %v2328
      %v2330 = vpop.f32.mrf.mxu0
      %2331 = vmatprep.mubr.f32.mxu0 0.0
      %2332 = vmatmul.mubr.f32.gmra.mxu0 %v2156
      %v2333 = vpop.f32.mrf.mxu0
      %v2334 = vadd.f32 0.0, %v2333
      %v2335 = vpop.f32.mrf.mxu0
      %2336 = vmatprep.mubr.f32.mxu0 0.0
      %2337 = vmatmul.mubr.f32.gmra.mxu0 %v2159
      %v2338 = vpop.f32.mrf.mxu0
      %v2339 = vadd.f32 0.0, %v2338
      %v2340 = vpop.f32.mrf.mxu0
      %2341 = vmatprep.mubr.f32.mxu0 0.0
      %2342 = vmatmul.mubr.f32.gmra.mxu0 %v2162
      %v2343 = vpop.f32.mrf.mxu0
      %v2344 = vadd.f32 0.0, %v2343
      %v2345 = vpop.f32.mrf.mxu0
      %2346 = vmatprep.mubr.f32.mxu0 0.0
      %2347 = vmatmul.mubr.f32.gmra.mxu0 %v2165
      %v2348 = vpop.f32.mrf.mxu0
      %v2349 = vadd.f32 0.0, %v2348
      %v2350 = vpop.f32.mrf.mxu0
      %2351 = vmatprep.mubr.f32.mxu0 0.0
      %2352 = vmatmul.mubr.f32.gmra.mxu0 %v2168
      %v2353 = vpop.f32.mrf.mxu0
      %v2354 = vadd.f32 0.0, %v2353
      %v2355 = vpop.f32.mrf.mxu0
      %2356 = vmatprep.mubr.f32.mxu0 0.0
      %2357 = vmatmul.mubr.f32.gmra.mxu0 %v2171
      %v2358 = vpop.f32.mrf.mxu0
      %v2359 = vadd.f32 0.0, %v2358
      %v2360 = vpop.f32.mrf.mxu0
      %2361 = vmatprep.mubr.f32.mxu0 0.0
      %2362 = vmatmul.mubr.f32.gmra.mxu0 %v2174
      %v2363 = vpop.f32.mrf.mxu0
      %v2364 = vadd.f32 0.0, %v2363
      %v2365 = vpop.f32.mrf.mxu0
      %2366 = vmatprep.mubr.f32.mxu0 0.0
      %2367 = vmatmul.mubr.f32.gmra.mxu0 %v2177
      %v2368 = vpop.f32.mrf.mxu0
      %v2369 = vadd.f32 0.0, %v2368
      %v2370 = vpop.f32.mrf.mxu0
      %2371 = vmatprep.mubr.f32.mxu0 0.0
      %2372 = vmatmul.mubr.f32.gmra.mxu0 %v2180
      %v2373 = vpop.f32.mrf.mxu0
      %v2374 = vadd.f32 0.0, %v2373
      %v2375 = vpop.f32.mrf.mxu0
      %2376 = vmatprep.mubr.f32.mxu0 0.0
      %2377 = vmatmul.mubr.f32.gmra.mxu0 %v2183
      %v2378 = vpop.f32.mrf.mxu0
      %v2379 = vadd.f32 0.0, %v2378
      %v2380 = vpop.f32.mrf.mxu0
      %2381 = vmatprep.mubr.f32.mxu0 0.0
      %2382 = vmatmul.mubr.f32.gmra.mxu0 %v2186
      %v2383 = vpop.f32.mrf.mxu0
      %v2384 = vadd.f32 0.0, %v2383
      %v2385 = vpop.f32.mrf.mxu0
      %2386 = vmatprep.mubr.f32.mxu0 0.0
      %2387 = vmatmul.mubr.f32.gmra.mxu0 %v2189
      %v2388 = vpop.f32.mrf.mxu0
      %v2389 = vadd.f32 0.0, %v2388
      %v2390 = vpop.f32.mrf.mxu0
      %2391 = vmatprep.mubr.f32.mxu0 0.0
      %2392 = vmatmul.mubr.f32.gmra.mxu0 %v2192
      %v2393 = vpop.f32.mrf.mxu0
      %v2394 = vadd.f32 0.0, %v2393
      %v2395 = vpop.f32.mrf.mxu0
      %2396 = vmatprep.mubr.f32.mxu0 0.0
      %2397 = vmatmul.mubr.f32.gmra.mxu0 %v2195
      %v2398 = vpop.f32.mrf.mxu0
      %v2399 = vadd.f32 0.0, %v2398
      %v2400 = vpop.f32.mrf.mxu0
      %2401 = vmatprep.mubr.f32.mxu0 0.0
      %2402 = vmatmul.mubr.f32.gmra.mxu0 %v2198
      %v2403 = vpop.f32.mrf.mxu0
      %v2404 = vadd.f32 0.0, %v2403
      %v2405 = vpop.f32.mrf.mxu0
      %2406 = vmatprep.mubr.f32.mxu0 0.0
      %2407 = vmatmul.mubr.f32.gmra.mxu0 %v2201
      %v2408 = vpop.f32.mrf.mxu0
      %v2409 = vadd.f32 0.0, %v2408
      %v2410 = vpop.f32.mrf.mxu0
      %2411 = vmatprep.mubr.f32.mxu0 0.0
      %2412 = vmatmul.mubr.f32.gmra.mxu0 %v2204
      %v2413 = vpop.f32.mrf.mxu0
      %v2414 = vadd.f32 0.0, %v2413
      %v2415 = vpop.f32.mrf.mxu0
      %2416 = vmatprep.mubr.f32.mxu0 0.0
      %2417 = vmatmul.mubr.f32.gmra.mxu0 %v2207
      %v2418 = vpop.f32.mrf.mxu0
      %v2419 = vadd.f32 0.0, %v2418
      %v2420 = vpop.f32.mrf.mxu0
      %2421 = vmatprep.mubr.f32.mxu0 0.0
      %2422 = vmatmul.mubr.f32.gmra.mxu0 %v2210
      %v2423 = vpop.f32.mrf.mxu0
      %v2424 = vadd.f32 0.0, %v2423
      %v2425 = vpop.f32.mrf.mxu0
      %2426 = vmatprep.mubr.f32.mxu0 0.0
      %2427 = vmatmul.mubr.f32.gmra.mxu0 %v2213
      %v2428 = vpop.f32.mrf.mxu0
      %v2429 = vadd.f32 0.0, %v2428
      %v2430 = vpop.f32.mrf.mxu0
      %2431 = vmatprep.mubr.f32.mxu0 0.0
      %2432 = vmatmul.mubr.f32.gmra.mxu0 %v2216
      %v2433 = vpop.f32.mrf.mxu0
      %v2434 = vadd.f32 0.0, %v2433
      %v2435 = vpop.f32.mrf.mxu0
      %2436 = vmatprep.mubr.f32.mxu0 0.0
      %2437 = vmatmul.mubr.f32.gmra.mxu0 %v2219
      %v2438 = vpop.f32.mrf.mxu0
      %v2439 = vadd.f32 0.0, %v2438
      %v2440 = vpop.f32.mrf.mxu0
      %2441 = vmatprep.mubr.f32.mxu0 0.0
      %2442 = vmatmul.mubr.f32.gmra.mxu0 %v2222
      %v2443 = vpop.f32.mrf.mxu0
      %v2444 = vadd.f32 0.0, %v2443
      %v2445 = vpop.f32.mrf.mxu0
      %2446 = vmatprep.mubr.f32.mxu0 0.0
      %2447 = vmatmul.mubr.f32.gmra.mxu0 %v2225
      %v2448 = vpop.f32.mrf.mxu0
      %v2449 = vadd.f32 0.0, %v2448
      %v2450 = vpop.f32.mrf.mxu0
      %2451 = vmatprep.mubr.f32.mxu0 0.0
      %2452 = vmatmul.mubr.f32.gmra.mxu0 %v2228
      %v2453 = vpop.f32.mrf.mxu0
      %v2454 = vadd.f32 0.0, %v2453
      %v2455 = vpop.f32.mrf.mxu0
      %2456 = vmatprep.mubr.f32.mxu0 0.0
      %2457 = vmatmul.mubr.f32.gmra.mxu0 %v2231
      %v2458 = vpop.f32.mrf.mxu0
      %v2459 = vadd.f32 0.0, %v2458
      %v2460 = vpop.f32.mrf.mxu0
      %2461 = vdwg.mxu0
      %2462 = vst.msk [vmem:[%s262] sm:$0xff] %vm269, %v2304
      %2463 = vst.msk [vmem:[%s262 + $0x8] sm:$0xff] %vm269, %v2309
      %2464 = vst.msk [vmem:[%s262 + $0x10] sm:$0xff] %vm269, %v2314
      %2465 = vst.msk [vmem:[%s262 + $0x18] sm:$0xff] %vm269, %v2319
      %2466 = vst.msk [vmem:[%s262 + $0x20] sm:$0xff] %vm269, %v2324
      %2467 = vst.msk [vmem:[%s262 + $0x28] sm:$0xff] %vm269, %v2329
      %2468 = vst.msk [vmem:[%s262 + $0x30] sm:$0xff] %vm269, %v2334
      %2469 = vst.msk [vmem:[%s262 + $0x38] sm:$0xff] %vm269, %v2339
      %2470 = vst.msk [vmem:[%s262 + $0x40] sm:$0xff] %vm269, %v2344
      %2471 = vst.msk [vmem:[%s262 + $0x48] sm:$0xff] %vm269, %v2349
      %2472 = vst.msk [vmem:[%s262 + $0x50] sm:$0xff] %vm269, %v2354
      %2473 = vst.msk [vmem:[%s262 + $0x58] sm:$0xff] %vm269, %v2359
      %2474 = vst.msk [vmem:[%s262 + $0x60] sm:$0xff] %vm269, %v2364
      %2475 = vst.msk [vmem:[%s262 + $0x68] sm:$0xff] %vm269, %v2369
      %2476 = vst.msk [vmem:[%s262 + $0x70] sm:$0xff] %vm269, %v2374
      %2477 = vst.msk [vmem:[%s262 + $0x78] sm:$0xff] %vm269, %v2379
      %2478 = vst.msk [vmem:[%s262 + $0x80] sm:$0xff] %vm269, %v2384
      %2479 = vst.msk [vmem:[%s262 + $0x88] sm:$0xff] %vm269, %v2389
      %2480 = vst.msk [vmem:[%s262 + $0x90] sm:$0xff] %vm269, %v2394
      %2481 = vst.msk [vmem:[%s262 + $0x98] sm:$0xff] %vm269, %v2399
      %2482 = vst.msk [vmem:[%s262 + $0xa0] sm:$0xff] %vm269, %v2404
      %2483 = vst.msk [vmem:[%s262 + $0xa8] sm:$0xff] %vm269, %v2409
      %2484 = vst.msk [vmem:[%s262 + $0xb0] sm:$0xff] %vm269, %v2414
      %2485 = vst.msk [vmem:[%s262 + $0xb8] sm:$0xff] %vm269, %v2419
      %2486 = vst.msk [vmem:[%s262 + $0xc0] sm:$0xff] %vm269, %v2424
      %2487 = vst.msk [vmem:[%s262 + $0xc8] sm:$0xff] %vm269, %v2429
      %2488 = vst.msk [vmem:[%s262 + $0xd0] sm:$0xff] %vm269, %v2434
      %2489 = vst.msk [vmem:[%s262 + $0xd8] sm:$0xff] %vm269, %v2439
      %2490 = vst.msk [vmem:[%s262 + $0xe0] sm:$0xff] %vm269, %v2444
      %2491 = vst.msk [vmem:[%s262 + $0xe8] sm:$0xff] %vm269, %v2449
      %2492 = vst.msk [vmem:[%s262 + $0xf0] sm:$0xff] %vm269, %v2454
      %2493 = vst.msk [vmem:[%s262 + $0xf8] sm:$0xff] %vm269, %v2459
      %v2494 = vsel %vm269, %v2304, 0.0
      %v2495 = vsel %vm269, %v2309, 0.0
      %v2496 = vadd.f32 %v2494, %v2495
      %v2497 = vsel %vm269, %v2314, 0.0
      %v2498 = vadd.f32 %v2496, %v2497
      %v2499 = vsel %vm269, %v2319, 0.0
      %v2500 = vadd.f32 %v2498, %v2499
      %v2501 = vsel %vm269, %v2324, 0.0
      %v2502 = vadd.f32 %v2500, %v2501
      %v2503 = vsel %vm269, %v2329, 0.0
      %v2504 = vadd.f32 %v2502, %v2503
      %v2505 = vsel %vm269, %v2334, 0.0
      %v2506 = vadd.f32 %v2504, %v2505
      %v2507 = vsel %vm269, %v2339, 0.0
      %v2508 = vadd.f32 %v2506, %v2507
      %v2509 = vsel %vm269, %v2344, 0.0
      %v2510 = vadd.f32 %v2508, %v2509
      %v2511 = vsel %vm269, %v2349, 0.0
      %v2512 = vadd.f32 %v2510, %v2511
      %v2513 = vsel %vm269, %v2354, 0.0
      %v2514 = vadd.f32 %v2512, %v2513
      %v2515 = vsel %vm269, %v2359, 0.0
      %v2516 = vadd.f32 %v2514, %v2515
      %v2517 = vsel %vm269, %v2364, 0.0
      %v2518 = vadd.f32 %v2516, %v2517
      %v2519 = vsel %vm269, %v2369, 0.0
      %v2520 = vadd.f32 %v2518, %v2519
      %v2521 = vsel %vm269, %v2374, 0.0
      %v2522 = vadd.f32 %v2520, %v2521
      %v2523 = vsel %vm269, %v2379, 0.0
      %v2524 = vadd.f32 %v2522, %v2523
      %v2525 = vsel %vm269, %v2384, 0.0
      %v2526 = vadd.f32 %v2524, %v2525
      %v2527 = vsel %vm269, %v2389, 0.0
      %v2528 = vadd.f32 %v2526, %v2527
      %v2529 = vsel %vm269, %v2394, 0.0
      %v2530 = vadd.f32 %v2528, %v2529
      %v2531 = vsel %vm269, %v2399, 0.0
      %v2532 = vadd.f32 %v2530, %v2531
      %v2533 = vsel %vm269, %v2404, 0.0
      %v2534 = vadd.f32 %v2532, %v2533
      %v2535 = vsel %vm269, %v2409, 0.0
      %v2536 = vadd.f32 %v2534, %v2535
      %v2537 = vsel %vm269, %v2414, 0.0
      %v2538 = vadd.f32 %v2536, %v2537
      %v2539 = vsel %vm269, %v2419, 0.0
      %v2540 = vadd.f32 %v2538, %v2539
      %v2541 = vsel %vm269, %v2424, 0.0
      %v2542 = vadd.f32 %v2540, %v2541
      %v2543 = vsel %vm269, %v2429, 0.0
      %v2544 = vadd.f32 %v2542, %v2543
      %v2545 = vsel %vm269, %v2434, 0.0
      %v2546 = vadd.f32 %v2544, %v2545
      %v2547 = vsel %vm269, %v2439, 0.0
      %v2548 = vadd.f32 %v2546, %v2547
      %v2549 = vsel %vm269, %v2444, 0.0
      %v2550 = vadd.f32 %v2548, %v2549
      %v2551 = vsel %vm269, %v2449, 0.0
      %v2552 = vadd.f32 %v2550, %v2551
      %v2553 = vsel %vm269, %v2454, 0.0
      %v2554 = vadd.f32 %v2552, %v2553
      %v2555 = vsel %vm269, %v2459, 0.0
      %v2556 = vadd.f32 %v2554, %v2555
      %v2557 = vrot.slane %v2556, 4
      %v2558 = vadd.f32 %v2556, %v2557
      %v2559 = vrot.slane %v2558, 2
      %v2560 = vadd.f32 %v2558, %v2559
      %v2561 = vrot.slane %v2560, 1
      %v2562 = vadd.f32 %v2560, %v2561
      %2563 = vst.msk [vmem:[%s265] sm:$0x1] %vm278, %v2562
      %v2564 = vmul.f32 %v2304, %v2304
      %v2565 = vmul.f32 %v2309, %v2309
      %v2566 = vmul.f32 %v2314, %v2314
      %v2567 = vmul.f32 %v2319, %v2319
      %v2568 = vmul.f32 %v2324, %v2324
      %v2569 = vmul.f32 %v2329, %v2329
      %v2570 = vmul.f32 %v2334, %v2334
      %v2571 = vmul.f32 %v2339, %v2339
      %v2572 = vmul.f32 %v2344, %v2344
      %v2573 = vmul.f32 %v2349, %v2349
      %v2574 = vmul.f32 %v2354, %v2354
      %v2575 = vmul.f32 %v2359, %v2359
      %v2576 = vmul.f32 %v2364, %v2364
      %v2577 = vmul.f32 %v2369, %v2369
      %v2578 = vmul.f32 %v2374, %v2374
      %v2579 = vmul.f32 %v2379, %v2379
      %v2580 = vmul.f32 %v2384, %v2384
      %v2581 = vmul.f32 %v2389, %v2389
      %v2582 = vmul.f32 %v2394, %v2394
      %v2583 = vmul.f32 %v2399, %v2399
      %v2584 = vmul.f32 %v2404, %v2404
      %v2585 = vmul.f32 %v2409, %v2409
      %v2586 = vmul.f32 %v2414, %v2414
      %v2587 = vmul.f32 %v2419, %v2419
      %v2588 = vmul.f32 %v2424, %v2424
      %v2589 = vmul.f32 %v2429, %v2429
      %v2590 = vmul.f32 %v2434, %v2434
      %v2591 = vmul.f32 %v2439, %v2439
      %v2592 = vmul.f32 %v2444, %v2444
      %v2593 = vmul.f32 %v2449, %v2449
      %v2594 = vmul.f32 %v2454, %v2454
      %v2595 = vmul.f32 %v2459, %v2459
      %v2596 = vsel %vm269, %v2564, 0.0
      %v2597 = vsel %vm269, %v2565, 0.0
      %v2598 = vadd.f32 %v2596, %v2597
      %v2599 = vsel %vm269, %v2566, 0.0
      %v2600 = vadd.f32 %v2598, %v2599
      %v2601 = vsel %vm269, %v2567, 0.0
      %v2602 = vadd.f32 %v2600, %v2601
      %v2603 = vsel %vm269, %v2568, 0.0
      %v2604 = vadd.f32 %v2602, %v2603
      %v2605 = vsel %vm269, %v2569, 0.0
      %v2606 = vadd.f32 %v2604, %v2605
      %v2607 = vsel %vm269, %v2570, 0.0
      %v2608 = vadd.f32 %v2606, %v2607
      %v2609 = vsel %vm269, %v2571, 0.0
      %v2610 = vadd.f32 %v2608, %v2609
      %v2611 = vsel %vm269, %v2572, 0.0
      %v2612 = vadd.f32 %v2610, %v2611
      %v2613 = vsel %vm269, %v2573, 0.0
      %v2614 = vadd.f32 %v2612, %v2613
      %v2615 = vsel %vm269, %v2574, 0.0
      %v2616 = vadd.f32 %v2614, %v2615
      %v2617 = vsel %vm269, %v2575, 0.0
      %v2618 = vadd.f32 %v2616, %v2617
      %v2619 = vsel %vm269, %v2576, 0.0
      %v2620 = vadd.f32 %v2618, %v2619
      %v2621 = vsel %vm269, %v2577, 0.0
      %v2622 = vadd.f32 %v2620, %v2621
      %v2623 = vsel %vm269, %v2578, 0.0
      %v2624 = vadd.f32 %v2622, %v2623
      %v2625 = vsel %vm269, %v2579, 0.0
      %v2626 = vadd.f32 %v2624, %v2625
      %v2627 = vsel %vm269, %v2580, 0.0
      %v2628 = vadd.f32 %v2626, %v2627
      %v2629 = vsel %vm269, %v2581, 0.0
      %v2630 = vadd.f32 %v2628, %v2629
      %v2631 = vsel %vm269, %v2582, 0.0
      %v2632 = vadd.f32 %v2630, %v2631
      %v2633 = vsel %vm269, %v2583, 0.0
      %v2634 = vadd.f32 %v2632, %v2633
      %v2635 = vsel %vm269, %v2584, 0.0
      %v2636 = vadd.f32 %v2634, %v2635
      %v2637 = vsel %vm269, %v2585, 0.0
      %v2638 = vadd.f32 %v2636, %v2637
      %v2639 = vsel %vm269, %v2586, 0.0
      %v2640 = vadd.f32 %v2638, %v2639
      %v2641 = vsel %vm269, %v2587, 0.0
      %v2642 = vadd.f32 %v2640, %v2641
      %v2643 = vsel %vm269, %v2588, 0.0
      %v2644 = vadd.f32 %v2642, %v2643
      %v2645 = vsel %vm269, %v2589, 0.0
      %v2646 = vadd.f32 %v2644, %v2645
      %v2647 = vsel %vm269, %v2590, 0.0
      %v2648 = vadd.f32 %v2646, %v2647
      %v2649 = vsel %vm269, %v2591, 0.0
      %v2650 = vadd.f32 %v2648, %v2649
      %v2651 = vsel %vm269, %v2592, 0.0
      %v2652 = vadd.f32 %v2650, %v2651
      %v2653 = vsel %vm269, %v2593, 0.0
      %v2654 = vadd.f32 %v2652, %v2653
      %v2655 = vsel %vm269, %v2594, 0.0
      %v2656 = vadd.f32 %v2654, %v2655
      %v2657 = vsel %vm269, %v2595, 0.0
      %v2658 = vadd.f32 %v2656, %v2657
      %v2659 = vrot.slane %v2658, 4
      %v2660 = vadd.f32 %v2658, %v2659
      %v2661 = vrot.slane %v2660, 2
      %v2662 = vadd.f32 %v2660, %v2661
      %v2663 = vrot.slane %v2662, 1
      %v2664 = vadd.f32 %v2662, %v2663
      %2665 = vst.msk [vmem:[%s268] sm:$0x1] %vm278, %v2664
      %p2666 = scmp.lt.s32.totalorder %s18, 1
      %s2667 = scalar_select %p2666, %s18, 1
      %s2668 = smul.addr %s2667, 32
      %s2669 = smul.addr %s2668, 8
      %s2670 = scalar_lea.vmem %s4, %s2669
      %p2671 = scmp.lt.s32.totalorder %s18, 1
      %s2672 = scalar_select %p2671, %s18, 1
      %s2673 = scalar_lea.vmem %s5, %s2672
      %p2674 = scmp.lt.s32.totalorder %s18, 1
      %s2675 = scalar_select %p2674, %s18, 1
      %s2676 = scalar_lea.vmem %s6, %s2675
      // Predicated region
      $region37: #{up_forward.6} parent=35 // pred_check
        %p2677 = pneg %p125
      $region38: #{up_forward.6} parent=35 // pred_check_branch
        %2679 = sbr.rel (%p2677) target = $region40
      $region39: #{up_forward.6} parent=35 // pred_region
        _
      $region40: #{up_forward.6} parent=35 // pred_fallthru
        _
      // Predicated region
      $region41: #{up_forward.6} parent=35 // pred_check
        %p2680 = pneg %p151
      $region42: #{up_forward.6} parent=35 // pred_check_branch
        %2682 = sbr.rel (%p2680) target = $region44
      $region43: #{up_forward.6} parent=35 // pred_region
        _
      $region44: #{up_forward.6} parent=35 // pred_fallthru
        _
      // Predicated region
      $region45: #{up_forward.6} parent=35 // pred_check
        %p2683 = pneg %p177
      $region46: #{up_forward.6} parent=35 // pred_check_branch
        %2685 = sbr.rel (%p2683) target = $region48
      $region47: #{up_forward.6} parent=35 // pred_region
        _
      $region48: #{up_forward.6} parent=35 // pred_fallthru
        _
    $region36: #{up_forward.6} parent=5 // pred_fallthru
      _
    %p2686 = scmp.le.s32.totalorder 2, %s13
    // Predicated region
    $region49: #{up_forward.6} parent=5 // pred_check
      %p2687 = pneg %p2686
    $region50: #{up_forward.6} parent=5 // pred_check_branch
      %2689 = sbr.rel (%p2687) target = $region52
    $region51: #{up_forward.6} parent=5 // pred_region
      %s2690 = ssub.s32 %s13, 2
      // Predicated region
      $region53: #{up_forward.6} parent=51 // pred_check
        %p2691 = pneg %p131
      $region54: #{up_forward.6} parent=51 // pred_check_branch
        %2693 = sbr.rel (%p2691) target = $region56
      $region55: #{up_forward.6} parent=51 // pred_region
        %p2694 = scmp.lt.s32.totalorder %s19, 1
        %s2695 = scalar_select %p2694, %s19, 1
        %s2696 = smul.addr %s2695, 32
        %s2697 = smul.addr %s2696, 8
        %s2698 = scalar_lea.vmem %s4, %s2697
      $region56: #{up_forward.6} parent=51 // pred_fallthru
        _
      // Predicated region
      $region57: #{up_forward.6} parent=51 // pred_check
        %p2699 = pneg %p157
      $region58: #{up_forward.6} parent=51 // pred_check_branch
        %2701 = sbr.rel (%p2699) target = $region60
      $region59: #{up_forward.6} parent=51 // pred_region
        %p2702 = scmp.lt.s32.totalorder %s19, 1
        %s2703 = scalar_select %p2702, %s19, 1
        %s2704 = scalar_lea.vmem %s5, %s2703
      $region60: #{up_forward.6} parent=51 // pred_fallthru
        _
      // Predicated region
      $region61: #{up_forward.6} parent=51 // pred_check
        %p2705 = pneg %p183
      $region62: #{up_forward.6} parent=51 // pred_check_branch
        %2707 = sbr.rel (%p2705) target = $region64
      $region63: #{up_forward.6} parent=51 // pred_region
        %p2708 = scmp.lt.s32.totalorder %s19, 1
        %s2709 = scalar_select %p2708, %s19, 1
        %s2710 = scalar_lea.vmem %s6, %s2709
      $region64: #{up_forward.6} parent=51 // pred_fallthru
        _
    $region52: #{up_forward.6} parent=5 // pred_fallthru
      _
  $region6: #{up_forward.6} parent=0 // loop_footer
    %s17 = sadd.s32 1, %s13
  $region7: #{up_forward.6} parent=0 // loop_footer_branch
    %12 = sbr.rel target = $region3
  $region8: #{up_forward.6} parent=0 // loop_exit
    _

</llo_original>
